<compile_context>
chip_gen: v6e
topology: v6e:2x2x1
jax: 0.10.0
libtpu: 0.0.40
codegen_flags: <defaults>
</compile_context>

<pallas_src>
import jax
import jax.numpy as jnp
import numpy as np
from jax.experimental import pallas as pl
from jax.experimental.pallas import tpu as pltpu

# ----------------------------- configuration -------------------------------
RATES = (3, 5, 7, 9)          # dilation rates (== padding per branch)
IN_CH = 4                     # in_channel
OUT_CH = 8                    # out_channel  (each branch produces OUT_CH // 4)
CB = OUT_CH // 4              # channels per branch
H = W = 16                    # spatial size
PAD = max(RATES)              # single shared zero pad for all branches
HP, WP = H + 2 * PAD, W + 2 * PAD
HO, WO = H // 2, W // 2       # after AvgPool2d((2, 2))
NB = len(RATES)
CTOT = NB * CB                # concatenated output channels
TAP_ROWS = 9 * IN_CH          # im2col rows per rate   (36)
PATCH_ROWS = NB * TAP_ROWS    # fused im2col rows      (144)
HW = H * W                    # matmul N dimension     (256)


# ------------------------------- kernel ------------------------------------
def multiscale_kernel(x_ref, w_ref, b_ref, o_ref, patch_ref):
    # x_ref:     (1, C, HP, WP)       VMEM  zero-padded input, one batch elem
    # w_ref:     (CTOT, PATCH_ROWS)   VMEM  block-diagonal fused weights
    # b_ref:     (CTOT, 1)            VMEM  bias vector (branch-major)
    # o_ref:     (1, CTOT, HO*WO)     VMEM  pooled output, lane dim = HO*WO
    # patch_ref: (PATCH_ROWS, HW)     VMEM  scratch: fused im2col patch

    # Center tap (kh=1, kw=1) is identical for every dilation rate:
    # extract/reshape once, copy into each branch's row block.
    center = x_ref[0, :, PAD:PAD + H, PAD:PAD + W].reshape(IN_CH, HW)
    for r in range(NB):
        row = r * TAP_ROWS + 4 * IN_CH          # tap index 4 == (kh=1, kw=1)
        patch_ref[row:row + IN_CH, :] = center

    # Remaining 8 dilated taps per rate, written straight into the scratch
    # (static row offsets; no concatenate temporaries kept live).
    for r, d in enumerate(RATES):
        base = r * TAP_ROWS
        for kh in range(3):
            for kw in range(3):
                if kh == 1 and kw == 1:
                    continue
                oh = PAD + (kh - 1) * d
                ow = PAD + (kw - 1) * d
                row = base + (kh * 3 + kw) * IN_CH
                patch_ref[row:row + IN_CH, :] = (
                    x_ref[0, :, oh:oh + H, ow:ow + W].reshape(IN_CH, HW))

    # One fused MXU matmul for all 4 branches: (8, 144) @ (144, 256).
    conv = jnp.dot(w_ref[...], patch_ref[...],
                   preferred_element_type=jnp.float32)       # (CTOT, H*W)

    # AvgPool2d((2, 2)) once on the fused slab: pool W pairs, then H pairs.
    t = conv.reshape(CTOT, H * WO, 2)
    t = t[..., 0] + t[..., 1]                                # (CTOT, H*WO)
    t2 = t.reshape(CTOT, HO, 2, WO)
    pooled = (t2[:, :, 0, :] + t2[:, :, 1, :]) * 0.25        # (CTOT, HO, WO)

    # Single lane-dense store; bias added with one broadcast add.
    o_ref[0, :, :] = pooled.reshape(CTOT, HO * WO) + b_ref[...]


# ------------------------------ wrapper -------------------------------------
@jax.jit
def multiscale(x, w_all, b_all):
    """x: (B, C, H, W) f32; w_all: (NB, CB, C, 3, 3); b_all: (NB, CB)."""
    B = x.shape[0]
    # Zero-pad once with the max rate; the kernel picks per-rate offsets.
    x_pad = jnp.pad(x, ((0, 0), (0, 0), (PAD, PAD), (PAD, PAD)))

    # OIHW -> (branch, out, kh, kw, c) -> (branch, out, 9*C), then build the
    # (CTOT, 144) block-diagonal matrix so all branches fuse into one matmul.
    w_flat = jnp.transpose(w_all, (0, 1, 3, 4, 2)).reshape(NB, CB, TAP_ROWS)
    w_bd = jnp.zeros((CTOT, PATCH_ROWS), jnp.float32)
    for r in range(NB):
        w_bd = w_bd.at[r * CB:(r + 1) * CB,
                       r * TAP_ROWS:(r + 1) * TAP_ROWS].set(w_flat[r])

    b_vec = b_all.reshape(CTOT, 1)   # branch-major, matches concat order

    out_flat = pl.pallas_call(
        multiscale_kernel,
        out_shape=jax.ShapeDtypeStruct((B, CTOT, HO * WO), jnp.float32),
        grid=(B,),
        in_specs=[
            pl.BlockSpec((1, IN_CH, HP, WP), lambda b: (b, 0, 0, 0)),
            pl.BlockSpec((CTOT, PATCH_ROWS), lambda b: (0, 0)),
            pl.BlockSpec((CTOT, 1), lambda b: (0, 0)),
        ],
        out_specs=pl.BlockSpec((1, CTOT, HO * WO), lambda b: (b, 0, 0)),
        scratch_shapes=[pltpu.VMEM((PATCH_ROWS, HW), jnp.float32)],
        compiler_params=pltpu.CompilerParams(
            dimension_semantics=("parallel",)),
    )(x_pad, w_bd, b_vec)

    # Layout plumbing back to NCHW outside the kernel.
    return out_flat.reshape(B, CTOT, HO, WO)


# --------------------------- pure-JAX reference ------------------------------
def multiscale_ref(x, w_all, b_all):
    outs = []
    for r, d in enumerate(RATES):
        y = jax.lax.conv_general_dilated(
            x, w_all[r],
            window_strides=(1, 1),
            padding=[(d, d), (d, d)],
            rhs_dilation=(d, d),
            dimension_numbers=("NCHW", "OIHW", "NCHW"),
        ) + b_all[r][None, :, None, None]
        B = y.shape[0]
        y = y.reshape(B, CB, HO, 2, WO, 2).mean(axis=(3, 5))
        outs.append(y)
    return jnp.concatenate(outs, axis=1)


# ------------------------------- main ---------------------------------------
if __name__ == "__main__":
    key = jax.random.PRNGKey(0)
    kx, kw, kb = jax.random.split(key, 3)

    # Deterministic parameter init mirroring the module's __init__ shapes:
    # Conv2d(IN_CH, OUT_CH//4, kernel_size=3) per dilation rate.
    fan_in = IN_CH * 3 * 3
    w_all = (jax.random.normal(kw, (NB, CB, IN_CH, 3, 3), jnp.float32)
             * np.sqrt(2.0 / fan_in))                       # kaiming_normal fan_in
    b_all = jax.random.uniform(kb, (NB, CB), jnp.float32,
                               -1.0 / np.sqrt(fan_in), 1.0 / np.sqrt(fan_in))

    x = jax.random.normal(kx, (2, IN_CH, H, W), jnp.float32)

    out = multiscale(x, w_all, b_all)
    out = jax.block_until_ready(out)

    ref = jax.block_until_ready(multiscale_ref(x, w_all, b_all))
    np.testing.assert_allclose(np.asarray(out), np.asarray(ref),
                               rtol=1e-4, atol=1e-4)
    assert out.shape == (2, CTOT, HO, WO)

    print("KERNEL_OK")
</pallas_src>

<mosaic_0001>
module attributes {stable_mosaic.version = 11 : i64} {
  func.func @multiscale_kernel(%arg0: i32, %arg1: memref<1x4x34x34xf32, #tpu.memory_space<vmem>>, %arg2: memref<8x144xf32, #tpu.memory_space<vmem>>, %arg3: memref<8x1xf32, #tpu.memory_space<vmem>>, %arg4: memref<1x8x64xf32, #tpu.memory_space<vmem>>, %arg5: memref<144x256xf32, #tpu.memory_space<vmem>>) attributes {dimension_semantics = [#tpu.dimension_semantics<parallel>], iteration_bounds = array<i64: 2>, scalar_prefetch = 0 : i64, scratch_operands = 1 : i64, tpu.core_type = #tpu.core_type<tc>, window_params = [{transform_indices = @transform_0, window_bounds = array<i64: 1, 4, 34, 34>}, {pipeline_mode = #tpu.pipeline_mode<synchronous>, transform_indices = @transform_1, window_bounds = array<i64: 8, 144>}, {pipeline_mode = #tpu.pipeline_mode<synchronous>, transform_indices = @transform_2, window_bounds = array<i64: 8, 1>}, {transform_indices = @transform_3, window_bounds = array<i64: 1, 8, 64>}]} {
    %c0 = arith.constant 0 : index
    %c0_0 = arith.constant 0 : index
    %c9 = arith.constant 9 : index
    %c9_1 = arith.constant 9 : index
    %0 = vector.load %arg1[%c0, %c0_0, %c9, %c9_1] : memref<1x4x34x34xf32, #tpu.memory_space<vmem>>, vector<1x4x16x16xf32>
    %1 = vector.shape_cast %0 : vector<1x4x16x16xf32> to vector<4x16x16xf32>
    %2 = vector.shape_cast %1 : vector<4x16x16xf32> to vector<4x256xf32>
    %c16 = arith.constant 16 : index
    %c0_2 = arith.constant 0 : index
    %3 = vector.load %arg5[%c16, %c0_2] : memref<144x256xf32, #tpu.memory_space<vmem>>, vector<4x256xf32>
    tpu.vector_store %arg5[%c16, %c0_2], %2 {strides = array<i32>} : memref<144x256xf32, #tpu.memory_space<vmem>>, vector<4x256xf32>,
    %c52 = arith.constant 52 : index
    %c0_3 = arith.constant 0 : index
    %4 = vector.load %arg5[%c52, %c0_3] : memref<144x256xf32, #tpu.memory_space<vmem>>, vector<4x256xf32>
    tpu.vector_store %arg5[%c52, %c0_3], %2 {strides = array<i32>} : memref<144x256xf32, #tpu.memory_space<vmem>>, vector<4x256xf32>,
    %c88 = arith.constant 88 : index
    %c0_4 = arith.constant 0 : index
    %5 = vector.load %arg5[%c88, %c0_4] : memref<144x256xf32, #tpu.memory_space<vmem>>, vector<4x256xf32>
    tpu.vector_store %arg5[%c88, %c0_4], %2 {strides = array<i32>} : memref<144x256xf32, #tpu.memory_space<vmem>>, vector<4x256xf32>,
    %c124 = arith.constant 124 : index
    %c0_5 = arith.constant 0 : index
    %6 = vector.load %arg5[%c124, %c0_5] : memref<144x256xf32, #tpu.memory_space<vmem>>, vector<4x256xf32>
    tpu.vector_store %arg5[%c124, %c0_5], %2 {strides = array<i32>} : memref<144x256xf32, #tpu.memory_space<vmem>>, vector<4x256xf32>,
    %c0_6 = arith.constant 0 : index
    %c0_7 = arith.constant 0 : index
    %c6 = arith.constant 6 : index
    %c6_8 = arith.constant 6 : index
    %7 = vector.load %arg1[%c0_6, %c0_7, %c6, %c6_8] : memref<1x4x34x34xf32, #tpu.memory_space<vmem>>, vector<1x4x16x16xf32>
    %8 = vector.shape_cast %7 : vector<1x4x16x16xf32> to vector<4x16x16xf32>
    %9 = vector.shape_cast %8 : vector<4x16x16xf32> to vector<4x256xf32>
    %c0_9 = arith.constant 0 : index
    %c0_10 = arith.constant 0 : index
    %10 = vector.load %arg5[%c0_9, %c0_10] : memref<144x256xf32, #tpu.memory_space<vmem>>, vector<4x256xf32>
    tpu.vector_store %arg5[%c0_9, %c0_10], %9 {strides = array<i32>} : memref<144x256xf32, #tpu.memory_space<vmem>>, vector<4x256xf32>,
    %c0_11 = arith.constant 0 : index
    %c0_12 = arith.constant 0 : index
    %c6_13 = arith.constant 6 : index
    %c9_14 = arith.constant 9 : index
    %11 = vector.load %arg1[%c0_11, %c0_12, %c6_13, %c9_14] : memref<1x4x34x34xf32, #tpu.memory_space<vmem>>, vector<1x4x16x16xf32>
    %12 = vector.shape_cast %11 : vector<1x4x16x16xf32> to vector<4x16x16xf32>
    %13 = vector.shape_cast %12 : vector<4x16x16xf32> to vector<4x256xf32>
    %c4 = arith.constant 4 : index
    %c0_15 = arith.constant 0 : index
    %14 = vector.load %arg5[%c4, %c0_15] : memref<144x256xf32, #tpu.memory_space<vmem>>, vector<4x256xf32>
    tpu.vector_store %arg5[%c4, %c0_15], %13 {strides = array<i32>} : memref<144x256xf32, #tpu.memory_space<vmem>>, vector<4x256xf32>,
    %c0_16 = arith.constant 0 : index
    %c0_17 = arith.constant 0 : index
    %c6_18 = arith.constant 6 : index
    %c12 = arith.constant 12 : index
    %15 = vector.load %arg1[%c0_16, %c0_17, %c6_18, %c12] : memref<1x4x34x34xf32, #tpu.memory_space<vmem>>, vector<1x4x16x16xf32>
    %16 = vector.shape_cast %15 : vector<1x4x16x16xf32> to vector<4x16x16xf32>
    %17 = vector.shape_cast %16 : vector<4x16x16xf32> to vector<4x256xf32>
    %c8 = arith.constant 8 : index
    %c0_19 = arith.constant 0 : index
    %18 = vector.load %arg5[%c8, %c0_19] : memref<144x256xf32, #tpu.memory_space<vmem>>, vector<4x256xf32>
    tpu.vector_store %arg5[%c8, %c0_19], %17 {strides = array<i32>} : memref<144x256xf32, #tpu.memory_space<vmem>>, vector<4x256xf32>,
    %c0_20 = arith.constant 0 : index
    %c0_21 = arith.constant 0 : index
    %c9_22 = arith.constant 9 : index
    %c6_23 = arith.constant 6 : index
    %19 = vector.load %arg1[%c0_20, %c0_21, %c9_22, %c6_23] : memref<1x4x34x34xf32, #tpu.memory_space<vmem>>, vector<1x4x16x16xf32>
    %20 = vector.shape_cast %19 : vector<1x4x16x16xf32> to vector<4x16x16xf32>
    %21 = vector.shape_cast %20 : vector<4x16x16xf32> to vector<4x256xf32>
    %c12_24 = arith.constant 12 : index
    %c0_25 = arith.constant 0 : index
    %22 = vector.load %arg5[%c12_24, %c0_25] : memref<144x256xf32, #tpu.memory_space<vmem>>, vector<4x256xf32>
    tpu.vector_store %arg5[%c12_24, %c0_25], %21 {strides = array<i32>} : memref<144x256xf32, #tpu.memory_space<vmem>>, vector<4x256xf32>,
    %c0_26 = arith.constant 0 : index
    %c0_27 = arith.constant 0 : index
    %c9_28 = arith.constant 9 : index
    %c12_29 = arith.constant 12 : index
    %23 = vector.load %arg1[%c0_26, %c0_27, %c9_28, %c12_29] : memref<1x4x34x34xf32, #tpu.memory_space<vmem>>, vector<1x4x16x16xf32>
    %24 = vector.shape_cast %23 : vector<1x4x16x16xf32> to vector<4x16x16xf32>
    %25 = vector.shape_cast %24 : vector<4x16x16xf32> to vector<4x256xf32>
    %c20 = arith.constant 20 : index
    %c0_30 = arith.constant 0 : index
    %26 = vector.load %arg5[%c20, %c0_30] : memref<144x256xf32, #tpu.memory_space<vmem>>, vector<4x256xf32>
    tpu.vector_store %arg5[%c20, %c0_30], %25 {strides = array<i32>} : memref<144x256xf32, #tpu.memory_space<vmem>>, vector<4x256xf32>,
    %c0_31 = arith.constant 0 : index
    %c0_32 = arith.constant 0 : index
    %c12_33 = arith.constant 12 : index
    %c6_34 = arith.constant 6 : index
    %27 = vector.load %arg1[%c0_31, %c0_32, %c12_33, %c6_34] : memref<1x4x34x34xf32, #tpu.memory_space<vmem>>, vector<1x4x16x16xf32>
    %28 = vector.shape_cast %27 : vector<1x4x16x16xf32> to vector<4x16x16xf32>
    %29 = vector.shape_cast %28 : vector<4x16x16xf32> to vector<4x256xf32>
    %c24 = arith.constant 24 : index
    %c0_35 = arith.constant 0 : index
    %30 = vector.load %arg5[%c24, %c0_35] : memref<144x256xf32, #tpu.memory_space<vmem>>, vector<4x256xf32>
    tpu.vector_store %arg5[%c24, %c0_35], %29 {strides = array<i32>} : memref<144x256xf32, #tpu.memory_space<vmem>>, vector<4x256xf32>,
    %c0_36 = arith.constant 0 : index
    %c0_37 = arith.constant 0 : index
    %c12_38 = arith.constant 12 : index
    %c9_39 = arith.constant 9 : index
    %31 = vector.load %arg1[%c0_36, %c0_37, %c12_38, %c9_39] : memref<1x4x34x34xf32, #tpu.memory_space<vmem>>, vector<1x4x16x16xf32>
    %32 = vector.shape_cast %31 : vector<1x4x16x16xf32> to vector<4x16x16xf32>
    %33 = vector.shape_cast %32 : vector<4x16x16xf32> to vector<4x256xf32>
    %c28 = arith.constant 28 : index
    %c0_40 = arith.constant 0 : index
    %34 = vector.load %arg5[%c28, %c0_40] : memref<144x256xf32, #tpu.memory_space<vmem>>, vector<4x256xf32>
    tpu.vector_store %arg5[%c28, %c0_40], %33 {strides = array<i32>} : memref<144x256xf32, #tpu.memory_space<vmem>>, vector<4x256xf32>,
    %c0_41 = arith.constant 0 : index
    %c0_42 = arith.constant 0 : index
    %c12_43 = arith.constant 12 : index
    %c12_44 = arith.constant 12 : index
    %35 = vector.load %arg1[%c0_41, %c0_42, %c12_43, %c12_44] : memref<1x4x34x34xf32, #tpu.memory_space<vmem>>, vector<1x4x16x16xf32>
    %36 = vector.shape_cast %35 : vector<1x4x16x16xf32> to vector<4x16x16xf32>
    %37 = vector.shape_cast %36 : vector<4x16x16xf32> to vector<4x256xf32>
    %c32 = arith.constant 32 : index
    %c0_45 = arith.constant 0 : index
    %38 = vector.load %arg5[%c32, %c0_45] : memref<144x256xf32, #tpu.memory_space<vmem>>, vector<4x256xf32>
    tpu.vector_store %arg5[%c32, %c0_45], %37 {strides = array<i32>} : memref<144x256xf32, #tpu.memory_space<vmem>>, vector<4x256xf32>,
    %c0_46 = arith.constant 0 : index
    %c0_47 = arith.constant 0 : index
    %c4_48 = arith.constant 4 : index
    %c4_49 = arith.constant 4 : index
    %39 = vector.load %arg1[%c0_46, %c0_47, %c4_48, %c4_49] : memref<1x4x34x34xf32, #tpu.memory_space<vmem>>, vector<1x4x16x16xf32>
    %40 = vector.shape_cast %39 : vector<1x4x16x16xf32> to vector<4x16x16xf32>
    %41 = vector.shape_cast %40 : vector<4x16x16xf32> to vector<4x256xf32>
    %c36 = arith.constant 36 : index
    %c0_50 = arith.constant 0 : index
    %42 = vector.load %arg5[%c36, %c0_50] : memref<144x256xf32, #tpu.memory_space<vmem>>, vector<4x256xf32>
    tpu.vector_store %arg5[%c36, %c0_50], %41 {strides = array<i32>} : memref<144x256xf32, #tpu.memory_space<vmem>>, vector<4x256xf32>,
    %c0_51 = arith.constant 0 : index
    %c0_52 = arith.constant 0 : index
    %c4_53 = arith.constant 4 : index
    %c9_54 = arith.constant 9 : index
    %43 = vector.load %arg1[%c0_51, %c0_52, %c4_53, %c9_54] : memref<1x4x34x34xf32, #tpu.memory_space<vmem>>, vector<1x4x16x16xf32>
    %44 = vector.shape_cast %43 : vector<1x4x16x16xf32> to vector<4x16x16xf32>
    %45 = vector.shape_cast %44 : vector<4x16x16xf32> to vector<4x256xf32>
    %c40 = arith.constant 40 : index
    %c0_55 = arith.constant 0 : index
    %46 = vector.load %arg5[%c40, %c0_55] : memref<144x256xf32, #tpu.memory_space<vmem>>, vector<4x256xf32>
    tpu.vector_store %arg5[%c40, %c0_55], %45 {strides = array<i32>} : memref<144x256xf32, #tpu.memory_space<vmem>>, vector<4x256xf32>,
    %c0_56 = arith.constant 0 : index
    %c0_57 = arith.constant 0 : index
    %c4_58 = arith.constant 4 : index
    %c14 = arith.constant 14 : index
    %47 = vector.load %arg1[%c0_56, %c0_57, %c4_58, %c14] : memref<1x4x34x34xf32, #tpu.memory_space<vmem>>, vector<1x4x16x16xf32>
    %48 = vector.shape_cast %47 : vector<1x4x16x16xf32> to vector<4x16x16xf32>
    %49 = vector.shape_cast %48 : vector<4x16x16xf32> to vector<4x256xf32>
    %c44 = arith.constant 44 : index
    %c0_59 = arith.constant 0 : index
    %50 = vector.load %arg5[%c44, %c0_59] : memref<144x256xf32, #tpu.memory_space<vmem>>, vector<4x256xf32>
    tpu.vector_store %arg5[%c44, %c0_59], %49 {strides = array<i32>} : memref<144x256xf32, #tpu.memory_space<vmem>>, vector<4x256xf32>,
    %c0_60 = arith.constant 0 : index
    %c0_61 = arith.constant 0 : index
    %c9_62 = arith.constant 9 : index
    %c4_63 = arith.constant 4 : index
    %51 = vector.load %arg1[%c0_60, %c0_61, %c9_62, %c4_63] : memref<1x4x34x34xf32, #tpu.memory_space<vmem>>, vector<1x4x16x16xf32>
    %52 = vector.shape_cast %51 : vector<1x4x16x16xf32> to vector<4x16x16xf32>
    %53 = vector.shape_cast %52 : vector<4x16x16xf32> to vector<4x256xf32>
    %c48 = arith.constant 48 : index
    %c0_64 = arith.constant 0 : index
    %54 = vector.load %arg5[%c48, %c0_64] : memref<144x256xf32, #tpu.memory_space<vmem>>, vector<4x256xf32>
    tpu.vector_store %arg5[%c48, %c0_64], %53 {strides = array<i32>} : memref<144x256xf32, #tpu.memory_space<vmem>>, vector<4x256xf32>,
    %c0_65 = arith.constant 0 : index
    %c0_66 = arith.constant 0 : index
    %c9_67 = arith.constant 9 : index
    %c14_68 = arith.constant 14 : index
    %55 = vector.load %arg1[%c0_65, %c0_66, %c9_67, %c14_68] : memref<1x4x34x34xf32, #tpu.memory_space<vmem>>, vector<1x4x16x16xf32>
    %56 = vector.shape_cast %55 : vector<1x4x16x16xf32> to vector<4x16x16xf32>
    %57 = vector.shape_cast %56 : vector<4x16x16xf32> to vector<4x256xf32>
    %c56 = arith.constant 56 : index
    %c0_69 = arith.constant 0 : index
    %58 = vector.load %arg5[%c56, %c0_69] : memref<144x256xf32, #tpu.memory_space<vmem>>, vector<4x256xf32>
    tpu.vector_store %arg5[%c56, %c0_69], %57 {strides = array<i32>} : memref<144x256xf32, #tpu.memory_space<vmem>>, vector<4x256xf32>,
    %c0_70 = arith.constant 0 : index
    %c0_71 = arith.constant 0 : index
    %c14_72 = arith.constant 14 : index
    %c4_73 = arith.constant 4 : index
    %59 = vector.load %arg1[%c0_70, %c0_71, %c14_72, %c4_73] : memref<1x4x34x34xf32, #tpu.memory_space<vmem>>, vector<1x4x16x16xf32>
    %60 = vector.shape_cast %59 : vector<1x4x16x16xf32> to vector<4x16x16xf32>
    %61 = vector.shape_cast %60 : vector<4x16x16xf32> to vector<4x256xf32>
    %c60 = arith.constant 60 : index
    %c0_74 = arith.constant 0 : index
    %62 = vector.load %arg5[%c60, %c0_74] : memref<144x256xf32, #tpu.memory_space<vmem>>, vector<4x256xf32>
    tpu.vector_store %arg5[%c60, %c0_74], %61 {strides = array<i32>} : memref<144x256xf32, #tpu.memory_space<vmem>>, vector<4x256xf32>,
    %c0_75 = arith.constant 0 : index
    %c0_76 = arith.constant 0 : index
    %c14_77 = arith.constant 14 : index
    %c9_78 = arith.constant 9 : index
    %63 = vector.load %arg1[%c0_75, %c0_76, %c14_77, %c9_78] : memref<1x4x34x34xf32, #tpu.memory_space<vmem>>, vector<1x4x16x16xf32>
    %64 = vector.shape_cast %63 : vector<1x4x16x16xf32> to vector<4x16x16xf32>
    %65 = vector.shape_cast %64 : vector<4x16x16xf32> to vector<4x256xf32>
    %c64 = arith.constant 64 : index
    %c0_79 = arith.constant 0 : index
    %66 = vector.load %arg5[%c64, %c0_79] : memref<144x256xf32, #tpu.memory_space<vmem>>, vector<4x256xf32>
    tpu.vector_store %arg5[%c64, %c0_79], %65 {strides = array<i32>} : memref<144x256xf32, #tpu.memory_space<vmem>>, vector<4x256xf32>,
    %c0_80 = arith.constant 0 : index
    %c0_81 = arith.constant 0 : index
    %c14_82 = arith.constant 14 : index
    %c14_83 = arith.constant 14 : index
    %67 = vector.load %arg1[%c0_80, %c0_81, %c14_82, %c14_83] : memref<1x4x34x34xf32, #tpu.memory_space<vmem>>, vector<1x4x16x16xf32>
    %68 = vector.shape_cast %67 : vector<1x4x16x16xf32> to vector<4x16x16xf32>
    %69 = vector.shape_cast %68 : vector<4x16x16xf32> to vector<4x256xf32>
    %c68 = arith.constant 68 : index
    %c0_84 = arith.constant 0 : index
    %70 = vector.load %arg5[%c68, %c0_84] : memref<144x256xf32, #tpu.memory_space<vmem>>, vector<4x256xf32>
    tpu.vector_store %arg5[%c68, %c0_84], %69 {strides = array<i32>} : memref<144x256xf32, #tpu.memory_space<vmem>>, vector<4x256xf32>,
    %c0_85 = arith.constant 0 : index
    %c0_86 = arith.constant 0 : index
    %c2 = arith.constant 2 : index
    %c2_87 = arith.constant 2 : index
    %71 = vector.load %arg1[%c0_85, %c0_86, %c2, %c2_87] : memref<1x4x34x34xf32, #tpu.memory_space<vmem>>, vector<1x4x16x16xf32>
    %72 = vector.shape_cast %71 : vector<1x4x16x16xf32> to vector<4x16x16xf32>
    %73 = vector.shape_cast %72 : vector<4x16x16xf32> to vector<4x256xf32>
    %c72 = arith.constant 72 : index
    %c0_88 = arith.constant 0 : index
    %74 = vector.load %arg5[%c72, %c0_88] : memref<144x256xf32, #tpu.memory_space<vmem>>, vector<4x256xf32>
    tpu.vector_store %arg5[%c72, %c0_88], %73 {strides = array<i32>} : memref<144x256xf32, #tpu.memory_space<vmem>>, vector<4x256xf32>,
    %c0_89 = arith.constant 0 : index
    %c0_90 = arith.constant 0 : index
    %c2_91 = arith.constant 2 : index
    %c9_92 = arith.constant 9 : index
    %75 = vector.load %arg1[%c0_89, %c0_90, %c2_91, %c9_92] : memref<1x4x34x34xf32, #tpu.memory_space<vmem>>, vector<1x4x16x16xf32>
    %76 = vector.shape_cast %75 : vector<1x4x16x16xf32> to vector<4x16x16xf32>
    %77 = vector.shape_cast %76 : vector<4x16x16xf32> to vector<4x256xf32>
    %c76 = arith.constant 76 : index
    %c0_93 = arith.constant 0 : index
    %78 = vector.load %arg5[%c76, %c0_93] : memref<144x256xf32, #tpu.memory_space<vmem>>, vector<4x256xf32>
    tpu.vector_store %arg5[%c76, %c0_93], %77 {strides = array<i32>} : memref<144x256xf32, #tpu.memory_space<vmem>>, vector<4x256xf32>,
    %c0_94 = arith.constant 0 : index
    %c0_95 = arith.constant 0 : index
    %c2_96 = arith.constant 2 : index
    %c16_97 = arith.constant 16 : index
    %79 = vector.load %arg1[%c0_94, %c0_95, %c2_96, %c16_97] : memref<1x4x34x34xf32, #tpu.memory_space<vmem>>, vector<1x4x16x16xf32>
    %80 = vector.shape_cast %79 : vector<1x4x16x16xf32> to vector<4x16x16xf32>
    %81 = vector.shape_cast %80 : vector<4x16x16xf32> to vector<4x256xf32>
    %c80 = arith.constant 80 : index
    %c0_98 = arith.constant 0 : index
    %82 = vector.load %arg5[%c80, %c0_98] : memref<144x256xf32, #tpu.memory_space<vmem>>, vector<4x256xf32>
    tpu.vector_store %arg5[%c80, %c0_98], %81 {strides = array<i32>} : memref<144x256xf32, #tpu.memory_space<vmem>>, vector<4x256xf32>,
    %c0_99 = arith.constant 0 : index
    %c0_100 = arith.constant 0 : index
    %c9_101 = arith.constant 9 : index
    %c2_102 = arith.constant 2 : index
    %83 = vector.load %arg1[%c0_99, %c0_100, %c9_101, %c2_102] : memref<1x4x34x34xf32, #tpu.memory_space<vmem>>, vector<1x4x16x16xf32>
    %84 = vector.shape_cast %83 : vector<1x4x16x16xf32> to vector<4x16x16xf32>
    %85 = vector.shape_cast %84 : vector<4x16x16xf32> to vector<4x256xf32>
    %c84 = arith.constant 84 : index
    %c0_103 = arith.constant 0 : index
    %86 = vector.load %arg5[%c84, %c0_103] : memref<144x256xf32, #tpu.memory_space<vmem>>, vector<4x256xf32>
    tpu.vector_store %arg5[%c84, %c0_103], %85 {strides = array<i32>} : memref<144x256xf32, #tpu.memory_space<vmem>>, vector<4x256xf32>,
    %c0_104 = arith.constant 0 : index
    %c0_105 = arith.constant 0 : index
    %c9_106 = arith.constant 9 : index
    %c16_107 = arith.constant 16 : index
    %87 = vector.load %arg1[%c0_104, %c0_105, %c9_106, %c16_107] : memref<1x4x34x34xf32, #tpu.memory_space<vmem>>, vector<1x4x16x16xf32>
    %88 = vector.shape_cast %87 : vector<1x4x16x16xf32> to vector<4x16x16xf32>
    %89 = vector.shape_cast %88 : vector<4x16x16xf32> to vector<4x256xf32>
    %c92 = arith.constant 92 : index
    %c0_108 = arith.constant 0 : index
    %90 = vector.load %arg5[%c92, %c0_108] : memref<144x256xf32, #tpu.memory_space<vmem>>, vector<4x256xf32>
    tpu.vector_store %arg5[%c92, %c0_108], %89 {strides = array<i32>} : memref<144x256xf32, #tpu.memory_space<vmem>>, vector<4x256xf32>,
    %c0_109 = arith.constant 0 : index
    %c0_110 = arith.constant 0 : index
    %c16_111 = arith.constant 16 : index
    %c2_112 = arith.constant 2 : index
    %91 = vector.load %arg1[%c0_109, %c0_110, %c16_111, %c2_112] : memref<1x4x34x34xf32, #tpu.memory_space<vmem>>, vector<1x4x16x16xf32>
    %92 = vector.shape_cast %91 : vector<1x4x16x16xf32> to vector<4x16x16xf32>
    %93 = vector.shape_cast %92 : vector<4x16x16xf32> to vector<4x256xf32>
    %c96 = arith.constant 96 : index
    %c0_113 = arith.constant 0 : index
    %94 = vector.load %arg5[%c96, %c0_113] : memref<144x256xf32, #tpu.memory_space<vmem>>, vector<4x256xf32>
    tpu.vector_store %arg5[%c96, %c0_113], %93 {strides = array<i32>} : memref<144x256xf32, #tpu.memory_space<vmem>>, vector<4x256xf32>,
    %c0_114 = arith.constant 0 : index
    %c0_115 = arith.constant 0 : index
    %c16_116 = arith.constant 16 : index
    %c9_117 = arith.constant 9 : index
    %95 = vector.load %arg1[%c0_114, %c0_115, %c16_116, %c9_117] : memref<1x4x34x34xf32, #tpu.memory_space<vmem>>, vector<1x4x16x16xf32>
    %96 = vector.shape_cast %95 : vector<1x4x16x16xf32> to vector<4x16x16xf32>
    %97 = vector.shape_cast %96 : vector<4x16x16xf32> to vector<4x256xf32>
    %c100 = arith.constant 100 : index
    %c0_118 = arith.constant 0 : index
    %98 = vector.load %arg5[%c100, %c0_118] : memref<144x256xf32, #tpu.memory_space<vmem>>, vector<4x256xf32>
    tpu.vector_store %arg5[%c100, %c0_118], %97 {strides = array<i32>} : memref<144x256xf32, #tpu.memory_space<vmem>>, vector<4x256xf32>,
    %c0_119 = arith.constant 0 : index
    %c0_120 = arith.constant 0 : index
    %c16_121 = arith.constant 16 : index
    %c16_122 = arith.constant 16 : index
    %99 = vector.load %arg1[%c0_119, %c0_120, %c16_121, %c16_122] : memref<1x4x34x34xf32, #tpu.memory_space<vmem>>, vector<1x4x16x16xf32>
    %100 = vector.shape_cast %99 : vector<1x4x16x16xf32> to vector<4x16x16xf32>
    %101 = vector.shape_cast %100 : vector<4x16x16xf32> to vector<4x256xf32>
    %c104 = arith.constant 104 : index
    %c0_123 = arith.constant 0 : index
    %102 = vector.load %arg5[%c104, %c0_123] : memref<144x256xf32, #tpu.memory_space<vmem>>, vector<4x256xf32>
    tpu.vector_store %arg5[%c104, %c0_123], %101 {strides = array<i32>} : memref<144x256xf32, #tpu.memory_space<vmem>>, vector<4x256xf32>,
    %c0_124 = arith.constant 0 : index
    %c0_125 = arith.constant 0 : index
    %c0_126 = arith.constant 0 : index
    %c0_127 = arith.constant 0 : index
    %103 = vector.load %arg1[%c0_124, %c0_125, %c0_126, %c0_127] : memref<1x4x34x34xf32, #tpu.memory_space<vmem>>, vector<1x4x16x16xf32>
    %104 = vector.shape_cast %103 : vector<1x4x16x16xf32> to vector<4x16x16xf32>
    %105 = vector.shape_cast %104 : vector<4x16x16xf32> to vector<4x256xf32>
    %c108 = arith.constant 108 : index
    %c0_128 = arith.constant 0 : index
    %106 = vector.load %arg5[%c108, %c0_128] : memref<144x256xf32, #tpu.memory_space<vmem>>, vector<4x256xf32>
    tpu.vector_store %arg5[%c108, %c0_128], %105 {strides = array<i32>} : memref<144x256xf32, #tpu.memory_space<vmem>>, vector<4x256xf32>,
    %c0_129 = arith.constant 0 : index
    %c0_130 = arith.constant 0 : index
    %c0_131 = arith.constant 0 : index
    %c9_132 = arith.constant 9 : index
    %107 = vector.load %arg1[%c0_129, %c0_130, %c0_131, %c9_132] : memref<1x4x34x34xf32, #tpu.memory_space<vmem>>, vector<1x4x16x16xf32>
    %108 = vector.shape_cast %107 : vector<1x4x16x16xf32> to vector<4x16x16xf32>
    %109 = vector.shape_cast %108 : vector<4x16x16xf32> to vector<4x256xf32>
    %c112 = arith.constant 112 : index
    %c0_133 = arith.constant 0 : index
    %110 = vector.load %arg5[%c112, %c0_133] : memref<144x256xf32, #tpu.memory_space<vmem>>, vector<4x256xf32>
    tpu.vector_store %arg5[%c112, %c0_133], %109 {strides = array<i32>} : memref<144x256xf32, #tpu.memory_space<vmem>>, vector<4x256xf32>,
    %c0_134 = arith.constant 0 : index
    %c0_135 = arith.constant 0 : index
    %c0_136 = arith.constant 0 : index
    %c18 = arith.constant 18 : index
    %111 = vector.load %arg1[%c0_134, %c0_135, %c0_136, %c18] : memref<1x4x34x34xf32, #tpu.memory_space<vmem>>, vector<1x4x16x16xf32>
    %112 = vector.shape_cast %111 : vector<1x4x16x16xf32> to vector<4x16x16xf32>
    %113 = vector.shape_cast %112 : vector<4x16x16xf32> to vector<4x256xf32>
    %c116 = arith.constant 116 : index
    %c0_137 = arith.constant 0 : index
    %114 = vector.load %arg5[%c116, %c0_137] : memref<144x256xf32, #tpu.memory_space<vmem>>, vector<4x256xf32>
    tpu.vector_store %arg5[%c116, %c0_137], %113 {strides = array<i32>} : memref<144x256xf32, #tpu.memory_space<vmem>>, vector<4x256xf32>,
    %c0_138 = arith.constant 0 : index
    %c0_139 = arith.constant 0 : index
    %c9_140 = arith.constant 9 : index
    %c0_141 = arith.constant 0 : index
    %115 = vector.load %arg1[%c0_138, %c0_139, %c9_140, %c0_141] : memref<1x4x34x34xf32, #tpu.memory_space<vmem>>, vector<1x4x16x16xf32>
    %116 = vector.shape_cast %115 : vector<1x4x16x16xf32> to vector<4x16x16xf32>
    %117 = vector.shape_cast %116 : vector<4x16x16xf32> to vector<4x256xf32>
    %c120 = arith.constant 120 : index
    %c0_142 = arith.constant 0 : index
    %118 = vector.load %arg5[%c120, %c0_142] : memref<144x256xf32, #tpu.memory_space<vmem>>, vector<4x256xf32>
    tpu.vector_store %arg5[%c120, %c0_142], %117 {strides = array<i32>} : memref<144x256xf32, #tpu.memory_space<vmem>>, vector<4x256xf32>,
    %c0_143 = arith.constant 0 : index
    %c0_144 = arith.constant 0 : index
    %c9_145 = arith.constant 9 : index
    %c18_146 = arith.constant 18 : index
    %119 = vector.load %arg1[%c0_143, %c0_144, %c9_145, %c18_146] : memref<1x4x34x34xf32, #tpu.memory_space<vmem>>, vector<1x4x16x16xf32>
    %120 = vector.shape_cast %119 : vector<1x4x16x16xf32> to vector<4x16x16xf32>
    %121 = vector.shape_cast %120 : vector<4x16x16xf32> to vector<4x256xf32>
    %c128 = arith.constant 128 : index
    %c0_147 = arith.constant 0 : index
    %122 = vector.load %arg5[%c128, %c0_147] : memref<144x256xf32, #tpu.memory_space<vmem>>, vector<4x256xf32>
    tpu.vector_store %arg5[%c128, %c0_147], %121 {strides = array<i32>} : memref<144x256xf32, #tpu.memory_space<vmem>>, vector<4x256xf32>,
    %c0_148 = arith.constant 0 : index
    %c0_149 = arith.constant 0 : index
    %c18_150 = arith.constant 18 : index
    %c0_151 = arith.constant 0 : index
    %123 = vector.load %arg1[%c0_148, %c0_149, %c18_150, %c0_151] : memref<1x4x34x34xf32, #tpu.memory_space<vmem>>, vector<1x4x16x16xf32>
    %124 = vector.shape_cast %123 : vector<1x4x16x16xf32> to vector<4x16x16xf32>
    %125 = vector.shape_cast %124 : vector<4x16x16xf32> to vector<4x256xf32>
    %c132 = arith.constant 132 : index
    %c0_152 = arith.constant 0 : index
    %126 = vector.load %arg5[%c132, %c0_152] : memref<144x256xf32, #tpu.memory_space<vmem>>, vector<4x256xf32>
    tpu.vector_store %arg5[%c132, %c0_152], %125 {strides = array<i32>} : memref<144x256xf32, #tpu.memory_space<vmem>>, vector<4x256xf32>,
    %c0_153 = arith.constant 0 : index
    %c0_154 = arith.constant 0 : index
    %c18_155 = arith.constant 18 : index
    %c9_156 = arith.constant 9 : index
    %127 = vector.load %arg1[%c0_153, %c0_154, %c18_155, %c9_156] : memref<1x4x34x34xf32, #tpu.memory_space<vmem>>, vector<1x4x16x16xf32>
    %128 = vector.shape_cast %127 : vector<1x4x16x16xf32> to vector<4x16x16xf32>
    %129 = vector.shape_cast %128 : vector<4x16x16xf32> to vector<4x256xf32>
    %c136 = arith.constant 136 : index
    %c0_157 = arith.constant 0 : index
    %130 = vector.load %arg5[%c136, %c0_157] : memref<144x256xf32, #tpu.memory_space<vmem>>, vector<4x256xf32>
    tpu.vector_store %arg5[%c136, %c0_157], %129 {strides = array<i32>} : memref<144x256xf32, #tpu.memory_space<vmem>>, vector<4x256xf32>,
    %c0_158 = arith.constant 0 : index
    %c0_159 = arith.constant 0 : index
    %c18_160 = arith.constant 18 : index
    %c18_161 = arith.constant 18 : index
    %131 = vector.load %arg1[%c0_158, %c0_159, %c18_160, %c18_161] : memref<1x4x34x34xf32, #tpu.memory_space<vmem>>, vector<1x4x16x16xf32>
    %132 = vector.shape_cast %131 : vector<1x4x16x16xf32> to vector<4x16x16xf32>
    %133 = vector.shape_cast %132 : vector<4x16x16xf32> to vector<4x256xf32>
    %c140 = arith.constant 140 : index
    %c0_162 = arith.constant 0 : index
    %134 = vector.load %arg5[%c140, %c0_162] : memref<144x256xf32, #tpu.memory_space<vmem>>, vector<4x256xf32>
    tpu.vector_store %arg5[%c140, %c0_162], %133 {strides = array<i32>} : memref<144x256xf32, #tpu.memory_space<vmem>>, vector<4x256xf32>,
    %c0_163 = arith.constant 0 : index
    %c0_164 = arith.constant 0 : index
    %135 = vector.load %arg2[%c0_163, %c0_164] : memref<8x144xf32, #tpu.memory_space<vmem>>, vector<8x144xf32>
    %c0_165 = arith.constant 0 : index
    %c0_166 = arith.constant 0 : index
    %136 = vector.load %arg5[%c0_165, %c0_166] : memref<144x256xf32, #tpu.memory_space<vmem>>, vector<144x256xf32>
    %cst = arith.constant dense<0.000000e+00> : vector<8x256xf32>
    %137 = tpu.matmul %135, %136, %cst {dimension_numbers = #tpu.dot_dimension_numbers<[1], [0], [0], [1], [0, 0, 1, 1], [], []>} : vector<8x144xf32>, vector<144x256xf32>, vector<8x256xf32> -> vector<8x256xf32>
    %138 = vector.shape_cast %137 : vector<8x256xf32> to vector<8x128x2xf32>
    %139 = vector.extract_strided_slice %138 {offsets = [0, 0, 0], sizes = [8, 128, 1], strides = [1, 1, 1]} : vector<8x128x2xf32> to vector<8x128x1xf32>
    %140 = vector.shape_cast %139 : vector<8x128x1xf32> to vector<8x128xf32>
    %141 = vector.extract_strided_slice %138 {offsets = [0, 0, 1], sizes = [8, 128, 1], strides = [1, 1, 1]} : vector<8x128x2xf32> to vector<8x128x1xf32>
    %142 = vector.shape_cast %141 : vector<8x128x1xf32> to vector<8x128xf32>
    %143 = arith.addf %140, %142 : vector<8x128xf32>
    %144 = vector.shape_cast %143 : vector<8x128xf32> to vector<8x8x2x8xf32>
    %145 = vector.extract_strided_slice %144 {offsets = [0, 0, 0, 0], sizes = [8, 8, 1, 8], strides = [1, 1, 1, 1]} : vector<8x8x2x8xf32> to vector<8x8x1x8xf32>
    %146 = vector.shape_cast %145 : vector<8x8x1x8xf32> to vector<8x8x8xf32>
    %147 = vector.extract_strided_slice %144 {offsets = [0, 0, 1, 0], sizes = [8, 8, 1, 8], strides = [1, 1, 1, 1]} : vector<8x8x2x8xf32> to vector<8x8x1x8xf32>
    %148 = vector.shape_cast %147 : vector<8x8x1x8xf32> to vector<8x8x8xf32>
    %149 = arith.addf %146, %148 : vector<8x8x8xf32>
    %cst_167 = arith.constant 2.500000e-01 : f32
    %150 = vector.broadcast %cst_167 : f32 to vector<8x8x8xf32>
    %151 = arith.mulf %149, %150 : vector<8x8x8xf32>
    %152 = vector.shape_cast %151 : vector<8x8x8xf32> to vector<8x64xf32>
    %c0_168 = arith.constant 0 : index
    %c0_169 = arith.constant 0 : index
    %153 = vector.load %arg3[%c0_168, %c0_169] : memref<8x1xf32, #tpu.memory_space<vmem>>, vector<8x1xf32>
    %154 = vector.broadcast %153 : vector<8x1xf32> to vector<8x64xf32>
    %155 = arith.addf %152, %154 : vector<8x64xf32>
    %c0_170 = arith.constant 0 : index
    %c0_171 = arith.constant 0 : index
    %c0_172 = arith.constant 0 : index
    %156 = vector.load %arg4[%c0_170, %c0_171, %c0_172] : memref<1x8x64xf32, #tpu.memory_space<vmem>>, vector<1x8x64xf32>
    %157 = vector.shape_cast %156 : vector<1x8x64xf32> to vector<8x64xf32>
    %158 = vector.shape_cast %155 : vector<8x64xf32> to vector<1x8x64xf32>
    tpu.vector_store %arg4[%c0_170, %c0_171, %c0_172], %158 {strides = array<i32>} : memref<1x8x64xf32, #tpu.memory_space<vmem>>, vector<1x8x64xf32>,
    return
  }
  func.func @transform_0(%arg0: i32) -> (i32, i32, i32, i32) {
    %c0_i32 = arith.constant 0 : i32
    %c0_i32_0 = arith.constant 0 : i32
    %c0_i32_1 = arith.constant 0 : i32
    %c0_i32_2 = arith.constant 0 : i32
    return %arg0, %c0_i32, %c0_i32_0, %c0_i32_1 : i32, i32, i32, i32
  }
  func.func @transform_1(%arg0: i32) -> (i32, i32) {
    %c0_i32 = arith.constant 0 : i32
    %c0_i32_0 = arith.constant 0 : i32
    %c0_i32_1 = arith.constant 0 : i32
    return %c0_i32, %c0_i32_0 : i32, i32
  }
  func.func @transform_2(%arg0: i32) -> (i32, i32) {
    %c0_i32 = arith.constant 0 : i32
    %c0_i32_0 = arith.constant 0 : i32
    %c0_i32_1 = arith.constant 0 : i32
    return %c0_i32, %c0_i32_0 : i32, i32
  }
  func.func @transform_3(%arg0: i32) -> (i32, i32, i32) {
    %c0_i32 = arith.constant 0 : i32
    %c0_i32_0 = arith.constant 0 : i32
    %c0_i32_1 = arith.constant 0 : i32
    return %arg0, %c0_i32, %c0_i32_0 : i32, i32, i32
  }
}

</mosaic_0001>

<llo_original>
// kernel: multiscale.1
$region0: #{multiscale.1}
  #allocation0 [shape = 'u32[]', space=smem, size = 0x4, offset = 0x4, fixed_abs, tag = 'smem constant byte address 0x4 - core index']
  #allocation1 [shape = 'u32[144,128]{1,0:T(1,128)}', space=vmem, size = 0x12000, scoped, tag = 'internal scratch']
  #allocation2 [shape = 'f32[144,256]{1,0:T(8,128)}', space=vmem, size = 0x24000, scoped, tag = 'scratch operand']
  %s0 = inlined_call_operand.vmem [shape: f32[2,4,34,34], index: 0, kind: input, shape index: {}]
  %s1 = inlined_call_operand.vmem [shape: f32[8,144], index: 1, kind: input, shape index: {}]
  %s2 = inlined_call_operand.vmem [shape: f32[8,1], index: 2, kind: input, shape index: {}]
  %s3 = inlined_call_operand.vmem [shape: f32[2,8,64], index: 3, kind: output, shape index: {}]
  %s4 = sld [smem:[#allocation0]]
  $region45: #{multiscale.1} parent=0
    _
  %s6 = ssub.s32 1, %s4
  %s7 = scalar_select 0, %s6, %s4
  loop: start=0, step=1, limit=4
  $region2: #{multiscale.1} parent=0 // loop_pre_header
    _
  $region3: #{multiscale.1} parent=0 // loop_header
    %s9 = sphi 0, %s13
    %p10 = scmp.ge.s32.totalorder %s9, 4
    %s19 = sphi 0, %s21
    %s22 = sphi 0, %s19
    %s23 = sphi 0, %s22
    %s39 = sphi 0, %s23
    %s43 = sphi 0, %s43
    %s45 = sphi 0, %s43
    %s46 = sphi 0, %s45
    %s60 = sphi 0, %s46
    %s64 = sphi 0, %s64
    %s66 = sphi 0, %s64
    %s67 = sphi 0, %s66
    %s81 = sphi 0, %s67
    %s87 = sphi 0, %s89
    %s90 = sphi 0, %s87
    %s91 = sphi 0, %s90
    %s107 = sphi 0, %s91
  $region4: #{multiscale.1} parent=0 // loop_header_branch
    %12 = sbr.rel (%p10) target = $region8
  $region5: #{multiscale.1} parent=0 // loop_body
    %s14 = ssub.s32 %s9, 1
    %s15 = ssub.s32 %s9, 2
    %s16 = sadd.s32 %s9, 1
    %s17 = ssub.s32 %s9, %s16
    %p18 = scmp.eq.s32.totalorder %s17, 0
    %s20 = sadd.s32 %s19, 1
    %s21 = scalar_select %p18, %s19, %s20
    %p24 = pneg %p18
    %p25 = scmp.eq.s32.totalorder %s9, 1
    %p26 = por %p24, %p25
    %p27 = scmp.ne.s32.totalorder %s19, %s22
    %p28 = scmp.eq.s32.totalorder %s9, 0
    %p29 = por %p27, %p28
    %p30 = scmp.ne.s32.totalorder %s19, %s22
    %p31 = scmp.eq.s32.totalorder %s14, 1
    %p32 = por %p30, %p31
    %p33 = scmp.ne.s32.totalorder %s22, %s23
    %p34 = scmp.eq.s32.totalorder %s14, 0
    %p35 = por %p33, %p34
    %p36 = scmp.ne.s32.totalorder %s22, %s23
    %p37 = scmp.eq.s32.totalorder %s15, 1
    %p38 = por %p36, %p37
    %p40 = scmp.ne.s32.totalorder %s23, %s39
    %p41 = scmp.eq.s32.totalorder %s15, 0
    %p42 = por %p40, %p41
    %s44 = sadd.s32 %s43, 1
    %p47 = scmp.eq.s32.totalorder %s9, 1
    %p48 = scmp.ne.s32.totalorder %s43, %s45
    %p49 = scmp.eq.s32.totalorder %s9, 0
    %p50 = por %p48, %p49
    %p51 = scmp.ne.s32.totalorder %s43, %s45
    %p52 = scmp.eq.s32.totalorder %s14, 1
    %p53 = por %p51, %p52
    %p54 = scmp.ne.s32.totalorder %s45, %s46
    %p55 = scmp.eq.s32.totalorder %s14, 0
    %p56 = por %p54, %p55
    %p57 = scmp.ne.s32.totalorder %s45, %s46
    %p58 = scmp.eq.s32.totalorder %s15, 1
    %p59 = por %p57, %p58
    %p61 = scmp.ne.s32.totalorder %s46, %s60
    %p62 = scmp.eq.s32.totalorder %s15, 0
    %p63 = por %p61, %p62
    %s65 = sadd.s32 %s64, 1
    %p68 = scmp.eq.s32.totalorder %s9, 1
    %p69 = scmp.ne.s32.totalorder %s64, %s66
    %p70 = scmp.eq.s32.totalorder %s9, 0
    %p71 = por %p69, %p70
    %p72 = scmp.ne.s32.totalorder %s64, %s66
    %p73 = scmp.eq.s32.totalorder %s14, 1
    %p74 = por %p72, %p73
    %p75 = scmp.ne.s32.totalorder %s66, %s67
    %p76 = scmp.eq.s32.totalorder %s14, 0
    %p77 = por %p75, %p76
    %p78 = scmp.ne.s32.totalorder %s66, %s67
    %p79 = scmp.eq.s32.totalorder %s15, 1
    %p80 = por %p78, %p79
    %p82 = scmp.ne.s32.totalorder %s67, %s81
    %p83 = scmp.eq.s32.totalorder %s15, 0
    %p84 = por %p82, %p83
    %s85 = ssub.s32 %s9, %s16
    %p86 = scmp.eq.s32.totalorder %s85, 0
    %s88 = sadd.s32 %s87, 1
    %s89 = scalar_select %p86, %s87, %s88
    %p92 = pneg %p86
    %p93 = scmp.eq.s32.totalorder %s9, 1
    %p94 = por %p92, %p93
    %p95 = scmp.ne.s32.totalorder %s87, %s90
    %p96 = scmp.eq.s32.totalorder %s9, 0
    %p97 = por %p95, %p96
    %p98 = scmp.ne.s32.totalorder %s87, %s90
    %p99 = scmp.eq.s32.totalorder %s14, 1
    %p100 = por %p98, %p99
    %p101 = scmp.ne.s32.totalorder %s90, %s91
    %p102 = scmp.eq.s32.totalorder %s14, 0
    %p103 = por %p101, %p102
    %p104 = scmp.ne.s32.totalorder %s90, %s91
    %p105 = scmp.eq.s32.totalorder %s15, 1
    %p106 = por %p104, %p105
    %p108 = scmp.ne.s32.totalorder %s91, %s107
    %p109 = scmp.eq.s32.totalorder %s15, 0
    %p110 = por %p108, %p109
    %p111 = scmp.le.s32.totalorder 1, %s9
    %p112 = scmp.lt.s32.totalorder %s9, 3
    %p113 = pnand %p111, %p112
    %p114 = pneg %p113
    // Predicated region
    $region9: #{multiscale.1} parent=5 // pred_check
      _
    $region10: #{multiscale.1} parent=5 // pred_check_branch
      %116 = sbr.rel (%p113) target = $region12
    $region11: #{multiscale.1} parent=5 // pred_region
      %s117 = ssub.s32 %s9, 1
      // Predicated region
      $region13: #{multiscale.1} parent=11 // pred_check
        %p118 = pneg %p56
      $region14: #{multiscale.1} parent=11 // pred_check_branch
        %120 = sbr.rel (%p118) target = $region16
      $region15: #{multiscale.1} parent=11 // pred_region
        _
      $region16: #{multiscale.1} parent=11 // pred_fallthru
        _
      // Predicated region
      $region17: #{multiscale.1} parent=11 // pred_check
        %p121 = pneg %p77
      $region18: #{multiscale.1} parent=11 // pred_check_branch
        %123 = sbr.rel (%p121) target = $region20
      $region19: #{multiscale.1} parent=11 // pred_region
        _
      $region20: #{multiscale.1} parent=11 // pred_fallthru
        _
    $region12: #{multiscale.1} parent=5 // pred_fallthru
      _
    %p124 = scmp.lt.s32.totalorder %s9, 2
    // Predicated region
    $region21: #{multiscale.1} parent=5 // pred_check
      %p125 = pneg %p124
    $region22: #{multiscale.1} parent=5 // pred_check_branch
      %127 = sbr.rel (%p125) target = $region24
    $region23: #{multiscale.1} parent=5 // pred_region
      // Predicated region
      $region25: #{multiscale.1} parent=23 // pred_check
        %p128 = pneg %p29
      $region26: #{multiscale.1} parent=23 // pred_check_branch
        %130 = sbr.rel (%p128) target = $region28
      $region27: #{multiscale.1} parent=23 // pred_region
        %p131 = scmp.lt.s32.totalorder %s9, 1
        %s132 = scalar_select %p131, %s9, 1
        %s133 = smul.addr %s132, 20
        %s134 = smul.addr %s133, 8
        %s135 = scalar_lea.vmem %s0, %s134
      $region28: #{multiscale.1} parent=23 // pred_fallthru
        _
    $region24: #{multiscale.1} parent=5 // pred_fallthru
      _
    %p136 = scmp.le.s32.totalorder 1, %s9
    %p137 = scmp.lt.s32.totalorder %s9, 3
    %p138 = pnand %p136, %p137
    %p139 = pneg %p138
    // Predicated region
    $region29: #{multiscale.1} parent=5 // pred_check
      _
    $region30: #{multiscale.1} parent=5 // pred_check_branch
      %141 = sbr.rel (%p138) target = $region32
    $region31: #{multiscale.1} parent=5 // pred_region
      %s142 = ssub.s32 %s9, 1
      %p143 = scmp.lt.s32.totalorder %s14, 1
      %s144 = scalar_select %p143, %s14, 1
      %s145 = smul.addr %s144, 20
      %s146 = smul.addr %s145, 8
      %s147 = scalar_lea.vmem %s0, %s146
      %p148 = pneg %p35
      %p149 = pneg %p32
      %p150 = pneg %p56
      %p151 = pneg %p53
      %p152 = pneg %p77
      %p153 = pneg %p74
      %p154 = pneg %p103
      %p155 = pneg %p100
      %p156 = scmp.lt.s32.totalorder %s14, 1
      %s157 = scalar_select %p156, %s14, 1
      %s158 = smul.addr %s157, 8
      %s159 = scalar_lea.vmem %s3, %s158
      %p160 = scmp.lt.s32.totalorder %s14, 1
      %s161 = scalar_select %p160, %s14, 1
      %s162 = smul.addr %s161, 20
      %s163 = smul.addr %s162, 8
      %s164 = scalar_lea.vmem %s0, %s163
      %p165 = scmp.lt.s32.totalorder %s14, 1
      %s166 = scalar_select %p165, %s14, 1
      %s167 = smul.addr %s166, 8
      %s168 = scalar_lea.vmem %s3, %s167
      %v169 = vld [vmem:[%s164 + $0x9] sm:$0xff]
      %v170 = vld [vmem:[%s164 + $0x11] sm:$0xff]
      %v171 = vld [vmem:[%s164 + $0x31] sm:$0xff]
      %v172 = vld [vmem:[%s164 + $0x39] sm:$0xff]
      %v173 = vld [vmem:[%s164 + $0x59] sm:$0xff]
      %v174 = vld [vmem:[%s164 + $0x61] sm:$0xff]
      %v175 = vld [vmem:[%s164 + $0x81] sm:$0xff]
      %v176 = vld [vmem:[%s164 + $0x89] sm:$0xff]
      %185 = vrot.lane.b32.xlu0 %v169, 119
      %v186 = vpop.permute.xlu0 %185
      %187 = vrot.lane.b32.xlu0 %v170, 119
      %v188 = vpop.permute.xlu0 %187
      %189 = vrot.lane.b32.xlu0 %v171, 119
      %v190 = vpop.permute.xlu0 %189
      %191 = vrot.lane.b32.xlu0 %v172, 119
      %v192 = vpop.permute.xlu0 %191
      %193 = vrot.lane.b32.xlu0 %v173, 119
      %v194 = vpop.permute.xlu0 %193
      %195 = vrot.lane.b32.xlu0 %v174, 119
      %v196 = vpop.permute.xlu0 %195
      %197 = vrot.lane.b32.xlu0 %v175, 119
      %v198 = vpop.permute.xlu0 %197
      %199 = vrot.lane.b32.xlu0 %v176, 119
      %v200 = vpop.permute.xlu0 %199
      %v209 = vcombine.low %v186, %v194
      %v210 = vcombine.high %v186, %v194
      %v212 = vunpack.c.l.s4 1983009808
      %v213 = vunpack.c.0.s8 %v212
      %v214 = vlaneseq
      %v215 = vshrl.u32 %v214, 7
      %v216 = vsub.s32 %v213, %v215
      %v217 = vrot.slane %v209, %v216
      %v219 = vunpack.c.l.s4 1983009808
      %v220 = vunpack.c.0.s8 %v219
      %v221 = vlaneseq
      %v222 = vshrl.u32 %v221, 7
      %v223 = vsub.s32 %v220, %v222
      %v224 = vrot.slane %v210, %v223
      %v225 = vcombine.low %v190, %v198
      %v226 = vcombine.high %v190, %v198
      %v228 = vunpack.c.l.s4 1983009808
      %v229 = vunpack.c.0.s8 %v228
      %v230 = vlaneseq
      %v231 = vshrl.u32 %v230, 7
      %v232 = vsub.s32 %v229, %v231
      %v233 = vrot.slane %v225, %v232
      %v235 = vunpack.c.l.s4 1983009808
      %v236 = vunpack.c.0.s8 %v235
      %v237 = vlaneseq
      %v238 = vshrl.u32 %v237, 7
      %v239 = vsub.s32 %v236, %v238
      %v240 = vrot.slane %v226, %v239
      %v241 = vcombine.low %v217, %v233
      %v242 = vcombine.high %v217, %v233
      %v244 = vunpack.c.l.s4 1934713408
      %v245 = vunpack.c.0.s8 %v244
      %v246 = vlaneseq
      %v247 = vshrl.u32 %v246, 7
      %v248 = vsub.s32 %v245, %v247
      %v249 = vrot.slane %v241, %v248
      %v251 = vunpack.c.l.s4 1934713408
      %v252 = vunpack.c.0.s8 %v251
      %v253 = vlaneseq
      %v254 = vshrl.u32 %v253, 7
      %v255 = vsub.s32 %v252, %v254
      %v256 = vrot.slane %v242, %v255
      %v257 = vcombine.low %v224, %v240
      %v258 = vcombine.high %v224, %v240
      %v260 = vunpack.c.l.s4 1934713408
      %v261 = vunpack.c.0.s8 %v260
      %v262 = vlaneseq
      %v263 = vshrl.u32 %v262, 7
      %v264 = vsub.s32 %v261, %v263
      %v265 = vrot.slane %v257, %v264
      %v267 = vunpack.c.l.s4 1934713408
      %v268 = vunpack.c.0.s8 %v267
      %v269 = vlaneseq
      %v270 = vshrl.u32 %v269, 7
      %v271 = vsub.s32 %v268, %v270
      %v272 = vrot.slane %v258, %v271
      %v273 = vcombine.high %v249, 0.0
      %v274 = vcombine.high %v256, 0.0
      %v275 = vcombine.high %v265, 0.0
      %v276 = vcombine.high %v272, 0.0
      %v277 = vcombine.low %v188, %v196
      %v278 = vcombine.high %v188, %v196
      %v280 = vunpack.c.l.s4 1983009808
      %v281 = vunpack.c.0.s8 %v280
      %v282 = vlaneseq
      %v283 = vshrl.u32 %v282, 7
      %v284 = vsub.s32 %v281, %v283
      %v285 = vrot.slane %v277, %v284
      %v287 = vunpack.c.l.s4 1983009808
      %v288 = vunpack.c.0.s8 %v287
      %v289 = vlaneseq
      %v290 = vshrl.u32 %v289, 7
      %v291 = vsub.s32 %v288, %v290
      %v292 = vrot.slane %v278, %v291
      %v293 = vcombine.low %v192, %v200
      %v294 = vcombine.high %v192, %v200
      %v296 = vunpack.c.l.s4 1983009808
      %v297 = vunpack.c.0.s8 %v296
      %v298 = vlaneseq
      %v299 = vshrl.u32 %v298, 7
      %v300 = vsub.s32 %v297, %v299
      %v301 = vrot.slane %v293, %v300
      %v303 = vunpack.c.l.s4 1983009808
      %v304 = vunpack.c.0.s8 %v303
      %v305 = vlaneseq
      %v306 = vshrl.u32 %v305, 7
      %v307 = vsub.s32 %v304, %v306
      %v308 = vrot.slane %v294, %v307
      %v309 = vcombine.low %v285, %v301
      %v310 = vcombine.high %v285, %v301
      %v312 = vunpack.c.l.s4 1934713408
      %v313 = vunpack.c.0.s8 %v312
      %v314 = vlaneseq
      %v315 = vshrl.u32 %v314, 7
      %v316 = vsub.s32 %v313, %v315
      %v317 = vrot.slane %v309, %v316
      %v319 = vunpack.c.l.s4 1934713408
      %v320 = vunpack.c.0.s8 %v319
      %v321 = vlaneseq
      %v322 = vshrl.u32 %v321, 7
      %v323 = vsub.s32 %v320, %v322
      %v324 = vrot.slane %v310, %v323
      %v325 = vcombine.low %v292, %v308
      %v326 = vcombine.high %v292, %v308
      %v328 = vunpack.c.l.s4 1934713408
      %v329 = vunpack.c.0.s8 %v328
      %v330 = vlaneseq
      %v331 = vshrl.u32 %v330, 7
      %v332 = vsub.s32 %v329, %v331
      %v333 = vrot.slane %v325, %v332
      %v335 = vunpack.c.l.s4 1934713408
      %v336 = vunpack.c.0.s8 %v335
      %v337 = vlaneseq
      %v338 = vshrl.u32 %v337, 7
      %v339 = vsub.s32 %v336, %v338
      %v340 = vrot.slane %v326, %v339
      %v341 = vcombine.high %v317, 0.0
      %v342 = vcombine.high %v324, 0.0
      %v343 = vcombine.high %v333, 0.0
      %v344 = vcombine.high %v340, 0.0
      %346 = vrot.lane.b32.xlu0 %v273, 16
      %v347 = vpop.permute.xlu0 %346
      %350 = vrot.lane.b32.xlu0 %v256, 32
      %v351 = vpop.permute.xlu0 %350
      %354 = vrot.lane.b32.xlu0 %v274, 48
      %v355 = vpop.permute.xlu0 %354
      %358 = vrot.lane.b32.xlu0 %v265, 64
      %v359 = vpop.permute.xlu0 %358
      %362 = vrot.lane.b32.xlu0 %v275, 80
      %v363 = vpop.permute.xlu0 %362
      %366 = vrot.lane.b32.xlu0 %v272, 96
      %v367 = vpop.permute.xlu0 %366
      %370 = vrot.lane.b32.xlu0 %v276, 112
      %v371 = vpop.permute.xlu0 %370
      %374 = vrot.lane.b32.xlu0 %v341, 16
      %v375 = vpop.permute.xlu0 %374
      %378 = vrot.lane.b32.xlu0 %v324, 32
      %v379 = vpop.permute.xlu0 %378
      %382 = vrot.lane.b32.xlu0 %v342, 48
      %v383 = vpop.permute.xlu0 %382
      %386 = vrot.lane.b32.xlu0 %v333, 64
      %v387 = vpop.permute.xlu0 %386
      %390 = vrot.lane.b32.xlu0 %v343, 80
      %v391 = vpop.permute.xlu0 %390
      %394 = vrot.lane.b32.xlu0 %v340, 96
      %v395 = vpop.permute.xlu0 %394
      %398 = vrot.lane.b32.xlu0 %v344, 112
      %v399 = vpop.permute.xlu0 %398
      %vm401 = vcmask 130048
      %v402 = vsel %vm401, %v249, %v347
      %vm403 = vcmask 261120
      %v404 = vsel %vm403, %v402, %v351
      %vm405 = vcmask 392192
      %v406 = vsel %vm405, %v404, %v355
      %vm407 = vcmask 523264
      %v408 = vsel %vm407, %v406, %v359
      %vm409 = vcmask 654336
      %v410 = vsel %vm409, %v408, %v363
      %vm411 = vcmask 785408
      %v412 = vsel %vm411, %v410, %v367
      %vm413 = vcmask 916480
      %v414 = vsel %vm413, %v412, %v371
      %v415 = vsel %vm401, %v317, %v375
      %v416 = vsel %vm403, %v415, %v379
      %v417 = vsel %vm405, %v416, %v383
      %v418 = vsel %vm407, %v417, %v387
      %v419 = vsel %vm409, %v418, %v391
      %v420 = vsel %vm411, %v419, %v395
      %v421 = vsel %vm413, %v420, %v399
      %422 = vst [vmem:[#allocation2 + $0x20] sm:$0xf] %v414
      %423 = vst [vmem:[#allocation2 + $0x28] sm:$0xf] %v421
      %v426 = vrot.slane %v414, 4
      %v427 = vrot.slane %v421, 4
      %430 = vst [vmem:[#allocation2 + $0x60] sm:$0xf0] %v426
      %431 = vst [vmem:[#allocation2 + $0x68] sm:$0xf0] %v427
      %432 = vst [vmem:[#allocation2 + $0xb0] sm:$0xf] %v414
      %433 = vst [vmem:[#allocation2 + $0xb8] sm:$0xf] %v421
      %434 = vst [vmem:[#allocation2 + $0xf0] sm:$0xf0] %v426
      %435 = vst [vmem:[#allocation2 + $0xf8] sm:$0xf0] %v427
      %v436 = vld [vmem:[%s164 + $0x6] sm:$0xff]
      %v437 = vld [vmem:[%s164 + $0xe] sm:$0xff]
      %v438 = vld [vmem:[%s164 + $0x2e] sm:$0xff]
      %v439 = vld [vmem:[%s164 + $0x36] sm:$0xff]
      %v440 = vld [vmem:[%s164 + $0x56] sm:$0xff]
      %v441 = vld [vmem:[%s164 + $0x5e] sm:$0xff]
      %v442 = vld [vmem:[%s164 + $0x7e] sm:$0xff]
      %v443 = vld [vmem:[%s164 + $0x86] sm:$0xff]
      %452 = vrot.lane.b32.xlu0 %v436, 122
      %v453 = vpop.permute.xlu0 %452
      %454 = vrot.lane.b32.xlu0 %v437, 122
      %v455 = vpop.permute.xlu0 %454
      %456 = vrot.lane.b32.xlu0 %v438, 122
      %v457 = vpop.permute.xlu0 %456
      %458 = vrot.lane.b32.xlu0 %v439, 122
      %v459 = vpop.permute.xlu0 %458
      %460 = vrot.lane.b32.xlu0 %v440, 122
      %v461 = vpop.permute.xlu0 %460
      %462 = vrot.lane.b32.xlu0 %v441, 122
      %v463 = vpop.permute.xlu0 %462
      %464 = vrot.lane.b32.xlu0 %v442, 122
      %v465 = vpop.permute.xlu0 %464
      %466 = vrot.lane.b32.xlu0 %v443, 122
      %v467 = vpop.permute.xlu0 %466
      %v476 = vcombine.low %v453, %v461
      %v477 = vcombine.high %v453, %v461
      %v479 = vunpack.c.l.s4 1983009808
      %v480 = vunpack.c.0.s8 %v479
      %v481 = vlaneseq
      %v482 = vshrl.u32 %v481, 7
      %v483 = vsub.s32 %v480, %v482
      %v484 = vrot.slane %v476, %v483
      %v486 = vunpack.c.l.s4 1983009808
      %v487 = vunpack.c.0.s8 %v486
      %v488 = vlaneseq
      %v489 = vshrl.u32 %v488, 7
      %v490 = vsub.s32 %v487, %v489
      %v491 = vrot.slane %v477, %v490
      %v492 = vcombine.low %v457, %v465
      %v493 = vcombine.high %v457, %v465
      %v495 = vunpack.c.l.s4 1983009808
      %v496 = vunpack.c.0.s8 %v495
      %v497 = vlaneseq
      %v498 = vshrl.u32 %v497, 7
      %v499 = vsub.s32 %v496, %v498
      %v500 = vrot.slane %v492, %v499
      %v502 = vunpack.c.l.s4 1983009808
      %v503 = vunpack.c.0.s8 %v502
      %v504 = vlaneseq
      %v505 = vshrl.u32 %v504, 7
      %v506 = vsub.s32 %v503, %v505
      %v507 = vrot.slane %v493, %v506
      %v508 = vcombine.low %v484, %v500
      %v509 = vcombine.high %v484, %v500
      %v511 = vunpack.c.l.s4 1934713408
      %v512 = vunpack.c.0.s8 %v511
      %v513 = vlaneseq
      %v514 = vshrl.u32 %v513, 7
      %v515 = vsub.s32 %v512, %v514
      %v516 = vrot.slane %v508, %v515
      %v518 = vunpack.c.l.s4 1934713408
      %v519 = vunpack.c.0.s8 %v518
      %v520 = vlaneseq
      %v521 = vshrl.u32 %v520, 7
      %v522 = vsub.s32 %v519, %v521
      %v523 = vrot.slane %v509, %v522
      %v524 = vcombine.low %v491, %v507
      %v525 = vcombine.high %v491, %v507
      %v527 = vunpack.c.l.s4 1934713408
      %v528 = vunpack.c.0.s8 %v527
      %v529 = vlaneseq
      %v530 = vshrl.u32 %v529, 7
      %v531 = vsub.s32 %v528, %v530
      %v532 = vrot.slane %v524, %v531
      %v534 = vunpack.c.l.s4 1934713408
      %v535 = vunpack.c.0.s8 %v534
      %v536 = vlaneseq
      %v537 = vshrl.u32 %v536, 7
      %v538 = vsub.s32 %v535, %v537
      %v539 = vrot.slane %v525, %v538
      %v540 = vcombine.high %v516, 0.0
      %v541 = vcombine.high %v523, 0.0
      %v542 = vcombine.high %v532, 0.0
      %v543 = vcombine.high %v539, 0.0
      %v544 = vcombine.low %v455, %v463
      %v545 = vcombine.high %v455, %v463
      %v547 = vunpack.c.l.s4 1983009808
      %v548 = vunpack.c.0.s8 %v547
      %v549 = vlaneseq
      %v550 = vshrl.u32 %v549, 7
      %v551 = vsub.s32 %v548, %v550
      %v552 = vrot.slane %v544, %v551
      %v554 = vunpack.c.l.s4 1983009808
      %v555 = vunpack.c.0.s8 %v554
      %v556 = vlaneseq
      %v557 = vshrl.u32 %v556, 7
      %v558 = vsub.s32 %v555, %v557
      %v559 = vrot.slane %v545, %v558
      %v560 = vcombine.low %v459, %v467
      %v561 = vcombine.high %v459, %v467
      %v563 = vunpack.c.l.s4 1983009808
      %v564 = vunpack.c.0.s8 %v563
      %v565 = vlaneseq
      %v566 = vshrl.u32 %v565, 7
      %v567 = vsub.s32 %v564, %v566
      %v568 = vrot.slane %v560, %v567
      %v570 = vunpack.c.l.s4 1983009808
      %v571 = vunpack.c.0.s8 %v570
      %v572 = vlaneseq
      %v573 = vshrl.u32 %v572, 7
      %v574 = vsub.s32 %v571, %v573
      %v575 = vrot.slane %v561, %v574
      %v576 = vcombine.low %v552, %v568
      %v577 = vcombine.high %v552, %v568
      %v579 = vunpack.c.l.s4 1934713408
      %v580 = vunpack.c.0.s8 %v579
      %v581 = vlaneseq
      %v582 = vshrl.u32 %v581, 7
      %v583 = vsub.s32 %v580, %v582
      %v584 = vrot.slane %v576, %v583
      %v586 = vunpack.c.l.s4 1934713408
      %v587 = vunpack.c.0.s8 %v586
      %v588 = vlaneseq
      %v589 = vshrl.u32 %v588, 7
      %v590 = vsub.s32 %v587, %v589
      %v591 = vrot.slane %v577, %v590
      %v592 = vcombine.low %v559, %v575
      %v593 = vcombine.high %v559, %v575
      %v595 = vunpack.c.l.s4 1934713408
      %v596 = vunpack.c.0.s8 %v595
      %v597 = vlaneseq
      %v598 = vshrl.u32 %v597, 7
      %v599 = vsub.s32 %v596, %v598
      %v600 = vrot.slane %v592, %v599
      %v602 = vunpack.c.l.s4 1934713408
      %v603 = vunpack.c.0.s8 %v602
      %v604 = vlaneseq
      %v605 = vshrl.u32 %v604, 7
      %v606 = vsub.s32 %v603, %v605
      %v607 = vrot.slane %v593, %v606
      %v608 = vcombine.high %v584, 0.0
      %v609 = vcombine.high %v591, 0.0
      %v610 = vcombine.high %v600, 0.0
      %v611 = vcombine.high %v607, 0.0
      %613 = vrot.lane.b32.xlu0 %v540, 16
      %v614 = vpop.permute.xlu0 %613
      %617 = vrot.lane.b32.xlu0 %v523, 32
      %v618 = vpop.permute.xlu0 %617
      %621 = vrot.lane.b32.xlu0 %v541, 48
      %v622 = vpop.permute.xlu0 %621
      %625 = vrot.lane.b32.xlu0 %v532, 64
      %v626 = vpop.permute.xlu0 %625
      %629 = vrot.lane.b32.xlu0 %v542, 80
      %v630 = vpop.permute.xlu0 %629
      %633 = vrot.lane.b32.xlu0 %v539, 96
      %v634 = vpop.permute.xlu0 %633
      %637 = vrot.lane.b32.xlu0 %v543, 112
      %v638 = vpop.permute.xlu0 %637
      %641 = vrot.lane.b32.xlu0 %v608, 16
      %v642 = vpop.permute.xlu0 %641
      %645 = vrot.lane.b32.xlu0 %v591, 32
      %v646 = vpop.permute.xlu0 %645
      %649 = vrot.lane.b32.xlu0 %v609, 48
      %v650 = vpop.permute.xlu0 %649
      %653 = vrot.lane.b32.xlu0 %v600, 64
      %v654 = vpop.permute.xlu0 %653
      %657 = vrot.lane.b32.xlu0 %v610, 80
      %v658 = vpop.permute.xlu0 %657
      %661 = vrot.lane.b32.xlu0 %v607, 96
      %v662 = vpop.permute.xlu0 %661
      %665 = vrot.lane.b32.xlu0 %v611, 112
      %v666 = vpop.permute.xlu0 %665
      %v668 = vsel %vm401, %v516, %v614
      %v669 = vsel %vm403, %v668, %v618
      %v670 = vsel %vm405, %v669, %v622
      %v671 = vsel %vm407, %v670, %v626
      %v672 = vsel %vm409, %v671, %v630
      %v673 = vsel %vm411, %v672, %v634
      %v674 = vsel %vm413, %v673, %v638
      %v675 = vsel %vm401, %v584, %v642
      %v676 = vsel %vm403, %v675, %v646
      %v677 = vsel %vm405, %v676, %v650
      %v678 = vsel %vm407, %v677, %v654
      %v679 = vsel %vm409, %v678, %v658
      %v680 = vsel %vm411, %v679, %v662
      %v681 = vsel %vm413, %v680, %v666
      %682 = vst [vmem:[#allocation2] sm:$0xf] %v674
      %683 = vst [vmem:[#allocation2 + $0x8] sm:$0xf] %v681
      %v684 = vld [vmem:[%s164 + $0x6] sm:$0xff]
      %v685 = vld [vmem:[%s164 + $0xe] sm:$0xff]
      %v686 = vld [vmem:[%s164 + $0x2e] sm:$0xff]
      %v687 = vld [vmem:[%s164 + $0x36] sm:$0xff]
      %v688 = vld [vmem:[%s164 + $0x56] sm:$0xff]
      %v689 = vld [vmem:[%s164 + $0x5e] sm:$0xff]
      %v690 = vld [vmem:[%s164 + $0x7e] sm:$0xff]
      %v691 = vld [vmem:[%s164 + $0x86] sm:$0xff]
      %700 = vrot.lane.b32.xlu0 %v684, 119
      %v701 = vpop.permute.xlu0 %700
      %702 = vrot.lane.b32.xlu0 %v685, 119
      %v703 = vpop.permute.xlu0 %702
      %704 = vrot.lane.b32.xlu0 %v686, 119
      %v705 = vpop.permute.xlu0 %704
      %706 = vrot.lane.b32.xlu0 %v687, 119
      %v707 = vpop.permute.xlu0 %706
      %708 = vrot.lane.b32.xlu0 %v688, 119
      %v709 = vpop.permute.xlu0 %708
      %710 = vrot.lane.b32.xlu0 %v689, 119
      %v711 = vpop.permute.xlu0 %710
      %712 = vrot.lane.b32.xlu0 %v690, 119
      %v713 = vpop.permute.xlu0 %712
      %714 = vrot.lane.b32.xlu0 %v691, 119
      %v715 = vpop.permute.xlu0 %714
      %v724 = vcombine.low %v701, %v709
      %v725 = vcombine.high %v701, %v709
      %v727 = vunpack.c.l.s4 1983009808
      %v728 = vunpack.c.0.s8 %v727
      %v729 = vlaneseq
      %v730 = vshrl.u32 %v729, 7
      %v731 = vsub.s32 %v728, %v730
      %v732 = vrot.slane %v724, %v731
      %v734 = vunpack.c.l.s4 1983009808
      %v735 = vunpack.c.0.s8 %v734
      %v736 = vlaneseq
      %v737 = vshrl.u32 %v736, 7
      %v738 = vsub.s32 %v735, %v737
      %v739 = vrot.slane %v725, %v738
      %v740 = vcombine.low %v705, %v713
      %v741 = vcombine.high %v705, %v713
      %v743 = vunpack.c.l.s4 1983009808
      %v744 = vunpack.c.0.s8 %v743
      %v745 = vlaneseq
      %v746 = vshrl.u32 %v745, 7
      %v747 = vsub.s32 %v744, %v746
      %v748 = vrot.slane %v740, %v747
      %v750 = vunpack.c.l.s4 1983009808
      %v751 = vunpack.c.0.s8 %v750
      %v752 = vlaneseq
      %v753 = vshrl.u32 %v752, 7
      %v754 = vsub.s32 %v751, %v753
      %v755 = vrot.slane %v741, %v754
      %v756 = vcombine.low %v732, %v748
      %v757 = vcombine.high %v732, %v748
      %v759 = vunpack.c.l.s4 1934713408
      %v760 = vunpack.c.0.s8 %v759
      %v761 = vlaneseq
      %v762 = vshrl.u32 %v761, 7
      %v763 = vsub.s32 %v760, %v762
      %v764 = vrot.slane %v756, %v763
      %v766 = vunpack.c.l.s4 1934713408
      %v767 = vunpack.c.0.s8 %v766
      %v768 = vlaneseq
      %v769 = vshrl.u32 %v768, 7
      %v770 = vsub.s32 %v767, %v769
      %v771 = vrot.slane %v757, %v770
      %v772 = vcombine.low %v739, %v755
      %v773 = vcombine.high %v739, %v755
      %v775 = vunpack.c.l.s4 1934713408
      %v776 = vunpack.c.0.s8 %v775
      %v777 = vlaneseq
      %v778 = vshrl.u32 %v777, 7
      %v779 = vsub.s32 %v776, %v778
      %v780 = vrot.slane %v772, %v779
      %v782 = vunpack.c.l.s4 1934713408
      %v783 = vunpack.c.0.s8 %v782
      %v784 = vlaneseq
      %v785 = vshrl.u32 %v784, 7
      %v786 = vsub.s32 %v783, %v785
      %v787 = vrot.slane %v773, %v786
      %v788 = vcombine.high %v764, 0.0
      %v789 = vcombine.high %v771, 0.0
      %v790 = vcombine.high %v780, 0.0
      %v791 = vcombine.high %v787, 0.0
      %v792 = vcombine.low %v703, %v711
      %v793 = vcombine.high %v703, %v711
      %v795 = vunpack.c.l.s4 1983009808
      %v796 = vunpack.c.0.s8 %v795
      %v797 = vlaneseq
      %v798 = vshrl.u32 %v797, 7
      %v799 = vsub.s32 %v796, %v798
      %v800 = vrot.slane %v792, %v799
      %v802 = vunpack.c.l.s4 1983009808
      %v803 = vunpack.c.0.s8 %v802
      %v804 = vlaneseq
      %v805 = vshrl.u32 %v804, 7
      %v806 = vsub.s32 %v803, %v805
      %v807 = vrot.slane %v793, %v806
      %v808 = vcombine.low %v707, %v715
      %v809 = vcombine.high %v707, %v715
      %v811 = vunpack.c.l.s4 1983009808
      %v812 = vunpack.c.0.s8 %v811
      %v813 = vlaneseq
      %v814 = vshrl.u32 %v813, 7
      %v815 = vsub.s32 %v812, %v814
      %v816 = vrot.slane %v808, %v815
      %v818 = vunpack.c.l.s4 1983009808
      %v819 = vunpack.c.0.s8 %v818
      %v820 = vlaneseq
      %v821 = vshrl.u32 %v820, 7
      %v822 = vsub.s32 %v819, %v821
      %v823 = vrot.slane %v809, %v822
      %v824 = vcombine.low %v800, %v816
      %v825 = vcombine.high %v800, %v816
      %v827 = vunpack.c.l.s4 1934713408
      %v828 = vunpack.c.0.s8 %v827
      %v829 = vlaneseq
      %v830 = vshrl.u32 %v829, 7
      %v831 = vsub.s32 %v828, %v830
      %v832 = vrot.slane %v824, %v831
      %v834 = vunpack.c.l.s4 1934713408
      %v835 = vunpack.c.0.s8 %v834
      %v836 = vlaneseq
      %v837 = vshrl.u32 %v836, 7
      %v838 = vsub.s32 %v835, %v837
      %v839 = vrot.slane %v825, %v838
      %v840 = vcombine.low %v807, %v823
      %v841 = vcombine.high %v807, %v823
      %v843 = vunpack.c.l.s4 1934713408
      %v844 = vunpack.c.0.s8 %v843
      %v845 = vlaneseq
      %v846 = vshrl.u32 %v845, 7
      %v847 = vsub.s32 %v844, %v846
      %v848 = vrot.slane %v840, %v847
      %v850 = vunpack.c.l.s4 1934713408
      %v851 = vunpack.c.0.s8 %v850
      %v852 = vlaneseq
      %v853 = vshrl.u32 %v852, 7
      %v854 = vsub.s32 %v851, %v853
      %v855 = vrot.slane %v841, %v854
      %v856 = vcombine.high %v832, 0.0
      %v857 = vcombine.high %v839, 0.0
      %v858 = vcombine.high %v848, 0.0
      %v859 = vcombine.high %v855, 0.0
      %861 = vrot.lane.b32.xlu0 %v788, 16
      %v862 = vpop.permute.xlu0 %861
      %865 = vrot.lane.b32.xlu0 %v771, 32
      %v866 = vpop.permute.xlu0 %865
      %869 = vrot.lane.b32.xlu0 %v789, 48
      %v870 = vpop.permute.xlu0 %869
      %873 = vrot.lane.b32.xlu0 %v780, 64
      %v874 = vpop.permute.xlu0 %873
      %877 = vrot.lane.b32.xlu0 %v790, 80
      %v878 = vpop.permute.xlu0 %877
      %881 = vrot.lane.b32.xlu0 %v787, 96
      %v882 = vpop.permute.xlu0 %881
      %885 = vrot.lane.b32.xlu0 %v791, 112
      %v886 = vpop.permute.xlu0 %885
      %889 = vrot.lane.b32.xlu0 %v856, 16
      %v890 = vpop.permute.xlu0 %889
      %893 = vrot.lane.b32.xlu0 %v839, 32
      %v894 = vpop.permute.xlu0 %893
      %897 = vrot.lane.b32.xlu0 %v857, 48
      %v898 = vpop.permute.xlu0 %897
      %901 = vrot.lane.b32.xlu0 %v848, 64
      %v902 = vpop.permute.xlu0 %901
      %905 = vrot.lane.b32.xlu0 %v858, 80
      %v906 = vpop.permute.xlu0 %905
      %909 = vrot.lane.b32.xlu0 %v855, 96
      %v910 = vpop.permute.xlu0 %909
      %913 = vrot.lane.b32.xlu0 %v859, 112
      %v914 = vpop.permute.xlu0 %913
      %v916 = vsel %vm401, %v764, %v862
      %v917 = vsel %vm403, %v916, %v866
      %v918 = vsel %vm405, %v917, %v870
      %v919 = vsel %vm407, %v918, %v874
      %v920 = vsel %vm409, %v919, %v878
      %v921 = vsel %vm411, %v920, %v882
      %v922 = vsel %vm413, %v921, %v886
      %v923 = vsel %vm401, %v832, %v890
      %v924 = vsel %vm403, %v923, %v894
      %v925 = vsel %vm405, %v924, %v898
      %v926 = vsel %vm407, %v925, %v902
      %v927 = vsel %vm409, %v926, %v906
      %v928 = vsel %vm411, %v927, %v910
      %v929 = vsel %vm413, %v928, %v914
      %v932 = vrot.slane %v922, 4
      %v933 = vrot.slane %v929, 4
      %936 = vst [vmem:[#allocation2] sm:$0xf0] %v932
      %937 = vst [vmem:[#allocation2 + $0x8] sm:$0xf0] %v933
      %v938 = vld [vmem:[%s164 + $0x6] sm:$0xff]
      %v939 = vld [vmem:[%s164 + $0xe] sm:$0xff]
      %v940 = vld [vmem:[%s164 + $0x2e] sm:$0xff]
      %v941 = vld [vmem:[%s164 + $0x36] sm:$0xff]
      %v942 = vld [vmem:[%s164 + $0x56] sm:$0xff]
      %v943 = vld [vmem:[%s164 + $0x5e] sm:$0xff]
      %v944 = vld [vmem:[%s164 + $0x7e] sm:$0xff]
      %v945 = vld [vmem:[%s164 + $0x86] sm:$0xff]
      %954 = vrot.lane.b32.xlu0 %v938, 116
      %v955 = vpop.permute.xlu0 %954
      %956 = vrot.lane.b32.xlu0 %v939, 116
      %v957 = vpop.permute.xlu0 %956
      %958 = vrot.lane.b32.xlu0 %v940, 116
      %v959 = vpop.permute.xlu0 %958
      %960 = vrot.lane.b32.xlu0 %v941, 116
      %v961 = vpop.permute.xlu0 %960
      %962 = vrot.lane.b32.xlu0 %v942, 116
      %v963 = vpop.permute.xlu0 %962
      %964 = vrot.lane.b32.xlu0 %v943, 116
      %v965 = vpop.permute.xlu0 %964
      %966 = vrot.lane.b32.xlu0 %v944, 116
      %v967 = vpop.permute.xlu0 %966
      %968 = vrot.lane.b32.xlu0 %v945, 116
      %v969 = vpop.permute.xlu0 %968
      %v978 = vcombine.low %v955, %v963
      %v979 = vcombine.high %v955, %v963
      %v981 = vunpack.c.l.s4 1983009808
      %v982 = vunpack.c.0.s8 %v981
      %v983 = vlaneseq
      %v984 = vshrl.u32 %v983, 7
      %v985 = vsub.s32 %v982, %v984
      %v986 = vrot.slane %v978, %v985
      %v988 = vunpack.c.l.s4 1983009808
      %v989 = vunpack.c.0.s8 %v988
      %v990 = vlaneseq
      %v991 = vshrl.u32 %v990, 7
      %v992 = vsub.s32 %v989, %v991
      %v993 = vrot.slane %v979, %v992
      %v994 = vcombine.low %v959, %v967
      %v995 = vcombine.high %v959, %v967
      %v997 = vunpack.c.l.s4 1983009808
      %v998 = vunpack.c.0.s8 %v997
      %v999 = vlaneseq
      %v1000 = vshrl.u32 %v999, 7
      %v1001 = vsub.s32 %v998, %v1000
      %v1002 = vrot.slane %v994, %v1001
      %v1004 = vunpack.c.l.s4 1983009808
      %v1005 = vunpack.c.0.s8 %v1004
      %v1006 = vlaneseq
      %v1007 = vshrl.u32 %v1006, 7
      %v1008 = vsub.s32 %v1005, %v1007
      %v1009 = vrot.slane %v995, %v1008
      %v1010 = vcombine.low %v986, %v1002
      %v1011 = vcombine.high %v986, %v1002
      %v1013 = vunpack.c.l.s4 1934713408
      %v1014 = vunpack.c.0.s8 %v1013
      %v1015 = vlaneseq
      %v1016 = vshrl.u32 %v1015, 7
      %v1017 = vsub.s32 %v1014, %v1016
      %v1018 = vrot.slane %v1010, %v1017
      %v1020 = vunpack.c.l.s4 1934713408
      %v1021 = vunpack.c.0.s8 %v1020
      %v1022 = vlaneseq
      %v1023 = vshrl.u32 %v1022, 7
      %v1024 = vsub.s32 %v1021, %v1023
      %v1025 = vrot.slane %v1011, %v1024
      %v1026 = vcombine.low %v993, %v1009
      %v1027 = vcombine.high %v993, %v1009
      %v1029 = vunpack.c.l.s4 1934713408
      %v1030 = vunpack.c.0.s8 %v1029
      %v1031 = vlaneseq
      %v1032 = vshrl.u32 %v1031, 7
      %v1033 = vsub.s32 %v1030, %v1032
      %v1034 = vrot.slane %v1026, %v1033
      %v1036 = vunpack.c.l.s4 1934713408
      %v1037 = vunpack.c.0.s8 %v1036
      %v1038 = vlaneseq
      %v1039 = vshrl.u32 %v1038, 7
      %v1040 = vsub.s32 %v1037, %v1039
      %v1041 = vrot.slane %v1027, %v1040
      %v1042 = vcombine.high %v1018, 0.0
      %v1043 = vcombine.high %v1025, 0.0
      %v1044 = vcombine.high %v1034, 0.0
      %v1045 = vcombine.high %v1041, 0.0
      %v1046 = vcombine.low %v957, %v965
      %v1047 = vcombine.high %v957, %v965
      %v1049 = vunpack.c.l.s4 1983009808
      %v1050 = vunpack.c.0.s8 %v1049
      %v1051 = vlaneseq
      %v1052 = vshrl.u32 %v1051, 7
      %v1053 = vsub.s32 %v1050, %v1052
      %v1054 = vrot.slane %v1046, %v1053
      %v1056 = vunpack.c.l.s4 1983009808
      %v1057 = vunpack.c.0.s8 %v1056
      %v1058 = vlaneseq
      %v1059 = vshrl.u32 %v1058, 7
      %v1060 = vsub.s32 %v1057, %v1059
      %v1061 = vrot.slane %v1047, %v1060
      %v1062 = vcombine.low %v961, %v969
      %v1063 = vcombine.high %v961, %v969
      %v1065 = vunpack.c.l.s4 1983009808
      %v1066 = vunpack.c.0.s8 %v1065
      %v1067 = vlaneseq
      %v1068 = vshrl.u32 %v1067, 7
      %v1069 = vsub.s32 %v1066, %v1068
      %v1070 = vrot.slane %v1062, %v1069
      %v1072 = vunpack.c.l.s4 1983009808
      %v1073 = vunpack.c.0.s8 %v1072
      %v1074 = vlaneseq
      %v1075 = vshrl.u32 %v1074, 7
      %v1076 = vsub.s32 %v1073, %v1075
      %v1077 = vrot.slane %v1063, %v1076
      %v1078 = vcombine.low %v1054, %v1070
      %v1079 = vcombine.high %v1054, %v1070
      %v1081 = vunpack.c.l.s4 1934713408
      %v1082 = vunpack.c.0.s8 %v1081
      %v1083 = vlaneseq
      %v1084 = vshrl.u32 %v1083, 7
      %v1085 = vsub.s32 %v1082, %v1084
      %v1086 = vrot.slane %v1078, %v1085
      %v1088 = vunpack.c.l.s4 1934713408
      %v1089 = vunpack.c.0.s8 %v1088
      %v1090 = vlaneseq
      %v1091 = vshrl.u32 %v1090, 7
      %v1092 = vsub.s32 %v1089, %v1091
      %v1093 = vrot.slane %v1079, %v1092
      %v1094 = vcombine.low %v1061, %v1077
      %v1095 = vcombine.high %v1061, %v1077
      %v1097 = vunpack.c.l.s4 1934713408
      %v1098 = vunpack.c.0.s8 %v1097
      %v1099 = vlaneseq
      %v1100 = vshrl.u32 %v1099, 7
      %v1101 = vsub.s32 %v1098, %v1100
      %v1102 = vrot.slane %v1094, %v1101
      %v1104 = vunpack.c.l.s4 1934713408
      %v1105 = vunpack.c.0.s8 %v1104
      %v1106 = vlaneseq
      %v1107 = vshrl.u32 %v1106, 7
      %v1108 = vsub.s32 %v1105, %v1107
      %v1109 = vrot.slane %v1095, %v1108
      %v1110 = vcombine.high %v1086, 0.0
      %v1111 = vcombine.high %v1093, 0.0
      %v1112 = vcombine.high %v1102, 0.0
      %v1113 = vcombine.high %v1109, 0.0
      %1115 = vrot.lane.b32.xlu0 %v1042, 16
      %v1116 = vpop.permute.xlu0 %1115
      %1119 = vrot.lane.b32.xlu0 %v1025, 32
      %v1120 = vpop.permute.xlu0 %1119
      %1123 = vrot.lane.b32.xlu0 %v1043, 48
      %v1124 = vpop.permute.xlu0 %1123
      %1127 = vrot.lane.b32.xlu0 %v1034, 64
      %v1128 = vpop.permute.xlu0 %1127
      %1131 = vrot.lane.b32.xlu0 %v1044, 80
      %v1132 = vpop.permute.xlu0 %1131
      %1135 = vrot.lane.b32.xlu0 %v1041, 96
      %v1136 = vpop.permute.xlu0 %1135
      %1139 = vrot.lane.b32.xlu0 %v1045, 112
      %v1140 = vpop.permute.xlu0 %1139
      %1143 = vrot.lane.b32.xlu0 %v1110, 16
      %v1144 = vpop.permute.xlu0 %1143
      %1147 = vrot.lane.b32.xlu0 %v1093, 32
      %v1148 = vpop.permute.xlu0 %1147
      %1151 = vrot.lane.b32.xlu0 %v1111, 48
      %v1152 = vpop.permute.xlu0 %1151
      %1155 = vrot.lane.b32.xlu0 %v1102, 64
      %v1156 = vpop.permute.xlu0 %1155
      %1159 = vrot.lane.b32.xlu0 %v1112, 80
      %v1160 = vpop.permute.xlu0 %1159
      %1163 = vrot.lane.b32.xlu0 %v1109, 96
      %v1164 = vpop.permute.xlu0 %1163
      %1167 = vrot.lane.b32.xlu0 %v1113, 112
      %v1168 = vpop.permute.xlu0 %1167
      %v1170 = vsel %vm401, %v1018, %v1116
      %v1171 = vsel %vm403, %v1170, %v1120
      %v1172 = vsel %vm405, %v1171, %v1124
      %v1173 = vsel %vm407, %v1172, %v1128
      %v1174 = vsel %vm409, %v1173, %v1132
      %v1175 = vsel %vm411, %v1174, %v1136
      %v1176 = vsel %vm413, %v1175, %v1140
      %v1177 = vsel %vm401, %v1086, %v1144
      %v1178 = vsel %vm403, %v1177, %v1148
      %v1179 = vsel %vm405, %v1178, %v1152
      %v1180 = vsel %vm407, %v1179, %v1156
      %v1181 = vsel %vm409, %v1180, %v1160
      %v1182 = vsel %vm411, %v1181, %v1164
      %v1183 = vsel %vm413, %v1182, %v1168
      %1184 = vst [vmem:[#allocation2 + $0x10] sm:$0xf] %v1176
      %1185 = vst [vmem:[#allocation2 + $0x18] sm:$0xf] %v1183
      %v1186 = vld [vmem:[%s164 + $0x9] sm:$0xff]
      %v1187 = vld [vmem:[%s164 + $0x11] sm:$0xff]
      %v1188 = vld [vmem:[%s164 + $0x31] sm:$0xff]
      %v1189 = vld [vmem:[%s164 + $0x39] sm:$0xff]
      %v1190 = vld [vmem:[%s164 + $0x59] sm:$0xff]
      %v1191 = vld [vmem:[%s164 + $0x61] sm:$0xff]
      %v1192 = vld [vmem:[%s164 + $0x81] sm:$0xff]
      %v1193 = vld [vmem:[%s164 + $0x89] sm:$0xff]
      %1202 = vrot.lane.b32.xlu0 %v1186, 122
      %v1203 = vpop.permute.xlu0 %1202
      %1204 = vrot.lane.b32.xlu0 %v1187, 122
      %v1205 = vpop.permute.xlu0 %1204
      %1206 = vrot.lane.b32.xlu0 %v1188, 122
      %v1207 = vpop.permute.xlu0 %1206
      %1208 = vrot.lane.b32.xlu0 %v1189, 122
      %v1209 = vpop.permute.xlu0 %1208
      %1210 = vrot.lane.b32.xlu0 %v1190, 122
      %v1211 = vpop.permute.xlu0 %1210
      %1212 = vrot.lane.b32.xlu0 %v1191, 122
      %v1213 = vpop.permute.xlu0 %1212
      %1214 = vrot.lane.b32.xlu0 %v1192, 122
      %v1215 = vpop.permute.xlu0 %1214
      %1216 = vrot.lane.b32.xlu0 %v1193, 122
      %v1217 = vpop.permute.xlu0 %1216
      %v1226 = vcombine.low %v1203, %v1211
      %v1227 = vcombine.high %v1203, %v1211
      %v1229 = vunpack.c.l.s4 1983009808
      %v1230 = vunpack.c.0.s8 %v1229
      %v1231 = vlaneseq
      %v1232 = vshrl.u32 %v1231, 7
      %v1233 = vsub.s32 %v1230, %v1232
      %v1234 = vrot.slane %v1226, %v1233
      %v1236 = vunpack.c.l.s4 1983009808
      %v1237 = vunpack.c.0.s8 %v1236
      %v1238 = vlaneseq
      %v1239 = vshrl.u32 %v1238, 7
      %v1240 = vsub.s32 %v1237, %v1239
      %v1241 = vrot.slane %v1227, %v1240
      %v1242 = vcombine.low %v1207, %v1215
      %v1243 = vcombine.high %v1207, %v1215
      %v1245 = vunpack.c.l.s4 1983009808
      %v1246 = vunpack.c.0.s8 %v1245
      %v1247 = vlaneseq
      %v1248 = vshrl.u32 %v1247, 7
      %v1249 = vsub.s32 %v1246, %v1248
      %v1250 = vrot.slane %v1242, %v1249
      %v1252 = vunpack.c.l.s4 1983009808
      %v1253 = vunpack.c.0.s8 %v1252
      %v1254 = vlaneseq
      %v1255 = vshrl.u32 %v1254, 7
      %v1256 = vsub.s32 %v1253, %v1255
      %v1257 = vrot.slane %v1243, %v1256
      %v1258 = vcombine.low %v1234, %v1250
      %v1259 = vcombine.high %v1234, %v1250
      %v1261 = vunpack.c.l.s4 1934713408
      %v1262 = vunpack.c.0.s8 %v1261
      %v1263 = vlaneseq
      %v1264 = vshrl.u32 %v1263, 7
      %v1265 = vsub.s32 %v1262, %v1264
      %v1266 = vrot.slane %v1258, %v1265
      %v1268 = vunpack.c.l.s4 1934713408
      %v1269 = vunpack.c.0.s8 %v1268
      %v1270 = vlaneseq
      %v1271 = vshrl.u32 %v1270, 7
      %v1272 = vsub.s32 %v1269, %v1271
      %v1273 = vrot.slane %v1259, %v1272
      %v1274 = vcombine.low %v1241, %v1257
      %v1275 = vcombine.high %v1241, %v1257
      %v1277 = vunpack.c.l.s4 1934713408
      %v1278 = vunpack.c.0.s8 %v1277
      %v1279 = vlaneseq
      %v1280 = vshrl.u32 %v1279, 7
      %v1281 = vsub.s32 %v1278, %v1280
      %v1282 = vrot.slane %v1274, %v1281
      %v1284 = vunpack.c.l.s4 1934713408
      %v1285 = vunpack.c.0.s8 %v1284
      %v1286 = vlaneseq
      %v1287 = vshrl.u32 %v1286, 7
      %v1288 = vsub.s32 %v1285, %v1287
      %v1289 = vrot.slane %v1275, %v1288
      %v1290 = vcombine.high %v1266, 0.0
      %v1291 = vcombine.high %v1273, 0.0
      %v1292 = vcombine.high %v1282, 0.0
      %v1293 = vcombine.high %v1289, 0.0
      %v1294 = vcombine.low %v1205, %v1213
      %v1295 = vcombine.high %v1205, %v1213
      %v1297 = vunpack.c.l.s4 1983009808
      %v1298 = vunpack.c.0.s8 %v1297
      %v1299 = vlaneseq
      %v1300 = vshrl.u32 %v1299, 7
      %v1301 = vsub.s32 %v1298, %v1300
      %v1302 = vrot.slane %v1294, %v1301
      %v1304 = vunpack.c.l.s4 1983009808
      %v1305 = vunpack.c.0.s8 %v1304
      %v1306 = vlaneseq
      %v1307 = vshrl.u32 %v1306, 7
      %v1308 = vsub.s32 %v1305, %v1307
      %v1309 = vrot.slane %v1295, %v1308
      %v1310 = vcombine.low %v1209, %v1217
      %v1311 = vcombine.high %v1209, %v1217
      %v1313 = vunpack.c.l.s4 1983009808
      %v1314 = vunpack.c.0.s8 %v1313
      %v1315 = vlaneseq
      %v1316 = vshrl.u32 %v1315, 7
      %v1317 = vsub.s32 %v1314, %v1316
      %v1318 = vrot.slane %v1310, %v1317
      %v1320 = vunpack.c.l.s4 1983009808
      %v1321 = vunpack.c.0.s8 %v1320
      %v1322 = vlaneseq
      %v1323 = vshrl.u32 %v1322, 7
      %v1324 = vsub.s32 %v1321, %v1323
      %v1325 = vrot.slane %v1311, %v1324
      %v1326 = vcombine.low %v1302, %v1318
      %v1327 = vcombine.high %v1302, %v1318
      %v1329 = vunpack.c.l.s4 1934713408
      %v1330 = vunpack.c.0.s8 %v1329
      %v1331 = vlaneseq
      %v1332 = vshrl.u32 %v1331, 7
      %v1333 = vsub.s32 %v1330, %v1332
      %v1334 = vrot.slane %v1326, %v1333
      %v1336 = vunpack.c.l.s4 1934713408
      %v1337 = vunpack.c.0.s8 %v1336
      %v1338 = vlaneseq
      %v1339 = vshrl.u32 %v1338, 7
      %v1340 = vsub.s32 %v1337, %v1339
      %v1341 = vrot.slane %v1327, %v1340
      %v1342 = vcombine.low %v1309, %v1325
      %v1343 = vcombine.high %v1309, %v1325
      %v1345 = vunpack.c.l.s4 1934713408
      %v1346 = vunpack.c.0.s8 %v1345
      %v1347 = vlaneseq
      %v1348 = vshrl.u32 %v1347, 7
      %v1349 = vsub.s32 %v1346, %v1348
      %v1350 = vrot.slane %v1342, %v1349
      %v1352 = vunpack.c.l.s4 1934713408
      %v1353 = vunpack.c.0.s8 %v1352
      %v1354 = vlaneseq
      %v1355 = vshrl.u32 %v1354, 7
      %v1356 = vsub.s32 %v1353, %v1355
      %v1357 = vrot.slane %v1343, %v1356
      %v1358 = vcombine.high %v1334, 0.0
      %v1359 = vcombine.high %v1341, 0.0
      %v1360 = vcombine.high %v1350, 0.0
      %v1361 = vcombine.high %v1357, 0.0
      %1363 = vrot.lane.b32.xlu0 %v1290, 16
      %v1364 = vpop.permute.xlu0 %1363
      %1367 = vrot.lane.b32.xlu0 %v1273, 32
      %v1368 = vpop.permute.xlu0 %1367
      %1371 = vrot.lane.b32.xlu0 %v1291, 48
      %v1372 = vpop.permute.xlu0 %1371
      %1375 = vrot.lane.b32.xlu0 %v1282, 64
      %v1376 = vpop.permute.xlu0 %1375
      %1379 = vrot.lane.b32.xlu0 %v1292, 80
      %v1380 = vpop.permute.xlu0 %1379
      %1383 = vrot.lane.b32.xlu0 %v1289, 96
      %v1384 = vpop.permute.xlu0 %1383
      %1387 = vrot.lane.b32.xlu0 %v1293, 112
      %v1388 = vpop.permute.xlu0 %1387
      %1391 = vrot.lane.b32.xlu0 %v1358, 16
      %v1392 = vpop.permute.xlu0 %1391
      %1395 = vrot.lane.b32.xlu0 %v1341, 32
      %v1396 = vpop.permute.xlu0 %1395
      %1399 = vrot.lane.b32.xlu0 %v1359, 48
      %v1400 = vpop.permute.xlu0 %1399
      %1403 = vrot.lane.b32.xlu0 %v1350, 64
      %v1404 = vpop.permute.xlu0 %1403
      %1407 = vrot.lane.b32.xlu0 %v1360, 80
      %v1408 = vpop.permute.xlu0 %1407
      %1411 = vrot.lane.b32.xlu0 %v1357, 96
      %v1412 = vpop.permute.xlu0 %1411
      %1415 = vrot.lane.b32.xlu0 %v1361, 112
      %v1416 = vpop.permute.xlu0 %1415
      %v1418 = vsel %vm401, %v1266, %v1364
      %v1419 = vsel %vm403, %v1418, %v1368
      %v1420 = vsel %vm405, %v1419, %v1372
      %v1421 = vsel %vm407, %v1420, %v1376
      %v1422 = vsel %vm409, %v1421, %v1380
      %v1423 = vsel %vm411, %v1422, %v1384
      %v1424 = vsel %vm413, %v1423, %v1388
      %v1425 = vsel %vm401, %v1334, %v1392
      %v1426 = vsel %vm403, %v1425, %v1396
      %v1427 = vsel %vm405, %v1426, %v1400
      %v1428 = vsel %vm407, %v1427, %v1404
      %v1429 = vsel %vm409, %v1428, %v1408
      %v1430 = vsel %vm411, %v1429, %v1412
      %v1431 = vsel %vm413, %v1430, %v1416
      %v1434 = vrot.slane %v1424, 4
      %v1435 = vrot.slane %v1431, 4
      %1438 = vst [vmem:[#allocation2 + $0x10] sm:$0xf0] %v1434
      %1439 = vst [vmem:[#allocation2 + $0x18] sm:$0xf0] %v1435
      %v1440 = vld [vmem:[%s164 + $0x9] sm:$0xff]
      %v1441 = vld [vmem:[%s164 + $0x11] sm:$0xff]
      %v1442 = vld [vmem:[%s164 + $0x31] sm:$0xff]
      %v1443 = vld [vmem:[%s164 + $0x39] sm:$0xff]
      %v1444 = vld [vmem:[%s164 + $0x59] sm:$0xff]
      %v1445 = vld [vmem:[%s164 + $0x61] sm:$0xff]
      %v1446 = vld [vmem:[%s164 + $0x81] sm:$0xff]
      %v1447 = vld [vmem:[%s164 + $0x89] sm:$0xff]
      %1456 = vrot.lane.b32.xlu0 %v1440, 116
      %v1457 = vpop.permute.xlu0 %1456
      %1458 = vrot.lane.b32.xlu0 %v1441, 116
      %v1459 = vpop.permute.xlu0 %1458
      %1460 = vrot.lane.b32.xlu0 %v1442, 116
      %v1461 = vpop.permute.xlu0 %1460
      %1462 = vrot.lane.b32.xlu0 %v1443, 116
      %v1463 = vpop.permute.xlu0 %1462
      %1464 = vrot.lane.b32.xlu0 %v1444, 116
      %v1465 = vpop.permute.xlu0 %1464
      %1466 = vrot.lane.b32.xlu0 %v1445, 116
      %v1467 = vpop.permute.xlu0 %1466
      %1468 = vrot.lane.b32.xlu0 %v1446, 116
      %v1469 = vpop.permute.xlu0 %1468
      %1470 = vrot.lane.b32.xlu0 %v1447, 116
      %v1471 = vpop.permute.xlu0 %1470
      %v1480 = vcombine.low %v1457, %v1465
      %v1481 = vcombine.high %v1457, %v1465
      %v1483 = vunpack.c.l.s4 1983009808
      %v1484 = vunpack.c.0.s8 %v1483
      %v1485 = vlaneseq
      %v1486 = vshrl.u32 %v1485, 7
      %v1487 = vsub.s32 %v1484, %v1486
      %v1488 = vrot.slane %v1480, %v1487
      %v1490 = vunpack.c.l.s4 1983009808
      %v1491 = vunpack.c.0.s8 %v1490
      %v1492 = vlaneseq
      %v1493 = vshrl.u32 %v1492, 7
      %v1494 = vsub.s32 %v1491, %v1493
      %v1495 = vrot.slane %v1481, %v1494
      %v1496 = vcombine.low %v1461, %v1469
      %v1497 = vcombine.high %v1461, %v1469
      %v1499 = vunpack.c.l.s4 1983009808
      %v1500 = vunpack.c.0.s8 %v1499
      %v1501 = vlaneseq
      %v1502 = vshrl.u32 %v1501, 7
      %v1503 = vsub.s32 %v1500, %v1502
      %v1504 = vrot.slane %v1496, %v1503
      %v1506 = vunpack.c.l.s4 1983009808
      %v1507 = vunpack.c.0.s8 %v1506
      %v1508 = vlaneseq
      %v1509 = vshrl.u32 %v1508, 7
      %v1510 = vsub.s32 %v1507, %v1509
      %v1511 = vrot.slane %v1497, %v1510
      %v1512 = vcombine.low %v1488, %v1504
      %v1513 = vcombine.high %v1488, %v1504
      %v1515 = vunpack.c.l.s4 1934713408
      %v1516 = vunpack.c.0.s8 %v1515
      %v1517 = vlaneseq
      %v1518 = vshrl.u32 %v1517, 7
      %v1519 = vsub.s32 %v1516, %v1518
      %v1520 = vrot.slane %v1512, %v1519
      %v1522 = vunpack.c.l.s4 1934713408
      %v1523 = vunpack.c.0.s8 %v1522
      %v1524 = vlaneseq
      %v1525 = vshrl.u32 %v1524, 7
      %v1526 = vsub.s32 %v1523, %v1525
      %v1527 = vrot.slane %v1513, %v1526
      %v1528 = vcombine.low %v1495, %v1511
      %v1529 = vcombine.high %v1495, %v1511
      %v1531 = vunpack.c.l.s4 1934713408
      %v1532 = vunpack.c.0.s8 %v1531
      %v1533 = vlaneseq
      %v1534 = vshrl.u32 %v1533, 7
      %v1535 = vsub.s32 %v1532, %v1534
      %v1536 = vrot.slane %v1528, %v1535
      %v1538 = vunpack.c.l.s4 1934713408
      %v1539 = vunpack.c.0.s8 %v1538
      %v1540 = vlaneseq
      %v1541 = vshrl.u32 %v1540, 7
      %v1542 = vsub.s32 %v1539, %v1541
      %v1543 = vrot.slane %v1529, %v1542
      %v1544 = vcombine.high %v1520, 0.0
      %v1545 = vcombine.high %v1527, 0.0
      %v1546 = vcombine.high %v1536, 0.0
      %v1547 = vcombine.high %v1543, 0.0
      %v1548 = vcombine.low %v1459, %v1467
      %v1549 = vcombine.high %v1459, %v1467
      %v1551 = vunpack.c.l.s4 1983009808
      %v1552 = vunpack.c.0.s8 %v1551
      %v1553 = vlaneseq
      %v1554 = vshrl.u32 %v1553, 7
      %v1555 = vsub.s32 %v1552, %v1554
      %v1556 = vrot.slane %v1548, %v1555
      %v1558 = vunpack.c.l.s4 1983009808
      %v1559 = vunpack.c.0.s8 %v1558
      %v1560 = vlaneseq
      %v1561 = vshrl.u32 %v1560, 7
      %v1562 = vsub.s32 %v1559, %v1561
      %v1563 = vrot.slane %v1549, %v1562
      %v1564 = vcombine.low %v1463, %v1471
      %v1565 = vcombine.high %v1463, %v1471
      %v1567 = vunpack.c.l.s4 1983009808
      %v1568 = vunpack.c.0.s8 %v1567
      %v1569 = vlaneseq
      %v1570 = vshrl.u32 %v1569, 7
      %v1571 = vsub.s32 %v1568, %v1570
      %v1572 = vrot.slane %v1564, %v1571
      %v1574 = vunpack.c.l.s4 1983009808
      %v1575 = vunpack.c.0.s8 %v1574
      %v1576 = vlaneseq
      %v1577 = vshrl.u32 %v1576, 7
      %v1578 = vsub.s32 %v1575, %v1577
      %v1579 = vrot.slane %v1565, %v1578
      %v1580 = vcombine.low %v1556, %v1572
      %v1581 = vcombine.high %v1556, %v1572
      %v1583 = vunpack.c.l.s4 1934713408
      %v1584 = vunpack.c.0.s8 %v1583
      %v1585 = vlaneseq
      %v1586 = vshrl.u32 %v1585, 7
      %v1587 = vsub.s32 %v1584, %v1586
      %v1588 = vrot.slane %v1580, %v1587
      %v1590 = vunpack.c.l.s4 1934713408
      %v1591 = vunpack.c.0.s8 %v1590
      %v1592 = vlaneseq
      %v1593 = vshrl.u32 %v1592, 7
      %v1594 = vsub.s32 %v1591, %v1593
      %v1595 = vrot.slane %v1581, %v1594
      %v1596 = vcombine.low %v1563, %v1579
      %v1597 = vcombine.high %v1563, %v1579
      %v1599 = vunpack.c.l.s4 1934713408
      %v1600 = vunpack.c.0.s8 %v1599
      %v1601 = vlaneseq
      %v1602 = vshrl.u32 %v1601, 7
      %v1603 = vsub.s32 %v1600, %v1602
      %v1604 = vrot.slane %v1596, %v1603
      %v1606 = vunpack.c.l.s4 1934713408
      %v1607 = vunpack.c.0.s8 %v1606
      %v1608 = vlaneseq
      %v1609 = vshrl.u32 %v1608, 7
      %v1610 = vsub.s32 %v1607, %v1609
      %v1611 = vrot.slane %v1597, %v1610
      %v1612 = vcombine.high %v1588, 0.0
      %v1613 = vcombine.high %v1595, 0.0
      %v1614 = vcombine.high %v1604, 0.0
      %v1615 = vcombine.high %v1611, 0.0
      %1617 = vrot.lane.b32.xlu0 %v1544, 16
      %v1618 = vpop.permute.xlu0 %1617
      %1621 = vrot.lane.b32.xlu0 %v1527, 32
      %v1622 = vpop.permute.xlu0 %1621
      %1625 = vrot.lane.b32.xlu0 %v1545, 48
      %v1626 = vpop.permute.xlu0 %1625
      %1629 = vrot.lane.b32.xlu0 %v1536, 64
      %v1630 = vpop.permute.xlu0 %1629
      %1633 = vrot.lane.b32.xlu0 %v1546, 80
      %v1634 = vpop.permute.xlu0 %1633
      %1637 = vrot.lane.b32.xlu0 %v1543, 96
      %v1638 = vpop.permute.xlu0 %1637
      %1641 = vrot.lane.b32.xlu0 %v1547, 112
      %v1642 = vpop.permute.xlu0 %1641
      %1645 = vrot.lane.b32.xlu0 %v1612, 16
      %v1646 = vpop.permute.xlu0 %1645
      %1649 = vrot.lane.b32.xlu0 %v1595, 32
      %v1650 = vpop.permute.xlu0 %1649
      %1653 = vrot.lane.b32.xlu0 %v1613, 48
      %v1654 = vpop.permute.xlu0 %1653
      %1657 = vrot.lane.b32.xlu0 %v1604, 64
      %v1658 = vpop.permute.xlu0 %1657
      %1661 = vrot.lane.b32.xlu0 %v1614, 80
      %v1662 = vpop.permute.xlu0 %1661
      %1665 = vrot.lane.b32.xlu0 %v1611, 96
      %v1666 = vpop.permute.xlu0 %1665
      %1669 = vrot.lane.b32.xlu0 %v1615, 112
      %v1670 = vpop.permute.xlu0 %1669
      %v1672 = vsel %vm401, %v1520, %v1618
      %v1673 = vsel %vm403, %v1672, %v1622
      %v1674 = vsel %vm405, %v1673, %v1626
      %v1675 = vsel %vm407, %v1674, %v1630
      %v1676 = vsel %vm409, %v1675, %v1634
      %v1677 = vsel %vm411, %v1676, %v1638
      %v1678 = vsel %vm413, %v1677, %v1642
      %v1679 = vsel %vm401, %v1588, %v1646
      %v1680 = vsel %vm403, %v1679, %v1650
      %v1681 = vsel %vm405, %v1680, %v1654
      %v1682 = vsel %vm407, %v1681, %v1658
      %v1683 = vsel %vm409, %v1682, %v1662
      %v1684 = vsel %vm411, %v1683, %v1666
      %v1685 = vsel %vm413, %v1684, %v1670
      %v1688 = vrot.slane %v1678, 4
      %v1689 = vrot.slane %v1685, 4
      %1692 = vst [vmem:[#allocation2 + $0x20] sm:$0xf0] %v1688
      %1693 = vst [vmem:[#allocation2 + $0x28] sm:$0xf0] %v1689
      %v1694 = vld [vmem:[%s164 + $0xc] sm:$0xff]
      %v1695 = vld [vmem:[%s164 + $0x14] sm:$0xff]
      %v1696 = vld [vmem:[%s164 + $0x34] sm:$0xff]
      %v1697 = vld [vmem:[%s164 + $0x3c] sm:$0xff]
      %v1698 = vld [vmem:[%s164 + $0x5c] sm:$0xff]
      %v1699 = vld [vmem:[%s164 + $0x64] sm:$0xff]
      %v1700 = vld [vmem:[%s164 + $0x84] sm:$0xff]
      %v1701 = vld [vmem:[%s164 + $0x8c] sm:$0xff]
      %1710 = vrot.lane.b32.xlu0 %v1694, 122
      %v1711 = vpop.permute.xlu0 %1710
      %1712 = vrot.lane.b32.xlu0 %v1695, 122
      %v1713 = vpop.permute.xlu0 %1712
      %1714 = vrot.lane.b32.xlu0 %v1696, 122
      %v1715 = vpop.permute.xlu0 %1714
      %1716 = vrot.lane.b32.xlu0 %v1697, 122
      %v1717 = vpop.permute.xlu0 %1716
      %1718 = vrot.lane.b32.xlu0 %v1698, 122
      %v1719 = vpop.permute.xlu0 %1718
      %1720 = vrot.lane.b32.xlu0 %v1699, 122
      %v1721 = vpop.permute.xlu0 %1720
      %1722 = vrot.lane.b32.xlu0 %v1700, 122
      %v1723 = vpop.permute.xlu0 %1722
      %1724 = vrot.lane.b32.xlu0 %v1701, 122
      %v1725 = vpop.permute.xlu0 %1724
      %v1734 = vcombine.low %v1711, %v1719
      %v1735 = vcombine.high %v1711, %v1719
      %v1737 = vunpack.c.l.s4 1983009808
      %v1738 = vunpack.c.0.s8 %v1737
      %v1739 = vlaneseq
      %v1740 = vshrl.u32 %v1739, 7
      %v1741 = vsub.s32 %v1738, %v1740
      %v1742 = vrot.slane %v1734, %v1741
      %v1744 = vunpack.c.l.s4 1983009808
      %v1745 = vunpack.c.0.s8 %v1744
      %v1746 = vlaneseq
      %v1747 = vshrl.u32 %v1746, 7
      %v1748 = vsub.s32 %v1745, %v1747
      %v1749 = vrot.slane %v1735, %v1748
      %v1750 = vcombine.low %v1715, %v1723
      %v1751 = vcombine.high %v1715, %v1723
      %v1753 = vunpack.c.l.s4 1983009808
      %v1754 = vunpack.c.0.s8 %v1753
      %v1755 = vlaneseq
      %v1756 = vshrl.u32 %v1755, 7
      %v1757 = vsub.s32 %v1754, %v1756
      %v1758 = vrot.slane %v1750, %v1757
      %v1760 = vunpack.c.l.s4 1983009808
      %v1761 = vunpack.c.0.s8 %v1760
      %v1762 = vlaneseq
      %v1763 = vshrl.u32 %v1762, 7
      %v1764 = vsub.s32 %v1761, %v1763
      %v1765 = vrot.slane %v1751, %v1764
      %v1766 = vcombine.low %v1742, %v1758
      %v1767 = vcombine.high %v1742, %v1758
      %v1769 = vunpack.c.l.s4 1934713408
      %v1770 = vunpack.c.0.s8 %v1769
      %v1771 = vlaneseq
      %v1772 = vshrl.u32 %v1771, 7
      %v1773 = vsub.s32 %v1770, %v1772
      %v1774 = vrot.slane %v1766, %v1773
      %v1776 = vunpack.c.l.s4 1934713408
      %v1777 = vunpack.c.0.s8 %v1776
      %v1778 = vlaneseq
      %v1779 = vshrl.u32 %v1778, 7
      %v1780 = vsub.s32 %v1777, %v1779
      %v1781 = vrot.slane %v1767, %v1780
      %v1782 = vcombine.low %v1749, %v1765
      %v1783 = vcombine.high %v1749, %v1765
      %v1785 = vunpack.c.l.s4 1934713408
      %v1786 = vunpack.c.0.s8 %v1785
      %v1787 = vlaneseq
      %v1788 = vshrl.u32 %v1787, 7
      %v1789 = vsub.s32 %v1786, %v1788
      %v1790 = vrot.slane %v1782, %v1789
      %v1792 = vunpack.c.l.s4 1934713408
      %v1793 = vunpack.c.0.s8 %v1792
      %v1794 = vlaneseq
      %v1795 = vshrl.u32 %v1794, 7
      %v1796 = vsub.s32 %v1793, %v1795
      %v1797 = vrot.slane %v1783, %v1796
      %v1798 = vcombine.high %v1774, 0.0
      %v1799 = vcombine.high %v1781, 0.0
      %v1800 = vcombine.high %v1790, 0.0
      %v1801 = vcombine.high %v1797, 0.0
      %v1802 = vcombine.low %v1713, %v1721
      %v1803 = vcombine.high %v1713, %v1721
      %v1805 = vunpack.c.l.s4 1983009808
      %v1806 = vunpack.c.0.s8 %v1805
      %v1807 = vlaneseq
      %v1808 = vshrl.u32 %v1807, 7
      %v1809 = vsub.s32 %v1806, %v1808
      %v1810 = vrot.slane %v1802, %v1809
      %v1812 = vunpack.c.l.s4 1983009808
      %v1813 = vunpack.c.0.s8 %v1812
      %v1814 = vlaneseq
      %v1815 = vshrl.u32 %v1814, 7
      %v1816 = vsub.s32 %v1813, %v1815
      %v1817 = vrot.slane %v1803, %v1816
      %v1818 = vcombine.low %v1717, %v1725
      %v1819 = vcombine.high %v1717, %v1725
      %v1821 = vunpack.c.l.s4 1983009808
      %v1822 = vunpack.c.0.s8 %v1821
      %v1823 = vlaneseq
      %v1824 = vshrl.u32 %v1823, 7
      %v1825 = vsub.s32 %v1822, %v1824
      %v1826 = vrot.slane %v1818, %v1825
      %v1828 = vunpack.c.l.s4 1983009808
      %v1829 = vunpack.c.0.s8 %v1828
      %v1830 = vlaneseq
      %v1831 = vshrl.u32 %v1830, 7
      %v1832 = vsub.s32 %v1829, %v1831
      %v1833 = vrot.slane %v1819, %v1832
      %v1834 = vcombine.low %v1810, %v1826
      %v1835 = vcombine.high %v1810, %v1826
      %v1837 = vunpack.c.l.s4 1934713408
      %v1838 = vunpack.c.0.s8 %v1837
      %v1839 = vlaneseq
      %v1840 = vshrl.u32 %v1839, 7
      %v1841 = vsub.s32 %v1838, %v1840
      %v1842 = vrot.slane %v1834, %v1841
      %v1844 = vunpack.c.l.s4 1934713408
      %v1845 = vunpack.c.0.s8 %v1844
      %v1846 = vlaneseq
      %v1847 = vshrl.u32 %v1846, 7
      %v1848 = vsub.s32 %v1845, %v1847
      %v1849 = vrot.slane %v1835, %v1848
      %v1850 = vcombine.low %v1817, %v1833
      %v1851 = vcombine.high %v1817, %v1833
      %v1853 = vunpack.c.l.s4 1934713408
      %v1854 = vunpack.c.0.s8 %v1853
      %v1855 = vlaneseq
      %v1856 = vshrl.u32 %v1855, 7
      %v1857 = vsub.s32 %v1854, %v1856
      %v1858 = vrot.slane %v1850, %v1857
      %v1860 = vunpack.c.l.s4 1934713408
      %v1861 = vunpack.c.0.s8 %v1860
      %v1862 = vlaneseq
      %v1863 = vshrl.u32 %v1862, 7
      %v1864 = vsub.s32 %v1861, %v1863
      %v1865 = vrot.slane %v1851, %v1864
      %v1866 = vcombine.high %v1842, 0.0
      %v1867 = vcombine.high %v1849, 0.0
      %v1868 = vcombine.high %v1858, 0.0
      %v1869 = vcombine.high %v1865, 0.0
      %1871 = vrot.lane.b32.xlu0 %v1798, 16
      %v1872 = vpop.permute.xlu0 %1871
      %1875 = vrot.lane.b32.xlu0 %v1781, 32
      %v1876 = vpop.permute.xlu0 %1875
      %1879 = vrot.lane.b32.xlu0 %v1799, 48
      %v1880 = vpop.permute.xlu0 %1879
      %1883 = vrot.lane.b32.xlu0 %v1790, 64
      %v1884 = vpop.permute.xlu0 %1883
      %1887 = vrot.lane.b32.xlu0 %v1800, 80
      %v1888 = vpop.permute.xlu0 %1887
      %1891 = vrot.lane.b32.xlu0 %v1797, 96
      %v1892 = vpop.permute.xlu0 %1891
      %1895 = vrot.lane.b32.xlu0 %v1801, 112
      %v1896 = vpop.permute.xlu0 %1895
      %1899 = vrot.lane.b32.xlu0 %v1866, 16
      %v1900 = vpop.permute.xlu0 %1899
      %1903 = vrot.lane.b32.xlu0 %v1849, 32
      %v1904 = vpop.permute.xlu0 %1903
      %1907 = vrot.lane.b32.xlu0 %v1867, 48
      %v1908 = vpop.permute.xlu0 %1907
      %1911 = vrot.lane.b32.xlu0 %v1858, 64
      %v1912 = vpop.permute.xlu0 %1911
      %1915 = vrot.lane.b32.xlu0 %v1868, 80
      %v1916 = vpop.permute.xlu0 %1915
      %1919 = vrot.lane.b32.xlu0 %v1865, 96
      %v1920 = vpop.permute.xlu0 %1919
      %1923 = vrot.lane.b32.xlu0 %v1869, 112
      %v1924 = vpop.permute.xlu0 %1923
      %v1926 = vsel %vm401, %v1774, %v1872
      %v1927 = vsel %vm403, %v1926, %v1876
      %v1928 = vsel %vm405, %v1927, %v1880
      %v1929 = vsel %vm407, %v1928, %v1884
      %v1930 = vsel %vm409, %v1929, %v1888
      %v1931 = vsel %vm411, %v1930, %v1892
      %v1932 = vsel %vm413, %v1931, %v1896
      %v1933 = vsel %vm401, %v1842, %v1900
      %v1934 = vsel %vm403, %v1933, %v1904
      %v1935 = vsel %vm405, %v1934, %v1908
      %v1936 = vsel %vm407, %v1935, %v1912
      %v1937 = vsel %vm409, %v1936, %v1916
      %v1938 = vsel %vm411, %v1937, %v1920
      %v1939 = vsel %vm413, %v1938, %v1924
      %1940 = vst [vmem:[#allocation2 + $0x30] sm:$0xf] %v1932
      %1941 = vst [vmem:[#allocation2 + $0x38] sm:$0xf] %v1939
      %v1942 = vld [vmem:[%s164 + $0xc] sm:$0xff]
      %v1943 = vld [vmem:[%s164 + $0x14] sm:$0xff]
      %v1944 = vld [vmem:[%s164 + $0x34] sm:$0xff]
      %v1945 = vld [vmem:[%s164 + $0x3c] sm:$0xff]
      %v1946 = vld [vmem:[%s164 + $0x5c] sm:$0xff]
      %v1947 = vld [vmem:[%s164 + $0x64] sm:$0xff]
      %v1948 = vld [vmem:[%s164 + $0x84] sm:$0xff]
      %v1949 = vld [vmem:[%s164 + $0x8c] sm:$0xff]
      %1958 = vrot.lane.b32.xlu0 %v1942, 119
      %v1959 = vpop.permute.xlu0 %1958
      %1960 = vrot.lane.b32.xlu0 %v1943, 119
      %v1961 = vpop.permute.xlu0 %1960
      %1962 = vrot.lane.b32.xlu0 %v1944, 119
      %v1963 = vpop.permute.xlu0 %1962
      %1964 = vrot.lane.b32.xlu0 %v1945, 119
      %v1965 = vpop.permute.xlu0 %1964
      %1966 = vrot.lane.b32.xlu0 %v1946, 119
      %v1967 = vpop.permute.xlu0 %1966
      %1968 = vrot.lane.b32.xlu0 %v1947, 119
      %v1969 = vpop.permute.xlu0 %1968
      %1970 = vrot.lane.b32.xlu0 %v1948, 119
      %v1971 = vpop.permute.xlu0 %1970
      %1972 = vrot.lane.b32.xlu0 %v1949, 119
      %v1973 = vpop.permute.xlu0 %1972
      %v1982 = vcombine.low %v1959, %v1967
      %v1983 = vcombine.high %v1959, %v1967
      %v1985 = vunpack.c.l.s4 1983009808
      %v1986 = vunpack.c.0.s8 %v1985
      %v1987 = vlaneseq
      %v1988 = vshrl.u32 %v1987, 7
      %v1989 = vsub.s32 %v1986, %v1988
      %v1990 = vrot.slane %v1982, %v1989
      %v1992 = vunpack.c.l.s4 1983009808
      %v1993 = vunpack.c.0.s8 %v1992
      %v1994 = vlaneseq
      %v1995 = vshrl.u32 %v1994, 7
      %v1996 = vsub.s32 %v1993, %v1995
      %v1997 = vrot.slane %v1983, %v1996
      %v1998 = vcombine.low %v1963, %v1971
      %v1999 = vcombine.high %v1963, %v1971
      %v2001 = vunpack.c.l.s4 1983009808
      %v2002 = vunpack.c.0.s8 %v2001
      %v2003 = vlaneseq
      %v2004 = vshrl.u32 %v2003, 7
      %v2005 = vsub.s32 %v2002, %v2004
      %v2006 = vrot.slane %v1998, %v2005
      %v2008 = vunpack.c.l.s4 1983009808
      %v2009 = vunpack.c.0.s8 %v2008
      %v2010 = vlaneseq
      %v2011 = vshrl.u32 %v2010, 7
      %v2012 = vsub.s32 %v2009, %v2011
      %v2013 = vrot.slane %v1999, %v2012
      %v2014 = vcombine.low %v1990, %v2006
      %v2015 = vcombine.high %v1990, %v2006
      %v2017 = vunpack.c.l.s4 1934713408
      %v2018 = vunpack.c.0.s8 %v2017
      %v2019 = vlaneseq
      %v2020 = vshrl.u32 %v2019, 7
      %v2021 = vsub.s32 %v2018, %v2020
      %v2022 = vrot.slane %v2014, %v2021
      %v2024 = vunpack.c.l.s4 1934713408
      %v2025 = vunpack.c.0.s8 %v2024
      %v2026 = vlaneseq
      %v2027 = vshrl.u32 %v2026, 7
      %v2028 = vsub.s32 %v2025, %v2027
      %v2029 = vrot.slane %v2015, %v2028
      %v2030 = vcombine.low %v1997, %v2013
      %v2031 = vcombine.high %v1997, %v2013
      %v2033 = vunpack.c.l.s4 1934713408
      %v2034 = vunpack.c.0.s8 %v2033
      %v2035 = vlaneseq
      %v2036 = vshrl.u32 %v2035, 7
      %v2037 = vsub.s32 %v2034, %v2036
      %v2038 = vrot.slane %v2030, %v2037
      %v2040 = vunpack.c.l.s4 1934713408
      %v2041 = vunpack.c.0.s8 %v2040
      %v2042 = vlaneseq
      %v2043 = vshrl.u32 %v2042, 7
      %v2044 = vsub.s32 %v2041, %v2043
      %v2045 = vrot.slane %v2031, %v2044
      %v2046 = vcombine.high %v2022, 0.0
      %v2047 = vcombine.high %v2029, 0.0
      %v2048 = vcombine.high %v2038, 0.0
      %v2049 = vcombine.high %v2045, 0.0
      %v2050 = vcombine.low %v1961, %v1969
      %v2051 = vcombine.high %v1961, %v1969
      %v2053 = vunpack.c.l.s4 1983009808
      %v2054 = vunpack.c.0.s8 %v2053
      %v2055 = vlaneseq
      %v2056 = vshrl.u32 %v2055, 7
      %v2057 = vsub.s32 %v2054, %v2056
      %v2058 = vrot.slane %v2050, %v2057
      %v2060 = vunpack.c.l.s4 1983009808
      %v2061 = vunpack.c.0.s8 %v2060
      %v2062 = vlaneseq
      %v2063 = vshrl.u32 %v2062, 7
      %v2064 = vsub.s32 %v2061, %v2063
      %v2065 = vrot.slane %v2051, %v2064
      %v2066 = vcombine.low %v1965, %v1973
      %v2067 = vcombine.high %v1965, %v1973
      %v2069 = vunpack.c.l.s4 1983009808
      %v2070 = vunpack.c.0.s8 %v2069
      %v2071 = vlaneseq
      %v2072 = vshrl.u32 %v2071, 7
      %v2073 = vsub.s32 %v2070, %v2072
      %v2074 = vrot.slane %v2066, %v2073
      %v2076 = vunpack.c.l.s4 1983009808
      %v2077 = vunpack.c.0.s8 %v2076
      %v2078 = vlaneseq
      %v2079 = vshrl.u32 %v2078, 7
      %v2080 = vsub.s32 %v2077, %v2079
      %v2081 = vrot.slane %v2067, %v2080
      %v2082 = vcombine.low %v2058, %v2074
      %v2083 = vcombine.high %v2058, %v2074
      %v2085 = vunpack.c.l.s4 1934713408
      %v2086 = vunpack.c.0.s8 %v2085
      %v2087 = vlaneseq
      %v2088 = vshrl.u32 %v2087, 7
      %v2089 = vsub.s32 %v2086, %v2088
      %v2090 = vrot.slane %v2082, %v2089
      %v2092 = vunpack.c.l.s4 1934713408
      %v2093 = vunpack.c.0.s8 %v2092
      %v2094 = vlaneseq
      %v2095 = vshrl.u32 %v2094, 7
      %v2096 = vsub.s32 %v2093, %v2095
      %v2097 = vrot.slane %v2083, %v2096
      %v2098 = vcombine.low %v2065, %v2081
      %v2099 = vcombine.high %v2065, %v2081
      %v2101 = vunpack.c.l.s4 1934713408
      %v2102 = vunpack.c.0.s8 %v2101
      %v2103 = vlaneseq
      %v2104 = vshrl.u32 %v2103, 7
      %v2105 = vsub.s32 %v2102, %v2104
      %v2106 = vrot.slane %v2098, %v2105
      %v2108 = vunpack.c.l.s4 1934713408
      %v2109 = vunpack.c.0.s8 %v2108
      %v2110 = vlaneseq
      %v2111 = vshrl.u32 %v2110, 7
      %v2112 = vsub.s32 %v2109, %v2111
      %v2113 = vrot.slane %v2099, %v2112
      %v2114 = vcombine.high %v2090, 0.0
      %v2115 = vcombine.high %v2097, 0.0
      %v2116 = vcombine.high %v2106, 0.0
      %v2117 = vcombine.high %v2113, 0.0
      %2119 = vrot.lane.b32.xlu0 %v2046, 16
      %v2120 = vpop.permute.xlu0 %2119
      %2123 = vrot.lane.b32.xlu0 %v2029, 32
      %v2124 = vpop.permute.xlu0 %2123
      %2127 = vrot.lane.b32.xlu0 %v2047, 48
      %v2128 = vpop.permute.xlu0 %2127
      %2131 = vrot.lane.b32.xlu0 %v2038, 64
      %v2132 = vpop.permute.xlu0 %2131
      %2135 = vrot.lane.b32.xlu0 %v2048, 80
      %v2136 = vpop.permute.xlu0 %2135
      %2139 = vrot.lane.b32.xlu0 %v2045, 96
      %v2140 = vpop.permute.xlu0 %2139
      %2143 = vrot.lane.b32.xlu0 %v2049, 112
      %v2144 = vpop.permute.xlu0 %2143
      %2147 = vrot.lane.b32.xlu0 %v2114, 16
      %v2148 = vpop.permute.xlu0 %2147
      %2151 = vrot.lane.b32.xlu0 %v2097, 32
      %v2152 = vpop.permute.xlu0 %2151
      %2155 = vrot.lane.b32.xlu0 %v2115, 48
      %v2156 = vpop.permute.xlu0 %2155
      %2159 = vrot.lane.b32.xlu0 %v2106, 64
      %v2160 = vpop.permute.xlu0 %2159
      %2163 = vrot.lane.b32.xlu0 %v2116, 80
      %v2164 = vpop.permute.xlu0 %2163
      %2167 = vrot.lane.b32.xlu0 %v2113, 96
      %v2168 = vpop.permute.xlu0 %2167
      %2171 = vrot.lane.b32.xlu0 %v2117, 112
      %v2172 = vpop.permute.xlu0 %2171
      %v2174 = vsel %vm401, %v2022, %v2120
      %v2175 = vsel %vm403, %v2174, %v2124
      %v2176 = vsel %vm405, %v2175, %v2128
      %v2177 = vsel %vm407, %v2176, %v2132
      %v2178 = vsel %vm409, %v2177, %v2136
      %v2179 = vsel %vm411, %v2178, %v2140
      %v2180 = vsel %vm413, %v2179, %v2144
      %v2181 = vsel %vm401, %v2090, %v2148
      %v2182 = vsel %vm403, %v2181, %v2152
      %v2183 = vsel %vm405, %v2182, %v2156
      %v2184 = vsel %vm407, %v2183, %v2160
      %v2185 = vsel %vm409, %v2184, %v2164
      %v2186 = vsel %vm411, %v2185, %v2168
      %v2187 = vsel %vm413, %v2186, %v2172
      %v2190 = vrot.slane %v2180, 4
      %v2191 = vrot.slane %v2187, 4
      %2194 = vst [vmem:[#allocation2 + $0x30] sm:$0xf0] %v2190
      %2195 = vst [vmem:[#allocation2 + $0x38] sm:$0xf0] %v2191
      %v2196 = vld [vmem:[%s164 + $0xc] sm:$0xff]
      %v2197 = vld [vmem:[%s164 + $0x14] sm:$0xff]
      %v2198 = vld [vmem:[%s164 + $0x34] sm:$0xff]
      %v2199 = vld [vmem:[%s164 + $0x3c] sm:$0xff]
      %v2200 = vld [vmem:[%s164 + $0x5c] sm:$0xff]
      %v2201 = vld [vmem:[%s164 + $0x64] sm:$0xff]
      %v2202 = vld [vmem:[%s164 + $0x84] sm:$0xff]
      %v2203 = vld [vmem:[%s164 + $0x8c] sm:$0xff]
      %2212 = vrot.lane.b32.xlu0 %v2196, 116
      %v2213 = vpop.permute.xlu0 %2212
      %2214 = vrot.lane.b32.xlu0 %v2197, 116
      %v2215 = vpop.permute.xlu0 %2214
      %2216 = vrot.lane.b32.xlu0 %v2198, 116
      %v2217 = vpop.permute.xlu0 %2216
      %2218 = vrot.lane.b32.xlu0 %v2199, 116
      %v2219 = vpop.permute.xlu0 %2218
      %2220 = vrot.lane.b32.xlu0 %v2200, 116
      %v2221 = vpop.permute.xlu0 %2220
      %2222 = vrot.lane.b32.xlu0 %v2201, 116
      %v2223 = vpop.permute.xlu0 %2222
      %2224 = vrot.lane.b32.xlu0 %v2202, 116
      %v2225 = vpop.permute.xlu0 %2224
      %2226 = vrot.lane.b32.xlu0 %v2203, 116
      %v2227 = vpop.permute.xlu0 %2226
      %v2236 = vcombine.low %v2213, %v2221
      %v2237 = vcombine.high %v2213, %v2221
      %v2239 = vunpack.c.l.s4 1983009808
      %v2240 = vunpack.c.0.s8 %v2239
      %v2241 = vlaneseq
      %v2242 = vshrl.u32 %v2241, 7
      %v2243 = vsub.s32 %v2240, %v2242
      %v2244 = vrot.slane %v2236, %v2243
      %v2246 = vunpack.c.l.s4 1983009808
      %v2247 = vunpack.c.0.s8 %v2246
      %v2248 = vlaneseq
      %v2249 = vshrl.u32 %v2248, 7
      %v2250 = vsub.s32 %v2247, %v2249
      %v2251 = vrot.slane %v2237, %v2250
      %v2252 = vcombine.low %v2217, %v2225
      %v2253 = vcombine.high %v2217, %v2225
      %v2255 = vunpack.c.l.s4 1983009808
      %v2256 = vunpack.c.0.s8 %v2255
      %v2257 = vlaneseq
      %v2258 = vshrl.u32 %v2257, 7
      %v2259 = vsub.s32 %v2256, %v2258
      %v2260 = vrot.slane %v2252, %v2259
      %v2262 = vunpack.c.l.s4 1983009808
      %v2263 = vunpack.c.0.s8 %v2262
      %v2264 = vlaneseq
      %v2265 = vshrl.u32 %v2264, 7
      %v2266 = vsub.s32 %v2263, %v2265
      %v2267 = vrot.slane %v2253, %v2266
      %v2268 = vcombine.low %v2244, %v2260
      %v2269 = vcombine.high %v2244, %v2260
      %v2271 = vunpack.c.l.s4 1934713408
      %v2272 = vunpack.c.0.s8 %v2271
      %v2273 = vlaneseq
      %v2274 = vshrl.u32 %v2273, 7
      %v2275 = vsub.s32 %v2272, %v2274
      %v2276 = vrot.slane %v2268, %v2275
      %v2278 = vunpack.c.l.s4 1934713408
      %v2279 = vunpack.c.0.s8 %v2278
      %v2280 = vlaneseq
      %v2281 = vshrl.u32 %v2280, 7
      %v2282 = vsub.s32 %v2279, %v2281
      %v2283 = vrot.slane %v2269, %v2282
      %v2284 = vcombine.low %v2251, %v2267
      %v2285 = vcombine.high %v2251, %v2267
      %v2287 = vunpack.c.l.s4 1934713408
      %v2288 = vunpack.c.0.s8 %v2287
      %v2289 = vlaneseq
      %v2290 = vshrl.u32 %v2289, 7
      %v2291 = vsub.s32 %v2288, %v2290
      %v2292 = vrot.slane %v2284, %v2291
      %v2294 = vunpack.c.l.s4 1934713408
      %v2295 = vunpack.c.0.s8 %v2294
      %v2296 = vlaneseq
      %v2297 = vshrl.u32 %v2296, 7
      %v2298 = vsub.s32 %v2295, %v2297
      %v2299 = vrot.slane %v2285, %v2298
      %v2300 = vcombine.high %v2276, 0.0
      %v2301 = vcombine.high %v2283, 0.0
      %v2302 = vcombine.high %v2292, 0.0
      %v2303 = vcombine.high %v2299, 0.0
      %v2304 = vcombine.low %v2215, %v2223
      %v2305 = vcombine.high %v2215, %v2223
      %v2307 = vunpack.c.l.s4 1983009808
      %v2308 = vunpack.c.0.s8 %v2307
      %v2309 = vlaneseq
      %v2310 = vshrl.u32 %v2309, 7
      %v2311 = vsub.s32 %v2308, %v2310
      %v2312 = vrot.slane %v2304, %v2311
      %v2314 = vunpack.c.l.s4 1983009808
      %v2315 = vunpack.c.0.s8 %v2314
      %v2316 = vlaneseq
      %v2317 = vshrl.u32 %v2316, 7
      %v2318 = vsub.s32 %v2315, %v2317
      %v2319 = vrot.slane %v2305, %v2318
      %v2320 = vcombine.low %v2219, %v2227
      %v2321 = vcombine.high %v2219, %v2227
      %v2323 = vunpack.c.l.s4 1983009808
      %v2324 = vunpack.c.0.s8 %v2323
      %v2325 = vlaneseq
      %v2326 = vshrl.u32 %v2325, 7
      %v2327 = vsub.s32 %v2324, %v2326
      %v2328 = vrot.slane %v2320, %v2327
      %v2330 = vunpack.c.l.s4 1983009808
      %v2331 = vunpack.c.0.s8 %v2330
      %v2332 = vlaneseq
      %v2333 = vshrl.u32 %v2332, 7
      %v2334 = vsub.s32 %v2331, %v2333
      %v2335 = vrot.slane %v2321, %v2334
      %v2336 = vcombine.low %v2312, %v2328
      %v2337 = vcombine.high %v2312, %v2328
      %v2339 = vunpack.c.l.s4 1934713408
      %v2340 = vunpack.c.0.s8 %v2339
      %v2341 = vlaneseq
      %v2342 = vshrl.u32 %v2341, 7
      %v2343 = vsub.s32 %v2340, %v2342
      %v2344 = vrot.slane %v2336, %v2343
      %v2346 = vunpack.c.l.s4 1934713408
      %v2347 = vunpack.c.0.s8 %v2346
      %v2348 = vlaneseq
      %v2349 = vshrl.u32 %v2348, 7
      %v2350 = vsub.s32 %v2347, %v2349
      %v2351 = vrot.slane %v2337, %v2350
      %v2352 = vcombine.low %v2319, %v2335
      %v2353 = vcombine.high %v2319, %v2335
      %v2355 = vunpack.c.l.s4 1934713408
      %v2356 = vunpack.c.0.s8 %v2355
      %v2357 = vlaneseq
      %v2358 = vshrl.u32 %v2357, 7
      %v2359 = vsub.s32 %v2356, %v2358
      %v2360 = vrot.slane %v2352, %v2359
      %v2362 = vunpack.c.l.s4 1934713408
      %v2363 = vunpack.c.0.s8 %v2362
      %v2364 = vlaneseq
      %v2365 = vshrl.u32 %v2364, 7
      %v2366 = vsub.s32 %v2363, %v2365
      %v2367 = vrot.slane %v2353, %v2366
      %v2368 = vcombine.high %v2344, 0.0
      %v2369 = vcombine.high %v2351, 0.0
      %v2370 = vcombine.high %v2360, 0.0
      %v2371 = vcombine.high %v2367, 0.0
      %2373 = vrot.lane.b32.xlu0 %v2300, 16
      %v2374 = vpop.permute.xlu0 %2373
      %2377 = vrot.lane.b32.xlu0 %v2283, 32
      %v2378 = vpop.permute.xlu0 %2377
      %2381 = vrot.lane.b32.xlu0 %v2301, 48
      %v2382 = vpop.permute.xlu0 %2381
      %2385 = vrot.lane.b32.xlu0 %v2292, 64
      %v2386 = vpop.permute.xlu0 %2385
      %2389 = vrot.lane.b32.xlu0 %v2302, 80
      %v2390 = vpop.permute.xlu0 %2389
      %2393 = vrot.lane.b32.xlu0 %v2299, 96
      %v2394 = vpop.permute.xlu0 %2393
      %2397 = vrot.lane.b32.xlu0 %v2303, 112
      %v2398 = vpop.permute.xlu0 %2397
      %2401 = vrot.lane.b32.xlu0 %v2368, 16
      %v2402 = vpop.permute.xlu0 %2401
      %2405 = vrot.lane.b32.xlu0 %v2351, 32
      %v2406 = vpop.permute.xlu0 %2405
      %2409 = vrot.lane.b32.xlu0 %v2369, 48
      %v2410 = vpop.permute.xlu0 %2409
      %2413 = vrot.lane.b32.xlu0 %v2360, 64
      %v2414 = vpop.permute.xlu0 %2413
      %2417 = vrot.lane.b32.xlu0 %v2370, 80
      %v2418 = vpop.permute.xlu0 %2417
      %2421 = vrot.lane.b32.xlu0 %v2367, 96
      %v2422 = vpop.permute.xlu0 %2421
      %2425 = vrot.lane.b32.xlu0 %v2371, 112
      %v2426 = vpop.permute.xlu0 %2425
      %v2428 = vsel %vm401, %v2276, %v2374
      %v2429 = vsel %vm403, %v2428, %v2378
      %v2430 = vsel %vm405, %v2429, %v2382
      %v2431 = vsel %vm407, %v2430, %v2386
      %v2432 = vsel %vm409, %v2431, %v2390
      %v2433 = vsel %vm411, %v2432, %v2394
      %v2434 = vsel %vm413, %v2433, %v2398
      %v2435 = vsel %vm401, %v2344, %v2402
      %v2436 = vsel %vm403, %v2435, %v2406
      %v2437 = vsel %vm405, %v2436, %v2410
      %v2438 = vsel %vm407, %v2437, %v2414
      %v2439 = vsel %vm409, %v2438, %v2418
      %v2440 = vsel %vm411, %v2439, %v2422
      %v2441 = vsel %vm413, %v2440, %v2426
      %2442 = vst [vmem:[#allocation2 + $0x40] sm:$0xf] %v2434
      %2443 = vst [vmem:[#allocation2 + $0x48] sm:$0xf] %v2441
      %v2444 = vld [vmem:[%s164 + $0x4] sm:$0xff]
      %v2445 = vld [vmem:[%s164 + $0xc] sm:$0xff]
      %v2446 = vld [vmem:[%s164 + $0x2c] sm:$0xff]
      %v2447 = vld [vmem:[%s164 + $0x34] sm:$0xff]
      %v2448 = vld [vmem:[%s164 + $0x54] sm:$0xff]
      %v2449 = vld [vmem:[%s164 + $0x5c] sm:$0xff]
      %v2450 = vld [vmem:[%s164 + $0x7c] sm:$0xff]
      %v2451 = vld [vmem:[%s164 + $0x84] sm:$0xff]
      %2460 = vrot.lane.b32.xlu0 %v2444, 124
      %v2461 = vpop.permute.xlu0 %2460
      %2462 = vrot.lane.b32.xlu0 %v2445, 124
      %v2463 = vpop.permute.xlu0 %2462
      %2464 = vrot.lane.b32.xlu0 %v2446, 124
      %v2465 = vpop.permute.xlu0 %2464
      %2466 = vrot.lane.b32.xlu0 %v2447, 124
      %v2467 = vpop.permute.xlu0 %2466
      %2468 = vrot.lane.b32.xlu0 %v2448, 124
      %v2469 = vpop.permute.xlu0 %2468
      %2470 = vrot.lane.b32.xlu0 %v2449, 124
      %v2471 = vpop.permute.xlu0 %2470
      %2472 = vrot.lane.b32.xlu0 %v2450, 124
      %v2473 = vpop.permute.xlu0 %2472
      %2474 = vrot.lane.b32.xlu0 %v2451, 124
      %v2475 = vpop.permute.xlu0 %2474
      %v2484 = vcombine.low %v2461, %v2469
      %v2485 = vcombine.high %v2461, %v2469
      %v2487 = vunpack.c.l.s4 1983009808
      %v2488 = vunpack.c.0.s8 %v2487
      %v2489 = vlaneseq
      %v2490 = vshrl.u32 %v2489, 7
      %v2491 = vsub.s32 %v2488, %v2490
      %v2492 = vrot.slane %v2484, %v2491
      %v2494 = vunpack.c.l.s4 1983009808
      %v2495 = vunpack.c.0.s8 %v2494
      %v2496 = vlaneseq
      %v2497 = vshrl.u32 %v2496, 7
      %v2498 = vsub.s32 %v2495, %v2497
      %v2499 = vrot.slane %v2485, %v2498
      %v2500 = vcombine.low %v2465, %v2473
      %v2501 = vcombine.high %v2465, %v2473
      %v2503 = vunpack.c.l.s4 1983009808
      %v2504 = vunpack.c.0.s8 %v2503
      %v2505 = vlaneseq
      %v2506 = vshrl.u32 %v2505, 7
      %v2507 = vsub.s32 %v2504, %v2506
      %v2508 = vrot.slane %v2500, %v2507
      %v2510 = vunpack.c.l.s4 1983009808
      %v2511 = vunpack.c.0.s8 %v2510
      %v2512 = vlaneseq
      %v2513 = vshrl.u32 %v2512, 7
      %v2514 = vsub.s32 %v2511, %v2513
      %v2515 = vrot.slane %v2501, %v2514
      %v2516 = vcombine.low %v2492, %v2508
      %v2517 = vcombine.high %v2492, %v2508
      %v2519 = vunpack.c.l.s4 1934713408
      %v2520 = vunpack.c.0.s8 %v2519
      %v2521 = vlaneseq
      %v2522 = vshrl.u32 %v2521, 7
      %v2523 = vsub.s32 %v2520, %v2522
      %v2524 = vrot.slane %v2516, %v2523
      %v2526 = vunpack.c.l.s4 1934713408
      %v2527 = vunpack.c.0.s8 %v2526
      %v2528 = vlaneseq
      %v2529 = vshrl.u32 %v2528, 7
      %v2530 = vsub.s32 %v2527, %v2529
      %v2531 = vrot.slane %v2517, %v2530
      %v2532 = vcombine.low %v2499, %v2515
      %v2533 = vcombine.high %v2499, %v2515
      %v2535 = vunpack.c.l.s4 1934713408
      %v2536 = vunpack.c.0.s8 %v2535
      %v2537 = vlaneseq
      %v2538 = vshrl.u32 %v2537, 7
      %v2539 = vsub.s32 %v2536, %v2538
      %v2540 = vrot.slane %v2532, %v2539
      %v2542 = vunpack.c.l.s4 1934713408
      %v2543 = vunpack.c.0.s8 %v2542
      %v2544 = vlaneseq
      %v2545 = vshrl.u32 %v2544, 7
      %v2546 = vsub.s32 %v2543, %v2545
      %v2547 = vrot.slane %v2533, %v2546
      %v2548 = vcombine.high %v2524, 0.0
      %v2549 = vcombine.high %v2531, 0.0
      %v2550 = vcombine.high %v2540, 0.0
      %v2551 = vcombine.high %v2547, 0.0
      %v2552 = vcombine.low %v2463, %v2471
      %v2553 = vcombine.high %v2463, %v2471
      %v2555 = vunpack.c.l.s4 1983009808
      %v2556 = vunpack.c.0.s8 %v2555
      %v2557 = vlaneseq
      %v2558 = vshrl.u32 %v2557, 7
      %v2559 = vsub.s32 %v2556, %v2558
      %v2560 = vrot.slane %v2552, %v2559
      %v2562 = vunpack.c.l.s4 1983009808
      %v2563 = vunpack.c.0.s8 %v2562
      %v2564 = vlaneseq
      %v2565 = vshrl.u32 %v2564, 7
      %v2566 = vsub.s32 %v2563, %v2565
      %v2567 = vrot.slane %v2553, %v2566
      %v2568 = vcombine.low %v2467, %v2475
      %v2569 = vcombine.high %v2467, %v2475
      %v2571 = vunpack.c.l.s4 1983009808
      %v2572 = vunpack.c.0.s8 %v2571
      %v2573 = vlaneseq
      %v2574 = vshrl.u32 %v2573, 7
      %v2575 = vsub.s32 %v2572, %v2574
      %v2576 = vrot.slane %v2568, %v2575
      %v2578 = vunpack.c.l.s4 1983009808
      %v2579 = vunpack.c.0.s8 %v2578
      %v2580 = vlaneseq
      %v2581 = vshrl.u32 %v2580, 7
      %v2582 = vsub.s32 %v2579, %v2581
      %v2583 = vrot.slane %v2569, %v2582
      %v2584 = vcombine.low %v2560, %v2576
      %v2585 = vcombine.high %v2560, %v2576
      %v2587 = vunpack.c.l.s4 1934713408
      %v2588 = vunpack.c.0.s8 %v2587
      %v2589 = vlaneseq
      %v2590 = vshrl.u32 %v2589, 7
      %v2591 = vsub.s32 %v2588, %v2590
      %v2592 = vrot.slane %v2584, %v2591
      %v2594 = vunpack.c.l.s4 1934713408
      %v2595 = vunpack.c.0.s8 %v2594
      %v2596 = vlaneseq
      %v2597 = vshrl.u32 %v2596, 7
      %v2598 = vsub.s32 %v2595, %v2597
      %v2599 = vrot.slane %v2585, %v2598
      %v2600 = vcombine.low %v2567, %v2583
      %v2601 = vcombine.high %v2567, %v2583
      %v2603 = vunpack.c.l.s4 1934713408
      %v2604 = vunpack.c.0.s8 %v2603
      %v2605 = vlaneseq
      %v2606 = vshrl.u32 %v2605, 7
      %v2607 = vsub.s32 %v2604, %v2606
      %v2608 = vrot.slane %v2600, %v2607
      %v2610 = vunpack.c.l.s4 1934713408
      %v2611 = vunpack.c.0.s8 %v2610
      %v2612 = vlaneseq
      %v2613 = vshrl.u32 %v2612, 7
      %v2614 = vsub.s32 %v2611, %v2613
      %v2615 = vrot.slane %v2601, %v2614
      %v2616 = vcombine.high %v2592, 0.0
      %v2617 = vcombine.high %v2599, 0.0
      %v2618 = vcombine.high %v2608, 0.0
      %v2619 = vcombine.high %v2615, 0.0
      %2621 = vrot.lane.b32.xlu0 %v2548, 16
      %v2622 = vpop.permute.xlu0 %2621
      %2625 = vrot.lane.b32.xlu0 %v2531, 32
      %v2626 = vpop.permute.xlu0 %2625
      %2629 = vrot.lane.b32.xlu0 %v2549, 48
      %v2630 = vpop.permute.xlu0 %2629
      %2633 = vrot.lane.b32.xlu0 %v2540, 64
      %v2634 = vpop.permute.xlu0 %2633
      %2637 = vrot.lane.b32.xlu0 %v2550, 80
      %v2638 = vpop.permute.xlu0 %2637
      %2641 = vrot.lane.b32.xlu0 %v2547, 96
      %v2642 = vpop.permute.xlu0 %2641
      %2645 = vrot.lane.b32.xlu0 %v2551, 112
      %v2646 = vpop.permute.xlu0 %2645
      %2649 = vrot.lane.b32.xlu0 %v2616, 16
      %v2650 = vpop.permute.xlu0 %2649
      %2653 = vrot.lane.b32.xlu0 %v2599, 32
      %v2654 = vpop.permute.xlu0 %2653
      %2657 = vrot.lane.b32.xlu0 %v2617, 48
      %v2658 = vpop.permute.xlu0 %2657
      %2661 = vrot.lane.b32.xlu0 %v2608, 64
      %v2662 = vpop.permute.xlu0 %2661
      %2665 = vrot.lane.b32.xlu0 %v2618, 80
      %v2666 = vpop.permute.xlu0 %2665
      %2669 = vrot.lane.b32.xlu0 %v2615, 96
      %v2670 = vpop.permute.xlu0 %2669
      %2673 = vrot.lane.b32.xlu0 %v2619, 112
      %v2674 = vpop.permute.xlu0 %2673
      %v2676 = vsel %vm401, %v2524, %v2622
      %v2677 = vsel %vm403, %v2676, %v2626
      %v2678 = vsel %vm405, %v2677, %v2630
      %v2679 = vsel %vm407, %v2678, %v2634
      %v2680 = vsel %vm409, %v2679, %v2638
      %v2681 = vsel %vm411, %v2680, %v2642
      %v2682 = vsel %vm413, %v2681, %v2646
      %v2683 = vsel %vm401, %v2592, %v2650
      %v2684 = vsel %vm403, %v2683, %v2654
      %v2685 = vsel %vm405, %v2684, %v2658
      %v2686 = vsel %vm407, %v2685, %v2662
      %v2687 = vsel %vm409, %v2686, %v2666
      %v2688 = vsel %vm411, %v2687, %v2670
      %v2689 = vsel %vm413, %v2688, %v2674
      %v2692 = vrot.slane %v2682, 4
      %v2693 = vrot.slane %v2689, 4
      %2696 = vst [vmem:[#allocation2 + $0x40] sm:$0xf0] %v2692
      %2697 = vst [vmem:[#allocation2 + $0x48] sm:$0xf0] %v2693
      %v2698 = vld [vmem:[%s164 + $0x4] sm:$0xff]
      %v2699 = vld [vmem:[%s164 + $0xc] sm:$0xff]
      %v2700 = vld [vmem:[%s164 + $0x2c] sm:$0xff]
      %v2701 = vld [vmem:[%s164 + $0x34] sm:$0xff]
      %v2702 = vld [vmem:[%s164 + $0x54] sm:$0xff]
      %v2703 = vld [vmem:[%s164 + $0x5c] sm:$0xff]
      %v2704 = vld [vmem:[%s164 + $0x7c] sm:$0xff]
      %v2705 = vld [vmem:[%s164 + $0x84] sm:$0xff]
      %2714 = vrot.lane.b32.xlu0 %v2698, 119
      %v2715 = vpop.permute.xlu0 %2714
      %2716 = vrot.lane.b32.xlu0 %v2699, 119
      %v2717 = vpop.permute.xlu0 %2716
      %2718 = vrot.lane.b32.xlu0 %v2700, 119
      %v2719 = vpop.permute.xlu0 %2718
      %2720 = vrot.lane.b32.xlu0 %v2701, 119
      %v2721 = vpop.permute.xlu0 %2720
      %2722 = vrot.lane.b32.xlu0 %v2702, 119
      %v2723 = vpop.permute.xlu0 %2722
      %2724 = vrot.lane.b32.xlu0 %v2703, 119
      %v2725 = vpop.permute.xlu0 %2724
      %2726 = vrot.lane.b32.xlu0 %v2704, 119
      %v2727 = vpop.permute.xlu0 %2726
      %2728 = vrot.lane.b32.xlu0 %v2705, 119
      %v2729 = vpop.permute.xlu0 %2728
      %v2738 = vcombine.low %v2715, %v2723
      %v2739 = vcombine.high %v2715, %v2723
      %v2741 = vunpack.c.l.s4 1983009808
      %v2742 = vunpack.c.0.s8 %v2741
      %v2743 = vlaneseq
      %v2744 = vshrl.u32 %v2743, 7
      %v2745 = vsub.s32 %v2742, %v2744
      %v2746 = vrot.slane %v2738, %v2745
      %v2748 = vunpack.c.l.s4 1983009808
      %v2749 = vunpack.c.0.s8 %v2748
      %v2750 = vlaneseq
      %v2751 = vshrl.u32 %v2750, 7
      %v2752 = vsub.s32 %v2749, %v2751
      %v2753 = vrot.slane %v2739, %v2752
      %v2754 = vcombine.low %v2719, %v2727
      %v2755 = vcombine.high %v2719, %v2727
      %v2757 = vunpack.c.l.s4 1983009808
      %v2758 = vunpack.c.0.s8 %v2757
      %v2759 = vlaneseq
      %v2760 = vshrl.u32 %v2759, 7
      %v2761 = vsub.s32 %v2758, %v2760
      %v2762 = vrot.slane %v2754, %v2761
      %v2764 = vunpack.c.l.s4 1983009808
      %v2765 = vunpack.c.0.s8 %v2764
      %v2766 = vlaneseq
      %v2767 = vshrl.u32 %v2766, 7
      %v2768 = vsub.s32 %v2765, %v2767
      %v2769 = vrot.slane %v2755, %v2768
      %v2770 = vcombine.low %v2746, %v2762
      %v2771 = vcombine.high %v2746, %v2762
      %v2773 = vunpack.c.l.s4 1934713408
      %v2774 = vunpack.c.0.s8 %v2773
      %v2775 = vlaneseq
      %v2776 = vshrl.u32 %v2775, 7
      %v2777 = vsub.s32 %v2774, %v2776
      %v2778 = vrot.slane %v2770, %v2777
      %v2780 = vunpack.c.l.s4 1934713408
      %v2781 = vunpack.c.0.s8 %v2780
      %v2782 = vlaneseq
      %v2783 = vshrl.u32 %v2782, 7
      %v2784 = vsub.s32 %v2781, %v2783
      %v2785 = vrot.slane %v2771, %v2784
      %v2786 = vcombine.low %v2753, %v2769
      %v2787 = vcombine.high %v2753, %v2769
      %v2789 = vunpack.c.l.s4 1934713408
      %v2790 = vunpack.c.0.s8 %v2789
      %v2791 = vlaneseq
      %v2792 = vshrl.u32 %v2791, 7
      %v2793 = vsub.s32 %v2790, %v2792
      %v2794 = vrot.slane %v2786, %v2793
      %v2796 = vunpack.c.l.s4 1934713408
      %v2797 = vunpack.c.0.s8 %v2796
      %v2798 = vlaneseq
      %v2799 = vshrl.u32 %v2798, 7
      %v2800 = vsub.s32 %v2797, %v2799
      %v2801 = vrot.slane %v2787, %v2800
      %v2802 = vcombine.high %v2778, 0.0
      %v2803 = vcombine.high %v2785, 0.0
      %v2804 = vcombine.high %v2794, 0.0
      %v2805 = vcombine.high %v2801, 0.0
      %v2806 = vcombine.low %v2717, %v2725
      %v2807 = vcombine.high %v2717, %v2725
      %v2809 = vunpack.c.l.s4 1983009808
      %v2810 = vunpack.c.0.s8 %v2809
      %v2811 = vlaneseq
      %v2812 = vshrl.u32 %v2811, 7
      %v2813 = vsub.s32 %v2810, %v2812
      %v2814 = vrot.slane %v2806, %v2813
      %v2816 = vunpack.c.l.s4 1983009808
      %v2817 = vunpack.c.0.s8 %v2816
      %v2818 = vlaneseq
      %v2819 = vshrl.u32 %v2818, 7
      %v2820 = vsub.s32 %v2817, %v2819
      %v2821 = vrot.slane %v2807, %v2820
      %v2822 = vcombine.low %v2721, %v2729
      %v2823 = vcombine.high %v2721, %v2729
      %v2825 = vunpack.c.l.s4 1983009808
      %v2826 = vunpack.c.0.s8 %v2825
      %v2827 = vlaneseq
      %v2828 = vshrl.u32 %v2827, 7
      %v2829 = vsub.s32 %v2826, %v2828
      %v2830 = vrot.slane %v2822, %v2829
      %v2832 = vunpack.c.l.s4 1983009808
      %v2833 = vunpack.c.0.s8 %v2832
      %v2834 = vlaneseq
      %v2835 = vshrl.u32 %v2834, 7
      %v2836 = vsub.s32 %v2833, %v2835
      %v2837 = vrot.slane %v2823, %v2836
      %v2838 = vcombine.low %v2814, %v2830
      %v2839 = vcombine.high %v2814, %v2830
      %v2841 = vunpack.c.l.s4 1934713408
      %v2842 = vunpack.c.0.s8 %v2841
      %v2843 = vlaneseq
      %v2844 = vshrl.u32 %v2843, 7
      %v2845 = vsub.s32 %v2842, %v2844
      %v2846 = vrot.slane %v2838, %v2845
      %v2848 = vunpack.c.l.s4 1934713408
      %v2849 = vunpack.c.0.s8 %v2848
      %v2850 = vlaneseq
      %v2851 = vshrl.u32 %v2850, 7
      %v2852 = vsub.s32 %v2849, %v2851
      %v2853 = vrot.slane %v2839, %v2852
      %v2854 = vcombine.low %v2821, %v2837
      %v2855 = vcombine.high %v2821, %v2837
      %v2857 = vunpack.c.l.s4 1934713408
      %v2858 = vunpack.c.0.s8 %v2857
      %v2859 = vlaneseq
      %v2860 = vshrl.u32 %v2859, 7
      %v2861 = vsub.s32 %v2858, %v2860
      %v2862 = vrot.slane %v2854, %v2861
      %v2864 = vunpack.c.l.s4 1934713408
      %v2865 = vunpack.c.0.s8 %v2864
      %v2866 = vlaneseq
      %v2867 = vshrl.u32 %v2866, 7
      %v2868 = vsub.s32 %v2865, %v2867
      %v2869 = vrot.slane %v2855, %v2868
      %v2870 = vcombine.high %v2846, 0.0
      %v2871 = vcombine.high %v2853, 0.0
      %v2872 = vcombine.high %v2862, 0.0
      %v2873 = vcombine.high %v2869, 0.0
      %2875 = vrot.lane.b32.xlu0 %v2802, 16
      %v2876 = vpop.permute.xlu0 %2875
      %2879 = vrot.lane.b32.xlu0 %v2785, 32
      %v2880 = vpop.permute.xlu0 %2879
      %2883 = vrot.lane.b32.xlu0 %v2803, 48
      %v2884 = vpop.permute.xlu0 %2883
      %2887 = vrot.lane.b32.xlu0 %v2794, 64
      %v2888 = vpop.permute.xlu0 %2887
      %2891 = vrot.lane.b32.xlu0 %v2804, 80
      %v2892 = vpop.permute.xlu0 %2891
      %2895 = vrot.lane.b32.xlu0 %v2801, 96
      %v2896 = vpop.permute.xlu0 %2895
      %2899 = vrot.lane.b32.xlu0 %v2805, 112
      %v2900 = vpop.permute.xlu0 %2899
      %2903 = vrot.lane.b32.xlu0 %v2870, 16
      %v2904 = vpop.permute.xlu0 %2903
      %2907 = vrot.lane.b32.xlu0 %v2853, 32
      %v2908 = vpop.permute.xlu0 %2907
      %2911 = vrot.lane.b32.xlu0 %v2871, 48
      %v2912 = vpop.permute.xlu0 %2911
      %2915 = vrot.lane.b32.xlu0 %v2862, 64
      %v2916 = vpop.permute.xlu0 %2915
      %2919 = vrot.lane.b32.xlu0 %v2872, 80
      %v2920 = vpop.permute.xlu0 %2919
      %2923 = vrot.lane.b32.xlu0 %v2869, 96
      %v2924 = vpop.permute.xlu0 %2923
      %2927 = vrot.lane.b32.xlu0 %v2873, 112
      %v2928 = vpop.permute.xlu0 %2927
      %v2930 = vsel %vm401, %v2778, %v2876
      %v2931 = vsel %vm403, %v2930, %v2880
      %v2932 = vsel %vm405, %v2931, %v2884
      %v2933 = vsel %vm407, %v2932, %v2888
      %v2934 = vsel %vm409, %v2933, %v2892
      %v2935 = vsel %vm411, %v2934, %v2896
      %v2936 = vsel %vm413, %v2935, %v2900
      %v2937 = vsel %vm401, %v2846, %v2904
      %v2938 = vsel %vm403, %v2937, %v2908
      %v2939 = vsel %vm405, %v2938, %v2912
      %v2940 = vsel %vm407, %v2939, %v2916
      %v2941 = vsel %vm409, %v2940, %v2920
      %v2942 = vsel %vm411, %v2941, %v2924
      %v2943 = vsel %vm413, %v2942, %v2928
      %2944 = vst [vmem:[#allocation2 + $0x50] sm:$0xf] %v2936
      %2945 = vst [vmem:[#allocation2 + $0x58] sm:$0xf] %v2943
      %v2946 = vld [vmem:[%s164 + $0x4] sm:$0xff]
      %v2947 = vld [vmem:[%s164 + $0xc] sm:$0xff]
      %v2948 = vld [vmem:[%s164 + $0x2c] sm:$0xff]
      %v2949 = vld [vmem:[%s164 + $0x34] sm:$0xff]
      %v2950 = vld [vmem:[%s164 + $0x54] sm:$0xff]
      %v2951 = vld [vmem:[%s164 + $0x5c] sm:$0xff]
      %v2952 = vld [vmem:[%s164 + $0x7c] sm:$0xff]
      %v2953 = vld [vmem:[%s164 + $0x84] sm:$0xff]
      %2962 = vrot.lane.b32.xlu0 %v2946, 114
      %v2963 = vpop.permute.xlu0 %2962
      %2964 = vrot.lane.b32.xlu0 %v2947, 114
      %v2965 = vpop.permute.xlu0 %2964
      %2966 = vrot.lane.b32.xlu0 %v2948, 114
      %v2967 = vpop.permute.xlu0 %2966
      %2968 = vrot.lane.b32.xlu0 %v2949, 114
      %v2969 = vpop.permute.xlu0 %2968
      %2970 = vrot.lane.b32.xlu0 %v2950, 114
      %v2971 = vpop.permute.xlu0 %2970
      %2972 = vrot.lane.b32.xlu0 %v2951, 114
      %v2973 = vpop.permute.xlu0 %2972
      %2974 = vrot.lane.b32.xlu0 %v2952, 114
      %v2975 = vpop.permute.xlu0 %2974
      %2976 = vrot.lane.b32.xlu0 %v2953, 114
      %v2977 = vpop.permute.xlu0 %2976
      %v2986 = vcombine.low %v2963, %v2971
      %v2987 = vcombine.high %v2963, %v2971
      %v2989 = vunpack.c.l.s4 1983009808
      %v2990 = vunpack.c.0.s8 %v2989
      %v2991 = vlaneseq
      %v2992 = vshrl.u32 %v2991, 7
      %v2993 = vsub.s32 %v2990, %v2992
      %v2994 = vrot.slane %v2986, %v2993
      %v2996 = vunpack.c.l.s4 1983009808
      %v2997 = vunpack.c.0.s8 %v2996
      %v2998 = vlaneseq
      %v2999 = vshrl.u32 %v2998, 7
      %v3000 = vsub.s32 %v2997, %v2999
      %v3001 = vrot.slane %v2987, %v3000
      %v3002 = vcombine.low %v2967, %v2975
      %v3003 = vcombine.high %v2967, %v2975
      %v3005 = vunpack.c.l.s4 1983009808
      %v3006 = vunpack.c.0.s8 %v3005
      %v3007 = vlaneseq
      %v3008 = vshrl.u32 %v3007, 7
      %v3009 = vsub.s32 %v3006, %v3008
      %v3010 = vrot.slane %v3002, %v3009
      %v3012 = vunpack.c.l.s4 1983009808
      %v3013 = vunpack.c.0.s8 %v3012
      %v3014 = vlaneseq
      %v3015 = vshrl.u32 %v3014, 7
      %v3016 = vsub.s32 %v3013, %v3015
      %v3017 = vrot.slane %v3003, %v3016
      %v3018 = vcombine.low %v2994, %v3010
      %v3019 = vcombine.high %v2994, %v3010
      %v3021 = vunpack.c.l.s4 1934713408
      %v3022 = vunpack.c.0.s8 %v3021
      %v3023 = vlaneseq
      %v3024 = vshrl.u32 %v3023, 7
      %v3025 = vsub.s32 %v3022, %v3024
      %v3026 = vrot.slane %v3018, %v3025
      %v3028 = vunpack.c.l.s4 1934713408
      %v3029 = vunpack.c.0.s8 %v3028
      %v3030 = vlaneseq
      %v3031 = vshrl.u32 %v3030, 7
      %v3032 = vsub.s32 %v3029, %v3031
      %v3033 = vrot.slane %v3019, %v3032
      %v3034 = vcombine.low %v3001, %v3017
      %v3035 = vcombine.high %v3001, %v3017
      %v3037 = vunpack.c.l.s4 1934713408
      %v3038 = vunpack.c.0.s8 %v3037
      %v3039 = vlaneseq
      %v3040 = vshrl.u32 %v3039, 7
      %v3041 = vsub.s32 %v3038, %v3040
      %v3042 = vrot.slane %v3034, %v3041
      %v3044 = vunpack.c.l.s4 1934713408
      %v3045 = vunpack.c.0.s8 %v3044
      %v3046 = vlaneseq
      %v3047 = vshrl.u32 %v3046, 7
      %v3048 = vsub.s32 %v3045, %v3047
      %v3049 = vrot.slane %v3035, %v3048
      %v3050 = vcombine.high %v3026, 0.0
      %v3051 = vcombine.high %v3033, 0.0
      %v3052 = vcombine.high %v3042, 0.0
      %v3053 = vcombine.high %v3049, 0.0
      %v3054 = vcombine.low %v2965, %v2973
      %v3055 = vcombine.high %v2965, %v2973
      %v3057 = vunpack.c.l.s4 1983009808
      %v3058 = vunpack.c.0.s8 %v3057
      %v3059 = vlaneseq
      %v3060 = vshrl.u32 %v3059, 7
      %v3061 = vsub.s32 %v3058, %v3060
      %v3062 = vrot.slane %v3054, %v3061
      %v3064 = vunpack.c.l.s4 1983009808
      %v3065 = vunpack.c.0.s8 %v3064
      %v3066 = vlaneseq
      %v3067 = vshrl.u32 %v3066, 7
      %v3068 = vsub.s32 %v3065, %v3067
      %v3069 = vrot.slane %v3055, %v3068
      %v3070 = vcombine.low %v2969, %v2977
      %v3071 = vcombine.high %v2969, %v2977
      %v3073 = vunpack.c.l.s4 1983009808
      %v3074 = vunpack.c.0.s8 %v3073
      %v3075 = vlaneseq
      %v3076 = vshrl.u32 %v3075, 7
      %v3077 = vsub.s32 %v3074, %v3076
      %v3078 = vrot.slane %v3070, %v3077
      %v3080 = vunpack.c.l.s4 1983009808
      %v3081 = vunpack.c.0.s8 %v3080
      %v3082 = vlaneseq
      %v3083 = vshrl.u32 %v3082, 7
      %v3084 = vsub.s32 %v3081, %v3083
      %v3085 = vrot.slane %v3071, %v3084
      %v3086 = vcombine.low %v3062, %v3078
      %v3087 = vcombine.high %v3062, %v3078
      %v3089 = vunpack.c.l.s4 1934713408
      %v3090 = vunpack.c.0.s8 %v3089
      %v3091 = vlaneseq
      %v3092 = vshrl.u32 %v3091, 7
      %v3093 = vsub.s32 %v3090, %v3092
      %v3094 = vrot.slane %v3086, %v3093
      %v3096 = vunpack.c.l.s4 1934713408
      %v3097 = vunpack.c.0.s8 %v3096
      %v3098 = vlaneseq
      %v3099 = vshrl.u32 %v3098, 7
      %v3100 = vsub.s32 %v3097, %v3099
      %v3101 = vrot.slane %v3087, %v3100
      %v3102 = vcombine.low %v3069, %v3085
      %v3103 = vcombine.high %v3069, %v3085
      %v3105 = vunpack.c.l.s4 1934713408
      %v3106 = vunpack.c.0.s8 %v3105
      %v3107 = vlaneseq
      %v3108 = vshrl.u32 %v3107, 7
      %v3109 = vsub.s32 %v3106, %v3108
      %v3110 = vrot.slane %v3102, %v3109
      %v3112 = vunpack.c.l.s4 1934713408
      %v3113 = vunpack.c.0.s8 %v3112
      %v3114 = vlaneseq
      %v3115 = vshrl.u32 %v3114, 7
      %v3116 = vsub.s32 %v3113, %v3115
      %v3117 = vrot.slane %v3103, %v3116
      %v3118 = vcombine.high %v3094, 0.0
      %v3119 = vcombine.high %v3101, 0.0
      %v3120 = vcombine.high %v3110, 0.0
      %v3121 = vcombine.high %v3117, 0.0
      %3123 = vrot.lane.b32.xlu0 %v3050, 16
      %v3124 = vpop.permute.xlu0 %3123
      %3127 = vrot.lane.b32.xlu0 %v3033, 32
      %v3128 = vpop.permute.xlu0 %3127
      %3131 = vrot.lane.b32.xlu0 %v3051, 48
      %v3132 = vpop.permute.xlu0 %3131
      %3135 = vrot.lane.b32.xlu0 %v3042, 64
      %v3136 = vpop.permute.xlu0 %3135
      %3139 = vrot.lane.b32.xlu0 %v3052, 80
      %v3140 = vpop.permute.xlu0 %3139
      %3143 = vrot.lane.b32.xlu0 %v3049, 96
      %v3144 = vpop.permute.xlu0 %3143
      %3147 = vrot.lane.b32.xlu0 %v3053, 112
      %v3148 = vpop.permute.xlu0 %3147
      %3151 = vrot.lane.b32.xlu0 %v3118, 16
      %v3152 = vpop.permute.xlu0 %3151
      %3155 = vrot.lane.b32.xlu0 %v3101, 32
      %v3156 = vpop.permute.xlu0 %3155
      %3159 = vrot.lane.b32.xlu0 %v3119, 48
      %v3160 = vpop.permute.xlu0 %3159
      %3163 = vrot.lane.b32.xlu0 %v3110, 64
      %v3164 = vpop.permute.xlu0 %3163
      %3167 = vrot.lane.b32.xlu0 %v3120, 80
      %v3168 = vpop.permute.xlu0 %3167
      %3171 = vrot.lane.b32.xlu0 %v3117, 96
      %v3172 = vpop.permute.xlu0 %3171
      %3175 = vrot.lane.b32.xlu0 %v3121, 112
      %v3176 = vpop.permute.xlu0 %3175
      %v3178 = vsel %vm401, %v3026, %v3124
      %v3179 = vsel %vm403, %v3178, %v3128
      %v3180 = vsel %vm405, %v3179, %v3132
      %v3181 = vsel %vm407, %v3180, %v3136
      %v3182 = vsel %vm409, %v3181, %v3140
      %v3183 = vsel %vm411, %v3182, %v3144
      %v3184 = vsel %vm413, %v3183, %v3148
      %v3185 = vsel %vm401, %v3094, %v3152
      %v3186 = vsel %vm403, %v3185, %v3156
      %v3187 = vsel %vm405, %v3186, %v3160
      %v3188 = vsel %vm407, %v3187, %v3164
      %v3189 = vsel %vm409, %v3188, %v3168
      %v3190 = vsel %vm411, %v3189, %v3172
      %v3191 = vsel %vm413, %v3190, %v3176
      %v3194 = vrot.slane %v3184, 4
      %v3195 = vrot.slane %v3191, 4
      %3198 = vst [vmem:[#allocation2 + $0x50] sm:$0xf0] %v3194
      %3199 = vst [vmem:[#allocation2 + $0x58] sm:$0xf0] %v3195
      %v3200 = vld [vmem:[%s164 + $0x9] sm:$0xff]
      %v3201 = vld [vmem:[%s164 + $0x11] sm:$0xff]
      %v3202 = vld [vmem:[%s164 + $0x31] sm:$0xff]
      %v3203 = vld [vmem:[%s164 + $0x39] sm:$0xff]
      %v3204 = vld [vmem:[%s164 + $0x59] sm:$0xff]
      %v3205 = vld [vmem:[%s164 + $0x61] sm:$0xff]
      %v3206 = vld [vmem:[%s164 + $0x81] sm:$0xff]
      %v3207 = vld [vmem:[%s164 + $0x89] sm:$0xff]
      %3216 = vrot.lane.b32.xlu0 %v3200, 124
      %v3217 = vpop.permute.xlu0 %3216
      %3218 = vrot.lane.b32.xlu0 %v3201, 124
      %v3219 = vpop.permute.xlu0 %3218
      %3220 = vrot.lane.b32.xlu0 %v3202, 124
      %v3221 = vpop.permute.xlu0 %3220
      %3222 = vrot.lane.b32.xlu0 %v3203, 124
      %v3223 = vpop.permute.xlu0 %3222
      %3224 = vrot.lane.b32.xlu0 %v3204, 124
      %v3225 = vpop.permute.xlu0 %3224
      %3226 = vrot.lane.b32.xlu0 %v3205, 124
      %v3227 = vpop.permute.xlu0 %3226
      %3228 = vrot.lane.b32.xlu0 %v3206, 124
      %v3229 = vpop.permute.xlu0 %3228
      %3230 = vrot.lane.b32.xlu0 %v3207, 124
      %v3231 = vpop.permute.xlu0 %3230
      %v3240 = vcombine.low %v3217, %v3225
      %v3241 = vcombine.high %v3217, %v3225
      %v3243 = vunpack.c.l.s4 1983009808
      %v3244 = vunpack.c.0.s8 %v3243
      %v3245 = vlaneseq
      %v3246 = vshrl.u32 %v3245, 7
      %v3247 = vsub.s32 %v3244, %v3246
      %v3248 = vrot.slane %v3240, %v3247
      %v3250 = vunpack.c.l.s4 1983009808
      %v3251 = vunpack.c.0.s8 %v3250
      %v3252 = vlaneseq
      %v3253 = vshrl.u32 %v3252, 7
      %v3254 = vsub.s32 %v3251, %v3253
      %v3255 = vrot.slane %v3241, %v3254
      %v3256 = vcombine.low %v3221, %v3229
      %v3257 = vcombine.high %v3221, %v3229
      %v3259 = vunpack.c.l.s4 1983009808
      %v3260 = vunpack.c.0.s8 %v3259
      %v3261 = vlaneseq
      %v3262 = vshrl.u32 %v3261, 7
      %v3263 = vsub.s32 %v3260, %v3262
      %v3264 = vrot.slane %v3256, %v3263
      %v3266 = vunpack.c.l.s4 1983009808
      %v3267 = vunpack.c.0.s8 %v3266
      %v3268 = vlaneseq
      %v3269 = vshrl.u32 %v3268, 7
      %v3270 = vsub.s32 %v3267, %v3269
      %v3271 = vrot.slane %v3257, %v3270
      %v3272 = vcombine.low %v3248, %v3264
      %v3273 = vcombine.high %v3248, %v3264
      %v3275 = vunpack.c.l.s4 1934713408
      %v3276 = vunpack.c.0.s8 %v3275
      %v3277 = vlaneseq
      %v3278 = vshrl.u32 %v3277, 7
      %v3279 = vsub.s32 %v3276, %v3278
      %v3280 = vrot.slane %v3272, %v3279
      %v3282 = vunpack.c.l.s4 1934713408
      %v3283 = vunpack.c.0.s8 %v3282
      %v3284 = vlaneseq
      %v3285 = vshrl.u32 %v3284, 7
      %v3286 = vsub.s32 %v3283, %v3285
      %v3287 = vrot.slane %v3273, %v3286
      %v3288 = vcombine.low %v3255, %v3271
      %v3289 = vcombine.high %v3255, %v3271
      %v3291 = vunpack.c.l.s4 1934713408
      %v3292 = vunpack.c.0.s8 %v3291
      %v3293 = vlaneseq
      %v3294 = vshrl.u32 %v3293, 7
      %v3295 = vsub.s32 %v3292, %v3294
      %v3296 = vrot.slane %v3288, %v3295
      %v3298 = vunpack.c.l.s4 1934713408
      %v3299 = vunpack.c.0.s8 %v3298
      %v3300 = vlaneseq
      %v3301 = vshrl.u32 %v3300, 7
      %v3302 = vsub.s32 %v3299, %v3301
      %v3303 = vrot.slane %v3289, %v3302
      %v3304 = vcombine.high %v3280, 0.0
      %v3305 = vcombine.high %v3287, 0.0
      %v3306 = vcombine.high %v3296, 0.0
      %v3307 = vcombine.high %v3303, 0.0
      %v3308 = vcombine.low %v3219, %v3227
      %v3309 = vcombine.high %v3219, %v3227
      %v3311 = vunpack.c.l.s4 1983009808
      %v3312 = vunpack.c.0.s8 %v3311
      %v3313 = vlaneseq
      %v3314 = vshrl.u32 %v3313, 7
      %v3315 = vsub.s32 %v3312, %v3314
      %v3316 = vrot.slane %v3308, %v3315
      %v3318 = vunpack.c.l.s4 1983009808
      %v3319 = vunpack.c.0.s8 %v3318
      %v3320 = vlaneseq
      %v3321 = vshrl.u32 %v3320, 7
      %v3322 = vsub.s32 %v3319, %v3321
      %v3323 = vrot.slane %v3309, %v3322
      %v3324 = vcombine.low %v3223, %v3231
      %v3325 = vcombine.high %v3223, %v3231
      %v3327 = vunpack.c.l.s4 1983009808
      %v3328 = vunpack.c.0.s8 %v3327
      %v3329 = vlaneseq
      %v3330 = vshrl.u32 %v3329, 7
      %v3331 = vsub.s32 %v3328, %v3330
      %v3332 = vrot.slane %v3324, %v3331
      %v3334 = vunpack.c.l.s4 1983009808
      %v3335 = vunpack.c.0.s8 %v3334
      %v3336 = vlaneseq
      %v3337 = vshrl.u32 %v3336, 7
      %v3338 = vsub.s32 %v3335, %v3337
      %v3339 = vrot.slane %v3325, %v3338
      %v3340 = vcombine.low %v3316, %v3332
      %v3341 = vcombine.high %v3316, %v3332
      %v3343 = vunpack.c.l.s4 1934713408
      %v3344 = vunpack.c.0.s8 %v3343
      %v3345 = vlaneseq
      %v3346 = vshrl.u32 %v3345, 7
      %v3347 = vsub.s32 %v3344, %v3346
      %v3348 = vrot.slane %v3340, %v3347
      %v3350 = vunpack.c.l.s4 1934713408
      %v3351 = vunpack.c.0.s8 %v3350
      %v3352 = vlaneseq
      %v3353 = vshrl.u32 %v3352, 7
      %v3354 = vsub.s32 %v3351, %v3353
      %v3355 = vrot.slane %v3341, %v3354
      %v3356 = vcombine.low %v3323, %v3339
      %v3357 = vcombine.high %v3323, %v3339
      %v3359 = vunpack.c.l.s4 1934713408
      %v3360 = vunpack.c.0.s8 %v3359
      %v3361 = vlaneseq
      %v3362 = vshrl.u32 %v3361, 7
      %v3363 = vsub.s32 %v3360, %v3362
      %v3364 = vrot.slane %v3356, %v3363
      %v3366 = vunpack.c.l.s4 1934713408
      %v3367 = vunpack.c.0.s8 %v3366
      %v3368 = vlaneseq
      %v3369 = vshrl.u32 %v3368, 7
      %v3370 = vsub.s32 %v3367, %v3369
      %v3371 = vrot.slane %v3357, %v3370
      %v3372 = vcombine.high %v3348, 0.0
      %v3373 = vcombine.high %v3355, 0.0
      %v3374 = vcombine.high %v3364, 0.0
      %v3375 = vcombine.high %v3371, 0.0
      %3377 = vrot.lane.b32.xlu0 %v3304, 16
      %v3378 = vpop.permute.xlu0 %3377
      %3381 = vrot.lane.b32.xlu0 %v3287, 32
      %v3382 = vpop.permute.xlu0 %3381
      %3385 = vrot.lane.b32.xlu0 %v3305, 48
      %v3386 = vpop.permute.xlu0 %3385
      %3389 = vrot.lane.b32.xlu0 %v3296, 64
      %v3390 = vpop.permute.xlu0 %3389
      %3393 = vrot.lane.b32.xlu0 %v3306, 80
      %v3394 = vpop.permute.xlu0 %3393
      %3397 = vrot.lane.b32.xlu0 %v3303, 96
      %v3398 = vpop.permute.xlu0 %3397
      %3401 = vrot.lane.b32.xlu0 %v3307, 112
      %v3402 = vpop.permute.xlu0 %3401
      %3405 = vrot.lane.b32.xlu0 %v3372, 16
      %v3406 = vpop.permute.xlu0 %3405
      %3409 = vrot.lane.b32.xlu0 %v3355, 32
      %v3410 = vpop.permute.xlu0 %3409
      %3413 = vrot.lane.b32.xlu0 %v3373, 48
      %v3414 = vpop.permute.xlu0 %3413
      %3417 = vrot.lane.b32.xlu0 %v3364, 64
      %v3418 = vpop.permute.xlu0 %3417
      %3421 = vrot.lane.b32.xlu0 %v3374, 80
      %v3422 = vpop.permute.xlu0 %3421
      %3425 = vrot.lane.b32.xlu0 %v3371, 96
      %v3426 = vpop.permute.xlu0 %3425
      %3429 = vrot.lane.b32.xlu0 %v3375, 112
      %v3430 = vpop.permute.xlu0 %3429
      %v3432 = vsel %vm401, %v3280, %v3378
      %v3433 = vsel %vm403, %v3432, %v3382
      %v3434 = vsel %vm405, %v3433, %v3386
      %v3435 = vsel %vm407, %v3434, %v3390
      %v3436 = vsel %vm409, %v3435, %v3394
      %v3437 = vsel %vm411, %v3436, %v3398
      %v3438 = vsel %vm413, %v3437, %v3402
      %v3439 = vsel %vm401, %v3348, %v3406
      %v3440 = vsel %vm403, %v3439, %v3410
      %v3441 = vsel %vm405, %v3440, %v3414
      %v3442 = vsel %vm407, %v3441, %v3418
      %v3443 = vsel %vm409, %v3442, %v3422
      %v3444 = vsel %vm411, %v3443, %v3426
      %v3445 = vsel %vm413, %v3444, %v3430
      %3446 = vst [vmem:[#allocation2 + $0x60] sm:$0xf] %v3438
      %3447 = vst [vmem:[#allocation2 + $0x68] sm:$0xf] %v3445
      %v3448 = vld [vmem:[%s164 + $0x9] sm:$0xff]
      %v3449 = vld [vmem:[%s164 + $0x11] sm:$0xff]
      %v3450 = vld [vmem:[%s164 + $0x31] sm:$0xff]
      %v3451 = vld [vmem:[%s164 + $0x39] sm:$0xff]
      %v3452 = vld [vmem:[%s164 + $0x59] sm:$0xff]
      %v3453 = vld [vmem:[%s164 + $0x61] sm:$0xff]
      %v3454 = vld [vmem:[%s164 + $0x81] sm:$0xff]
      %v3455 = vld [vmem:[%s164 + $0x89] sm:$0xff]
      %3464 = vrot.lane.b32.xlu0 %v3448, 114
      %v3465 = vpop.permute.xlu0 %3464
      %3466 = vrot.lane.b32.xlu0 %v3449, 114
      %v3467 = vpop.permute.xlu0 %3466
      %3468 = vrot.lane.b32.xlu0 %v3450, 114
      %v3469 = vpop.permute.xlu0 %3468
      %3470 = vrot.lane.b32.xlu0 %v3451, 114
      %v3471 = vpop.permute.xlu0 %3470
      %3472 = vrot.lane.b32.xlu0 %v3452, 114
      %v3473 = vpop.permute.xlu0 %3472
      %3474 = vrot.lane.b32.xlu0 %v3453, 114
      %v3475 = vpop.permute.xlu0 %3474
      %3476 = vrot.lane.b32.xlu0 %v3454, 114
      %v3477 = vpop.permute.xlu0 %3476
      %3478 = vrot.lane.b32.xlu0 %v3455, 114
      %v3479 = vpop.permute.xlu0 %3478
      %v3488 = vcombine.low %v3465, %v3473
      %v3489 = vcombine.high %v3465, %v3473
      %v3491 = vunpack.c.l.s4 1983009808
      %v3492 = vunpack.c.0.s8 %v3491
      %v3493 = vlaneseq
      %v3494 = vshrl.u32 %v3493, 7
      %v3495 = vsub.s32 %v3492, %v3494
      %v3496 = vrot.slane %v3488, %v3495
      %v3498 = vunpack.c.l.s4 1983009808
      %v3499 = vunpack.c.0.s8 %v3498
      %v3500 = vlaneseq
      %v3501 = vshrl.u32 %v3500, 7
      %v3502 = vsub.s32 %v3499, %v3501
      %v3503 = vrot.slane %v3489, %v3502
      %v3504 = vcombine.low %v3469, %v3477
      %v3505 = vcombine.high %v3469, %v3477
      %v3507 = vunpack.c.l.s4 1983009808
      %v3508 = vunpack.c.0.s8 %v3507
      %v3509 = vlaneseq
      %v3510 = vshrl.u32 %v3509, 7
      %v3511 = vsub.s32 %v3508, %v3510
      %v3512 = vrot.slane %v3504, %v3511
      %v3514 = vunpack.c.l.s4 1983009808
      %v3515 = vunpack.c.0.s8 %v3514
      %v3516 = vlaneseq
      %v3517 = vshrl.u32 %v3516, 7
      %v3518 = vsub.s32 %v3515, %v3517
      %v3519 = vrot.slane %v3505, %v3518
      %v3520 = vcombine.low %v3496, %v3512
      %v3521 = vcombine.high %v3496, %v3512
      %v3523 = vunpack.c.l.s4 1934713408
      %v3524 = vunpack.c.0.s8 %v3523
      %v3525 = vlaneseq
      %v3526 = vshrl.u32 %v3525, 7
      %v3527 = vsub.s32 %v3524, %v3526
      %v3528 = vrot.slane %v3520, %v3527
      %v3530 = vunpack.c.l.s4 1934713408
      %v3531 = vunpack.c.0.s8 %v3530
      %v3532 = vlaneseq
      %v3533 = vshrl.u32 %v3532, 7
      %v3534 = vsub.s32 %v3531, %v3533
      %v3535 = vrot.slane %v3521, %v3534
      %v3536 = vcombine.low %v3503, %v3519
      %v3537 = vcombine.high %v3503, %v3519
      %v3539 = vunpack.c.l.s4 1934713408
      %v3540 = vunpack.c.0.s8 %v3539
      %v3541 = vlaneseq
      %v3542 = vshrl.u32 %v3541, 7
      %v3543 = vsub.s32 %v3540, %v3542
      %v3544 = vrot.slane %v3536, %v3543
      %v3546 = vunpack.c.l.s4 1934713408
      %v3547 = vunpack.c.0.s8 %v3546
      %v3548 = vlaneseq
      %v3549 = vshrl.u32 %v3548, 7
      %v3550 = vsub.s32 %v3547, %v3549
      %v3551 = vrot.slane %v3537, %v3550
      %v3552 = vcombine.high %v3528, 0.0
      %v3553 = vcombine.high %v3535, 0.0
      %v3554 = vcombine.high %v3544, 0.0
      %v3555 = vcombine.high %v3551, 0.0
      %v3556 = vcombine.low %v3467, %v3475
      %v3557 = vcombine.high %v3467, %v3475
      %v3559 = vunpack.c.l.s4 1983009808
      %v3560 = vunpack.c.0.s8 %v3559
      %v3561 = vlaneseq
      %v3562 = vshrl.u32 %v3561, 7
      %v3563 = vsub.s32 %v3560, %v3562
      %v3564 = vrot.slane %v3556, %v3563
      %v3566 = vunpack.c.l.s4 1983009808
      %v3567 = vunpack.c.0.s8 %v3566
      %v3568 = vlaneseq
      %v3569 = vshrl.u32 %v3568, 7
      %v3570 = vsub.s32 %v3567, %v3569
      %v3571 = vrot.slane %v3557, %v3570
      %v3572 = vcombine.low %v3471, %v3479
      %v3573 = vcombine.high %v3471, %v3479
      %v3575 = vunpack.c.l.s4 1983009808
      %v3576 = vunpack.c.0.s8 %v3575
      %v3577 = vlaneseq
      %v3578 = vshrl.u32 %v3577, 7
      %v3579 = vsub.s32 %v3576, %v3578
      %v3580 = vrot.slane %v3572, %v3579
      %v3582 = vunpack.c.l.s4 1983009808
      %v3583 = vunpack.c.0.s8 %v3582
      %v3584 = vlaneseq
      %v3585 = vshrl.u32 %v3584, 7
      %v3586 = vsub.s32 %v3583, %v3585
      %v3587 = vrot.slane %v3573, %v3586
      %v3588 = vcombine.low %v3564, %v3580
      %v3589 = vcombine.high %v3564, %v3580
      %v3591 = vunpack.c.l.s4 1934713408
      %v3592 = vunpack.c.0.s8 %v3591
      %v3593 = vlaneseq
      %v3594 = vshrl.u32 %v3593, 7
      %v3595 = vsub.s32 %v3592, %v3594
      %v3596 = vrot.slane %v3588, %v3595
      %v3598 = vunpack.c.l.s4 1934713408
      %v3599 = vunpack.c.0.s8 %v3598
      %v3600 = vlaneseq
      %v3601 = vshrl.u32 %v3600, 7
      %v3602 = vsub.s32 %v3599, %v3601
      %v3603 = vrot.slane %v3589, %v3602
      %v3604 = vcombine.low %v3571, %v3587
      %v3605 = vcombine.high %v3571, %v3587
      %v3607 = vunpack.c.l.s4 1934713408
      %v3608 = vunpack.c.0.s8 %v3607
      %v3609 = vlaneseq
      %v3610 = vshrl.u32 %v3609, 7
      %v3611 = vsub.s32 %v3608, %v3610
      %v3612 = vrot.slane %v3604, %v3611
      %v3614 = vunpack.c.l.s4 1934713408
      %v3615 = vunpack.c.0.s8 %v3614
      %v3616 = vlaneseq
      %v3617 = vshrl.u32 %v3616, 7
      %v3618 = vsub.s32 %v3615, %v3617
      %v3619 = vrot.slane %v3605, %v3618
      %v3620 = vcombine.high %v3596, 0.0
      %v3621 = vcombine.high %v3603, 0.0
      %v3622 = vcombine.high %v3612, 0.0
      %v3623 = vcombine.high %v3619, 0.0
      %3625 = vrot.lane.b32.xlu0 %v3552, 16
      %v3626 = vpop.permute.xlu0 %3625
      %3629 = vrot.lane.b32.xlu0 %v3535, 32
      %v3630 = vpop.permute.xlu0 %3629
      %3633 = vrot.lane.b32.xlu0 %v3553, 48
      %v3634 = vpop.permute.xlu0 %3633
      %3637 = vrot.lane.b32.xlu0 %v3544, 64
      %v3638 = vpop.permute.xlu0 %3637
      %3641 = vrot.lane.b32.xlu0 %v3554, 80
      %v3642 = vpop.permute.xlu0 %3641
      %3645 = vrot.lane.b32.xlu0 %v3551, 96
      %v3646 = vpop.permute.xlu0 %3645
      %3649 = vrot.lane.b32.xlu0 %v3555, 112
      %v3650 = vpop.permute.xlu0 %3649
      %3653 = vrot.lane.b32.xlu0 %v3620, 16
      %v3654 = vpop.permute.xlu0 %3653
      %3657 = vrot.lane.b32.xlu0 %v3603, 32
      %v3658 = vpop.permute.xlu0 %3657
      %3661 = vrot.lane.b32.xlu0 %v3621, 48
      %v3662 = vpop.permute.xlu0 %3661
      %3665 = vrot.lane.b32.xlu0 %v3612, 64
      %v3666 = vpop.permute.xlu0 %3665
      %3669 = vrot.lane.b32.xlu0 %v3622, 80
      %v3670 = vpop.permute.xlu0 %3669
      %3673 = vrot.lane.b32.xlu0 %v3619, 96
      %v3674 = vpop.permute.xlu0 %3673
      %3677 = vrot.lane.b32.xlu0 %v3623, 112
      %v3678 = vpop.permute.xlu0 %3677
      %v3680 = vsel %vm401, %v3528, %v3626
      %v3681 = vsel %vm403, %v3680, %v3630
      %v3682 = vsel %vm405, %v3681, %v3634
      %v3683 = vsel %vm407, %v3682, %v3638
      %v3684 = vsel %vm409, %v3683, %v3642
      %v3685 = vsel %vm411, %v3684, %v3646
      %v3686 = vsel %vm413, %v3685, %v3650
      %v3687 = vsel %vm401, %v3596, %v3654
      %v3688 = vsel %vm403, %v3687, %v3658
      %v3689 = vsel %vm405, %v3688, %v3662
      %v3690 = vsel %vm407, %v3689, %v3666
      %v3691 = vsel %vm409, %v3690, %v3670
      %v3692 = vsel %vm411, %v3691, %v3674
      %v3693 = vsel %vm413, %v3692, %v3678
      %3694 = vst [vmem:[#allocation2 + $0x70] sm:$0xf] %v3686
      %3695 = vst [vmem:[#allocation2 + $0x78] sm:$0xf] %v3693
      %v3696 = vld [vmem:[%s164 + $0xe] sm:$0xff]
      %v3697 = vld [vmem:[%s164 + $0x16] sm:$0xff]
      %v3698 = vld [vmem:[%s164 + $0x36] sm:$0xff]
      %v3699 = vld [vmem:[%s164 + $0x3e] sm:$0xff]
      %v3700 = vld [vmem:[%s164 + $0x5e] sm:$0xff]
      %v3701 = vld [vmem:[%s164 + $0x66] sm:$0xff]
      %v3702 = vld [vmem:[%s164 + $0x86] sm:$0xff]
      %v3703 = vld [vmem:[%s164 + $0x8e] sm:$0xff]
      %3712 = vrot.lane.b32.xlu0 %v3696, 124
      %v3713 = vpop.permute.xlu0 %3712
      %3714 = vrot.lane.b32.xlu0 %v3697, 124
      %v3715 = vpop.permute.xlu0 %3714
      %3716 = vrot.lane.b32.xlu0 %v3698, 124
      %v3717 = vpop.permute.xlu0 %3716
      %3718 = vrot.lane.b32.xlu0 %v3699, 124
      %v3719 = vpop.permute.xlu0 %3718
      %3720 = vrot.lane.b32.xlu0 %v3700, 124
      %v3721 = vpop.permute.xlu0 %3720
      %3722 = vrot.lane.b32.xlu0 %v3701, 124
      %v3723 = vpop.permute.xlu0 %3722
      %3724 = vrot.lane.b32.xlu0 %v3702, 124
      %v3725 = vpop.permute.xlu0 %3724
      %3726 = vrot.lane.b32.xlu0 %v3703, 124
      %v3727 = vpop.permute.xlu0 %3726
      %v3736 = vcombine.low %v3713, %v3721
      %v3737 = vcombine.high %v3713, %v3721
      %v3739 = vunpack.c.l.s4 1983009808
      %v3740 = vunpack.c.0.s8 %v3739
      %v3741 = vlaneseq
      %v3742 = vshrl.u32 %v3741, 7
      %v3743 = vsub.s32 %v3740, %v3742
      %v3744 = vrot.slane %v3736, %v3743
      %v3746 = vunpack.c.l.s4 1983009808
      %v3747 = vunpack.c.0.s8 %v3746
      %v3748 = vlaneseq
      %v3749 = vshrl.u32 %v3748, 7
      %v3750 = vsub.s32 %v3747, %v3749
      %v3751 = vrot.slane %v3737, %v3750
      %v3752 = vcombine.low %v3717, %v3725
      %v3753 = vcombine.high %v3717, %v3725
      %v3755 = vunpack.c.l.s4 1983009808
      %v3756 = vunpack.c.0.s8 %v3755
      %v3757 = vlaneseq
      %v3758 = vshrl.u32 %v3757, 7
      %v3759 = vsub.s32 %v3756, %v3758
      %v3760 = vrot.slane %v3752, %v3759
      %v3762 = vunpack.c.l.s4 1983009808
      %v3763 = vunpack.c.0.s8 %v3762
      %v3764 = vlaneseq
      %v3765 = vshrl.u32 %v3764, 7
      %v3766 = vsub.s32 %v3763, %v3765
      %v3767 = vrot.slane %v3753, %v3766
      %v3768 = vcombine.low %v3744, %v3760
      %v3769 = vcombine.high %v3744, %v3760
      %v3771 = vunpack.c.l.s4 1934713408
      %v3772 = vunpack.c.0.s8 %v3771
      %v3773 = vlaneseq
      %v3774 = vshrl.u32 %v3773, 7
      %v3775 = vsub.s32 %v3772, %v3774
      %v3776 = vrot.slane %v3768, %v3775
      %v3778 = vunpack.c.l.s4 1934713408
      %v3779 = vunpack.c.0.s8 %v3778
      %v3780 = vlaneseq
      %v3781 = vshrl.u32 %v3780, 7
      %v3782 = vsub.s32 %v3779, %v3781
      %v3783 = vrot.slane %v3769, %v3782
      %v3784 = vcombine.low %v3751, %v3767
      %v3785 = vcombine.high %v3751, %v3767
      %v3787 = vunpack.c.l.s4 1934713408
      %v3788 = vunpack.c.0.s8 %v3787
      %v3789 = vlaneseq
      %v3790 = vshrl.u32 %v3789, 7
      %v3791 = vsub.s32 %v3788, %v3790
      %v3792 = vrot.slane %v3784, %v3791
      %v3794 = vunpack.c.l.s4 1934713408
      %v3795 = vunpack.c.0.s8 %v3794
      %v3796 = vlaneseq
      %v3797 = vshrl.u32 %v3796, 7
      %v3798 = vsub.s32 %v3795, %v3797
      %v3799 = vrot.slane %v3785, %v3798
      %v3800 = vcombine.high %v3776, 0.0
      %v3801 = vcombine.high %v3783, 0.0
      %v3802 = vcombine.high %v3792, 0.0
      %v3803 = vcombine.high %v3799, 0.0
      %v3804 = vcombine.low %v3715, %v3723
      %v3805 = vcombine.high %v3715, %v3723
      %v3807 = vunpack.c.l.s4 1983009808
      %v3808 = vunpack.c.0.s8 %v3807
      %v3809 = vlaneseq
      %v3810 = vshrl.u32 %v3809, 7
      %v3811 = vsub.s32 %v3808, %v3810
      %v3812 = vrot.slane %v3804, %v3811
      %v3814 = vunpack.c.l.s4 1983009808
      %v3815 = vunpack.c.0.s8 %v3814
      %v3816 = vlaneseq
      %v3817 = vshrl.u32 %v3816, 7
      %v3818 = vsub.s32 %v3815, %v3817
      %v3819 = vrot.slane %v3805, %v3818
      %v3820 = vcombine.low %v3719, %v3727
      %v3821 = vcombine.high %v3719, %v3727
      %v3823 = vunpack.c.l.s4 1983009808
      %v3824 = vunpack.c.0.s8 %v3823
      %v3825 = vlaneseq
      %v3826 = vshrl.u32 %v3825, 7
      %v3827 = vsub.s32 %v3824, %v3826
      %v3828 = vrot.slane %v3820, %v3827
      %v3830 = vunpack.c.l.s4 1983009808
      %v3831 = vunpack.c.0.s8 %v3830
      %v3832 = vlaneseq
      %v3833 = vshrl.u32 %v3832, 7
      %v3834 = vsub.s32 %v3831, %v3833
      %v3835 = vrot.slane %v3821, %v3834
      %v3836 = vcombine.low %v3812, %v3828
      %v3837 = vcombine.high %v3812, %v3828
      %v3839 = vunpack.c.l.s4 1934713408
      %v3840 = vunpack.c.0.s8 %v3839
      %v3841 = vlaneseq
      %v3842 = vshrl.u32 %v3841, 7
      %v3843 = vsub.s32 %v3840, %v3842
      %v3844 = vrot.slane %v3836, %v3843
      %v3846 = vunpack.c.l.s4 1934713408
      %v3847 = vunpack.c.0.s8 %v3846
      %v3848 = vlaneseq
      %v3849 = vshrl.u32 %v3848, 7
      %v3850 = vsub.s32 %v3847, %v3849
      %v3851 = vrot.slane %v3837, %v3850
      %v3852 = vcombine.low %v3819, %v3835
      %v3853 = vcombine.high %v3819, %v3835
      %v3855 = vunpack.c.l.s4 1934713408
      %v3856 = vunpack.c.0.s8 %v3855
      %v3857 = vlaneseq
      %v3858 = vshrl.u32 %v3857, 7
      %v3859 = vsub.s32 %v3856, %v3858
      %v3860 = vrot.slane %v3852, %v3859
      %v3862 = vunpack.c.l.s4 1934713408
      %v3863 = vunpack.c.0.s8 %v3862
      %v3864 = vlaneseq
      %v3865 = vshrl.u32 %v3864, 7
      %v3866 = vsub.s32 %v3863, %v3865
      %v3867 = vrot.slane %v3853, %v3866
      %v3868 = vcombine.high %v3844, 0.0
      %v3869 = vcombine.high %v3851, 0.0
      %v3870 = vcombine.high %v3860, 0.0
      %v3871 = vcombine.high %v3867, 0.0
      %3873 = vrot.lane.b32.xlu0 %v3800, 16
      %v3874 = vpop.permute.xlu0 %3873
      %3877 = vrot.lane.b32.xlu0 %v3783, 32
      %v3878 = vpop.permute.xlu0 %3877
      %3881 = vrot.lane.b32.xlu0 %v3801, 48
      %v3882 = vpop.permute.xlu0 %3881
      %3885 = vrot.lane.b32.xlu0 %v3792, 64
      %v3886 = vpop.permute.xlu0 %3885
      %3889 = vrot.lane.b32.xlu0 %v3802, 80
      %v3890 = vpop.permute.xlu0 %3889
      %3893 = vrot.lane.b32.xlu0 %v3799, 96
      %v3894 = vpop.permute.xlu0 %3893
      %3897 = vrot.lane.b32.xlu0 %v3803, 112
      %v3898 = vpop.permute.xlu0 %3897
      %3901 = vrot.lane.b32.xlu0 %v3868, 16
      %v3902 = vpop.permute.xlu0 %3901
      %3905 = vrot.lane.b32.xlu0 %v3851, 32
      %v3906 = vpop.permute.xlu0 %3905
      %3909 = vrot.lane.b32.xlu0 %v3869, 48
      %v3910 = vpop.permute.xlu0 %3909
      %3913 = vrot.lane.b32.xlu0 %v3860, 64
      %v3914 = vpop.permute.xlu0 %3913
      %3917 = vrot.lane.b32.xlu0 %v3870, 80
      %v3918 = vpop.permute.xlu0 %3917
      %3921 = vrot.lane.b32.xlu0 %v3867, 96
      %v3922 = vpop.permute.xlu0 %3921
      %3925 = vrot.lane.b32.xlu0 %v3871, 112
      %v3926 = vpop.permute.xlu0 %3925
      %v3928 = vsel %vm401, %v3776, %v3874
      %v3929 = vsel %vm403, %v3928, %v3878
      %v3930 = vsel %vm405, %v3929, %v3882
      %v3931 = vsel %vm407, %v3930, %v3886
      %v3932 = vsel %vm409, %v3931, %v3890
      %v3933 = vsel %vm411, %v3932, %v3894
      %v3934 = vsel %vm413, %v3933, %v3898
      %v3935 = vsel %vm401, %v3844, %v3902
      %v3936 = vsel %vm403, %v3935, %v3906
      %v3937 = vsel %vm405, %v3936, %v3910
      %v3938 = vsel %vm407, %v3937, %v3914
      %v3939 = vsel %vm409, %v3938, %v3918
      %v3940 = vsel %vm411, %v3939, %v3922
      %v3941 = vsel %vm413, %v3940, %v3926
      %v3944 = vrot.slane %v3934, 4
      %v3945 = vrot.slane %v3941, 4
      %3948 = vst [vmem:[#allocation2 + $0x70] sm:$0xf0] %v3944
      %3949 = vst [vmem:[#allocation2 + $0x78] sm:$0xf0] %v3945
      %v3950 = vld [vmem:[%s164 + $0xe] sm:$0xff]
      %v3951 = vld [vmem:[%s164 + $0x16] sm:$0xff]
      %v3952 = vld [vmem:[%s164 + $0x36] sm:$0xff]
      %v3953 = vld [vmem:[%s164 + $0x3e] sm:$0xff]
      %v3954 = vld [vmem:[%s164 + $0x5e] sm:$0xff]
      %v3955 = vld [vmem:[%s164 + $0x66] sm:$0xff]
      %v3956 = vld [vmem:[%s164 + $0x86] sm:$0xff]
      %v3957 = vld [vmem:[%s164 + $0x8e] sm:$0xff]
      %3966 = vrot.lane.b32.xlu0 %v3950, 119
      %v3967 = vpop.permute.xlu0 %3966
      %3968 = vrot.lane.b32.xlu0 %v3951, 119
      %v3969 = vpop.permute.xlu0 %3968
      %3970 = vrot.lane.b32.xlu0 %v3952, 119
      %v3971 = vpop.permute.xlu0 %3970
      %3972 = vrot.lane.b32.xlu0 %v3953, 119
      %v3973 = vpop.permute.xlu0 %3972
      %3974 = vrot.lane.b32.xlu0 %v3954, 119
      %v3975 = vpop.permute.xlu0 %3974
      %3976 = vrot.lane.b32.xlu0 %v3955, 119
      %v3977 = vpop.permute.xlu0 %3976
      %3978 = vrot.lane.b32.xlu0 %v3956, 119
      %v3979 = vpop.permute.xlu0 %3978
      %3980 = vrot.lane.b32.xlu0 %v3957, 119
      %v3981 = vpop.permute.xlu0 %3980
      %v3990 = vcombine.low %v3967, %v3975
      %v3991 = vcombine.high %v3967, %v3975
      %v3993 = vunpack.c.l.s4 1983009808
      %v3994 = vunpack.c.0.s8 %v3993
      %v3995 = vlaneseq
      %v3996 = vshrl.u32 %v3995, 7
      %v3997 = vsub.s32 %v3994, %v3996
      %v3998 = vrot.slane %v3990, %v3997
      %v4000 = vunpack.c.l.s4 1983009808
      %v4001 = vunpack.c.0.s8 %v4000
      %v4002 = vlaneseq
      %v4003 = vshrl.u32 %v4002, 7
      %v4004 = vsub.s32 %v4001, %v4003
      %v4005 = vrot.slane %v3991, %v4004
      %v4006 = vcombine.low %v3971, %v3979
      %v4007 = vcombine.high %v3971, %v3979
      %v4009 = vunpack.c.l.s4 1983009808
      %v4010 = vunpack.c.0.s8 %v4009
      %v4011 = vlaneseq
      %v4012 = vshrl.u32 %v4011, 7
      %v4013 = vsub.s32 %v4010, %v4012
      %v4014 = vrot.slane %v4006, %v4013
      %v4016 = vunpack.c.l.s4 1983009808
      %v4017 = vunpack.c.0.s8 %v4016
      %v4018 = vlaneseq
      %v4019 = vshrl.u32 %v4018, 7
      %v4020 = vsub.s32 %v4017, %v4019
      %v4021 = vrot.slane %v4007, %v4020
      %v4022 = vcombine.low %v3998, %v4014
      %v4023 = vcombine.high %v3998, %v4014
      %v4025 = vunpack.c.l.s4 1934713408
      %v4026 = vunpack.c.0.s8 %v4025
      %v4027 = vlaneseq
      %v4028 = vshrl.u32 %v4027, 7
      %v4029 = vsub.s32 %v4026, %v4028
      %v4030 = vrot.slane %v4022, %v4029
      %v4032 = vunpack.c.l.s4 1934713408
      %v4033 = vunpack.c.0.s8 %v4032
      %v4034 = vlaneseq
      %v4035 = vshrl.u32 %v4034, 7
      %v4036 = vsub.s32 %v4033, %v4035
      %v4037 = vrot.slane %v4023, %v4036
      %v4038 = vcombine.low %v4005, %v4021
      %v4039 = vcombine.high %v4005, %v4021
      %v4041 = vunpack.c.l.s4 1934713408
      %v4042 = vunpack.c.0.s8 %v4041
      %v4043 = vlaneseq
      %v4044 = vshrl.u32 %v4043, 7
      %v4045 = vsub.s32 %v4042, %v4044
      %v4046 = vrot.slane %v4038, %v4045
      %v4048 = vunpack.c.l.s4 1934713408
      %v4049 = vunpack.c.0.s8 %v4048
      %v4050 = vlaneseq
      %v4051 = vshrl.u32 %v4050, 7
      %v4052 = vsub.s32 %v4049, %v4051
      %v4053 = vrot.slane %v4039, %v4052
      %v4054 = vcombine.high %v4030, 0.0
      %v4055 = vcombine.high %v4037, 0.0
      %v4056 = vcombine.high %v4046, 0.0
      %v4057 = vcombine.high %v4053, 0.0
      %v4058 = vcombine.low %v3969, %v3977
      %v4059 = vcombine.high %v3969, %v3977
      %v4061 = vunpack.c.l.s4 1983009808
      %v4062 = vunpack.c.0.s8 %v4061
      %v4063 = vlaneseq
      %v4064 = vshrl.u32 %v4063, 7
      %v4065 = vsub.s32 %v4062, %v4064
      %v4066 = vrot.slane %v4058, %v4065
      %v4068 = vunpack.c.l.s4 1983009808
      %v4069 = vunpack.c.0.s8 %v4068
      %v4070 = vlaneseq
      %v4071 = vshrl.u32 %v4070, 7
      %v4072 = vsub.s32 %v4069, %v4071
      %v4073 = vrot.slane %v4059, %v4072
      %v4074 = vcombine.low %v3973, %v3981
      %v4075 = vcombine.high %v3973, %v3981
      %v4077 = vunpack.c.l.s4 1983009808
      %v4078 = vunpack.c.0.s8 %v4077
      %v4079 = vlaneseq
      %v4080 = vshrl.u32 %v4079, 7
      %v4081 = vsub.s32 %v4078, %v4080
      %v4082 = vrot.slane %v4074, %v4081
      %v4084 = vunpack.c.l.s4 1983009808
      %v4085 = vunpack.c.0.s8 %v4084
      %v4086 = vlaneseq
      %v4087 = vshrl.u32 %v4086, 7
      %v4088 = vsub.s32 %v4085, %v4087
      %v4089 = vrot.slane %v4075, %v4088
      %v4090 = vcombine.low %v4066, %v4082
      %v4091 = vcombine.high %v4066, %v4082
      %v4093 = vunpack.c.l.s4 1934713408
      %v4094 = vunpack.c.0.s8 %v4093
      %v4095 = vlaneseq
      %v4096 = vshrl.u32 %v4095, 7
      %v4097 = vsub.s32 %v4094, %v4096
      %v4098 = vrot.slane %v4090, %v4097
      %v4100 = vunpack.c.l.s4 1934713408
      %v4101 = vunpack.c.0.s8 %v4100
      %v4102 = vlaneseq
      %v4103 = vshrl.u32 %v4102, 7
      %v4104 = vsub.s32 %v4101, %v4103
      %v4105 = vrot.slane %v4091, %v4104
      %v4106 = vcombine.low %v4073, %v4089
      %v4107 = vcombine.high %v4073, %v4089
      %v4109 = vunpack.c.l.s4 1934713408
      %v4110 = vunpack.c.0.s8 %v4109
      %v4111 = vlaneseq
      %v4112 = vshrl.u32 %v4111, 7
      %v4113 = vsub.s32 %v4110, %v4112
      %v4114 = vrot.slane %v4106, %v4113
      %v4116 = vunpack.c.l.s4 1934713408
      %v4117 = vunpack.c.0.s8 %v4116
      %v4118 = vlaneseq
      %v4119 = vshrl.u32 %v4118, 7
      %v4120 = vsub.s32 %v4117, %v4119
      %v4121 = vrot.slane %v4107, %v4120
      %v4122 = vcombine.high %v4098, 0.0
      %v4123 = vcombine.high %v4105, 0.0
      %v4124 = vcombine.high %v4114, 0.0
      %v4125 = vcombine.high %v4121, 0.0
      %4127 = vrot.lane.b32.xlu0 %v4054, 16
      %v4128 = vpop.permute.xlu0 %4127
      %4131 = vrot.lane.b32.xlu0 %v4037, 32
      %v4132 = vpop.permute.xlu0 %4131
      %4135 = vrot.lane.b32.xlu0 %v4055, 48
      %v4136 = vpop.permute.xlu0 %4135
      %4139 = vrot.lane.b32.xlu0 %v4046, 64
      %v4140 = vpop.permute.xlu0 %4139
      %4143 = vrot.lane.b32.xlu0 %v4056, 80
      %v4144 = vpop.permute.xlu0 %4143
      %4147 = vrot.lane.b32.xlu0 %v4053, 96
      %v4148 = vpop.permute.xlu0 %4147
      %4151 = vrot.lane.b32.xlu0 %v4057, 112
      %v4152 = vpop.permute.xlu0 %4151
      %4155 = vrot.lane.b32.xlu0 %v4122, 16
      %v4156 = vpop.permute.xlu0 %4155
      %4159 = vrot.lane.b32.xlu0 %v4105, 32
      %v4160 = vpop.permute.xlu0 %4159
      %4163 = vrot.lane.b32.xlu0 %v4123, 48
      %v4164 = vpop.permute.xlu0 %4163
      %4167 = vrot.lane.b32.xlu0 %v4114, 64
      %v4168 = vpop.permute.xlu0 %4167
      %4171 = vrot.lane.b32.xlu0 %v4124, 80
      %v4172 = vpop.permute.xlu0 %4171
      %4175 = vrot.lane.b32.xlu0 %v4121, 96
      %v4176 = vpop.permute.xlu0 %4175
      %4179 = vrot.lane.b32.xlu0 %v4125, 112
      %v4180 = vpop.permute.xlu0 %4179
      %v4182 = vsel %vm401, %v4030, %v4128
      %v4183 = vsel %vm403, %v4182, %v4132
      %v4184 = vsel %vm405, %v4183, %v4136
      %v4185 = vsel %vm407, %v4184, %v4140
      %v4186 = vsel %vm409, %v4185, %v4144
      %v4187 = vsel %vm411, %v4186, %v4148
      %v4188 = vsel %vm413, %v4187, %v4152
      %v4189 = vsel %vm401, %v4098, %v4156
      %v4190 = vsel %vm403, %v4189, %v4160
      %v4191 = vsel %vm405, %v4190, %v4164
      %v4192 = vsel %vm407, %v4191, %v4168
      %v4193 = vsel %vm409, %v4192, %v4172
      %v4194 = vsel %vm411, %v4193, %v4176
      %v4195 = vsel %vm413, %v4194, %v4180
      %4196 = vst [vmem:[#allocation2 + $0x80] sm:$0xf] %v4188
      %4197 = vst [vmem:[#allocation2 + $0x88] sm:$0xf] %v4195
      %v4198 = vld [vmem:[%s164 + $0xe] sm:$0xff]
      %v4199 = vld [vmem:[%s164 + $0x16] sm:$0xff]
      %v4200 = vld [vmem:[%s164 + $0x36] sm:$0xff]
      %v4201 = vld [vmem:[%s164 + $0x3e] sm:$0xff]
      %v4202 = vld [vmem:[%s164 + $0x5e] sm:$0xff]
      %v4203 = vld [vmem:[%s164 + $0x66] sm:$0xff]
      %v4204 = vld [vmem:[%s164 + $0x86] sm:$0xff]
      %v4205 = vld [vmem:[%s164 + $0x8e] sm:$0xff]
      %4214 = vrot.lane.b32.xlu0 %v4198, 114
      %v4215 = vpop.permute.xlu0 %4214
      %4216 = vrot.lane.b32.xlu0 %v4199, 114
      %v4217 = vpop.permute.xlu0 %4216
      %4218 = vrot.lane.b32.xlu0 %v4200, 114
      %v4219 = vpop.permute.xlu0 %4218
      %4220 = vrot.lane.b32.xlu0 %v4201, 114
      %v4221 = vpop.permute.xlu0 %4220
      %4222 = vrot.lane.b32.xlu0 %v4202, 114
      %v4223 = vpop.permute.xlu0 %4222
      %4224 = vrot.lane.b32.xlu0 %v4203, 114
      %v4225 = vpop.permute.xlu0 %4224
      %4226 = vrot.lane.b32.xlu0 %v4204, 114
      %v4227 = vpop.permute.xlu0 %4226
      %4228 = vrot.lane.b32.xlu0 %v4205, 114
      %v4229 = vpop.permute.xlu0 %4228
      %v4238 = vcombine.low %v4215, %v4223
      %v4239 = vcombine.high %v4215, %v4223
      %v4241 = vunpack.c.l.s4 1983009808
      %v4242 = vunpack.c.0.s8 %v4241
      %v4243 = vlaneseq
      %v4244 = vshrl.u32 %v4243, 7
      %v4245 = vsub.s32 %v4242, %v4244
      %v4246 = vrot.slane %v4238, %v4245
      %v4248 = vunpack.c.l.s4 1983009808
      %v4249 = vunpack.c.0.s8 %v4248
      %v4250 = vlaneseq
      %v4251 = vshrl.u32 %v4250, 7
      %v4252 = vsub.s32 %v4249, %v4251
      %v4253 = vrot.slane %v4239, %v4252
      %v4254 = vcombine.low %v4219, %v4227
      %v4255 = vcombine.high %v4219, %v4227
      %v4257 = vunpack.c.l.s4 1983009808
      %v4258 = vunpack.c.0.s8 %v4257
      %v4259 = vlaneseq
      %v4260 = vshrl.u32 %v4259, 7
      %v4261 = vsub.s32 %v4258, %v4260
      %v4262 = vrot.slane %v4254, %v4261
      %v4264 = vunpack.c.l.s4 1983009808
      %v4265 = vunpack.c.0.s8 %v4264
      %v4266 = vlaneseq
      %v4267 = vshrl.u32 %v4266, 7
      %v4268 = vsub.s32 %v4265, %v4267
      %v4269 = vrot.slane %v4255, %v4268
      %v4270 = vcombine.low %v4246, %v4262
      %v4271 = vcombine.high %v4246, %v4262
      %v4273 = vunpack.c.l.s4 1934713408
      %v4274 = vunpack.c.0.s8 %v4273
      %v4275 = vlaneseq
      %v4276 = vshrl.u32 %v4275, 7
      %v4277 = vsub.s32 %v4274, %v4276
      %v4278 = vrot.slane %v4270, %v4277
      %v4280 = vunpack.c.l.s4 1934713408
      %v4281 = vunpack.c.0.s8 %v4280
      %v4282 = vlaneseq
      %v4283 = vshrl.u32 %v4282, 7
      %v4284 = vsub.s32 %v4281, %v4283
      %v4285 = vrot.slane %v4271, %v4284
      %v4286 = vcombine.low %v4253, %v4269
      %v4287 = vcombine.high %v4253, %v4269
      %v4289 = vunpack.c.l.s4 1934713408
      %v4290 = vunpack.c.0.s8 %v4289
      %v4291 = vlaneseq
      %v4292 = vshrl.u32 %v4291, 7
      %v4293 = vsub.s32 %v4290, %v4292
      %v4294 = vrot.slane %v4286, %v4293
      %v4296 = vunpack.c.l.s4 1934713408
      %v4297 = vunpack.c.0.s8 %v4296
      %v4298 = vlaneseq
      %v4299 = vshrl.u32 %v4298, 7
      %v4300 = vsub.s32 %v4297, %v4299
      %v4301 = vrot.slane %v4287, %v4300
      %v4302 = vcombine.high %v4278, 0.0
      %v4303 = vcombine.high %v4285, 0.0
      %v4304 = vcombine.high %v4294, 0.0
      %v4305 = vcombine.high %v4301, 0.0
      %v4306 = vcombine.low %v4217, %v4225
      %v4307 = vcombine.high %v4217, %v4225
      %v4309 = vunpack.c.l.s4 1983009808
      %v4310 = vunpack.c.0.s8 %v4309
      %v4311 = vlaneseq
      %v4312 = vshrl.u32 %v4311, 7
      %v4313 = vsub.s32 %v4310, %v4312
      %v4314 = vrot.slane %v4306, %v4313
      %v4316 = vunpack.c.l.s4 1983009808
      %v4317 = vunpack.c.0.s8 %v4316
      %v4318 = vlaneseq
      %v4319 = vshrl.u32 %v4318, 7
      %v4320 = vsub.s32 %v4317, %v4319
      %v4321 = vrot.slane %v4307, %v4320
      %v4322 = vcombine.low %v4221, %v4229
      %v4323 = vcombine.high %v4221, %v4229
      %v4325 = vunpack.c.l.s4 1983009808
      %v4326 = vunpack.c.0.s8 %v4325
      %v4327 = vlaneseq
      %v4328 = vshrl.u32 %v4327, 7
      %v4329 = vsub.s32 %v4326, %v4328
      %v4330 = vrot.slane %v4322, %v4329
      %v4332 = vunpack.c.l.s4 1983009808
      %v4333 = vunpack.c.0.s8 %v4332
      %v4334 = vlaneseq
      %v4335 = vshrl.u32 %v4334, 7
      %v4336 = vsub.s32 %v4333, %v4335
      %v4337 = vrot.slane %v4323, %v4336
      %v4338 = vcombine.low %v4314, %v4330
      %v4339 = vcombine.high %v4314, %v4330
      %v4341 = vunpack.c.l.s4 1934713408
      %v4342 = vunpack.c.0.s8 %v4341
      %v4343 = vlaneseq
      %v4344 = vshrl.u32 %v4343, 7
      %v4345 = vsub.s32 %v4342, %v4344
      %v4346 = vrot.slane %v4338, %v4345
      %v4348 = vunpack.c.l.s4 1934713408
      %v4349 = vunpack.c.0.s8 %v4348
      %v4350 = vlaneseq
      %v4351 = vshrl.u32 %v4350, 7
      %v4352 = vsub.s32 %v4349, %v4351
      %v4353 = vrot.slane %v4339, %v4352
      %v4354 = vcombine.low %v4321, %v4337
      %v4355 = vcombine.high %v4321, %v4337
      %v4357 = vunpack.c.l.s4 1934713408
      %v4358 = vunpack.c.0.s8 %v4357
      %v4359 = vlaneseq
      %v4360 = vshrl.u32 %v4359, 7
      %v4361 = vsub.s32 %v4358, %v4360
      %v4362 = vrot.slane %v4354, %v4361
      %v4364 = vunpack.c.l.s4 1934713408
      %v4365 = vunpack.c.0.s8 %v4364
      %v4366 = vlaneseq
      %v4367 = vshrl.u32 %v4366, 7
      %v4368 = vsub.s32 %v4365, %v4367
      %v4369 = vrot.slane %v4355, %v4368
      %v4370 = vcombine.high %v4346, 0.0
      %v4371 = vcombine.high %v4353, 0.0
      %v4372 = vcombine.high %v4362, 0.0
      %v4373 = vcombine.high %v4369, 0.0
      %4375 = vrot.lane.b32.xlu0 %v4302, 16
      %v4376 = vpop.permute.xlu0 %4375
      %4379 = vrot.lane.b32.xlu0 %v4285, 32
      %v4380 = vpop.permute.xlu0 %4379
      %4383 = vrot.lane.b32.xlu0 %v4303, 48
      %v4384 = vpop.permute.xlu0 %4383
      %4387 = vrot.lane.b32.xlu0 %v4294, 64
      %v4388 = vpop.permute.xlu0 %4387
      %4391 = vrot.lane.b32.xlu0 %v4304, 80
      %v4392 = vpop.permute.xlu0 %4391
      %4395 = vrot.lane.b32.xlu0 %v4301, 96
      %v4396 = vpop.permute.xlu0 %4395
      %4399 = vrot.lane.b32.xlu0 %v4305, 112
      %v4400 = vpop.permute.xlu0 %4399
      %4403 = vrot.lane.b32.xlu0 %v4370, 16
      %v4404 = vpop.permute.xlu0 %4403
      %4407 = vrot.lane.b32.xlu0 %v4353, 32
      %v4408 = vpop.permute.xlu0 %4407
      %4411 = vrot.lane.b32.xlu0 %v4371, 48
      %v4412 = vpop.permute.xlu0 %4411
      %4415 = vrot.lane.b32.xlu0 %v4362, 64
      %v4416 = vpop.permute.xlu0 %4415
      %4419 = vrot.lane.b32.xlu0 %v4372, 80
      %v4420 = vpop.permute.xlu0 %4419
      %4423 = vrot.lane.b32.xlu0 %v4369, 96
      %v4424 = vpop.permute.xlu0 %4423
      %4427 = vrot.lane.b32.xlu0 %v4373, 112
      %v4428 = vpop.permute.xlu0 %4427
      %v4430 = vsel %vm401, %v4278, %v4376
      %v4431 = vsel %vm403, %v4430, %v4380
      %v4432 = vsel %vm405, %v4431, %v4384
      %v4433 = vsel %vm407, %v4432, %v4388
      %v4434 = vsel %vm409, %v4433, %v4392
      %v4435 = vsel %vm411, %v4434, %v4396
      %v4436 = vsel %vm413, %v4435, %v4400
      %v4437 = vsel %vm401, %v4346, %v4404
      %v4438 = vsel %vm403, %v4437, %v4408
      %v4439 = vsel %vm405, %v4438, %v4412
      %v4440 = vsel %vm407, %v4439, %v4416
      %v4441 = vsel %vm409, %v4440, %v4420
      %v4442 = vsel %vm411, %v4441, %v4424
      %v4443 = vsel %vm413, %v4442, %v4428
      %v4446 = vrot.slane %v4436, 4
      %v4447 = vrot.slane %v4443, 4
      %4450 = vst [vmem:[#allocation2 + $0x80] sm:$0xf0] %v4446
      %4451 = vst [vmem:[#allocation2 + $0x88] sm:$0xf0] %v4447
      %v4452 = vld [vmem:[%s164 + $0x2] sm:$0xff]
      %v4453 = vld [vmem:[%s164 + $0xa] sm:$0xff]
      %v4454 = vld [vmem:[%s164 + $0x2a] sm:$0xff]
      %v4455 = vld [vmem:[%s164 + $0x32] sm:$0xff]
      %v4456 = vld [vmem:[%s164 + $0x52] sm:$0xff]
      %v4457 = vld [vmem:[%s164 + $0x5a] sm:$0xff]
      %v4458 = vld [vmem:[%s164 + $0x7a] sm:$0xff]
      %v4459 = vld [vmem:[%s164 + $0x82] sm:$0xff]
      %4468 = vrot.lane.b32.xlu0 %v4452, 126
      %v4469 = vpop.permute.xlu0 %4468
      %4470 = vrot.lane.b32.xlu0 %v4453, 126
      %v4471 = vpop.permute.xlu0 %4470
      %4472 = vrot.lane.b32.xlu0 %v4454, 126
      %v4473 = vpop.permute.xlu0 %4472
      %4474 = vrot.lane.b32.xlu0 %v4455, 126
      %v4475 = vpop.permute.xlu0 %4474
      %4476 = vrot.lane.b32.xlu0 %v4456, 126
      %v4477 = vpop.permute.xlu0 %4476
      %4478 = vrot.lane.b32.xlu0 %v4457, 126
      %v4479 = vpop.permute.xlu0 %4478
      %4480 = vrot.lane.b32.xlu0 %v4458, 126
      %v4481 = vpop.permute.xlu0 %4480
      %4482 = vrot.lane.b32.xlu0 %v4459, 126
      %v4483 = vpop.permute.xlu0 %4482
      %v4492 = vcombine.low %v4469, %v4477
      %v4493 = vcombine.high %v4469, %v4477
      %v4495 = vunpack.c.l.s4 1983009808
      %v4496 = vunpack.c.0.s8 %v4495
      %v4497 = vlaneseq
      %v4498 = vshrl.u32 %v4497, 7
      %v4499 = vsub.s32 %v4496, %v4498
      %v4500 = vrot.slane %v4492, %v4499
      %v4502 = vunpack.c.l.s4 1983009808
      %v4503 = vunpack.c.0.s8 %v4502
      %v4504 = vlaneseq
      %v4505 = vshrl.u32 %v4504, 7
      %v4506 = vsub.s32 %v4503, %v4505
      %v4507 = vrot.slane %v4493, %v4506
      %v4508 = vcombine.low %v4473, %v4481
      %v4509 = vcombine.high %v4473, %v4481
      %v4511 = vunpack.c.l.s4 1983009808
      %v4512 = vunpack.c.0.s8 %v4511
      %v4513 = vlaneseq
      %v4514 = vshrl.u32 %v4513, 7
      %v4515 = vsub.s32 %v4512, %v4514
      %v4516 = vrot.slane %v4508, %v4515
      %v4518 = vunpack.c.l.s4 1983009808
      %v4519 = vunpack.c.0.s8 %v4518
      %v4520 = vlaneseq
      %v4521 = vshrl.u32 %v4520, 7
      %v4522 = vsub.s32 %v4519, %v4521
      %v4523 = vrot.slane %v4509, %v4522
      %v4524 = vcombine.low %v4500, %v4516
      %v4525 = vcombine.high %v4500, %v4516
      %v4527 = vunpack.c.l.s4 1934713408
      %v4528 = vunpack.c.0.s8 %v4527
      %v4529 = vlaneseq
      %v4530 = vshrl.u32 %v4529, 7
      %v4531 = vsub.s32 %v4528, %v4530
      %v4532 = vrot.slane %v4524, %v4531
      %v4534 = vunpack.c.l.s4 1934713408
      %v4535 = vunpack.c.0.s8 %v4534
      %v4536 = vlaneseq
      %v4537 = vshrl.u32 %v4536, 7
      %v4538 = vsub.s32 %v4535, %v4537
      %v4539 = vrot.slane %v4525, %v4538
      %v4540 = vcombine.low %v4507, %v4523
      %v4541 = vcombine.high %v4507, %v4523
      %v4543 = vunpack.c.l.s4 1934713408
      %v4544 = vunpack.c.0.s8 %v4543
      %v4545 = vlaneseq
      %v4546 = vshrl.u32 %v4545, 7
      %v4547 = vsub.s32 %v4544, %v4546
      %v4548 = vrot.slane %v4540, %v4547
      %v4550 = vunpack.c.l.s4 1934713408
      %v4551 = vunpack.c.0.s8 %v4550
      %v4552 = vlaneseq
      %v4553 = vshrl.u32 %v4552, 7
      %v4554 = vsub.s32 %v4551, %v4553
      %v4555 = vrot.slane %v4541, %v4554
      %v4556 = vcombine.high %v4532, 0.0
      %v4557 = vcombine.high %v4539, 0.0
      %v4558 = vcombine.high %v4548, 0.0
      %v4559 = vcombine.high %v4555, 0.0
      %v4560 = vcombine.low %v4471, %v4479
      %v4561 = vcombine.high %v4471, %v4479
      %v4563 = vunpack.c.l.s4 1983009808
      %v4564 = vunpack.c.0.s8 %v4563
      %v4565 = vlaneseq
      %v4566 = vshrl.u32 %v4565, 7
      %v4567 = vsub.s32 %v4564, %v4566
      %v4568 = vrot.slane %v4560, %v4567
      %v4570 = vunpack.c.l.s4 1983009808
      %v4571 = vunpack.c.0.s8 %v4570
      %v4572 = vlaneseq
      %v4573 = vshrl.u32 %v4572, 7
      %v4574 = vsub.s32 %v4571, %v4573
      %v4575 = vrot.slane %v4561, %v4574
      %v4576 = vcombine.low %v4475, %v4483
      %v4577 = vcombine.high %v4475, %v4483
      %v4579 = vunpack.c.l.s4 1983009808
      %v4580 = vunpack.c.0.s8 %v4579
      %v4581 = vlaneseq
      %v4582 = vshrl.u32 %v4581, 7
      %v4583 = vsub.s32 %v4580, %v4582
      %v4584 = vrot.slane %v4576, %v4583
      %v4586 = vunpack.c.l.s4 1983009808
      %v4587 = vunpack.c.0.s8 %v4586
      %v4588 = vlaneseq
      %v4589 = vshrl.u32 %v4588, 7
      %v4590 = vsub.s32 %v4587, %v4589
      %v4591 = vrot.slane %v4577, %v4590
      %v4592 = vcombine.low %v4568, %v4584
      %v4593 = vcombine.high %v4568, %v4584
      %v4595 = vunpack.c.l.s4 1934713408
      %v4596 = vunpack.c.0.s8 %v4595
      %v4597 = vlaneseq
      %v4598 = vshrl.u32 %v4597, 7
      %v4599 = vsub.s32 %v4596, %v4598
      %v4600 = vrot.slane %v4592, %v4599
      %v4602 = vunpack.c.l.s4 1934713408
      %v4603 = vunpack.c.0.s8 %v4602
      %v4604 = vlaneseq
      %v4605 = vshrl.u32 %v4604, 7
      %v4606 = vsub.s32 %v4603, %v4605
      %v4607 = vrot.slane %v4593, %v4606
      %v4608 = vcombine.low %v4575, %v4591
      %v4609 = vcombine.high %v4575, %v4591
      %v4611 = vunpack.c.l.s4 1934713408
      %v4612 = vunpack.c.0.s8 %v4611
      %v4613 = vlaneseq
      %v4614 = vshrl.u32 %v4613, 7
      %v4615 = vsub.s32 %v4612, %v4614
      %v4616 = vrot.slane %v4608, %v4615
      %v4618 = vunpack.c.l.s4 1934713408
      %v4619 = vunpack.c.0.s8 %v4618
      %v4620 = vlaneseq
      %v4621 = vshrl.u32 %v4620, 7
      %v4622 = vsub.s32 %v4619, %v4621
      %v4623 = vrot.slane %v4609, %v4622
      %v4624 = vcombine.high %v4600, 0.0
      %v4625 = vcombine.high %v4607, 0.0
      %v4626 = vcombine.high %v4616, 0.0
      %v4627 = vcombine.high %v4623, 0.0
      %4629 = vrot.lane.b32.xlu0 %v4556, 16
      %v4630 = vpop.permute.xlu0 %4629
      %4633 = vrot.lane.b32.xlu0 %v4539, 32
      %v4634 = vpop.permute.xlu0 %4633
      %4637 = vrot.lane.b32.xlu0 %v4557, 48
      %v4638 = vpop.permute.xlu0 %4637
      %4641 = vrot.lane.b32.xlu0 %v4548, 64
      %v4642 = vpop.permute.xlu0 %4641
      %4645 = vrot.lane.b32.xlu0 %v4558, 80
      %v4646 = vpop.permute.xlu0 %4645
      %4649 = vrot.lane.b32.xlu0 %v4555, 96
      %v4650 = vpop.permute.xlu0 %4649
      %4653 = vrot.lane.b32.xlu0 %v4559, 112
      %v4654 = vpop.permute.xlu0 %4653
      %4657 = vrot.lane.b32.xlu0 %v4624, 16
      %v4658 = vpop.permute.xlu0 %4657
      %4661 = vrot.lane.b32.xlu0 %v4607, 32
      %v4662 = vpop.permute.xlu0 %4661
      %4665 = vrot.lane.b32.xlu0 %v4625, 48
      %v4666 = vpop.permute.xlu0 %4665
      %4669 = vrot.lane.b32.xlu0 %v4616, 64
      %v4670 = vpop.permute.xlu0 %4669
      %4673 = vrot.lane.b32.xlu0 %v4626, 80
      %v4674 = vpop.permute.xlu0 %4673
      %4677 = vrot.lane.b32.xlu0 %v4623, 96
      %v4678 = vpop.permute.xlu0 %4677
      %4681 = vrot.lane.b32.xlu0 %v4627, 112
      %v4682 = vpop.permute.xlu0 %4681
      %v4684 = vsel %vm401, %v4532, %v4630
      %v4685 = vsel %vm403, %v4684, %v4634
      %v4686 = vsel %vm405, %v4685, %v4638
      %v4687 = vsel %vm407, %v4686, %v4642
      %v4688 = vsel %vm409, %v4687, %v4646
      %v4689 = vsel %vm411, %v4688, %v4650
      %v4690 = vsel %vm413, %v4689, %v4654
      %v4691 = vsel %vm401, %v4600, %v4658
      %v4692 = vsel %vm403, %v4691, %v4662
      %v4693 = vsel %vm405, %v4692, %v4666
      %v4694 = vsel %vm407, %v4693, %v4670
      %v4695 = vsel %vm409, %v4694, %v4674
      %v4696 = vsel %vm411, %v4695, %v4678
      %v4697 = vsel %vm413, %v4696, %v4682
      %4698 = vst [vmem:[#allocation2 + $0x90] sm:$0xf] %v4690
      %4699 = vst [vmem:[#allocation2 + $0x98] sm:$0xf] %v4697
      %v4700 = vld [vmem:[%s164 + $0x2] sm:$0xff]
      %v4701 = vld [vmem:[%s164 + $0xa] sm:$0xff]
      %v4702 = vld [vmem:[%s164 + $0x2a] sm:$0xff]
      %v4703 = vld [vmem:[%s164 + $0x32] sm:$0xff]
      %v4704 = vld [vmem:[%s164 + $0x52] sm:$0xff]
      %v4705 = vld [vmem:[%s164 + $0x5a] sm:$0xff]
      %v4706 = vld [vmem:[%s164 + $0x7a] sm:$0xff]
      %v4707 = vld [vmem:[%s164 + $0x82] sm:$0xff]
      %4716 = vrot.lane.b32.xlu0 %v4700, 119
      %v4717 = vpop.permute.xlu0 %4716
      %4718 = vrot.lane.b32.xlu0 %v4701, 119
      %v4719 = vpop.permute.xlu0 %4718
      %4720 = vrot.lane.b32.xlu0 %v4702, 119
      %v4721 = vpop.permute.xlu0 %4720
      %4722 = vrot.lane.b32.xlu0 %v4703, 119
      %v4723 = vpop.permute.xlu0 %4722
      %4724 = vrot.lane.b32.xlu0 %v4704, 119
      %v4725 = vpop.permute.xlu0 %4724
      %4726 = vrot.lane.b32.xlu0 %v4705, 119
      %v4727 = vpop.permute.xlu0 %4726
      %4728 = vrot.lane.b32.xlu0 %v4706, 119
      %v4729 = vpop.permute.xlu0 %4728
      %4730 = vrot.lane.b32.xlu0 %v4707, 119
      %v4731 = vpop.permute.xlu0 %4730
      %v4740 = vcombine.low %v4717, %v4725
      %v4741 = vcombine.high %v4717, %v4725
      %v4743 = vunpack.c.l.s4 1983009808
      %v4744 = vunpack.c.0.s8 %v4743
      %v4745 = vlaneseq
      %v4746 = vshrl.u32 %v4745, 7
      %v4747 = vsub.s32 %v4744, %v4746
      %v4748 = vrot.slane %v4740, %v4747
      %v4750 = vunpack.c.l.s4 1983009808
      %v4751 = vunpack.c.0.s8 %v4750
      %v4752 = vlaneseq
      %v4753 = vshrl.u32 %v4752, 7
      %v4754 = vsub.s32 %v4751, %v4753
      %v4755 = vrot.slane %v4741, %v4754
      %v4756 = vcombine.low %v4721, %v4729
      %v4757 = vcombine.high %v4721, %v4729
      %v4759 = vunpack.c.l.s4 1983009808
      %v4760 = vunpack.c.0.s8 %v4759
      %v4761 = vlaneseq
      %v4762 = vshrl.u32 %v4761, 7
      %v4763 = vsub.s32 %v4760, %v4762
      %v4764 = vrot.slane %v4756, %v4763
      %v4766 = vunpack.c.l.s4 1983009808
      %v4767 = vunpack.c.0.s8 %v4766
      %v4768 = vlaneseq
      %v4769 = vshrl.u32 %v4768, 7
      %v4770 = vsub.s32 %v4767, %v4769
      %v4771 = vrot.slane %v4757, %v4770
      %v4772 = vcombine.low %v4748, %v4764
      %v4773 = vcombine.high %v4748, %v4764
      %v4775 = vunpack.c.l.s4 1934713408
      %v4776 = vunpack.c.0.s8 %v4775
      %v4777 = vlaneseq
      %v4778 = vshrl.u32 %v4777, 7
      %v4779 = vsub.s32 %v4776, %v4778
      %v4780 = vrot.slane %v4772, %v4779
      %v4782 = vunpack.c.l.s4 1934713408
      %v4783 = vunpack.c.0.s8 %v4782
      %v4784 = vlaneseq
      %v4785 = vshrl.u32 %v4784, 7
      %v4786 = vsub.s32 %v4783, %v4785
      %v4787 = vrot.slane %v4773, %v4786
      %v4788 = vcombine.low %v4755, %v4771
      %v4789 = vcombine.high %v4755, %v4771
      %v4791 = vunpack.c.l.s4 1934713408
      %v4792 = vunpack.c.0.s8 %v4791
      %v4793 = vlaneseq
      %v4794 = vshrl.u32 %v4793, 7
      %v4795 = vsub.s32 %v4792, %v4794
      %v4796 = vrot.slane %v4788, %v4795
      %v4798 = vunpack.c.l.s4 1934713408
      %v4799 = vunpack.c.0.s8 %v4798
      %v4800 = vlaneseq
      %v4801 = vshrl.u32 %v4800, 7
      %v4802 = vsub.s32 %v4799, %v4801
      %v4803 = vrot.slane %v4789, %v4802
      %v4804 = vcombine.high %v4780, 0.0
      %v4805 = vcombine.high %v4787, 0.0
      %v4806 = vcombine.high %v4796, 0.0
      %v4807 = vcombine.high %v4803, 0.0
      %v4808 = vcombine.low %v4719, %v4727
      %v4809 = vcombine.high %v4719, %v4727
      %v4811 = vunpack.c.l.s4 1983009808
      %v4812 = vunpack.c.0.s8 %v4811
      %v4813 = vlaneseq
      %v4814 = vshrl.u32 %v4813, 7
      %v4815 = vsub.s32 %v4812, %v4814
      %v4816 = vrot.slane %v4808, %v4815
      %v4818 = vunpack.c.l.s4 1983009808
      %v4819 = vunpack.c.0.s8 %v4818
      %v4820 = vlaneseq
      %v4821 = vshrl.u32 %v4820, 7
      %v4822 = vsub.s32 %v4819, %v4821
      %v4823 = vrot.slane %v4809, %v4822
      %v4824 = vcombine.low %v4723, %v4731
      %v4825 = vcombine.high %v4723, %v4731
      %v4827 = vunpack.c.l.s4 1983009808
      %v4828 = vunpack.c.0.s8 %v4827
      %v4829 = vlaneseq
      %v4830 = vshrl.u32 %v4829, 7
      %v4831 = vsub.s32 %v4828, %v4830
      %v4832 = vrot.slane %v4824, %v4831
      %v4834 = vunpack.c.l.s4 1983009808
      %v4835 = vunpack.c.0.s8 %v4834
      %v4836 = vlaneseq
      %v4837 = vshrl.u32 %v4836, 7
      %v4838 = vsub.s32 %v4835, %v4837
      %v4839 = vrot.slane %v4825, %v4838
      %v4840 = vcombine.low %v4816, %v4832
      %v4841 = vcombine.high %v4816, %v4832
      %v4843 = vunpack.c.l.s4 1934713408
      %v4844 = vunpack.c.0.s8 %v4843
      %v4845 = vlaneseq
      %v4846 = vshrl.u32 %v4845, 7
      %v4847 = vsub.s32 %v4844, %v4846
      %v4848 = vrot.slane %v4840, %v4847
      %v4850 = vunpack.c.l.s4 1934713408
      %v4851 = vunpack.c.0.s8 %v4850
      %v4852 = vlaneseq
      %v4853 = vshrl.u32 %v4852, 7
      %v4854 = vsub.s32 %v4851, %v4853
      %v4855 = vrot.slane %v4841, %v4854
      %v4856 = vcombine.low %v4823, %v4839
      %v4857 = vcombine.high %v4823, %v4839
      %v4859 = vunpack.c.l.s4 1934713408
      %v4860 = vunpack.c.0.s8 %v4859
      %v4861 = vlaneseq
      %v4862 = vshrl.u32 %v4861, 7
      %v4863 = vsub.s32 %v4860, %v4862
      %v4864 = vrot.slane %v4856, %v4863
      %v4866 = vunpack.c.l.s4 1934713408
      %v4867 = vunpack.c.0.s8 %v4866
      %v4868 = vlaneseq
      %v4869 = vshrl.u32 %v4868, 7
      %v4870 = vsub.s32 %v4867, %v4869
      %v4871 = vrot.slane %v4857, %v4870
      %v4872 = vcombine.high %v4848, 0.0
      %v4873 = vcombine.high %v4855, 0.0
      %v4874 = vcombine.high %v4864, 0.0
      %v4875 = vcombine.high %v4871, 0.0
      %4877 = vrot.lane.b32.xlu0 %v4804, 16
      %v4878 = vpop.permute.xlu0 %4877
      %4881 = vrot.lane.b32.xlu0 %v4787, 32
      %v4882 = vpop.permute.xlu0 %4881
      %4885 = vrot.lane.b32.xlu0 %v4805, 48
      %v4886 = vpop.permute.xlu0 %4885
      %4889 = vrot.lane.b32.xlu0 %v4796, 64
      %v4890 = vpop.permute.xlu0 %4889
      %4893 = vrot.lane.b32.xlu0 %v4806, 80
      %v4894 = vpop.permute.xlu0 %4893
      %4897 = vrot.lane.b32.xlu0 %v4803, 96
      %v4898 = vpop.permute.xlu0 %4897
      %4901 = vrot.lane.b32.xlu0 %v4807, 112
      %v4902 = vpop.permute.xlu0 %4901
      %4905 = vrot.lane.b32.xlu0 %v4872, 16
      %v4906 = vpop.permute.xlu0 %4905
      %4909 = vrot.lane.b32.xlu0 %v4855, 32
      %v4910 = vpop.permute.xlu0 %4909
      %4913 = vrot.lane.b32.xlu0 %v4873, 48
      %v4914 = vpop.permute.xlu0 %4913
      %4917 = vrot.lane.b32.xlu0 %v4864, 64
      %v4918 = vpop.permute.xlu0 %4917
      %4921 = vrot.lane.b32.xlu0 %v4874, 80
      %v4922 = vpop.permute.xlu0 %4921
      %4925 = vrot.lane.b32.xlu0 %v4871, 96
      %v4926 = vpop.permute.xlu0 %4925
      %4929 = vrot.lane.b32.xlu0 %v4875, 112
      %v4930 = vpop.permute.xlu0 %4929
      %v4932 = vsel %vm401, %v4780, %v4878
      %v4933 = vsel %vm403, %v4932, %v4882
      %v4934 = vsel %vm405, %v4933, %v4886
      %v4935 = vsel %vm407, %v4934, %v4890
      %v4936 = vsel %vm409, %v4935, %v4894
      %v4937 = vsel %vm411, %v4936, %v4898
      %v4938 = vsel %vm413, %v4937, %v4902
      %v4939 = vsel %vm401, %v4848, %v4906
      %v4940 = vsel %vm403, %v4939, %v4910
      %v4941 = vsel %vm405, %v4940, %v4914
      %v4942 = vsel %vm407, %v4941, %v4918
      %v4943 = vsel %vm409, %v4942, %v4922
      %v4944 = vsel %vm411, %v4943, %v4926
      %v4945 = vsel %vm413, %v4944, %v4930
      %v4948 = vrot.slane %v4938, 4
      %v4949 = vrot.slane %v4945, 4
      %4952 = vst [vmem:[#allocation2 + $0x90] sm:$0xf0] %v4948
      %4953 = vst [vmem:[#allocation2 + $0x98] sm:$0xf0] %v4949
      %v4954 = vld [vmem:[%s164 + $0x2] sm:$0xff]
      %v4955 = vld [vmem:[%s164 + $0xa] sm:$0xff]
      %v4956 = vld [vmem:[%s164 + $0x2a] sm:$0xff]
      %v4957 = vld [vmem:[%s164 + $0x32] sm:$0xff]
      %v4958 = vld [vmem:[%s164 + $0x52] sm:$0xff]
      %v4959 = vld [vmem:[%s164 + $0x5a] sm:$0xff]
      %v4960 = vld [vmem:[%s164 + $0x7a] sm:$0xff]
      %v4961 = vld [vmem:[%s164 + $0x82] sm:$0xff]
      %4970 = vrot.lane.b32.xlu0 %v4954, 112
      %v4971 = vpop.permute.xlu0 %4970
      %4972 = vrot.lane.b32.xlu0 %v4955, 112
      %v4973 = vpop.permute.xlu0 %4972
      %4974 = vrot.lane.b32.xlu0 %v4956, 112
      %v4975 = vpop.permute.xlu0 %4974
      %4976 = vrot.lane.b32.xlu0 %v4957, 112
      %v4977 = vpop.permute.xlu0 %4976
      %4978 = vrot.lane.b32.xlu0 %v4958, 112
      %v4979 = vpop.permute.xlu0 %4978
      %4980 = vrot.lane.b32.xlu0 %v4959, 112
      %v4981 = vpop.permute.xlu0 %4980
      %4982 = vrot.lane.b32.xlu0 %v4960, 112
      %v4983 = vpop.permute.xlu0 %4982
      %4984 = vrot.lane.b32.xlu0 %v4961, 112
      %v4985 = vpop.permute.xlu0 %4984
      %v4994 = vcombine.low %v4971, %v4979
      %v4995 = vcombine.high %v4971, %v4979
      %v4997 = vunpack.c.l.s4 1983009808
      %v4998 = vunpack.c.0.s8 %v4997
      %v4999 = vlaneseq
      %v5000 = vshrl.u32 %v4999, 7
      %v5001 = vsub.s32 %v4998, %v5000
      %v5002 = vrot.slane %v4994, %v5001
      %v5004 = vunpack.c.l.s4 1983009808
      %v5005 = vunpack.c.0.s8 %v5004
      %v5006 = vlaneseq
      %v5007 = vshrl.u32 %v5006, 7
      %v5008 = vsub.s32 %v5005, %v5007
      %v5009 = vrot.slane %v4995, %v5008
      %v5010 = vcombine.low %v4975, %v4983
      %v5011 = vcombine.high %v4975, %v4983
      %v5013 = vunpack.c.l.s4 1983009808
      %v5014 = vunpack.c.0.s8 %v5013
      %v5015 = vlaneseq
      %v5016 = vshrl.u32 %v5015, 7
      %v5017 = vsub.s32 %v5014, %v5016
      %v5018 = vrot.slane %v5010, %v5017
      %v5020 = vunpack.c.l.s4 1983009808
      %v5021 = vunpack.c.0.s8 %v5020
      %v5022 = vlaneseq
      %v5023 = vshrl.u32 %v5022, 7
      %v5024 = vsub.s32 %v5021, %v5023
      %v5025 = vrot.slane %v5011, %v5024
      %v5026 = vcombine.low %v5002, %v5018
      %v5027 = vcombine.high %v5002, %v5018
      %v5029 = vunpack.c.l.s4 1934713408
      %v5030 = vunpack.c.0.s8 %v5029
      %v5031 = vlaneseq
      %v5032 = vshrl.u32 %v5031, 7
      %v5033 = vsub.s32 %v5030, %v5032
      %v5034 = vrot.slane %v5026, %v5033
      %v5036 = vunpack.c.l.s4 1934713408
      %v5037 = vunpack.c.0.s8 %v5036
      %v5038 = vlaneseq
      %v5039 = vshrl.u32 %v5038, 7
      %v5040 = vsub.s32 %v5037, %v5039
      %v5041 = vrot.slane %v5027, %v5040
      %v5042 = vcombine.low %v5009, %v5025
      %v5043 = vcombine.high %v5009, %v5025
      %v5045 = vunpack.c.l.s4 1934713408
      %v5046 = vunpack.c.0.s8 %v5045
      %v5047 = vlaneseq
      %v5048 = vshrl.u32 %v5047, 7
      %v5049 = vsub.s32 %v5046, %v5048
      %v5050 = vrot.slane %v5042, %v5049
      %v5052 = vunpack.c.l.s4 1934713408
      %v5053 = vunpack.c.0.s8 %v5052
      %v5054 = vlaneseq
      %v5055 = vshrl.u32 %v5054, 7
      %v5056 = vsub.s32 %v5053, %v5055
      %v5057 = vrot.slane %v5043, %v5056
      %v5058 = vcombine.high %v5034, 0.0
      %v5059 = vcombine.high %v5041, 0.0
      %v5060 = vcombine.high %v5050, 0.0
      %v5061 = vcombine.high %v5057, 0.0
      %v5062 = vcombine.low %v4973, %v4981
      %v5063 = vcombine.high %v4973, %v4981
      %v5065 = vunpack.c.l.s4 1983009808
      %v5066 = vunpack.c.0.s8 %v5065
      %v5067 = vlaneseq
      %v5068 = vshrl.u32 %v5067, 7
      %v5069 = vsub.s32 %v5066, %v5068
      %v5070 = vrot.slane %v5062, %v5069
      %v5072 = vunpack.c.l.s4 1983009808
      %v5073 = vunpack.c.0.s8 %v5072
      %v5074 = vlaneseq
      %v5075 = vshrl.u32 %v5074, 7
      %v5076 = vsub.s32 %v5073, %v5075
      %v5077 = vrot.slane %v5063, %v5076
      %v5078 = vcombine.low %v4977, %v4985
      %v5079 = vcombine.high %v4977, %v4985
      %v5081 = vunpack.c.l.s4 1983009808
      %v5082 = vunpack.c.0.s8 %v5081
      %v5083 = vlaneseq
      %v5084 = vshrl.u32 %v5083, 7
      %v5085 = vsub.s32 %v5082, %v5084
      %v5086 = vrot.slane %v5078, %v5085
      %v5088 = vunpack.c.l.s4 1983009808
      %v5089 = vunpack.c.0.s8 %v5088
      %v5090 = vlaneseq
      %v5091 = vshrl.u32 %v5090, 7
      %v5092 = vsub.s32 %v5089, %v5091
      %v5093 = vrot.slane %v5079, %v5092
      %v5094 = vcombine.low %v5070, %v5086
      %v5095 = vcombine.high %v5070, %v5086
      %v5097 = vunpack.c.l.s4 1934713408
      %v5098 = vunpack.c.0.s8 %v5097
      %v5099 = vlaneseq
      %v5100 = vshrl.u32 %v5099, 7
      %v5101 = vsub.s32 %v5098, %v5100
      %v5102 = vrot.slane %v5094, %v5101
      %v5104 = vunpack.c.l.s4 1934713408
      %v5105 = vunpack.c.0.s8 %v5104
      %v5106 = vlaneseq
      %v5107 = vshrl.u32 %v5106, 7
      %v5108 = vsub.s32 %v5105, %v5107
      %v5109 = vrot.slane %v5095, %v5108
      %v5110 = vcombine.low %v5077, %v5093
      %v5111 = vcombine.high %v5077, %v5093
      %v5113 = vunpack.c.l.s4 1934713408
      %v5114 = vunpack.c.0.s8 %v5113
      %v5115 = vlaneseq
      %v5116 = vshrl.u32 %v5115, 7
      %v5117 = vsub.s32 %v5114, %v5116
      %v5118 = vrot.slane %v5110, %v5117
      %v5120 = vunpack.c.l.s4 1934713408
      %v5121 = vunpack.c.0.s8 %v5120
      %v5122 = vlaneseq
      %v5123 = vshrl.u32 %v5122, 7
      %v5124 = vsub.s32 %v5121, %v5123
      %v5125 = vrot.slane %v5111, %v5124
      %v5126 = vcombine.high %v5102, 0.0
      %v5127 = vcombine.high %v5109, 0.0
      %v5128 = vcombine.high %v5118, 0.0
      %v5129 = vcombine.high %v5125, 0.0
      %5131 = vrot.lane.b32.xlu0 %v5058, 16
      %v5132 = vpop.permute.xlu0 %5131
      %5135 = vrot.lane.b32.xlu0 %v5041, 32
      %v5136 = vpop.permute.xlu0 %5135
      %5139 = vrot.lane.b32.xlu0 %v5059, 48
      %v5140 = vpop.permute.xlu0 %5139
      %5143 = vrot.lane.b32.xlu0 %v5050, 64
      %v5144 = vpop.permute.xlu0 %5143
      %5147 = vrot.lane.b32.xlu0 %v5060, 80
      %v5148 = vpop.permute.xlu0 %5147
      %5151 = vrot.lane.b32.xlu0 %v5057, 96
      %v5152 = vpop.permute.xlu0 %5151
      %5155 = vrot.lane.b32.xlu0 %v5061, 112
      %v5156 = vpop.permute.xlu0 %5155
      %5159 = vrot.lane.b32.xlu0 %v5126, 16
      %v5160 = vpop.permute.xlu0 %5159
      %5163 = vrot.lane.b32.xlu0 %v5109, 32
      %v5164 = vpop.permute.xlu0 %5163
      %5167 = vrot.lane.b32.xlu0 %v5127, 48
      %v5168 = vpop.permute.xlu0 %5167
      %5171 = vrot.lane.b32.xlu0 %v5118, 64
      %v5172 = vpop.permute.xlu0 %5171
      %5175 = vrot.lane.b32.xlu0 %v5128, 80
      %v5176 = vpop.permute.xlu0 %5175
      %5179 = vrot.lane.b32.xlu0 %v5125, 96
      %v5180 = vpop.permute.xlu0 %5179
      %5183 = vrot.lane.b32.xlu0 %v5129, 112
      %v5184 = vpop.permute.xlu0 %5183
      %v5186 = vsel %vm401, %v5034, %v5132
      %v5187 = vsel %vm403, %v5186, %v5136
      %v5188 = vsel %vm405, %v5187, %v5140
      %v5189 = vsel %vm407, %v5188, %v5144
      %v5190 = vsel %vm409, %v5189, %v5148
      %v5191 = vsel %vm411, %v5190, %v5152
      %v5192 = vsel %vm413, %v5191, %v5156
      %v5193 = vsel %vm401, %v5102, %v5160
      %v5194 = vsel %vm403, %v5193, %v5164
      %v5195 = vsel %vm405, %v5194, %v5168
      %v5196 = vsel %vm407, %v5195, %v5172
      %v5197 = vsel %vm409, %v5196, %v5176
      %v5198 = vsel %vm411, %v5197, %v5180
      %v5199 = vsel %vm413, %v5198, %v5184
      %5200 = vst [vmem:[#allocation2 + $0xa0] sm:$0xf] %v5192
      %5201 = vst [vmem:[#allocation2 + $0xa8] sm:$0xf] %v5199
      %v5202 = vld [vmem:[%s164 + $0x9] sm:$0xff]
      %v5203 = vld [vmem:[%s164 + $0x11] sm:$0xff]
      %v5204 = vld [vmem:[%s164 + $0x31] sm:$0xff]
      %v5205 = vld [vmem:[%s164 + $0x39] sm:$0xff]
      %v5206 = vld [vmem:[%s164 + $0x59] sm:$0xff]
      %v5207 = vld [vmem:[%s164 + $0x61] sm:$0xff]
      %v5208 = vld [vmem:[%s164 + $0x81] sm:$0xff]
      %v5209 = vld [vmem:[%s164 + $0x89] sm:$0xff]
      %5218 = vrot.lane.b32.xlu0 %v5202, 126
      %v5219 = vpop.permute.xlu0 %5218
      %5220 = vrot.lane.b32.xlu0 %v5203, 126
      %v5221 = vpop.permute.xlu0 %5220
      %5222 = vrot.lane.b32.xlu0 %v5204, 126
      %v5223 = vpop.permute.xlu0 %5222
      %5224 = vrot.lane.b32.xlu0 %v5205, 126
      %v5225 = vpop.permute.xlu0 %5224
      %5226 = vrot.lane.b32.xlu0 %v5206, 126
      %v5227 = vpop.permute.xlu0 %5226
      %5228 = vrot.lane.b32.xlu0 %v5207, 126
      %v5229 = vpop.permute.xlu0 %5228
      %5230 = vrot.lane.b32.xlu0 %v5208, 126
      %v5231 = vpop.permute.xlu0 %5230
      %5232 = vrot.lane.b32.xlu0 %v5209, 126
      %v5233 = vpop.permute.xlu0 %5232
      %v5242 = vcombine.low %v5219, %v5227
      %v5243 = vcombine.high %v5219, %v5227
      %v5245 = vunpack.c.l.s4 1983009808
      %v5246 = vunpack.c.0.s8 %v5245
      %v5247 = vlaneseq
      %v5248 = vshrl.u32 %v5247, 7
      %v5249 = vsub.s32 %v5246, %v5248
      %v5250 = vrot.slane %v5242, %v5249
      %v5252 = vunpack.c.l.s4 1983009808
      %v5253 = vunpack.c.0.s8 %v5252
      %v5254 = vlaneseq
      %v5255 = vshrl.u32 %v5254, 7
      %v5256 = vsub.s32 %v5253, %v5255
      %v5257 = vrot.slane %v5243, %v5256
      %v5258 = vcombine.low %v5223, %v5231
      %v5259 = vcombine.high %v5223, %v5231
      %v5261 = vunpack.c.l.s4 1983009808
      %v5262 = vunpack.c.0.s8 %v5261
      %v5263 = vlaneseq
      %v5264 = vshrl.u32 %v5263, 7
      %v5265 = vsub.s32 %v5262, %v5264
      %v5266 = vrot.slane %v5258, %v5265
      %v5268 = vunpack.c.l.s4 1983009808
      %v5269 = vunpack.c.0.s8 %v5268
      %v5270 = vlaneseq
      %v5271 = vshrl.u32 %v5270, 7
      %v5272 = vsub.s32 %v5269, %v5271
      %v5273 = vrot.slane %v5259, %v5272
      %v5274 = vcombine.low %v5250, %v5266
      %v5275 = vcombine.high %v5250, %v5266
      %v5277 = vunpack.c.l.s4 1934713408
      %v5278 = vunpack.c.0.s8 %v5277
      %v5279 = vlaneseq
      %v5280 = vshrl.u32 %v5279, 7
      %v5281 = vsub.s32 %v5278, %v5280
      %v5282 = vrot.slane %v5274, %v5281
      %v5284 = vunpack.c.l.s4 1934713408
      %v5285 = vunpack.c.0.s8 %v5284
      %v5286 = vlaneseq
      %v5287 = vshrl.u32 %v5286, 7
      %v5288 = vsub.s32 %v5285, %v5287
      %v5289 = vrot.slane %v5275, %v5288
      %v5290 = vcombine.low %v5257, %v5273
      %v5291 = vcombine.high %v5257, %v5273
      %v5293 = vunpack.c.l.s4 1934713408
      %v5294 = vunpack.c.0.s8 %v5293
      %v5295 = vlaneseq
      %v5296 = vshrl.u32 %v5295, 7
      %v5297 = vsub.s32 %v5294, %v5296
      %v5298 = vrot.slane %v5290, %v5297
      %v5300 = vunpack.c.l.s4 1934713408
      %v5301 = vunpack.c.0.s8 %v5300
      %v5302 = vlaneseq
      %v5303 = vshrl.u32 %v5302, 7
      %v5304 = vsub.s32 %v5301, %v5303
      %v5305 = vrot.slane %v5291, %v5304
      %v5306 = vcombine.high %v5282, 0.0
      %v5307 = vcombine.high %v5289, 0.0
      %v5308 = vcombine.high %v5298, 0.0
      %v5309 = vcombine.high %v5305, 0.0
      %v5310 = vcombine.low %v5221, %v5229
      %v5311 = vcombine.high %v5221, %v5229
      %v5313 = vunpack.c.l.s4 1983009808
      %v5314 = vunpack.c.0.s8 %v5313
      %v5315 = vlaneseq
      %v5316 = vshrl.u32 %v5315, 7
      %v5317 = vsub.s32 %v5314, %v5316
      %v5318 = vrot.slane %v5310, %v5317
      %v5320 = vunpack.c.l.s4 1983009808
      %v5321 = vunpack.c.0.s8 %v5320
      %v5322 = vlaneseq
      %v5323 = vshrl.u32 %v5322, 7
      %v5324 = vsub.s32 %v5321, %v5323
      %v5325 = vrot.slane %v5311, %v5324
      %v5326 = vcombine.low %v5225, %v5233
      %v5327 = vcombine.high %v5225, %v5233
      %v5329 = vunpack.c.l.s4 1983009808
      %v5330 = vunpack.c.0.s8 %v5329
      %v5331 = vlaneseq
      %v5332 = vshrl.u32 %v5331, 7
      %v5333 = vsub.s32 %v5330, %v5332
      %v5334 = vrot.slane %v5326, %v5333
      %v5336 = vunpack.c.l.s4 1983009808
      %v5337 = vunpack.c.0.s8 %v5336
      %v5338 = vlaneseq
      %v5339 = vshrl.u32 %v5338, 7
      %v5340 = vsub.s32 %v5337, %v5339
      %v5341 = vrot.slane %v5327, %v5340
      %v5342 = vcombine.low %v5318, %v5334
      %v5343 = vcombine.high %v5318, %v5334
      %v5345 = vunpack.c.l.s4 1934713408
      %v5346 = vunpack.c.0.s8 %v5345
      %v5347 = vlaneseq
      %v5348 = vshrl.u32 %v5347, 7
      %v5349 = vsub.s32 %v5346, %v5348
      %v5350 = vrot.slane %v5342, %v5349
      %v5352 = vunpack.c.l.s4 1934713408
      %v5353 = vunpack.c.0.s8 %v5352
      %v5354 = vlaneseq
      %v5355 = vshrl.u32 %v5354, 7
      %v5356 = vsub.s32 %v5353, %v5355
      %v5357 = vrot.slane %v5343, %v5356
      %v5358 = vcombine.low %v5325, %v5341
      %v5359 = vcombine.high %v5325, %v5341
      %v5361 = vunpack.c.l.s4 1934713408
      %v5362 = vunpack.c.0.s8 %v5361
      %v5363 = vlaneseq
      %v5364 = vshrl.u32 %v5363, 7
      %v5365 = vsub.s32 %v5362, %v5364
      %v5366 = vrot.slane %v5358, %v5365
      %v5368 = vunpack.c.l.s4 1934713408
      %v5369 = vunpack.c.0.s8 %v5368
      %v5370 = vlaneseq
      %v5371 = vshrl.u32 %v5370, 7
      %v5372 = vsub.s32 %v5369, %v5371
      %v5373 = vrot.slane %v5359, %v5372
      %v5374 = vcombine.high %v5350, 0.0
      %v5375 = vcombine.high %v5357, 0.0
      %v5376 = vcombine.high %v5366, 0.0
      %v5377 = vcombine.high %v5373, 0.0
      %5379 = vrot.lane.b32.xlu0 %v5306, 16
      %v5380 = vpop.permute.xlu0 %5379
      %5383 = vrot.lane.b32.xlu0 %v5289, 32
      %v5384 = vpop.permute.xlu0 %5383
      %5387 = vrot.lane.b32.xlu0 %v5307, 48
      %v5388 = vpop.permute.xlu0 %5387
      %5391 = vrot.lane.b32.xlu0 %v5298, 64
      %v5392 = vpop.permute.xlu0 %5391
      %5395 = vrot.lane.b32.xlu0 %v5308, 80
      %v5396 = vpop.permute.xlu0 %5395
      %5399 = vrot.lane.b32.xlu0 %v5305, 96
      %v5400 = vpop.permute.xlu0 %5399
      %5403 = vrot.lane.b32.xlu0 %v5309, 112
      %v5404 = vpop.permute.xlu0 %5403
      %5407 = vrot.lane.b32.xlu0 %v5374, 16
      %v5408 = vpop.permute.xlu0 %5407
      %5411 = vrot.lane.b32.xlu0 %v5357, 32
      %v5412 = vpop.permute.xlu0 %5411
      %5415 = vrot.lane.b32.xlu0 %v5375, 48
      %v5416 = vpop.permute.xlu0 %5415
      %5419 = vrot.lane.b32.xlu0 %v5366, 64
      %v5420 = vpop.permute.xlu0 %5419
      %5423 = vrot.lane.b32.xlu0 %v5376, 80
      %v5424 = vpop.permute.xlu0 %5423
      %5427 = vrot.lane.b32.xlu0 %v5373, 96
      %v5428 = vpop.permute.xlu0 %5427
      %5431 = vrot.lane.b32.xlu0 %v5377, 112
      %v5432 = vpop.permute.xlu0 %5431
      %v5434 = vsel %vm401, %v5282, %v5380
      %v5435 = vsel %vm403, %v5434, %v5384
      %v5436 = vsel %vm405, %v5435, %v5388
      %v5437 = vsel %vm407, %v5436, %v5392
      %v5438 = vsel %vm409, %v5437, %v5396
      %v5439 = vsel %vm411, %v5438, %v5400
      %v5440 = vsel %vm413, %v5439, %v5404
      %v5441 = vsel %vm401, %v5350, %v5408
      %v5442 = vsel %vm403, %v5441, %v5412
      %v5443 = vsel %vm405, %v5442, %v5416
      %v5444 = vsel %vm407, %v5443, %v5420
      %v5445 = vsel %vm409, %v5444, %v5424
      %v5446 = vsel %vm411, %v5445, %v5428
      %v5447 = vsel %vm413, %v5446, %v5432
      %v5450 = vrot.slane %v5440, 4
      %v5451 = vrot.slane %v5447, 4
      %5454 = vst [vmem:[#allocation2 + $0xa0] sm:$0xf0] %v5450
      %5455 = vst [vmem:[#allocation2 + $0xa8] sm:$0xf0] %v5451
      %v5456 = vld [vmem:[%s164 + $0x9] sm:$0xff]
      %v5457 = vld [vmem:[%s164 + $0x11] sm:$0xff]
      %v5458 = vld [vmem:[%s164 + $0x31] sm:$0xff]
      %v5459 = vld [vmem:[%s164 + $0x39] sm:$0xff]
      %v5460 = vld [vmem:[%s164 + $0x59] sm:$0xff]
      %v5461 = vld [vmem:[%s164 + $0x61] sm:$0xff]
      %v5462 = vld [vmem:[%s164 + $0x81] sm:$0xff]
      %v5463 = vld [vmem:[%s164 + $0x89] sm:$0xff]
      %5472 = vrot.lane.b32.xlu0 %v5456, 112
      %v5473 = vpop.permute.xlu0 %5472
      %5474 = vrot.lane.b32.xlu0 %v5457, 112
      %v5475 = vpop.permute.xlu0 %5474
      %5476 = vrot.lane.b32.xlu0 %v5458, 112
      %v5477 = vpop.permute.xlu0 %5476
      %5478 = vrot.lane.b32.xlu0 %v5459, 112
      %v5479 = vpop.permute.xlu0 %5478
      %5480 = vrot.lane.b32.xlu0 %v5460, 112
      %v5481 = vpop.permute.xlu0 %5480
      %5482 = vrot.lane.b32.xlu0 %v5461, 112
      %v5483 = vpop.permute.xlu0 %5482
      %5484 = vrot.lane.b32.xlu0 %v5462, 112
      %v5485 = vpop.permute.xlu0 %5484
      %5486 = vrot.lane.b32.xlu0 %v5463, 112
      %v5487 = vpop.permute.xlu0 %5486
      %v5496 = vcombine.low %v5473, %v5481
      %v5497 = vcombine.high %v5473, %v5481
      %v5499 = vunpack.c.l.s4 1983009808
      %v5500 = vunpack.c.0.s8 %v5499
      %v5501 = vlaneseq
      %v5502 = vshrl.u32 %v5501, 7
      %v5503 = vsub.s32 %v5500, %v5502
      %v5504 = vrot.slane %v5496, %v5503
      %v5506 = vunpack.c.l.s4 1983009808
      %v5507 = vunpack.c.0.s8 %v5506
      %v5508 = vlaneseq
      %v5509 = vshrl.u32 %v5508, 7
      %v5510 = vsub.s32 %v5507, %v5509
      %v5511 = vrot.slane %v5497, %v5510
      %v5512 = vcombine.low %v5477, %v5485
      %v5513 = vcombine.high %v5477, %v5485
      %v5515 = vunpack.c.l.s4 1983009808
      %v5516 = vunpack.c.0.s8 %v5515
      %v5517 = vlaneseq
      %v5518 = vshrl.u32 %v5517, 7
      %v5519 = vsub.s32 %v5516, %v5518
      %v5520 = vrot.slane %v5512, %v5519
      %v5522 = vunpack.c.l.s4 1983009808
      %v5523 = vunpack.c.0.s8 %v5522
      %v5524 = vlaneseq
      %v5525 = vshrl.u32 %v5524, 7
      %v5526 = vsub.s32 %v5523, %v5525
      %v5527 = vrot.slane %v5513, %v5526
      %v5528 = vcombine.low %v5504, %v5520
      %v5529 = vcombine.high %v5504, %v5520
      %v5531 = vunpack.c.l.s4 1934713408
      %v5532 = vunpack.c.0.s8 %v5531
      %v5533 = vlaneseq
      %v5534 = vshrl.u32 %v5533, 7
      %v5535 = vsub.s32 %v5532, %v5534
      %v5536 = vrot.slane %v5528, %v5535
      %v5538 = vunpack.c.l.s4 1934713408
      %v5539 = vunpack.c.0.s8 %v5538
      %v5540 = vlaneseq
      %v5541 = vshrl.u32 %v5540, 7
      %v5542 = vsub.s32 %v5539, %v5541
      %v5543 = vrot.slane %v5529, %v5542
      %v5544 = vcombine.low %v5511, %v5527
      %v5545 = vcombine.high %v5511, %v5527
      %v5547 = vunpack.c.l.s4 1934713408
      %v5548 = vunpack.c.0.s8 %v5547
      %v5549 = vlaneseq
      %v5550 = vshrl.u32 %v5549, 7
      %v5551 = vsub.s32 %v5548, %v5550
      %v5552 = vrot.slane %v5544, %v5551
      %v5554 = vunpack.c.l.s4 1934713408
      %v5555 = vunpack.c.0.s8 %v5554
      %v5556 = vlaneseq
      %v5557 = vshrl.u32 %v5556, 7
      %v5558 = vsub.s32 %v5555, %v5557
      %v5559 = vrot.slane %v5545, %v5558
      %v5560 = vcombine.high %v5536, 0.0
      %v5561 = vcombine.high %v5543, 0.0
      %v5562 = vcombine.high %v5552, 0.0
      %v5563 = vcombine.high %v5559, 0.0
      %v5564 = vcombine.low %v5475, %v5483
      %v5565 = vcombine.high %v5475, %v5483
      %v5567 = vunpack.c.l.s4 1983009808
      %v5568 = vunpack.c.0.s8 %v5567
      %v5569 = vlaneseq
      %v5570 = vshrl.u32 %v5569, 7
      %v5571 = vsub.s32 %v5568, %v5570
      %v5572 = vrot.slane %v5564, %v5571
      %v5574 = vunpack.c.l.s4 1983009808
      %v5575 = vunpack.c.0.s8 %v5574
      %v5576 = vlaneseq
      %v5577 = vshrl.u32 %v5576, 7
      %v5578 = vsub.s32 %v5575, %v5577
      %v5579 = vrot.slane %v5565, %v5578
      %v5580 = vcombine.low %v5479, %v5487
      %v5581 = vcombine.high %v5479, %v5487
      %v5583 = vunpack.c.l.s4 1983009808
      %v5584 = vunpack.c.0.s8 %v5583
      %v5585 = vlaneseq
      %v5586 = vshrl.u32 %v5585, 7
      %v5587 = vsub.s32 %v5584, %v5586
      %v5588 = vrot.slane %v5580, %v5587
      %v5590 = vunpack.c.l.s4 1983009808
      %v5591 = vunpack.c.0.s8 %v5590
      %v5592 = vlaneseq
      %v5593 = vshrl.u32 %v5592, 7
      %v5594 = vsub.s32 %v5591, %v5593
      %v5595 = vrot.slane %v5581, %v5594
      %v5596 = vcombine.low %v5572, %v5588
      %v5597 = vcombine.high %v5572, %v5588
      %v5599 = vunpack.c.l.s4 1934713408
      %v5600 = vunpack.c.0.s8 %v5599
      %v5601 = vlaneseq
      %v5602 = vshrl.u32 %v5601, 7
      %v5603 = vsub.s32 %v5600, %v5602
      %v5604 = vrot.slane %v5596, %v5603
      %v5606 = vunpack.c.l.s4 1934713408
      %v5607 = vunpack.c.0.s8 %v5606
      %v5608 = vlaneseq
      %v5609 = vshrl.u32 %v5608, 7
      %v5610 = vsub.s32 %v5607, %v5609
      %v5611 = vrot.slane %v5597, %v5610
      %v5612 = vcombine.low %v5579, %v5595
      %v5613 = vcombine.high %v5579, %v5595
      %v5615 = vunpack.c.l.s4 1934713408
      %v5616 = vunpack.c.0.s8 %v5615
      %v5617 = vlaneseq
      %v5618 = vshrl.u32 %v5617, 7
      %v5619 = vsub.s32 %v5616, %v5618
      %v5620 = vrot.slane %v5612, %v5619
      %v5622 = vunpack.c.l.s4 1934713408
      %v5623 = vunpack.c.0.s8 %v5622
      %v5624 = vlaneseq
      %v5625 = vshrl.u32 %v5624, 7
      %v5626 = vsub.s32 %v5623, %v5625
      %v5627 = vrot.slane %v5613, %v5626
      %v5628 = vcombine.high %v5604, 0.0
      %v5629 = vcombine.high %v5611, 0.0
      %v5630 = vcombine.high %v5620, 0.0
      %v5631 = vcombine.high %v5627, 0.0
      %5633 = vrot.lane.b32.xlu0 %v5560, 16
      %v5634 = vpop.permute.xlu0 %5633
      %5637 = vrot.lane.b32.xlu0 %v5543, 32
      %v5638 = vpop.permute.xlu0 %5637
      %5641 = vrot.lane.b32.xlu0 %v5561, 48
      %v5642 = vpop.permute.xlu0 %5641
      %5645 = vrot.lane.b32.xlu0 %v5552, 64
      %v5646 = vpop.permute.xlu0 %5645
      %5649 = vrot.lane.b32.xlu0 %v5562, 80
      %v5650 = vpop.permute.xlu0 %5649
      %5653 = vrot.lane.b32.xlu0 %v5559, 96
      %v5654 = vpop.permute.xlu0 %5653
      %5657 = vrot.lane.b32.xlu0 %v5563, 112
      %v5658 = vpop.permute.xlu0 %5657
      %5661 = vrot.lane.b32.xlu0 %v5628, 16
      %v5662 = vpop.permute.xlu0 %5661
      %5665 = vrot.lane.b32.xlu0 %v5611, 32
      %v5666 = vpop.permute.xlu0 %5665
      %5669 = vrot.lane.b32.xlu0 %v5629, 48
      %v5670 = vpop.permute.xlu0 %5669
      %5673 = vrot.lane.b32.xlu0 %v5620, 64
      %v5674 = vpop.permute.xlu0 %5673
      %5677 = vrot.lane.b32.xlu0 %v5630, 80
      %v5678 = vpop.permute.xlu0 %5677
      %5681 = vrot.lane.b32.xlu0 %v5627, 96
      %v5682 = vpop.permute.xlu0 %5681
      %5685 = vrot.lane.b32.xlu0 %v5631, 112
      %v5686 = vpop.permute.xlu0 %5685
      %v5688 = vsel %vm401, %v5536, %v5634
      %v5689 = vsel %vm403, %v5688, %v5638
      %v5690 = vsel %vm405, %v5689, %v5642
      %v5691 = vsel %vm407, %v5690, %v5646
      %v5692 = vsel %vm409, %v5691, %v5650
      %v5693 = vsel %vm411, %v5692, %v5654
      %v5694 = vsel %vm413, %v5693, %v5658
      %v5695 = vsel %vm401, %v5604, %v5662
      %v5696 = vsel %vm403, %v5695, %v5666
      %v5697 = vsel %vm405, %v5696, %v5670
      %v5698 = vsel %vm407, %v5697, %v5674
      %v5699 = vsel %vm409, %v5698, %v5678
      %v5700 = vsel %vm411, %v5699, %v5682
      %v5701 = vsel %vm413, %v5700, %v5686
      %v5704 = vrot.slane %v5694, 4
      %v5705 = vrot.slane %v5701, 4
      %5708 = vst [vmem:[#allocation2 + $0xb0] sm:$0xf0] %v5704
      %5709 = vst [vmem:[#allocation2 + $0xb8] sm:$0xf0] %v5705
      %v5710 = vld [vmem:[%s164 + $0x10] sm:$0xff]
      %v5711 = vld [vmem:[%s164 + $0x18] sm:$0xff]
      %v5712 = vld [vmem:[%s164 + $0x38] sm:$0xff]
      %v5713 = vld [vmem:[%s164 + $0x40] sm:$0xff]
      %v5714 = vld [vmem:[%s164 + $0x60] sm:$0xff]
      %v5715 = vld [vmem:[%s164 + $0x68] sm:$0xff]
      %v5716 = vld [vmem:[%s164 + $0x88] sm:$0xff]
      %v5717 = vld [vmem:[%s164 + $0x90] sm:$0xff]
      %5726 = vrot.lane.b32.xlu0 %v5710, 126
      %v5727 = vpop.permute.xlu0 %5726
      %5728 = vrot.lane.b32.xlu0 %v5711, 126
      %v5729 = vpop.permute.xlu0 %5728
      %5730 = vrot.lane.b32.xlu0 %v5712, 126
      %v5731 = vpop.permute.xlu0 %5730
      %5732 = vrot.lane.b32.xlu0 %v5713, 126
      %v5733 = vpop.permute.xlu0 %5732
      %5734 = vrot.lane.b32.xlu0 %v5714, 126
      %v5735 = vpop.permute.xlu0 %5734
      %5736 = vrot.lane.b32.xlu0 %v5715, 126
      %v5737 = vpop.permute.xlu0 %5736
      %5738 = vrot.lane.b32.xlu0 %v5716, 126
      %v5739 = vpop.permute.xlu0 %5738
      %5740 = vrot.lane.b32.xlu0 %v5717, 126
      %v5741 = vpop.permute.xlu0 %5740
      %v5750 = vcombine.low %v5727, %v5735
      %v5751 = vcombine.high %v5727, %v5735
      %v5753 = vunpack.c.l.s4 1983009808
      %v5754 = vunpack.c.0.s8 %v5753
      %v5755 = vlaneseq
      %v5756 = vshrl.u32 %v5755, 7
      %v5757 = vsub.s32 %v5754, %v5756
      %v5758 = vrot.slane %v5750, %v5757
      %v5760 = vunpack.c.l.s4 1983009808
      %v5761 = vunpack.c.0.s8 %v5760
      %v5762 = vlaneseq
      %v5763 = vshrl.u32 %v5762, 7
      %v5764 = vsub.s32 %v5761, %v5763
      %v5765 = vrot.slane %v5751, %v5764
      %v5766 = vcombine.low %v5731, %v5739
      %v5767 = vcombine.high %v5731, %v5739
      %v5769 = vunpack.c.l.s4 1983009808
      %v5770 = vunpack.c.0.s8 %v5769
      %v5771 = vlaneseq
      %v5772 = vshrl.u32 %v5771, 7
      %v5773 = vsub.s32 %v5770, %v5772
      %v5774 = vrot.slane %v5766, %v5773
      %v5776 = vunpack.c.l.s4 1983009808
      %v5777 = vunpack.c.0.s8 %v5776
      %v5778 = vlaneseq
      %v5779 = vshrl.u32 %v5778, 7
      %v5780 = vsub.s32 %v5777, %v5779
      %v5781 = vrot.slane %v5767, %v5780
      %v5782 = vcombine.low %v5758, %v5774
      %v5783 = vcombine.high %v5758, %v5774
      %v5785 = vunpack.c.l.s4 1934713408
      %v5786 = vunpack.c.0.s8 %v5785
      %v5787 = vlaneseq
      %v5788 = vshrl.u32 %v5787, 7
      %v5789 = vsub.s32 %v5786, %v5788
      %v5790 = vrot.slane %v5782, %v5789
      %v5792 = vunpack.c.l.s4 1934713408
      %v5793 = vunpack.c.0.s8 %v5792
      %v5794 = vlaneseq
      %v5795 = vshrl.u32 %v5794, 7
      %v5796 = vsub.s32 %v5793, %v5795
      %v5797 = vrot.slane %v5783, %v5796
      %v5798 = vcombine.low %v5765, %v5781
      %v5799 = vcombine.high %v5765, %v5781
      %v5801 = vunpack.c.l.s4 1934713408
      %v5802 = vunpack.c.0.s8 %v5801
      %v5803 = vlaneseq
      %v5804 = vshrl.u32 %v5803, 7
      %v5805 = vsub.s32 %v5802, %v5804
      %v5806 = vrot.slane %v5798, %v5805
      %v5808 = vunpack.c.l.s4 1934713408
      %v5809 = vunpack.c.0.s8 %v5808
      %v5810 = vlaneseq
      %v5811 = vshrl.u32 %v5810, 7
      %v5812 = vsub.s32 %v5809, %v5811
      %v5813 = vrot.slane %v5799, %v5812
      %v5814 = vcombine.high %v5790, 0.0
      %v5815 = vcombine.high %v5797, 0.0
      %v5816 = vcombine.high %v5806, 0.0
      %v5817 = vcombine.high %v5813, 0.0
      %v5818 = vcombine.low %v5729, %v5737
      %v5819 = vcombine.high %v5729, %v5737
      %v5821 = vunpack.c.l.s4 1983009808
      %v5822 = vunpack.c.0.s8 %v5821
      %v5823 = vlaneseq
      %v5824 = vshrl.u32 %v5823, 7
      %v5825 = vsub.s32 %v5822, %v5824
      %v5826 = vrot.slane %v5818, %v5825
      %v5828 = vunpack.c.l.s4 1983009808
      %v5829 = vunpack.c.0.s8 %v5828
      %v5830 = vlaneseq
      %v5831 = vshrl.u32 %v5830, 7
      %v5832 = vsub.s32 %v5829, %v5831
      %v5833 = vrot.slane %v5819, %v5832
      %v5834 = vcombine.low %v5733, %v5741
      %v5835 = vcombine.high %v5733, %v5741
      %v5837 = vunpack.c.l.s4 1983009808
      %v5838 = vunpack.c.0.s8 %v5837
      %v5839 = vlaneseq
      %v5840 = vshrl.u32 %v5839, 7
      %v5841 = vsub.s32 %v5838, %v5840
      %v5842 = vrot.slane %v5834, %v5841
      %v5844 = vunpack.c.l.s4 1983009808
      %v5845 = vunpack.c.0.s8 %v5844
      %v5846 = vlaneseq
      %v5847 = vshrl.u32 %v5846, 7
      %v5848 = vsub.s32 %v5845, %v5847
      %v5849 = vrot.slane %v5835, %v5848
      %v5850 = vcombine.low %v5826, %v5842
      %v5851 = vcombine.high %v5826, %v5842
      %v5853 = vunpack.c.l.s4 1934713408
      %v5854 = vunpack.c.0.s8 %v5853
      %v5855 = vlaneseq
      %v5856 = vshrl.u32 %v5855, 7
      %v5857 = vsub.s32 %v5854, %v5856
      %v5858 = vrot.slane %v5850, %v5857
      %v5860 = vunpack.c.l.s4 1934713408
      %v5861 = vunpack.c.0.s8 %v5860
      %v5862 = vlaneseq
      %v5863 = vshrl.u32 %v5862, 7
      %v5864 = vsub.s32 %v5861, %v5863
      %v5865 = vrot.slane %v5851, %v5864
      %v5866 = vcombine.low %v5833, %v5849
      %v5867 = vcombine.high %v5833, %v5849
      %v5869 = vunpack.c.l.s4 1934713408
      %v5870 = vunpack.c.0.s8 %v5869
      %v5871 = vlaneseq
      %v5872 = vshrl.u32 %v5871, 7
      %v5873 = vsub.s32 %v5870, %v5872
      %v5874 = vrot.slane %v5866, %v5873
      %v5876 = vunpack.c.l.s4 1934713408
      %v5877 = vunpack.c.0.s8 %v5876
      %v5878 = vlaneseq
      %v5879 = vshrl.u32 %v5878, 7
      %v5880 = vsub.s32 %v5877, %v5879
      %v5881 = vrot.slane %v5867, %v5880
      %v5882 = vcombine.high %v5858, 0.0
      %v5883 = vcombine.high %v5865, 0.0
      %v5884 = vcombine.high %v5874, 0.0
      %v5885 = vcombine.high %v5881, 0.0
      %5887 = vrot.lane.b32.xlu0 %v5814, 16
      %v5888 = vpop.permute.xlu0 %5887
      %5891 = vrot.lane.b32.xlu0 %v5797, 32
      %v5892 = vpop.permute.xlu0 %5891
      %5895 = vrot.lane.b32.xlu0 %v5815, 48
      %v5896 = vpop.permute.xlu0 %5895
      %5899 = vrot.lane.b32.xlu0 %v5806, 64
      %v5900 = vpop.permute.xlu0 %5899
      %5903 = vrot.lane.b32.xlu0 %v5816, 80
      %v5904 = vpop.permute.xlu0 %5903
      %5907 = vrot.lane.b32.xlu0 %v5813, 96
      %v5908 = vpop.permute.xlu0 %5907
      %5911 = vrot.lane.b32.xlu0 %v5817, 112
      %v5912 = vpop.permute.xlu0 %5911
      %5915 = vrot.lane.b32.xlu0 %v5882, 16
      %v5916 = vpop.permute.xlu0 %5915
      %5919 = vrot.lane.b32.xlu0 %v5865, 32
      %v5920 = vpop.permute.xlu0 %5919
      %5923 = vrot.lane.b32.xlu0 %v5883, 48
      %v5924 = vpop.permute.xlu0 %5923
      %5927 = vrot.lane.b32.xlu0 %v5874, 64
      %v5928 = vpop.permute.xlu0 %5927
      %5931 = vrot.lane.b32.xlu0 %v5884, 80
      %v5932 = vpop.permute.xlu0 %5931
      %5935 = vrot.lane.b32.xlu0 %v5881, 96
      %v5936 = vpop.permute.xlu0 %5935
      %5939 = vrot.lane.b32.xlu0 %v5885, 112
      %v5940 = vpop.permute.xlu0 %5939
      %v5942 = vsel %vm401, %v5790, %v5888
      %v5943 = vsel %vm403, %v5942, %v5892
      %v5944 = vsel %vm405, %v5943, %v5896
      %v5945 = vsel %vm407, %v5944, %v5900
      %v5946 = vsel %vm409, %v5945, %v5904
      %v5947 = vsel %vm411, %v5946, %v5908
      %v5948 = vsel %vm413, %v5947, %v5912
      %v5949 = vsel %vm401, %v5858, %v5916
      %v5950 = vsel %vm403, %v5949, %v5920
      %v5951 = vsel %vm405, %v5950, %v5924
      %v5952 = vsel %vm407, %v5951, %v5928
      %v5953 = vsel %vm409, %v5952, %v5932
      %v5954 = vsel %vm411, %v5953, %v5936
      %v5955 = vsel %vm413, %v5954, %v5940
      %5956 = vst [vmem:[#allocation2 + $0xc0] sm:$0xf] %v5948
      %5957 = vst [vmem:[#allocation2 + $0xc8] sm:$0xf] %v5955
      %v5958 = vld [vmem:[%s164 + $0x10] sm:$0xff]
      %v5959 = vld [vmem:[%s164 + $0x18] sm:$0xff]
      %v5960 = vld [vmem:[%s164 + $0x38] sm:$0xff]
      %v5961 = vld [vmem:[%s164 + $0x40] sm:$0xff]
      %v5962 = vld [vmem:[%s164 + $0x60] sm:$0xff]
      %v5963 = vld [vmem:[%s164 + $0x68] sm:$0xff]
      %v5964 = vld [vmem:[%s164 + $0x88] sm:$0xff]
      %v5965 = vld [vmem:[%s164 + $0x90] sm:$0xff]
      %5974 = vrot.lane.b32.xlu0 %v5958, 119
      %v5975 = vpop.permute.xlu0 %5974
      %5976 = vrot.lane.b32.xlu0 %v5959, 119
      %v5977 = vpop.permute.xlu0 %5976
      %5978 = vrot.lane.b32.xlu0 %v5960, 119
      %v5979 = vpop.permute.xlu0 %5978
      %5980 = vrot.lane.b32.xlu0 %v5961, 119
      %v5981 = vpop.permute.xlu0 %5980
      %5982 = vrot.lane.b32.xlu0 %v5962, 119
      %v5983 = vpop.permute.xlu0 %5982
      %5984 = vrot.lane.b32.xlu0 %v5963, 119
      %v5985 = vpop.permute.xlu0 %5984
      %5986 = vrot.lane.b32.xlu0 %v5964, 119
      %v5987 = vpop.permute.xlu0 %5986
      %5988 = vrot.lane.b32.xlu0 %v5965, 119
      %v5989 = vpop.permute.xlu0 %5988
      %v5998 = vcombine.low %v5975, %v5983
      %v5999 = vcombine.high %v5975, %v5983
      %v6001 = vunpack.c.l.s4 1983009808
      %v6002 = vunpack.c.0.s8 %v6001
      %v6003 = vlaneseq
      %v6004 = vshrl.u32 %v6003, 7
      %v6005 = vsub.s32 %v6002, %v6004
      %v6006 = vrot.slane %v5998, %v6005
      %v6008 = vunpack.c.l.s4 1983009808
      %v6009 = vunpack.c.0.s8 %v6008
      %v6010 = vlaneseq
      %v6011 = vshrl.u32 %v6010, 7
      %v6012 = vsub.s32 %v6009, %v6011
      %v6013 = vrot.slane %v5999, %v6012
      %v6014 = vcombine.low %v5979, %v5987
      %v6015 = vcombine.high %v5979, %v5987
      %v6017 = vunpack.c.l.s4 1983009808
      %v6018 = vunpack.c.0.s8 %v6017
      %v6019 = vlaneseq
      %v6020 = vshrl.u32 %v6019, 7
      %v6021 = vsub.s32 %v6018, %v6020
      %v6022 = vrot.slane %v6014, %v6021
      %v6024 = vunpack.c.l.s4 1983009808
      %v6025 = vunpack.c.0.s8 %v6024
      %v6026 = vlaneseq
      %v6027 = vshrl.u32 %v6026, 7
      %v6028 = vsub.s32 %v6025, %v6027
      %v6029 = vrot.slane %v6015, %v6028
      %v6030 = vcombine.low %v6006, %v6022
      %v6031 = vcombine.high %v6006, %v6022
      %v6033 = vunpack.c.l.s4 1934713408
      %v6034 = vunpack.c.0.s8 %v6033
      %v6035 = vlaneseq
      %v6036 = vshrl.u32 %v6035, 7
      %v6037 = vsub.s32 %v6034, %v6036
      %v6038 = vrot.slane %v6030, %v6037
      %v6040 = vunpack.c.l.s4 1934713408
      %v6041 = vunpack.c.0.s8 %v6040
      %v6042 = vlaneseq
      %v6043 = vshrl.u32 %v6042, 7
      %v6044 = vsub.s32 %v6041, %v6043
      %v6045 = vrot.slane %v6031, %v6044
      %v6046 = vcombine.low %v6013, %v6029
      %v6047 = vcombine.high %v6013, %v6029
      %v6049 = vunpack.c.l.s4 1934713408
      %v6050 = vunpack.c.0.s8 %v6049
      %v6051 = vlaneseq
      %v6052 = vshrl.u32 %v6051, 7
      %v6053 = vsub.s32 %v6050, %v6052
      %v6054 = vrot.slane %v6046, %v6053
      %v6056 = vunpack.c.l.s4 1934713408
      %v6057 = vunpack.c.0.s8 %v6056
      %v6058 = vlaneseq
      %v6059 = vshrl.u32 %v6058, 7
      %v6060 = vsub.s32 %v6057, %v6059
      %v6061 = vrot.slane %v6047, %v6060
      %v6062 = vcombine.high %v6038, 0.0
      %v6063 = vcombine.high %v6045, 0.0
      %v6064 = vcombine.high %v6054, 0.0
      %v6065 = vcombine.high %v6061, 0.0
      %v6066 = vcombine.low %v5977, %v5985
      %v6067 = vcombine.high %v5977, %v5985
      %v6069 = vunpack.c.l.s4 1983009808
      %v6070 = vunpack.c.0.s8 %v6069
      %v6071 = vlaneseq
      %v6072 = vshrl.u32 %v6071, 7
      %v6073 = vsub.s32 %v6070, %v6072
      %v6074 = vrot.slane %v6066, %v6073
      %v6076 = vunpack.c.l.s4 1983009808
      %v6077 = vunpack.c.0.s8 %v6076
      %v6078 = vlaneseq
      %v6079 = vshrl.u32 %v6078, 7
      %v6080 = vsub.s32 %v6077, %v6079
      %v6081 = vrot.slane %v6067, %v6080
      %v6082 = vcombine.low %v5981, %v5989
      %v6083 = vcombine.high %v5981, %v5989
      %v6085 = vunpack.c.l.s4 1983009808
      %v6086 = vunpack.c.0.s8 %v6085
      %v6087 = vlaneseq
      %v6088 = vshrl.u32 %v6087, 7
      %v6089 = vsub.s32 %v6086, %v6088
      %v6090 = vrot.slane %v6082, %v6089
      %v6092 = vunpack.c.l.s4 1983009808
      %v6093 = vunpack.c.0.s8 %v6092
      %v6094 = vlaneseq
      %v6095 = vshrl.u32 %v6094, 7
      %v6096 = vsub.s32 %v6093, %v6095
      %v6097 = vrot.slane %v6083, %v6096
      %v6098 = vcombine.low %v6074, %v6090
      %v6099 = vcombine.high %v6074, %v6090
      %v6101 = vunpack.c.l.s4 1934713408
      %v6102 = vunpack.c.0.s8 %v6101
      %v6103 = vlaneseq
      %v6104 = vshrl.u32 %v6103, 7
      %v6105 = vsub.s32 %v6102, %v6104
      %v6106 = vrot.slane %v6098, %v6105
      %v6108 = vunpack.c.l.s4 1934713408
      %v6109 = vunpack.c.0.s8 %v6108
      %v6110 = vlaneseq
      %v6111 = vshrl.u32 %v6110, 7
      %v6112 = vsub.s32 %v6109, %v6111
      %v6113 = vrot.slane %v6099, %v6112
      %v6114 = vcombine.low %v6081, %v6097
      %v6115 = vcombine.high %v6081, %v6097
      %v6117 = vunpack.c.l.s4 1934713408
      %v6118 = vunpack.c.0.s8 %v6117
      %v6119 = vlaneseq
      %v6120 = vshrl.u32 %v6119, 7
      %v6121 = vsub.s32 %v6118, %v6120
      %v6122 = vrot.slane %v6114, %v6121
      %v6124 = vunpack.c.l.s4 1934713408
      %v6125 = vunpack.c.0.s8 %v6124
      %v6126 = vlaneseq
      %v6127 = vshrl.u32 %v6126, 7
      %v6128 = vsub.s32 %v6125, %v6127
      %v6129 = vrot.slane %v6115, %v6128
      %v6130 = vcombine.high %v6106, 0.0
      %v6131 = vcombine.high %v6113, 0.0
      %v6132 = vcombine.high %v6122, 0.0
      %v6133 = vcombine.high %v6129, 0.0
      %6135 = vrot.lane.b32.xlu0 %v6062, 16
      %v6136 = vpop.permute.xlu0 %6135
      %6139 = vrot.lane.b32.xlu0 %v6045, 32
      %v6140 = vpop.permute.xlu0 %6139
      %6143 = vrot.lane.b32.xlu0 %v6063, 48
      %v6144 = vpop.permute.xlu0 %6143
      %6147 = vrot.lane.b32.xlu0 %v6054, 64
      %v6148 = vpop.permute.xlu0 %6147
      %6151 = vrot.lane.b32.xlu0 %v6064, 80
      %v6152 = vpop.permute.xlu0 %6151
      %6155 = vrot.lane.b32.xlu0 %v6061, 96
      %v6156 = vpop.permute.xlu0 %6155
      %6159 = vrot.lane.b32.xlu0 %v6065, 112
      %v6160 = vpop.permute.xlu0 %6159
      %6163 = vrot.lane.b32.xlu0 %v6130, 16
      %v6164 = vpop.permute.xlu0 %6163
      %6167 = vrot.lane.b32.xlu0 %v6113, 32
      %v6168 = vpop.permute.xlu0 %6167
      %6171 = vrot.lane.b32.xlu0 %v6131, 48
      %v6172 = vpop.permute.xlu0 %6171
      %6175 = vrot.lane.b32.xlu0 %v6122, 64
      %v6176 = vpop.permute.xlu0 %6175
      %6179 = vrot.lane.b32.xlu0 %v6132, 80
      %v6180 = vpop.permute.xlu0 %6179
      %6183 = vrot.lane.b32.xlu0 %v6129, 96
      %v6184 = vpop.permute.xlu0 %6183
      %6187 = vrot.lane.b32.xlu0 %v6133, 112
      %v6188 = vpop.permute.xlu0 %6187
      %v6190 = vsel %vm401, %v6038, %v6136
      %v6191 = vsel %vm403, %v6190, %v6140
      %v6192 = vsel %vm405, %v6191, %v6144
      %v6193 = vsel %vm407, %v6192, %v6148
      %v6194 = vsel %vm409, %v6193, %v6152
      %v6195 = vsel %vm411, %v6194, %v6156
      %v6196 = vsel %vm413, %v6195, %v6160
      %v6197 = vsel %vm401, %v6106, %v6164
      %v6198 = vsel %vm403, %v6197, %v6168
      %v6199 = vsel %vm405, %v6198, %v6172
      %v6200 = vsel %vm407, %v6199, %v6176
      %v6201 = vsel %vm409, %v6200, %v6180
      %v6202 = vsel %vm411, %v6201, %v6184
      %v6203 = vsel %vm413, %v6202, %v6188
      %v6206 = vrot.slane %v6196, 4
      %v6207 = vrot.slane %v6203, 4
      %6210 = vst [vmem:[#allocation2 + $0xc0] sm:$0xf0] %v6206
      %6211 = vst [vmem:[#allocation2 + $0xc8] sm:$0xf0] %v6207
      %v6212 = vld [vmem:[%s164 + $0x10] sm:$0xff]
      %v6213 = vld [vmem:[%s164 + $0x18] sm:$0xff]
      %v6214 = vld [vmem:[%s164 + $0x38] sm:$0xff]
      %v6215 = vld [vmem:[%s164 + $0x40] sm:$0xff]
      %v6216 = vld [vmem:[%s164 + $0x60] sm:$0xff]
      %v6217 = vld [vmem:[%s164 + $0x68] sm:$0xff]
      %v6218 = vld [vmem:[%s164 + $0x88] sm:$0xff]
      %v6219 = vld [vmem:[%s164 + $0x90] sm:$0xff]
      %6228 = vrot.lane.b32.xlu0 %v6212, 112
      %v6229 = vpop.permute.xlu0 %6228
      %6230 = vrot.lane.b32.xlu0 %v6213, 112
      %v6231 = vpop.permute.xlu0 %6230
      %6232 = vrot.lane.b32.xlu0 %v6214, 112
      %v6233 = vpop.permute.xlu0 %6232
      %6234 = vrot.lane.b32.xlu0 %v6215, 112
      %v6235 = vpop.permute.xlu0 %6234
      %6236 = vrot.lane.b32.xlu0 %v6216, 112
      %v6237 = vpop.permute.xlu0 %6236
      %6238 = vrot.lane.b32.xlu0 %v6217, 112
      %v6239 = vpop.permute.xlu0 %6238
      %6240 = vrot.lane.b32.xlu0 %v6218, 112
      %v6241 = vpop.permute.xlu0 %6240
      %6242 = vrot.lane.b32.xlu0 %v6219, 112
      %v6243 = vpop.permute.xlu0 %6242
      %v6252 = vcombine.low %v6229, %v6237
      %v6253 = vcombine.high %v6229, %v6237
      %v6255 = vunpack.c.l.s4 1983009808
      %v6256 = vunpack.c.0.s8 %v6255
      %v6257 = vlaneseq
      %v6258 = vshrl.u32 %v6257, 7
      %v6259 = vsub.s32 %v6256, %v6258
      %v6260 = vrot.slane %v6252, %v6259
      %v6262 = vunpack.c.l.s4 1983009808
      %v6263 = vunpack.c.0.s8 %v6262
      %v6264 = vlaneseq
      %v6265 = vshrl.u32 %v6264, 7
      %v6266 = vsub.s32 %v6263, %v6265
      %v6267 = vrot.slane %v6253, %v6266
      %v6268 = vcombine.low %v6233, %v6241
      %v6269 = vcombine.high %v6233, %v6241
      %v6271 = vunpack.c.l.s4 1983009808
      %v6272 = vunpack.c.0.s8 %v6271
      %v6273 = vlaneseq
      %v6274 = vshrl.u32 %v6273, 7
      %v6275 = vsub.s32 %v6272, %v6274
      %v6276 = vrot.slane %v6268, %v6275
      %v6278 = vunpack.c.l.s4 1983009808
      %v6279 = vunpack.c.0.s8 %v6278
      %v6280 = vlaneseq
      %v6281 = vshrl.u32 %v6280, 7
      %v6282 = vsub.s32 %v6279, %v6281
      %v6283 = vrot.slane %v6269, %v6282
      %v6284 = vcombine.low %v6260, %v6276
      %v6285 = vcombine.high %v6260, %v6276
      %v6287 = vunpack.c.l.s4 1934713408
      %v6288 = vunpack.c.0.s8 %v6287
      %v6289 = vlaneseq
      %v6290 = vshrl.u32 %v6289, 7
      %v6291 = vsub.s32 %v6288, %v6290
      %v6292 = vrot.slane %v6284, %v6291
      %v6294 = vunpack.c.l.s4 1934713408
      %v6295 = vunpack.c.0.s8 %v6294
      %v6296 = vlaneseq
      %v6297 = vshrl.u32 %v6296, 7
      %v6298 = vsub.s32 %v6295, %v6297
      %v6299 = vrot.slane %v6285, %v6298
      %v6300 = vcombine.low %v6267, %v6283
      %v6301 = vcombine.high %v6267, %v6283
      %v6303 = vunpack.c.l.s4 1934713408
      %v6304 = vunpack.c.0.s8 %v6303
      %v6305 = vlaneseq
      %v6306 = vshrl.u32 %v6305, 7
      %v6307 = vsub.s32 %v6304, %v6306
      %v6308 = vrot.slane %v6300, %v6307
      %v6310 = vunpack.c.l.s4 1934713408
      %v6311 = vunpack.c.0.s8 %v6310
      %v6312 = vlaneseq
      %v6313 = vshrl.u32 %v6312, 7
      %v6314 = vsub.s32 %v6311, %v6313
      %v6315 = vrot.slane %v6301, %v6314
      %v6316 = vcombine.high %v6292, 0.0
      %v6317 = vcombine.high %v6299, 0.0
      %v6318 = vcombine.high %v6308, 0.0
      %v6319 = vcombine.high %v6315, 0.0
      %v6320 = vcombine.low %v6231, %v6239
      %v6321 = vcombine.high %v6231, %v6239
      %v6323 = vunpack.c.l.s4 1983009808
      %v6324 = vunpack.c.0.s8 %v6323
      %v6325 = vlaneseq
      %v6326 = vshrl.u32 %v6325, 7
      %v6327 = vsub.s32 %v6324, %v6326
      %v6328 = vrot.slane %v6320, %v6327
      %v6330 = vunpack.c.l.s4 1983009808
      %v6331 = vunpack.c.0.s8 %v6330
      %v6332 = vlaneseq
      %v6333 = vshrl.u32 %v6332, 7
      %v6334 = vsub.s32 %v6331, %v6333
      %v6335 = vrot.slane %v6321, %v6334
      %v6336 = vcombine.low %v6235, %v6243
      %v6337 = vcombine.high %v6235, %v6243
      %v6339 = vunpack.c.l.s4 1983009808
      %v6340 = vunpack.c.0.s8 %v6339
      %v6341 = vlaneseq
      %v6342 = vshrl.u32 %v6341, 7
      %v6343 = vsub.s32 %v6340, %v6342
      %v6344 = vrot.slane %v6336, %v6343
      %v6346 = vunpack.c.l.s4 1983009808
      %v6347 = vunpack.c.0.s8 %v6346
      %v6348 = vlaneseq
      %v6349 = vshrl.u32 %v6348, 7
      %v6350 = vsub.s32 %v6347, %v6349
      %v6351 = vrot.slane %v6337, %v6350
      %v6352 = vcombine.low %v6328, %v6344
      %v6353 = vcombine.high %v6328, %v6344
      %v6355 = vunpack.c.l.s4 1934713408
      %v6356 = vunpack.c.0.s8 %v6355
      %v6357 = vlaneseq
      %v6358 = vshrl.u32 %v6357, 7
      %v6359 = vsub.s32 %v6356, %v6358
      %v6360 = vrot.slane %v6352, %v6359
      %v6362 = vunpack.c.l.s4 1934713408
      %v6363 = vunpack.c.0.s8 %v6362
      %v6364 = vlaneseq
      %v6365 = vshrl.u32 %v6364, 7
      %v6366 = vsub.s32 %v6363, %v6365
      %v6367 = vrot.slane %v6353, %v6366
      %v6368 = vcombine.low %v6335, %v6351
      %v6369 = vcombine.high %v6335, %v6351
      %v6371 = vunpack.c.l.s4 1934713408
      %v6372 = vunpack.c.0.s8 %v6371
      %v6373 = vlaneseq
      %v6374 = vshrl.u32 %v6373, 7
      %v6375 = vsub.s32 %v6372, %v6374
      %v6376 = vrot.slane %v6368, %v6375
      %v6378 = vunpack.c.l.s4 1934713408
      %v6379 = vunpack.c.0.s8 %v6378
      %v6380 = vlaneseq
      %v6381 = vshrl.u32 %v6380, 7
      %v6382 = vsub.s32 %v6379, %v6381
      %v6383 = vrot.slane %v6369, %v6382
      %v6384 = vcombine.high %v6360, 0.0
      %v6385 = vcombine.high %v6367, 0.0
      %v6386 = vcombine.high %v6376, 0.0
      %v6387 = vcombine.high %v6383, 0.0
      %6389 = vrot.lane.b32.xlu0 %v6316, 16
      %v6390 = vpop.permute.xlu0 %6389
      %6393 = vrot.lane.b32.xlu0 %v6299, 32
      %v6394 = vpop.permute.xlu0 %6393
      %6397 = vrot.lane.b32.xlu0 %v6317, 48
      %v6398 = vpop.permute.xlu0 %6397
      %6401 = vrot.lane.b32.xlu0 %v6308, 64
      %v6402 = vpop.permute.xlu0 %6401
      %6405 = vrot.lane.b32.xlu0 %v6318, 80
      %v6406 = vpop.permute.xlu0 %6405
      %6409 = vrot.lane.b32.xlu0 %v6315, 96
      %v6410 = vpop.permute.xlu0 %6409
      %6413 = vrot.lane.b32.xlu0 %v6319, 112
      %v6414 = vpop.permute.xlu0 %6413
      %6417 = vrot.lane.b32.xlu0 %v6384, 16
      %v6418 = vpop.permute.xlu0 %6417
      %6421 = vrot.lane.b32.xlu0 %v6367, 32
      %v6422 = vpop.permute.xlu0 %6421
      %6425 = vrot.lane.b32.xlu0 %v6385, 48
      %v6426 = vpop.permute.xlu0 %6425
      %6429 = vrot.lane.b32.xlu0 %v6376, 64
      %v6430 = vpop.permute.xlu0 %6429
      %6433 = vrot.lane.b32.xlu0 %v6386, 80
      %v6434 = vpop.permute.xlu0 %6433
      %6437 = vrot.lane.b32.xlu0 %v6383, 96
      %v6438 = vpop.permute.xlu0 %6437
      %6441 = vrot.lane.b32.xlu0 %v6387, 112
      %v6442 = vpop.permute.xlu0 %6441
      %v6444 = vsel %vm401, %v6292, %v6390
      %v6445 = vsel %vm403, %v6444, %v6394
      %v6446 = vsel %vm405, %v6445, %v6398
      %v6447 = vsel %vm407, %v6446, %v6402
      %v6448 = vsel %vm409, %v6447, %v6406
      %v6449 = vsel %vm411, %v6448, %v6410
      %v6450 = vsel %vm413, %v6449, %v6414
      %v6451 = vsel %vm401, %v6360, %v6418
      %v6452 = vsel %vm403, %v6451, %v6422
      %v6453 = vsel %vm405, %v6452, %v6426
      %v6454 = vsel %vm407, %v6453, %v6430
      %v6455 = vsel %vm409, %v6454, %v6434
      %v6456 = vsel %vm411, %v6455, %v6438
      %v6457 = vsel %vm413, %v6456, %v6442
      %6458 = vst [vmem:[#allocation2 + $0xd0] sm:$0xf] %v6450
      %6459 = vst [vmem:[#allocation2 + $0xd8] sm:$0xf] %v6457
      %v6460 = vld [vmem:[%s164] sm:$0xff]
      %v6461 = vld [vmem:[%s164 + $0x8] sm:$0xff]
      %v6462 = vld [vmem:[%s164 + $0x28] sm:$0xff]
      %v6463 = vld [vmem:[%s164 + $0x30] sm:$0xff]
      %v6464 = vld [vmem:[%s164 + $0x50] sm:$0xff]
      %v6465 = vld [vmem:[%s164 + $0x58] sm:$0xff]
      %v6466 = vld [vmem:[%s164 + $0x78] sm:$0xff]
      %v6467 = vld [vmem:[%s164 + $0x80] sm:$0xff]
      %v6468 = vcombine.low %v6460, %v6464
      %v6469 = vcombine.high %v6460, %v6464
      %v6471 = vunpack.c.l.s4 1983009808
      %v6472 = vunpack.c.0.s8 %v6471
      %v6473 = vlaneseq
      %v6474 = vshrl.u32 %v6473, 7
      %v6475 = vsub.s32 %v6472, %v6474
      %v6476 = vrot.slane %v6468, %v6475
      %v6478 = vunpack.c.l.s4 1983009808
      %v6479 = vunpack.c.0.s8 %v6478
      %v6480 = vlaneseq
      %v6481 = vshrl.u32 %v6480, 7
      %v6482 = vsub.s32 %v6479, %v6481
      %v6483 = vrot.slane %v6469, %v6482
      %v6484 = vcombine.low %v6462, %v6466
      %v6485 = vcombine.high %v6462, %v6466
      %v6487 = vunpack.c.l.s4 1983009808
      %v6488 = vunpack.c.0.s8 %v6487
      %v6489 = vlaneseq
      %v6490 = vshrl.u32 %v6489, 7
      %v6491 = vsub.s32 %v6488, %v6490
      %v6492 = vrot.slane %v6484, %v6491
      %v6494 = vunpack.c.l.s4 1983009808
      %v6495 = vunpack.c.0.s8 %v6494
      %v6496 = vlaneseq
      %v6497 = vshrl.u32 %v6496, 7
      %v6498 = vsub.s32 %v6495, %v6497
      %v6499 = vrot.slane %v6485, %v6498
      %v6500 = vcombine.low %v6476, %v6492
      %v6501 = vcombine.high %v6476, %v6492
      %v6503 = vunpack.c.l.s4 1934713408
      %v6504 = vunpack.c.0.s8 %v6503
      %v6505 = vlaneseq
      %v6506 = vshrl.u32 %v6505, 7
      %v6507 = vsub.s32 %v6504, %v6506
      %v6508 = vrot.slane %v6500, %v6507
      %v6510 = vunpack.c.l.s4 1934713408
      %v6511 = vunpack.c.0.s8 %v6510
      %v6512 = vlaneseq
      %v6513 = vshrl.u32 %v6512, 7
      %v6514 = vsub.s32 %v6511, %v6513
      %v6515 = vrot.slane %v6501, %v6514
      %v6516 = vcombine.low %v6483, %v6499
      %v6517 = vcombine.high %v6483, %v6499
      %v6519 = vunpack.c.l.s4 1934713408
      %v6520 = vunpack.c.0.s8 %v6519
      %v6521 = vlaneseq
      %v6522 = vshrl.u32 %v6521, 7
      %v6523 = vsub.s32 %v6520, %v6522
      %v6524 = vrot.slane %v6516, %v6523
      %v6526 = vunpack.c.l.s4 1934713408
      %v6527 = vunpack.c.0.s8 %v6526
      %v6528 = vlaneseq
      %v6529 = vshrl.u32 %v6528, 7
      %v6530 = vsub.s32 %v6527, %v6529
      %v6531 = vrot.slane %v6517, %v6530
      %v6532 = vcombine.high %v6508, 0.0
      %v6533 = vcombine.high %v6515, 0.0
      %v6534 = vcombine.high %v6524, 0.0
      %v6535 = vcombine.high %v6531, 0.0
      %v6536 = vcombine.low %v6461, %v6465
      %v6537 = vcombine.high %v6461, %v6465
      %v6539 = vunpack.c.l.s4 1983009808
      %v6540 = vunpack.c.0.s8 %v6539
      %v6541 = vlaneseq
      %v6542 = vshrl.u32 %v6541, 7
      %v6543 = vsub.s32 %v6540, %v6542
      %v6544 = vrot.slane %v6536, %v6543
      %v6546 = vunpack.c.l.s4 1983009808
      %v6547 = vunpack.c.0.s8 %v6546
      %v6548 = vlaneseq
      %v6549 = vshrl.u32 %v6548, 7
      %v6550 = vsub.s32 %v6547, %v6549
      %v6551 = vrot.slane %v6537, %v6550
      %v6552 = vcombine.low %v6463, %v6467
      %v6553 = vcombine.high %v6463, %v6467
      %v6555 = vunpack.c.l.s4 1983009808
      %v6556 = vunpack.c.0.s8 %v6555
      %v6557 = vlaneseq
      %v6558 = vshrl.u32 %v6557, 7
      %v6559 = vsub.s32 %v6556, %v6558
      %v6560 = vrot.slane %v6552, %v6559
      %v6562 = vunpack.c.l.s4 1983009808
      %v6563 = vunpack.c.0.s8 %v6562
      %v6564 = vlaneseq
      %v6565 = vshrl.u32 %v6564, 7
      %v6566 = vsub.s32 %v6563, %v6565
      %v6567 = vrot.slane %v6553, %v6566
      %v6568 = vcombine.low %v6544, %v6560
      %v6569 = vcombine.high %v6544, %v6560
      %v6571 = vunpack.c.l.s4 1934713408
      %v6572 = vunpack.c.0.s8 %v6571
      %v6573 = vlaneseq
      %v6574 = vshrl.u32 %v6573, 7
      %v6575 = vsub.s32 %v6572, %v6574
      %v6576 = vrot.slane %v6568, %v6575
      %v6578 = vunpack.c.l.s4 1934713408
      %v6579 = vunpack.c.0.s8 %v6578
      %v6580 = vlaneseq
      %v6581 = vshrl.u32 %v6580, 7
      %v6582 = vsub.s32 %v6579, %v6581
      %v6583 = vrot.slane %v6569, %v6582
      %v6584 = vcombine.low %v6551, %v6567
      %v6585 = vcombine.high %v6551, %v6567
      %v6587 = vunpack.c.l.s4 1934713408
      %v6588 = vunpack.c.0.s8 %v6587
      %v6589 = vlaneseq
      %v6590 = vshrl.u32 %v6589, 7
      %v6591 = vsub.s32 %v6588, %v6590
      %v6592 = vrot.slane %v6584, %v6591
      %v6594 = vunpack.c.l.s4 1934713408
      %v6595 = vunpack.c.0.s8 %v6594
      %v6596 = vlaneseq
      %v6597 = vshrl.u32 %v6596, 7
      %v6598 = vsub.s32 %v6595, %v6597
      %v6599 = vrot.slane %v6585, %v6598
      %v6600 = vcombine.high %v6576, 0.0
      %v6601 = vcombine.high %v6583, 0.0
      %v6602 = vcombine.high %v6592, 0.0
      %v6603 = vcombine.high %v6599, 0.0
      %6605 = vrot.lane.b32.xlu0 %v6532, 16
      %v6606 = vpop.permute.xlu0 %6605
      %6609 = vrot.lane.b32.xlu0 %v6515, 32
      %v6610 = vpop.permute.xlu0 %6609
      %6613 = vrot.lane.b32.xlu0 %v6533, 48
      %v6614 = vpop.permute.xlu0 %6613
      %6617 = vrot.lane.b32.xlu0 %v6524, 64
      %v6618 = vpop.permute.xlu0 %6617
      %6621 = vrot.lane.b32.xlu0 %v6534, 80
      %v6622 = vpop.permute.xlu0 %6621
      %6625 = vrot.lane.b32.xlu0 %v6531, 96
      %v6626 = vpop.permute.xlu0 %6625
      %6629 = vrot.lane.b32.xlu0 %v6535, 112
      %v6630 = vpop.permute.xlu0 %6629
      %6633 = vrot.lane.b32.xlu0 %v6600, 16
      %v6634 = vpop.permute.xlu0 %6633
      %6637 = vrot.lane.b32.xlu0 %v6583, 32
      %v6638 = vpop.permute.xlu0 %6637
      %6641 = vrot.lane.b32.xlu0 %v6601, 48
      %v6642 = vpop.permute.xlu0 %6641
      %6645 = vrot.lane.b32.xlu0 %v6592, 64
      %v6646 = vpop.permute.xlu0 %6645
      %6649 = vrot.lane.b32.xlu0 %v6602, 80
      %v6650 = vpop.permute.xlu0 %6649
      %6653 = vrot.lane.b32.xlu0 %v6599, 96
      %v6654 = vpop.permute.xlu0 %6653
      %6657 = vrot.lane.b32.xlu0 %v6603, 112
      %v6658 = vpop.permute.xlu0 %6657
      %v6660 = vsel %vm401, %v6508, %v6606
      %v6661 = vsel %vm403, %v6660, %v6610
      %v6662 = vsel %vm405, %v6661, %v6614
      %v6663 = vsel %vm407, %v6662, %v6618
      %v6664 = vsel %vm409, %v6663, %v6622
      %v6665 = vsel %vm411, %v6664, %v6626
      %v6666 = vsel %vm413, %v6665, %v6630
      %v6667 = vsel %vm401, %v6576, %v6634
      %v6668 = vsel %vm403, %v6667, %v6638
      %v6669 = vsel %vm405, %v6668, %v6642
      %v6670 = vsel %vm407, %v6669, %v6646
      %v6671 = vsel %vm409, %v6670, %v6650
      %v6672 = vsel %vm411, %v6671, %v6654
      %v6673 = vsel %vm413, %v6672, %v6658
      %v6676 = vrot.slane %v6666, 4
      %v6677 = vrot.slane %v6673, 4
      %6680 = vst [vmem:[#allocation2 + $0xd0] sm:$0xf0] %v6676
      %6681 = vst [vmem:[#allocation2 + $0xd8] sm:$0xf0] %v6677
      %v6682 = vld [vmem:[%s164] sm:$0xff]
      %v6683 = vld [vmem:[%s164 + $0x8] sm:$0xff]
      %v6684 = vld [vmem:[%s164 + $0x28] sm:$0xff]
      %v6685 = vld [vmem:[%s164 + $0x30] sm:$0xff]
      %v6686 = vld [vmem:[%s164 + $0x50] sm:$0xff]
      %v6687 = vld [vmem:[%s164 + $0x58] sm:$0xff]
      %v6688 = vld [vmem:[%s164 + $0x78] sm:$0xff]
      %v6689 = vld [vmem:[%s164 + $0x80] sm:$0xff]
      %6698 = vrot.lane.b32.xlu0 %v6682, 119
      %v6699 = vpop.permute.xlu0 %6698
      %6700 = vrot.lane.b32.xlu0 %v6683, 119
      %v6701 = vpop.permute.xlu0 %6700
      %6702 = vrot.lane.b32.xlu0 %v6684, 119
      %v6703 = vpop.permute.xlu0 %6702
      %6704 = vrot.lane.b32.xlu0 %v6685, 119
      %v6705 = vpop.permute.xlu0 %6704
      %6706 = vrot.lane.b32.xlu0 %v6686, 119
      %v6707 = vpop.permute.xlu0 %6706
      %6708 = vrot.lane.b32.xlu0 %v6687, 119
      %v6709 = vpop.permute.xlu0 %6708
      %6710 = vrot.lane.b32.xlu0 %v6688, 119
      %v6711 = vpop.permute.xlu0 %6710
      %6712 = vrot.lane.b32.xlu0 %v6689, 119
      %v6713 = vpop.permute.xlu0 %6712
      %v6722 = vcombine.low %v6699, %v6707
      %v6723 = vcombine.high %v6699, %v6707
      %v6725 = vunpack.c.l.s4 1983009808
      %v6726 = vunpack.c.0.s8 %v6725
      %v6727 = vlaneseq
      %v6728 = vshrl.u32 %v6727, 7
      %v6729 = vsub.s32 %v6726, %v6728
      %v6730 = vrot.slane %v6722, %v6729
      %v6732 = vunpack.c.l.s4 1983009808
      %v6733 = vunpack.c.0.s8 %v6732
      %v6734 = vlaneseq
      %v6735 = vshrl.u32 %v6734, 7
      %v6736 = vsub.s32 %v6733, %v6735
      %v6737 = vrot.slane %v6723, %v6736
      %v6738 = vcombine.low %v6703, %v6711
      %v6739 = vcombine.high %v6703, %v6711
      %v6741 = vunpack.c.l.s4 1983009808
      %v6742 = vunpack.c.0.s8 %v6741
      %v6743 = vlaneseq
      %v6744 = vshrl.u32 %v6743, 7
      %v6745 = vsub.s32 %v6742, %v6744
      %v6746 = vrot.slane %v6738, %v6745
      %v6748 = vunpack.c.l.s4 1983009808
      %v6749 = vunpack.c.0.s8 %v6748
      %v6750 = vlaneseq
      %v6751 = vshrl.u32 %v6750, 7
      %v6752 = vsub.s32 %v6749, %v6751
      %v6753 = vrot.slane %v6739, %v6752
      %v6754 = vcombine.low %v6730, %v6746
      %v6755 = vcombine.high %v6730, %v6746
      %v6757 = vunpack.c.l.s4 1934713408
      %v6758 = vunpack.c.0.s8 %v6757
      %v6759 = vlaneseq
      %v6760 = vshrl.u32 %v6759, 7
      %v6761 = vsub.s32 %v6758, %v6760
      %v6762 = vrot.slane %v6754, %v6761
      %v6764 = vunpack.c.l.s4 1934713408
      %v6765 = vunpack.c.0.s8 %v6764
      %v6766 = vlaneseq
      %v6767 = vshrl.u32 %v6766, 7
      %v6768 = vsub.s32 %v6765, %v6767
      %v6769 = vrot.slane %v6755, %v6768
      %v6770 = vcombine.low %v6737, %v6753
      %v6771 = vcombine.high %v6737, %v6753
      %v6773 = vunpack.c.l.s4 1934713408
      %v6774 = vunpack.c.0.s8 %v6773
      %v6775 = vlaneseq
      %v6776 = vshrl.u32 %v6775, 7
      %v6777 = vsub.s32 %v6774, %v6776
      %v6778 = vrot.slane %v6770, %v6777
      %v6780 = vunpack.c.l.s4 1934713408
      %v6781 = vunpack.c.0.s8 %v6780
      %v6782 = vlaneseq
      %v6783 = vshrl.u32 %v6782, 7
      %v6784 = vsub.s32 %v6781, %v6783
      %v6785 = vrot.slane %v6771, %v6784
      %v6786 = vcombine.high %v6762, 0.0
      %v6787 = vcombine.high %v6769, 0.0
      %v6788 = vcombine.high %v6778, 0.0
      %v6789 = vcombine.high %v6785, 0.0
      %v6790 = vcombine.low %v6701, %v6709
      %v6791 = vcombine.high %v6701, %v6709
      %v6793 = vunpack.c.l.s4 1983009808
      %v6794 = vunpack.c.0.s8 %v6793
      %v6795 = vlaneseq
      %v6796 = vshrl.u32 %v6795, 7
      %v6797 = vsub.s32 %v6794, %v6796
      %v6798 = vrot.slane %v6790, %v6797
      %v6800 = vunpack.c.l.s4 1983009808
      %v6801 = vunpack.c.0.s8 %v6800
      %v6802 = vlaneseq
      %v6803 = vshrl.u32 %v6802, 7
      %v6804 = vsub.s32 %v6801, %v6803
      %v6805 = vrot.slane %v6791, %v6804
      %v6806 = vcombine.low %v6705, %v6713
      %v6807 = vcombine.high %v6705, %v6713
      %v6809 = vunpack.c.l.s4 1983009808
      %v6810 = vunpack.c.0.s8 %v6809
      %v6811 = vlaneseq
      %v6812 = vshrl.u32 %v6811, 7
      %v6813 = vsub.s32 %v6810, %v6812
      %v6814 = vrot.slane %v6806, %v6813
      %v6816 = vunpack.c.l.s4 1983009808
      %v6817 = vunpack.c.0.s8 %v6816
      %v6818 = vlaneseq
      %v6819 = vshrl.u32 %v6818, 7
      %v6820 = vsub.s32 %v6817, %v6819
      %v6821 = vrot.slane %v6807, %v6820
      %v6822 = vcombine.low %v6798, %v6814
      %v6823 = vcombine.high %v6798, %v6814
      %v6825 = vunpack.c.l.s4 1934713408
      %v6826 = vunpack.c.0.s8 %v6825
      %v6827 = vlaneseq
      %v6828 = vshrl.u32 %v6827, 7
      %v6829 = vsub.s32 %v6826, %v6828
      %v6830 = vrot.slane %v6822, %v6829
      %v6832 = vunpack.c.l.s4 1934713408
      %v6833 = vunpack.c.0.s8 %v6832
      %v6834 = vlaneseq
      %v6835 = vshrl.u32 %v6834, 7
      %v6836 = vsub.s32 %v6833, %v6835
      %v6837 = vrot.slane %v6823, %v6836
      %v6838 = vcombine.low %v6805, %v6821
      %v6839 = vcombine.high %v6805, %v6821
      %v6841 = vunpack.c.l.s4 1934713408
      %v6842 = vunpack.c.0.s8 %v6841
      %v6843 = vlaneseq
      %v6844 = vshrl.u32 %v6843, 7
      %v6845 = vsub.s32 %v6842, %v6844
      %v6846 = vrot.slane %v6838, %v6845
      %v6848 = vunpack.c.l.s4 1934713408
      %v6849 = vunpack.c.0.s8 %v6848
      %v6850 = vlaneseq
      %v6851 = vshrl.u32 %v6850, 7
      %v6852 = vsub.s32 %v6849, %v6851
      %v6853 = vrot.slane %v6839, %v6852
      %v6854 = vcombine.high %v6830, 0.0
      %v6855 = vcombine.high %v6837, 0.0
      %v6856 = vcombine.high %v6846, 0.0
      %v6857 = vcombine.high %v6853, 0.0
      %6859 = vrot.lane.b32.xlu0 %v6786, 16
      %v6860 = vpop.permute.xlu0 %6859
      %6863 = vrot.lane.b32.xlu0 %v6769, 32
      %v6864 = vpop.permute.xlu0 %6863
      %6867 = vrot.lane.b32.xlu0 %v6787, 48
      %v6868 = vpop.permute.xlu0 %6867
      %6871 = vrot.lane.b32.xlu0 %v6778, 64
      %v6872 = vpop.permute.xlu0 %6871
      %6875 = vrot.lane.b32.xlu0 %v6788, 80
      %v6876 = vpop.permute.xlu0 %6875
      %6879 = vrot.lane.b32.xlu0 %v6785, 96
      %v6880 = vpop.permute.xlu0 %6879
      %6883 = vrot.lane.b32.xlu0 %v6789, 112
      %v6884 = vpop.permute.xlu0 %6883
      %6887 = vrot.lane.b32.xlu0 %v6854, 16
      %v6888 = vpop.permute.xlu0 %6887
      %6891 = vrot.lane.b32.xlu0 %v6837, 32
      %v6892 = vpop.permute.xlu0 %6891
      %6895 = vrot.lane.b32.xlu0 %v6855, 48
      %v6896 = vpop.permute.xlu0 %6895
      %6899 = vrot.lane.b32.xlu0 %v6846, 64
      %v6900 = vpop.permute.xlu0 %6899
      %6903 = vrot.lane.b32.xlu0 %v6856, 80
      %v6904 = vpop.permute.xlu0 %6903
      %6907 = vrot.lane.b32.xlu0 %v6853, 96
      %v6908 = vpop.permute.xlu0 %6907
      %6911 = vrot.lane.b32.xlu0 %v6857, 112
      %v6912 = vpop.permute.xlu0 %6911
      %v6914 = vsel %vm401, %v6762, %v6860
      %v6915 = vsel %vm403, %v6914, %v6864
      %v6916 = vsel %vm405, %v6915, %v6868
      %v6917 = vsel %vm407, %v6916, %v6872
      %v6918 = vsel %vm409, %v6917, %v6876
      %v6919 = vsel %vm411, %v6918, %v6880
      %v6920 = vsel %vm413, %v6919, %v6884
      %v6921 = vsel %vm401, %v6830, %v6888
      %v6922 = vsel %vm403, %v6921, %v6892
      %v6923 = vsel %vm405, %v6922, %v6896
      %v6924 = vsel %vm407, %v6923, %v6900
      %v6925 = vsel %vm409, %v6924, %v6904
      %v6926 = vsel %vm411, %v6925, %v6908
      %v6927 = vsel %vm413, %v6926, %v6912
      %6928 = vst [vmem:[#allocation2 + $0xe0] sm:$0xf] %v6920
      %6929 = vst [vmem:[#allocation2 + $0xe8] sm:$0xf] %v6927
      %v6930 = vld [vmem:[%s164] sm:$0xff]
      %v6931 = vld [vmem:[%s164 + $0x8] sm:$0xff]
      %v6932 = vld [vmem:[%s164 + $0x28] sm:$0xff]
      %v6933 = vld [vmem:[%s164 + $0x30] sm:$0xff]
      %v6934 = vld [vmem:[%s164 + $0x50] sm:$0xff]
      %v6935 = vld [vmem:[%s164 + $0x58] sm:$0xff]
      %v6936 = vld [vmem:[%s164 + $0x78] sm:$0xff]
      %v6937 = vld [vmem:[%s164 + $0x80] sm:$0xff]
      %6946 = vrot.lane.b32.xlu0 %v6930, 110
      %v6947 = vpop.permute.xlu0 %6946
      %6948 = vrot.lane.b32.xlu0 %v6931, 110
      %v6949 = vpop.permute.xlu0 %6948
      %6950 = vrot.lane.b32.xlu0 %v6932, 110
      %v6951 = vpop.permute.xlu0 %6950
      %6952 = vrot.lane.b32.xlu0 %v6933, 110
      %v6953 = vpop.permute.xlu0 %6952
      %6954 = vrot.lane.b32.xlu0 %v6934, 110
      %v6955 = vpop.permute.xlu0 %6954
      %6956 = vrot.lane.b32.xlu0 %v6935, 110
      %v6957 = vpop.permute.xlu0 %6956
      %6958 = vrot.lane.b32.xlu0 %v6936, 110
      %v6959 = vpop.permute.xlu0 %6958
      %6960 = vrot.lane.b32.xlu0 %v6937, 110
      %v6961 = vpop.permute.xlu0 %6960
      %v6970 = vcombine.low %v6947, %v6955
      %v6971 = vcombine.high %v6947, %v6955
      %v6973 = vunpack.c.l.s4 1983009808
      %v6974 = vunpack.c.0.s8 %v6973
      %v6975 = vlaneseq
      %v6976 = vshrl.u32 %v6975, 7
      %v6977 = vsub.s32 %v6974, %v6976
      %v6978 = vrot.slane %v6970, %v6977
      %v6980 = vunpack.c.l.s4 1983009808
      %v6981 = vunpack.c.0.s8 %v6980
      %v6982 = vlaneseq
      %v6983 = vshrl.u32 %v6982, 7
      %v6984 = vsub.s32 %v6981, %v6983
      %v6985 = vrot.slane %v6971, %v6984
      %v6986 = vcombine.low %v6951, %v6959
      %v6987 = vcombine.high %v6951, %v6959
      %v6989 = vunpack.c.l.s4 1983009808
      %v6990 = vunpack.c.0.s8 %v6989
      %v6991 = vlaneseq
      %v6992 = vshrl.u32 %v6991, 7
      %v6993 = vsub.s32 %v6990, %v6992
      %v6994 = vrot.slane %v6986, %v6993
      %v6996 = vunpack.c.l.s4 1983009808
      %v6997 = vunpack.c.0.s8 %v6996
      %v6998 = vlaneseq
      %v6999 = vshrl.u32 %v6998, 7
      %v7000 = vsub.s32 %v6997, %v6999
      %v7001 = vrot.slane %v6987, %v7000
      %v7002 = vcombine.low %v6978, %v6994
      %v7003 = vcombine.high %v6978, %v6994
      %v7005 = vunpack.c.l.s4 1934713408
      %v7006 = vunpack.c.0.s8 %v7005
      %v7007 = vlaneseq
      %v7008 = vshrl.u32 %v7007, 7
      %v7009 = vsub.s32 %v7006, %v7008
      %v7010 = vrot.slane %v7002, %v7009
      %v7012 = vunpack.c.l.s4 1934713408
      %v7013 = vunpack.c.0.s8 %v7012
      %v7014 = vlaneseq
      %v7015 = vshrl.u32 %v7014, 7
      %v7016 = vsub.s32 %v7013, %v7015
      %v7017 = vrot.slane %v7003, %v7016
      %v7018 = vcombine.low %v6985, %v7001
      %v7019 = vcombine.high %v6985, %v7001
      %v7021 = vunpack.c.l.s4 1934713408
      %v7022 = vunpack.c.0.s8 %v7021
      %v7023 = vlaneseq
      %v7024 = vshrl.u32 %v7023, 7
      %v7025 = vsub.s32 %v7022, %v7024
      %v7026 = vrot.slane %v7018, %v7025
      %v7028 = vunpack.c.l.s4 1934713408
      %v7029 = vunpack.c.0.s8 %v7028
      %v7030 = vlaneseq
      %v7031 = vshrl.u32 %v7030, 7
      %v7032 = vsub.s32 %v7029, %v7031
      %v7033 = vrot.slane %v7019, %v7032
      %v7034 = vcombine.high %v7010, 0.0
      %v7035 = vcombine.high %v7017, 0.0
      %v7036 = vcombine.high %v7026, 0.0
      %v7037 = vcombine.high %v7033, 0.0
      %v7038 = vcombine.low %v6949, %v6957
      %v7039 = vcombine.high %v6949, %v6957
      %v7041 = vunpack.c.l.s4 1983009808
      %v7042 = vunpack.c.0.s8 %v7041
      %v7043 = vlaneseq
      %v7044 = vshrl.u32 %v7043, 7
      %v7045 = vsub.s32 %v7042, %v7044
      %v7046 = vrot.slane %v7038, %v7045
      %v7048 = vunpack.c.l.s4 1983009808
      %v7049 = vunpack.c.0.s8 %v7048
      %v7050 = vlaneseq
      %v7051 = vshrl.u32 %v7050, 7
      %v7052 = vsub.s32 %v7049, %v7051
      %v7053 = vrot.slane %v7039, %v7052
      %v7054 = vcombine.low %v6953, %v6961
      %v7055 = vcombine.high %v6953, %v6961
      %v7057 = vunpack.c.l.s4 1983009808
      %v7058 = vunpack.c.0.s8 %v7057
      %v7059 = vlaneseq
      %v7060 = vshrl.u32 %v7059, 7
      %v7061 = vsub.s32 %v7058, %v7060
      %v7062 = vrot.slane %v7054, %v7061
      %v7064 = vunpack.c.l.s4 1983009808
      %v7065 = vunpack.c.0.s8 %v7064
      %v7066 = vlaneseq
      %v7067 = vshrl.u32 %v7066, 7
      %v7068 = vsub.s32 %v7065, %v7067
      %v7069 = vrot.slane %v7055, %v7068
      %v7070 = vcombine.low %v7046, %v7062
      %v7071 = vcombine.high %v7046, %v7062
      %v7073 = vunpack.c.l.s4 1934713408
      %v7074 = vunpack.c.0.s8 %v7073
      %v7075 = vlaneseq
      %v7076 = vshrl.u32 %v7075, 7
      %v7077 = vsub.s32 %v7074, %v7076
      %v7078 = vrot.slane %v7070, %v7077
      %v7080 = vunpack.c.l.s4 1934713408
      %v7081 = vunpack.c.0.s8 %v7080
      %v7082 = vlaneseq
      %v7083 = vshrl.u32 %v7082, 7
      %v7084 = vsub.s32 %v7081, %v7083
      %v7085 = vrot.slane %v7071, %v7084
      %v7086 = vcombine.low %v7053, %v7069
      %v7087 = vcombine.high %v7053, %v7069
      %v7089 = vunpack.c.l.s4 1934713408
      %v7090 = vunpack.c.0.s8 %v7089
      %v7091 = vlaneseq
      %v7092 = vshrl.u32 %v7091, 7
      %v7093 = vsub.s32 %v7090, %v7092
      %v7094 = vrot.slane %v7086, %v7093
      %v7096 = vunpack.c.l.s4 1934713408
      %v7097 = vunpack.c.0.s8 %v7096
      %v7098 = vlaneseq
      %v7099 = vshrl.u32 %v7098, 7
      %v7100 = vsub.s32 %v7097, %v7099
      %v7101 = vrot.slane %v7087, %v7100
      %v7102 = vcombine.high %v7078, 0.0
      %v7103 = vcombine.high %v7085, 0.0
      %v7104 = vcombine.high %v7094, 0.0
      %v7105 = vcombine.high %v7101, 0.0
      %7107 = vrot.lane.b32.xlu0 %v7034, 16
      %v7108 = vpop.permute.xlu0 %7107
      %7111 = vrot.lane.b32.xlu0 %v7017, 32
      %v7112 = vpop.permute.xlu0 %7111
      %7115 = vrot.lane.b32.xlu0 %v7035, 48
      %v7116 = vpop.permute.xlu0 %7115
      %7119 = vrot.lane.b32.xlu0 %v7026, 64
      %v7120 = vpop.permute.xlu0 %7119
      %7123 = vrot.lane.b32.xlu0 %v7036, 80
      %v7124 = vpop.permute.xlu0 %7123
      %7127 = vrot.lane.b32.xlu0 %v7033, 96
      %v7128 = vpop.permute.xlu0 %7127
      %7131 = vrot.lane.b32.xlu0 %v7037, 112
      %v7132 = vpop.permute.xlu0 %7131
      %7135 = vrot.lane.b32.xlu0 %v7102, 16
      %v7136 = vpop.permute.xlu0 %7135
      %7139 = vrot.lane.b32.xlu0 %v7085, 32
      %v7140 = vpop.permute.xlu0 %7139
      %7143 = vrot.lane.b32.xlu0 %v7103, 48
      %v7144 = vpop.permute.xlu0 %7143
      %7147 = vrot.lane.b32.xlu0 %v7094, 64
      %v7148 = vpop.permute.xlu0 %7147
      %7151 = vrot.lane.b32.xlu0 %v7104, 80
      %v7152 = vpop.permute.xlu0 %7151
      %7155 = vrot.lane.b32.xlu0 %v7101, 96
      %v7156 = vpop.permute.xlu0 %7155
      %7159 = vrot.lane.b32.xlu0 %v7105, 112
      %v7160 = vpop.permute.xlu0 %7159
      %v7162 = vsel %vm401, %v7010, %v7108
      %v7163 = vsel %vm403, %v7162, %v7112
      %v7164 = vsel %vm405, %v7163, %v7116
      %v7165 = vsel %vm407, %v7164, %v7120
      %v7166 = vsel %vm409, %v7165, %v7124
      %v7167 = vsel %vm411, %v7166, %v7128
      %v7168 = vsel %vm413, %v7167, %v7132
      %v7169 = vsel %vm401, %v7078, %v7136
      %v7170 = vsel %vm403, %v7169, %v7140
      %v7171 = vsel %vm405, %v7170, %v7144
      %v7172 = vsel %vm407, %v7171, %v7148
      %v7173 = vsel %vm409, %v7172, %v7152
      %v7174 = vsel %vm411, %v7173, %v7156
      %v7175 = vsel %vm413, %v7174, %v7160
      %v7178 = vrot.slane %v7168, 4
      %v7179 = vrot.slane %v7175, 4
      %7182 = vst [vmem:[#allocation2 + $0xe0] sm:$0xf0] %v7178
      %7183 = vst [vmem:[#allocation2 + $0xe8] sm:$0xf0] %v7179
      %v7184 = vld [vmem:[%s164 + $0x9] sm:$0xff]
      %v7185 = vld [vmem:[%s164 + $0x11] sm:$0xff]
      %v7186 = vld [vmem:[%s164 + $0x31] sm:$0xff]
      %v7187 = vld [vmem:[%s164 + $0x39] sm:$0xff]
      %v7188 = vld [vmem:[%s164 + $0x59] sm:$0xff]
      %v7189 = vld [vmem:[%s164 + $0x61] sm:$0xff]
      %v7190 = vld [vmem:[%s164 + $0x81] sm:$0xff]
      %v7191 = vld [vmem:[%s164 + $0x89] sm:$0xff]
      %v7192 = vcombine.low %v7184, %v7188
      %v7193 = vcombine.high %v7184, %v7188
      %v7195 = vunpack.c.l.s4 1983009808
      %v7196 = vunpack.c.0.s8 %v7195
      %v7197 = vlaneseq
      %v7198 = vshrl.u32 %v7197, 7
      %v7199 = vsub.s32 %v7196, %v7198
      %v7200 = vrot.slane %v7192, %v7199
      %v7202 = vunpack.c.l.s4 1983009808
      %v7203 = vunpack.c.0.s8 %v7202
      %v7204 = vlaneseq
      %v7205 = vshrl.u32 %v7204, 7
      %v7206 = vsub.s32 %v7203, %v7205
      %v7207 = vrot.slane %v7193, %v7206
      %v7208 = vcombine.low %v7186, %v7190
      %v7209 = vcombine.high %v7186, %v7190
      %v7211 = vunpack.c.l.s4 1983009808
      %v7212 = vunpack.c.0.s8 %v7211
      %v7213 = vlaneseq
      %v7214 = vshrl.u32 %v7213, 7
      %v7215 = vsub.s32 %v7212, %v7214
      %v7216 = vrot.slane %v7208, %v7215
      %v7218 = vunpack.c.l.s4 1983009808
      %v7219 = vunpack.c.0.s8 %v7218
      %v7220 = vlaneseq
      %v7221 = vshrl.u32 %v7220, 7
      %v7222 = vsub.s32 %v7219, %v7221
      %v7223 = vrot.slane %v7209, %v7222
      %v7224 = vcombine.low %v7200, %v7216
      %v7225 = vcombine.high %v7200, %v7216
      %v7227 = vunpack.c.l.s4 1934713408
      %v7228 = vunpack.c.0.s8 %v7227
      %v7229 = vlaneseq
      %v7230 = vshrl.u32 %v7229, 7
      %v7231 = vsub.s32 %v7228, %v7230
      %v7232 = vrot.slane %v7224, %v7231
      %v7234 = vunpack.c.l.s4 1934713408
      %v7235 = vunpack.c.0.s8 %v7234
      %v7236 = vlaneseq
      %v7237 = vshrl.u32 %v7236, 7
      %v7238 = vsub.s32 %v7235, %v7237
      %v7239 = vrot.slane %v7225, %v7238
      %v7240 = vcombine.low %v7207, %v7223
      %v7241 = vcombine.high %v7207, %v7223
      %v7243 = vunpack.c.l.s4 1934713408
      %v7244 = vunpack.c.0.s8 %v7243
      %v7245 = vlaneseq
      %v7246 = vshrl.u32 %v7245, 7
      %v7247 = vsub.s32 %v7244, %v7246
      %v7248 = vrot.slane %v7240, %v7247
      %v7250 = vunpack.c.l.s4 1934713408
      %v7251 = vunpack.c.0.s8 %v7250
      %v7252 = vlaneseq
      %v7253 = vshrl.u32 %v7252, 7
      %v7254 = vsub.s32 %v7251, %v7253
      %v7255 = vrot.slane %v7241, %v7254
      %v7256 = vcombine.high %v7232, 0.0
      %v7257 = vcombine.high %v7239, 0.0
      %v7258 = vcombine.high %v7248, 0.0
      %v7259 = vcombine.high %v7255, 0.0
      %v7260 = vcombine.low %v7185, %v7189
      %v7261 = vcombine.high %v7185, %v7189
      %v7263 = vunpack.c.l.s4 1983009808
      %v7264 = vunpack.c.0.s8 %v7263
      %v7265 = vlaneseq
      %v7266 = vshrl.u32 %v7265, 7
      %v7267 = vsub.s32 %v7264, %v7266
      %v7268 = vrot.slane %v7260, %v7267
      %v7270 = vunpack.c.l.s4 1983009808
      %v7271 = vunpack.c.0.s8 %v7270
      %v7272 = vlaneseq
      %v7273 = vshrl.u32 %v7272, 7
      %v7274 = vsub.s32 %v7271, %v7273
      %v7275 = vrot.slane %v7261, %v7274
      %v7276 = vcombine.low %v7187, %v7191
      %v7277 = vcombine.high %v7187, %v7191
      %v7279 = vunpack.c.l.s4 1983009808
      %v7280 = vunpack.c.0.s8 %v7279
      %v7281 = vlaneseq
      %v7282 = vshrl.u32 %v7281, 7
      %v7283 = vsub.s32 %v7280, %v7282
      %v7284 = vrot.slane %v7276, %v7283
      %v7286 = vunpack.c.l.s4 1983009808
      %v7287 = vunpack.c.0.s8 %v7286
      %v7288 = vlaneseq
      %v7289 = vshrl.u32 %v7288, 7
      %v7290 = vsub.s32 %v7287, %v7289
      %v7291 = vrot.slane %v7277, %v7290
      %v7292 = vcombine.low %v7268, %v7284
      %v7293 = vcombine.high %v7268, %v7284
      %v7295 = vunpack.c.l.s4 1934713408
      %v7296 = vunpack.c.0.s8 %v7295
      %v7297 = vlaneseq
      %v7298 = vshrl.u32 %v7297, 7
      %v7299 = vsub.s32 %v7296, %v7298
      %v7300 = vrot.slane %v7292, %v7299
      %v7302 = vunpack.c.l.s4 1934713408
      %v7303 = vunpack.c.0.s8 %v7302
      %v7304 = vlaneseq
      %v7305 = vshrl.u32 %v7304, 7
      %v7306 = vsub.s32 %v7303, %v7305
      %v7307 = vrot.slane %v7293, %v7306
      %v7308 = vcombine.low %v7275, %v7291
      %v7309 = vcombine.high %v7275, %v7291
      %v7311 = vunpack.c.l.s4 1934713408
      %v7312 = vunpack.c.0.s8 %v7311
      %v7313 = vlaneseq
      %v7314 = vshrl.u32 %v7313, 7
      %v7315 = vsub.s32 %v7312, %v7314
      %v7316 = vrot.slane %v7308, %v7315
      %v7318 = vunpack.c.l.s4 1934713408
      %v7319 = vunpack.c.0.s8 %v7318
      %v7320 = vlaneseq
      %v7321 = vshrl.u32 %v7320, 7
      %v7322 = vsub.s32 %v7319, %v7321
      %v7323 = vrot.slane %v7309, %v7322
      %v7324 = vcombine.high %v7300, 0.0
      %v7325 = vcombine.high %v7307, 0.0
      %v7326 = vcombine.high %v7316, 0.0
      %v7327 = vcombine.high %v7323, 0.0
      %7329 = vrot.lane.b32.xlu0 %v7256, 16
      %v7330 = vpop.permute.xlu0 %7329
      %7333 = vrot.lane.b32.xlu0 %v7239, 32
      %v7334 = vpop.permute.xlu0 %7333
      %7337 = vrot.lane.b32.xlu0 %v7257, 48
      %v7338 = vpop.permute.xlu0 %7337
      %7341 = vrot.lane.b32.xlu0 %v7248, 64
      %v7342 = vpop.permute.xlu0 %7341
      %7345 = vrot.lane.b32.xlu0 %v7258, 80
      %v7346 = vpop.permute.xlu0 %7345
      %7349 = vrot.lane.b32.xlu0 %v7255, 96
      %v7350 = vpop.permute.xlu0 %7349
      %7353 = vrot.lane.b32.xlu0 %v7259, 112
      %v7354 = vpop.permute.xlu0 %7353
      %7357 = vrot.lane.b32.xlu0 %v7324, 16
      %v7358 = vpop.permute.xlu0 %7357
      %7361 = vrot.lane.b32.xlu0 %v7307, 32
      %v7362 = vpop.permute.xlu0 %7361
      %7365 = vrot.lane.b32.xlu0 %v7325, 48
      %v7366 = vpop.permute.xlu0 %7365
      %7369 = vrot.lane.b32.xlu0 %v7316, 64
      %v7370 = vpop.permute.xlu0 %7369
      %7373 = vrot.lane.b32.xlu0 %v7326, 80
      %v7374 = vpop.permute.xlu0 %7373
      %7377 = vrot.lane.b32.xlu0 %v7323, 96
      %v7378 = vpop.permute.xlu0 %7377
      %7381 = vrot.lane.b32.xlu0 %v7327, 112
      %v7382 = vpop.permute.xlu0 %7381
      %v7384 = vsel %vm401, %v7232, %v7330
      %v7385 = vsel %vm403, %v7384, %v7334
      %v7386 = vsel %vm405, %v7385, %v7338
      %v7387 = vsel %vm407, %v7386, %v7342
      %v7388 = vsel %vm409, %v7387, %v7346
      %v7389 = vsel %vm411, %v7388, %v7350
      %v7390 = vsel %vm413, %v7389, %v7354
      %v7391 = vsel %vm401, %v7300, %v7358
      %v7392 = vsel %vm403, %v7391, %v7362
      %v7393 = vsel %vm405, %v7392, %v7366
      %v7394 = vsel %vm407, %v7393, %v7370
      %v7395 = vsel %vm409, %v7394, %v7374
      %v7396 = vsel %vm411, %v7395, %v7378
      %v7397 = vsel %vm413, %v7396, %v7382
      %7398 = vst [vmem:[#allocation2 + $0xf0] sm:$0xf] %v7390
      %7399 = vst [vmem:[#allocation2 + $0xf8] sm:$0xf] %v7397
      %v7400 = vld [vmem:[%s164 + $0x9] sm:$0xff]
      %v7401 = vld [vmem:[%s164 + $0x11] sm:$0xff]
      %v7402 = vld [vmem:[%s164 + $0x31] sm:$0xff]
      %v7403 = vld [vmem:[%s164 + $0x39] sm:$0xff]
      %v7404 = vld [vmem:[%s164 + $0x59] sm:$0xff]
      %v7405 = vld [vmem:[%s164 + $0x61] sm:$0xff]
      %v7406 = vld [vmem:[%s164 + $0x81] sm:$0xff]
      %v7407 = vld [vmem:[%s164 + $0x89] sm:$0xff]
      %7416 = vrot.lane.b32.xlu0 %v7400, 110
      %v7417 = vpop.permute.xlu0 %7416
      %7418 = vrot.lane.b32.xlu0 %v7401, 110
      %v7419 = vpop.permute.xlu0 %7418
      %7420 = vrot.lane.b32.xlu0 %v7402, 110
      %v7421 = vpop.permute.xlu0 %7420
      %7422 = vrot.lane.b32.xlu0 %v7403, 110
      %v7423 = vpop.permute.xlu0 %7422
      %7424 = vrot.lane.b32.xlu0 %v7404, 110
      %v7425 = vpop.permute.xlu0 %7424
      %7426 = vrot.lane.b32.xlu0 %v7405, 110
      %v7427 = vpop.permute.xlu0 %7426
      %7428 = vrot.lane.b32.xlu0 %v7406, 110
      %v7429 = vpop.permute.xlu0 %7428
      %7430 = vrot.lane.b32.xlu0 %v7407, 110
      %v7431 = vpop.permute.xlu0 %7430
      %v7440 = vcombine.low %v7417, %v7425
      %v7441 = vcombine.high %v7417, %v7425
      %v7443 = vunpack.c.l.s4 1983009808
      %v7444 = vunpack.c.0.s8 %v7443
      %v7445 = vlaneseq
      %v7446 = vshrl.u32 %v7445, 7
      %v7447 = vsub.s32 %v7444, %v7446
      %v7448 = vrot.slane %v7440, %v7447
      %v7450 = vunpack.c.l.s4 1983009808
      %v7451 = vunpack.c.0.s8 %v7450
      %v7452 = vlaneseq
      %v7453 = vshrl.u32 %v7452, 7
      %v7454 = vsub.s32 %v7451, %v7453
      %v7455 = vrot.slane %v7441, %v7454
      %v7456 = vcombine.low %v7421, %v7429
      %v7457 = vcombine.high %v7421, %v7429
      %v7459 = vunpack.c.l.s4 1983009808
      %v7460 = vunpack.c.0.s8 %v7459
      %v7461 = vlaneseq
      %v7462 = vshrl.u32 %v7461, 7
      %v7463 = vsub.s32 %v7460, %v7462
      %v7464 = vrot.slane %v7456, %v7463
      %v7466 = vunpack.c.l.s4 1983009808
      %v7467 = vunpack.c.0.s8 %v7466
      %v7468 = vlaneseq
      %v7469 = vshrl.u32 %v7468, 7
      %v7470 = vsub.s32 %v7467, %v7469
      %v7471 = vrot.slane %v7457, %v7470
      %v7472 = vcombine.low %v7448, %v7464
      %v7473 = vcombine.high %v7448, %v7464
      %v7475 = vunpack.c.l.s4 1934713408
      %v7476 = vunpack.c.0.s8 %v7475
      %v7477 = vlaneseq
      %v7478 = vshrl.u32 %v7477, 7
      %v7479 = vsub.s32 %v7476, %v7478
      %v7480 = vrot.slane %v7472, %v7479
      %v7482 = vunpack.c.l.s4 1934713408
      %v7483 = vunpack.c.0.s8 %v7482
      %v7484 = vlaneseq
      %v7485 = vshrl.u32 %v7484, 7
      %v7486 = vsub.s32 %v7483, %v7485
      %v7487 = vrot.slane %v7473, %v7486
      %v7488 = vcombine.low %v7455, %v7471
      %v7489 = vcombine.high %v7455, %v7471
      %v7491 = vunpack.c.l.s4 1934713408
      %v7492 = vunpack.c.0.s8 %v7491
      %v7493 = vlaneseq
      %v7494 = vshrl.u32 %v7493, 7
      %v7495 = vsub.s32 %v7492, %v7494
      %v7496 = vrot.slane %v7488, %v7495
      %v7498 = vunpack.c.l.s4 1934713408
      %v7499 = vunpack.c.0.s8 %v7498
      %v7500 = vlaneseq
      %v7501 = vshrl.u32 %v7500, 7
      %v7502 = vsub.s32 %v7499, %v7501
      %v7503 = vrot.slane %v7489, %v7502
      %v7504 = vcombine.high %v7480, 0.0
      %v7505 = vcombine.high %v7487, 0.0
      %v7506 = vcombine.high %v7496, 0.0
      %v7507 = vcombine.high %v7503, 0.0
      %v7508 = vcombine.low %v7419, %v7427
      %v7509 = vcombine.high %v7419, %v7427
      %v7511 = vunpack.c.l.s4 1983009808
      %v7512 = vunpack.c.0.s8 %v7511
      %v7513 = vlaneseq
      %v7514 = vshrl.u32 %v7513, 7
      %v7515 = vsub.s32 %v7512, %v7514
      %v7516 = vrot.slane %v7508, %v7515
      %v7518 = vunpack.c.l.s4 1983009808
      %v7519 = vunpack.c.0.s8 %v7518
      %v7520 = vlaneseq
      %v7521 = vshrl.u32 %v7520, 7
      %v7522 = vsub.s32 %v7519, %v7521
      %v7523 = vrot.slane %v7509, %v7522
      %v7524 = vcombine.low %v7423, %v7431
      %v7525 = vcombine.high %v7423, %v7431
      %v7527 = vunpack.c.l.s4 1983009808
      %v7528 = vunpack.c.0.s8 %v7527
      %v7529 = vlaneseq
      %v7530 = vshrl.u32 %v7529, 7
      %v7531 = vsub.s32 %v7528, %v7530
      %v7532 = vrot.slane %v7524, %v7531
      %v7534 = vunpack.c.l.s4 1983009808
      %v7535 = vunpack.c.0.s8 %v7534
      %v7536 = vlaneseq
      %v7537 = vshrl.u32 %v7536, 7
      %v7538 = vsub.s32 %v7535, %v7537
      %v7539 = vrot.slane %v7525, %v7538
      %v7540 = vcombine.low %v7516, %v7532
      %v7541 = vcombine.high %v7516, %v7532
      %v7543 = vunpack.c.l.s4 1934713408
      %v7544 = vunpack.c.0.s8 %v7543
      %v7545 = vlaneseq
      %v7546 = vshrl.u32 %v7545, 7
      %v7547 = vsub.s32 %v7544, %v7546
      %v7548 = vrot.slane %v7540, %v7547
      %v7550 = vunpack.c.l.s4 1934713408
      %v7551 = vunpack.c.0.s8 %v7550
      %v7552 = vlaneseq
      %v7553 = vshrl.u32 %v7552, 7
      %v7554 = vsub.s32 %v7551, %v7553
      %v7555 = vrot.slane %v7541, %v7554
      %v7556 = vcombine.low %v7523, %v7539
      %v7557 = vcombine.high %v7523, %v7539
      %v7559 = vunpack.c.l.s4 1934713408
      %v7560 = vunpack.c.0.s8 %v7559
      %v7561 = vlaneseq
      %v7562 = vshrl.u32 %v7561, 7
      %v7563 = vsub.s32 %v7560, %v7562
      %v7564 = vrot.slane %v7556, %v7563
      %v7566 = vunpack.c.l.s4 1934713408
      %v7567 = vunpack.c.0.s8 %v7566
      %v7568 = vlaneseq
      %v7569 = vshrl.u32 %v7568, 7
      %v7570 = vsub.s32 %v7567, %v7569
      %v7571 = vrot.slane %v7557, %v7570
      %v7572 = vcombine.high %v7548, 0.0
      %v7573 = vcombine.high %v7555, 0.0
      %v7574 = vcombine.high %v7564, 0.0
      %v7575 = vcombine.high %v7571, 0.0
      %7577 = vrot.lane.b32.xlu0 %v7504, 16
      %v7578 = vpop.permute.xlu0 %7577
      %7581 = vrot.lane.b32.xlu0 %v7487, 32
      %v7582 = vpop.permute.xlu0 %7581
      %7585 = vrot.lane.b32.xlu0 %v7505, 48
      %v7586 = vpop.permute.xlu0 %7585
      %7589 = vrot.lane.b32.xlu0 %v7496, 64
      %v7590 = vpop.permute.xlu0 %7589
      %7593 = vrot.lane.b32.xlu0 %v7506, 80
      %v7594 = vpop.permute.xlu0 %7593
      %7597 = vrot.lane.b32.xlu0 %v7503, 96
      %v7598 = vpop.permute.xlu0 %7597
      %7601 = vrot.lane.b32.xlu0 %v7507, 112
      %v7602 = vpop.permute.xlu0 %7601
      %7605 = vrot.lane.b32.xlu0 %v7572, 16
      %v7606 = vpop.permute.xlu0 %7605
      %7609 = vrot.lane.b32.xlu0 %v7555, 32
      %v7610 = vpop.permute.xlu0 %7609
      %7613 = vrot.lane.b32.xlu0 %v7573, 48
      %v7614 = vpop.permute.xlu0 %7613
      %7617 = vrot.lane.b32.xlu0 %v7564, 64
      %v7618 = vpop.permute.xlu0 %7617
      %7621 = vrot.lane.b32.xlu0 %v7574, 80
      %v7622 = vpop.permute.xlu0 %7621
      %7625 = vrot.lane.b32.xlu0 %v7571, 96
      %v7626 = vpop.permute.xlu0 %7625
      %7629 = vrot.lane.b32.xlu0 %v7575, 112
      %v7630 = vpop.permute.xlu0 %7629
      %v7632 = vsel %vm401, %v7480, %v7578
      %v7633 = vsel %vm403, %v7632, %v7582
      %v7634 = vsel %vm405, %v7633, %v7586
      %v7635 = vsel %vm407, %v7634, %v7590
      %v7636 = vsel %vm409, %v7635, %v7594
      %v7637 = vsel %vm411, %v7636, %v7598
      %v7638 = vsel %vm413, %v7637, %v7602
      %v7639 = vsel %vm401, %v7548, %v7606
      %v7640 = vsel %vm403, %v7639, %v7610
      %v7641 = vsel %vm405, %v7640, %v7614
      %v7642 = vsel %vm407, %v7641, %v7618
      %v7643 = vsel %vm409, %v7642, %v7622
      %v7644 = vsel %vm411, %v7643, %v7626
      %v7645 = vsel %vm413, %v7644, %v7630
      %7646 = vst [vmem:[#allocation2 + $0x100] sm:$0xf] %v7638
      %7647 = vst [vmem:[#allocation2 + $0x108] sm:$0xf] %v7645
      %v7648 = vld [vmem:[%s164 + $0x12] sm:$0xff]
      %v7649 = vld [vmem:[%s164 + $0x1a] sm:$0xff]
      %v7650 = vld [vmem:[%s164 + $0x3a] sm:$0xff]
      %v7651 = vld [vmem:[%s164 + $0x42] sm:$0xff]
      %v7652 = vld [vmem:[%s164 + $0x62] sm:$0xff]
      %v7653 = vld [vmem:[%s164 + $0x6a] sm:$0xff]
      %v7654 = vld [vmem:[%s164 + $0x8a] sm:$0xff]
      %v7655 = vld [vmem:[%s164 + $0x92] sm:$0xff]
      %v7656 = vcombine.low %v7648, %v7652
      %v7657 = vcombine.high %v7648, %v7652
      %v7659 = vunpack.c.l.s4 1983009808
      %v7660 = vunpack.c.0.s8 %v7659
      %v7661 = vlaneseq
      %v7662 = vshrl.u32 %v7661, 7
      %v7663 = vsub.s32 %v7660, %v7662
      %v7664 = vrot.slane %v7656, %v7663
      %v7666 = vunpack.c.l.s4 1983009808
      %v7667 = vunpack.c.0.s8 %v7666
      %v7668 = vlaneseq
      %v7669 = vshrl.u32 %v7668, 7
      %v7670 = vsub.s32 %v7667, %v7669
      %v7671 = vrot.slane %v7657, %v7670
      %v7672 = vcombine.low %v7650, %v7654
      %v7673 = vcombine.high %v7650, %v7654
      %v7675 = vunpack.c.l.s4 1983009808
      %v7676 = vunpack.c.0.s8 %v7675
      %v7677 = vlaneseq
      %v7678 = vshrl.u32 %v7677, 7
      %v7679 = vsub.s32 %v7676, %v7678
      %v7680 = vrot.slane %v7672, %v7679
      %v7682 = vunpack.c.l.s4 1983009808
      %v7683 = vunpack.c.0.s8 %v7682
      %v7684 = vlaneseq
      %v7685 = vshrl.u32 %v7684, 7
      %v7686 = vsub.s32 %v7683, %v7685
      %v7687 = vrot.slane %v7673, %v7686
      %v7688 = vcombine.low %v7664, %v7680
      %v7689 = vcombine.high %v7664, %v7680
      %v7691 = vunpack.c.l.s4 1934713408
      %v7692 = vunpack.c.0.s8 %v7691
      %v7693 = vlaneseq
      %v7694 = vshrl.u32 %v7693, 7
      %v7695 = vsub.s32 %v7692, %v7694
      %v7696 = vrot.slane %v7688, %v7695
      %v7698 = vunpack.c.l.s4 1934713408
      %v7699 = vunpack.c.0.s8 %v7698
      %v7700 = vlaneseq
      %v7701 = vshrl.u32 %v7700, 7
      %v7702 = vsub.s32 %v7699, %v7701
      %v7703 = vrot.slane %v7689, %v7702
      %v7704 = vcombine.low %v7671, %v7687
      %v7705 = vcombine.high %v7671, %v7687
      %v7707 = vunpack.c.l.s4 1934713408
      %v7708 = vunpack.c.0.s8 %v7707
      %v7709 = vlaneseq
      %v7710 = vshrl.u32 %v7709, 7
      %v7711 = vsub.s32 %v7708, %v7710
      %v7712 = vrot.slane %v7704, %v7711
      %v7714 = vunpack.c.l.s4 1934713408
      %v7715 = vunpack.c.0.s8 %v7714
      %v7716 = vlaneseq
      %v7717 = vshrl.u32 %v7716, 7
      %v7718 = vsub.s32 %v7715, %v7717
      %v7719 = vrot.slane %v7705, %v7718
      %v7720 = vcombine.high %v7696, 0.0
      %v7721 = vcombine.high %v7703, 0.0
      %v7722 = vcombine.high %v7712, 0.0
      %v7723 = vcombine.high %v7719, 0.0
      %v7724 = vcombine.low %v7649, %v7653
      %v7725 = vcombine.high %v7649, %v7653
      %v7727 = vunpack.c.l.s4 1983009808
      %v7728 = vunpack.c.0.s8 %v7727
      %v7729 = vlaneseq
      %v7730 = vshrl.u32 %v7729, 7
      %v7731 = vsub.s32 %v7728, %v7730
      %v7732 = vrot.slane %v7724, %v7731
      %v7734 = vunpack.c.l.s4 1983009808
      %v7735 = vunpack.c.0.s8 %v7734
      %v7736 = vlaneseq
      %v7737 = vshrl.u32 %v7736, 7
      %v7738 = vsub.s32 %v7735, %v7737
      %v7739 = vrot.slane %v7725, %v7738
      %v7740 = vcombine.low %v7651, %v7655
      %v7741 = vcombine.high %v7651, %v7655
      %v7743 = vunpack.c.l.s4 1983009808
      %v7744 = vunpack.c.0.s8 %v7743
      %v7745 = vlaneseq
      %v7746 = vshrl.u32 %v7745, 7
      %v7747 = vsub.s32 %v7744, %v7746
      %v7748 = vrot.slane %v7740, %v7747
      %v7750 = vunpack.c.l.s4 1983009808
      %v7751 = vunpack.c.0.s8 %v7750
      %v7752 = vlaneseq
      %v7753 = vshrl.u32 %v7752, 7
      %v7754 = vsub.s32 %v7751, %v7753
      %v7755 = vrot.slane %v7741, %v7754
      %v7756 = vcombine.low %v7732, %v7748
      %v7757 = vcombine.high %v7732, %v7748
      %v7759 = vunpack.c.l.s4 1934713408
      %v7760 = vunpack.c.0.s8 %v7759
      %v7761 = vlaneseq
      %v7762 = vshrl.u32 %v7761, 7
      %v7763 = vsub.s32 %v7760, %v7762
      %v7764 = vrot.slane %v7756, %v7763
      %v7766 = vunpack.c.l.s4 1934713408
      %v7767 = vunpack.c.0.s8 %v7766
      %v7768 = vlaneseq
      %v7769 = vshrl.u32 %v7768, 7
      %v7770 = vsub.s32 %v7767, %v7769
      %v7771 = vrot.slane %v7757, %v7770
      %v7772 = vcombine.low %v7739, %v7755
      %v7773 = vcombine.high %v7739, %v7755
      %v7775 = vunpack.c.l.s4 1934713408
      %v7776 = vunpack.c.0.s8 %v7775
      %v7777 = vlaneseq
      %v7778 = vshrl.u32 %v7777, 7
      %v7779 = vsub.s32 %v7776, %v7778
      %v7780 = vrot.slane %v7772, %v7779
      %v7782 = vunpack.c.l.s4 1934713408
      %v7783 = vunpack.c.0.s8 %v7782
      %v7784 = vlaneseq
      %v7785 = vshrl.u32 %v7784, 7
      %v7786 = vsub.s32 %v7783, %v7785
      %v7787 = vrot.slane %v7773, %v7786
      %v7788 = vcombine.high %v7764, 0.0
      %v7789 = vcombine.high %v7771, 0.0
      %v7790 = vcombine.high %v7780, 0.0
      %v7791 = vcombine.high %v7787, 0.0
      %7793 = vrot.lane.b32.xlu0 %v7720, 16
      %v7794 = vpop.permute.xlu0 %7793
      %7797 = vrot.lane.b32.xlu0 %v7703, 32
      %v7798 = vpop.permute.xlu0 %7797
      %7801 = vrot.lane.b32.xlu0 %v7721, 48
      %v7802 = vpop.permute.xlu0 %7801
      %7805 = vrot.lane.b32.xlu0 %v7712, 64
      %v7806 = vpop.permute.xlu0 %7805
      %7809 = vrot.lane.b32.xlu0 %v7722, 80
      %v7810 = vpop.permute.xlu0 %7809
      %7813 = vrot.lane.b32.xlu0 %v7719, 96
      %v7814 = vpop.permute.xlu0 %7813
      %7817 = vrot.lane.b32.xlu0 %v7723, 112
      %v7818 = vpop.permute.xlu0 %7817
      %7821 = vrot.lane.b32.xlu0 %v7788, 16
      %v7822 = vpop.permute.xlu0 %7821
      %7825 = vrot.lane.b32.xlu0 %v7771, 32
      %v7826 = vpop.permute.xlu0 %7825
      %7829 = vrot.lane.b32.xlu0 %v7789, 48
      %v7830 = vpop.permute.xlu0 %7829
      %7833 = vrot.lane.b32.xlu0 %v7780, 64
      %v7834 = vpop.permute.xlu0 %7833
      %7837 = vrot.lane.b32.xlu0 %v7790, 80
      %v7838 = vpop.permute.xlu0 %7837
      %7841 = vrot.lane.b32.xlu0 %v7787, 96
      %v7842 = vpop.permute.xlu0 %7841
      %7845 = vrot.lane.b32.xlu0 %v7791, 112
      %v7846 = vpop.permute.xlu0 %7845
      %v7848 = vsel %vm401, %v7696, %v7794
      %v7849 = vsel %vm403, %v7848, %v7798
      %v7850 = vsel %vm405, %v7849, %v7802
      %v7851 = vsel %vm407, %v7850, %v7806
      %v7852 = vsel %vm409, %v7851, %v7810
      %v7853 = vsel %vm411, %v7852, %v7814
      %v7854 = vsel %vm413, %v7853, %v7818
      %v7855 = vsel %vm401, %v7764, %v7822
      %v7856 = vsel %vm403, %v7855, %v7826
      %v7857 = vsel %vm405, %v7856, %v7830
      %v7858 = vsel %vm407, %v7857, %v7834
      %v7859 = vsel %vm409, %v7858, %v7838
      %v7860 = vsel %vm411, %v7859, %v7842
      %v7861 = vsel %vm413, %v7860, %v7846
      %v7864 = vrot.slane %v7854, 4
      %v7865 = vrot.slane %v7861, 4
      %7868 = vst [vmem:[#allocation2 + $0x100] sm:$0xf0] %v7864
      %7869 = vst [vmem:[#allocation2 + $0x108] sm:$0xf0] %v7865
      %v7870 = vld [vmem:[%s164 + $0x12] sm:$0xff]
      %v7871 = vld [vmem:[%s164 + $0x1a] sm:$0xff]
      %v7872 = vld [vmem:[%s164 + $0x3a] sm:$0xff]
      %v7873 = vld [vmem:[%s164 + $0x42] sm:$0xff]
      %v7874 = vld [vmem:[%s164 + $0x62] sm:$0xff]
      %v7875 = vld [vmem:[%s164 + $0x6a] sm:$0xff]
      %v7876 = vld [vmem:[%s164 + $0x8a] sm:$0xff]
      %v7877 = vld [vmem:[%s164 + $0x92] sm:$0xff]
      %7886 = vrot.lane.b32.xlu0 %v7870, 119
      %v7887 = vpop.permute.xlu0 %7886
      %7888 = vrot.lane.b32.xlu0 %v7871, 119
      %v7889 = vpop.permute.xlu0 %7888
      %7890 = vrot.lane.b32.xlu0 %v7872, 119
      %v7891 = vpop.permute.xlu0 %7890
      %7892 = vrot.lane.b32.xlu0 %v7873, 119
      %v7893 = vpop.permute.xlu0 %7892
      %7894 = vrot.lane.b32.xlu0 %v7874, 119
      %v7895 = vpop.permute.xlu0 %7894
      %7896 = vrot.lane.b32.xlu0 %v7875, 119
      %v7897 = vpop.permute.xlu0 %7896
      %7898 = vrot.lane.b32.xlu0 %v7876, 119
      %v7899 = vpop.permute.xlu0 %7898
      %7900 = vrot.lane.b32.xlu0 %v7877, 119
      %v7901 = vpop.permute.xlu0 %7900
      %v7910 = vcombine.low %v7887, %v7895
      %v7911 = vcombine.high %v7887, %v7895
      %v7913 = vunpack.c.l.s4 1983009808
      %v7914 = vunpack.c.0.s8 %v7913
      %v7915 = vlaneseq
      %v7916 = vshrl.u32 %v7915, 7
      %v7917 = vsub.s32 %v7914, %v7916
      %v7918 = vrot.slane %v7910, %v7917
      %v7920 = vunpack.c.l.s4 1983009808
      %v7921 = vunpack.c.0.s8 %v7920
      %v7922 = vlaneseq
      %v7923 = vshrl.u32 %v7922, 7
      %v7924 = vsub.s32 %v7921, %v7923
      %v7925 = vrot.slane %v7911, %v7924
      %v7926 = vcombine.low %v7891, %v7899
      %v7927 = vcombine.high %v7891, %v7899
      %v7929 = vunpack.c.l.s4 1983009808
      %v7930 = vunpack.c.0.s8 %v7929
      %v7931 = vlaneseq
      %v7932 = vshrl.u32 %v7931, 7
      %v7933 = vsub.s32 %v7930, %v7932
      %v7934 = vrot.slane %v7926, %v7933
      %v7936 = vunpack.c.l.s4 1983009808
      %v7937 = vunpack.c.0.s8 %v7936
      %v7938 = vlaneseq
      %v7939 = vshrl.u32 %v7938, 7
      %v7940 = vsub.s32 %v7937, %v7939
      %v7941 = vrot.slane %v7927, %v7940
      %v7942 = vcombine.low %v7918, %v7934
      %v7943 = vcombine.high %v7918, %v7934
      %v7945 = vunpack.c.l.s4 1934713408
      %v7946 = vunpack.c.0.s8 %v7945
      %v7947 = vlaneseq
      %v7948 = vshrl.u32 %v7947, 7
      %v7949 = vsub.s32 %v7946, %v7948
      %v7950 = vrot.slane %v7942, %v7949
      %v7952 = vunpack.c.l.s4 1934713408
      %v7953 = vunpack.c.0.s8 %v7952
      %v7954 = vlaneseq
      %v7955 = vshrl.u32 %v7954, 7
      %v7956 = vsub.s32 %v7953, %v7955
      %v7957 = vrot.slane %v7943, %v7956
      %v7958 = vcombine.low %v7925, %v7941
      %v7959 = vcombine.high %v7925, %v7941
      %v7961 = vunpack.c.l.s4 1934713408
      %v7962 = vunpack.c.0.s8 %v7961
      %v7963 = vlaneseq
      %v7964 = vshrl.u32 %v7963, 7
      %v7965 = vsub.s32 %v7962, %v7964
      %v7966 = vrot.slane %v7958, %v7965
      %v7968 = vunpack.c.l.s4 1934713408
      %v7969 = vunpack.c.0.s8 %v7968
      %v7970 = vlaneseq
      %v7971 = vshrl.u32 %v7970, 7
      %v7972 = vsub.s32 %v7969, %v7971
      %v7973 = vrot.slane %v7959, %v7972
      %v7974 = vcombine.high %v7950, 0.0
      %v7975 = vcombine.high %v7957, 0.0
      %v7976 = vcombine.high %v7966, 0.0
      %v7977 = vcombine.high %v7973, 0.0
      %v7978 = vcombine.low %v7889, %v7897
      %v7979 = vcombine.high %v7889, %v7897
      %v7981 = vunpack.c.l.s4 1983009808
      %v7982 = vunpack.c.0.s8 %v7981
      %v7983 = vlaneseq
      %v7984 = vshrl.u32 %v7983, 7
      %v7985 = vsub.s32 %v7982, %v7984
      %v7986 = vrot.slane %v7978, %v7985
      %v7988 = vunpack.c.l.s4 1983009808
      %v7989 = vunpack.c.0.s8 %v7988
      %v7990 = vlaneseq
      %v7991 = vshrl.u32 %v7990, 7
      %v7992 = vsub.s32 %v7989, %v7991
      %v7993 = vrot.slane %v7979, %v7992
      %v7994 = vcombine.low %v7893, %v7901
      %v7995 = vcombine.high %v7893, %v7901
      %v7997 = vunpack.c.l.s4 1983009808
      %v7998 = vunpack.c.0.s8 %v7997
      %v7999 = vlaneseq
      %v8000 = vshrl.u32 %v7999, 7
      %v8001 = vsub.s32 %v7998, %v8000
      %v8002 = vrot.slane %v7994, %v8001
      %v8004 = vunpack.c.l.s4 1983009808
      %v8005 = vunpack.c.0.s8 %v8004
      %v8006 = vlaneseq
      %v8007 = vshrl.u32 %v8006, 7
      %v8008 = vsub.s32 %v8005, %v8007
      %v8009 = vrot.slane %v7995, %v8008
      %v8010 = vcombine.low %v7986, %v8002
      %v8011 = vcombine.high %v7986, %v8002
      %v8013 = vunpack.c.l.s4 1934713408
      %v8014 = vunpack.c.0.s8 %v8013
      %v8015 = vlaneseq
      %v8016 = vshrl.u32 %v8015, 7
      %v8017 = vsub.s32 %v8014, %v8016
      %v8018 = vrot.slane %v8010, %v8017
      %v8020 = vunpack.c.l.s4 1934713408
      %v8021 = vunpack.c.0.s8 %v8020
      %v8022 = vlaneseq
      %v8023 = vshrl.u32 %v8022, 7
      %v8024 = vsub.s32 %v8021, %v8023
      %v8025 = vrot.slane %v8011, %v8024
      %v8026 = vcombine.low %v7993, %v8009
      %v8027 = vcombine.high %v7993, %v8009
      %v8029 = vunpack.c.l.s4 1934713408
      %v8030 = vunpack.c.0.s8 %v8029
      %v8031 = vlaneseq
      %v8032 = vshrl.u32 %v8031, 7
      %v8033 = vsub.s32 %v8030, %v8032
      %v8034 = vrot.slane %v8026, %v8033
      %v8036 = vunpack.c.l.s4 1934713408
      %v8037 = vunpack.c.0.s8 %v8036
      %v8038 = vlaneseq
      %v8039 = vshrl.u32 %v8038, 7
      %v8040 = vsub.s32 %v8037, %v8039
      %v8041 = vrot.slane %v8027, %v8040
      %v8042 = vcombine.high %v8018, 0.0
      %v8043 = vcombine.high %v8025, 0.0
      %v8044 = vcombine.high %v8034, 0.0
      %v8045 = vcombine.high %v8041, 0.0
      %8047 = vrot.lane.b32.xlu0 %v7974, 16
      %v8048 = vpop.permute.xlu0 %8047
      %8051 = vrot.lane.b32.xlu0 %v7957, 32
      %v8052 = vpop.permute.xlu0 %8051
      %8055 = vrot.lane.b32.xlu0 %v7975, 48
      %v8056 = vpop.permute.xlu0 %8055
      %8059 = vrot.lane.b32.xlu0 %v7966, 64
      %v8060 = vpop.permute.xlu0 %8059
      %8063 = vrot.lane.b32.xlu0 %v7976, 80
      %v8064 = vpop.permute.xlu0 %8063
      %8067 = vrot.lane.b32.xlu0 %v7973, 96
      %v8068 = vpop.permute.xlu0 %8067
      %8071 = vrot.lane.b32.xlu0 %v7977, 112
      %v8072 = vpop.permute.xlu0 %8071
      %8075 = vrot.lane.b32.xlu0 %v8042, 16
      %v8076 = vpop.permute.xlu0 %8075
      %8079 = vrot.lane.b32.xlu0 %v8025, 32
      %v8080 = vpop.permute.xlu0 %8079
      %8083 = vrot.lane.b32.xlu0 %v8043, 48
      %v8084 = vpop.permute.xlu0 %8083
      %8087 = vrot.lane.b32.xlu0 %v8034, 64
      %v8088 = vpop.permute.xlu0 %8087
      %8091 = vrot.lane.b32.xlu0 %v8044, 80
      %v8092 = vpop.permute.xlu0 %8091
      %8095 = vrot.lane.b32.xlu0 %v8041, 96
      %v8096 = vpop.permute.xlu0 %8095
      %8099 = vrot.lane.b32.xlu0 %v8045, 112
      %v8100 = vpop.permute.xlu0 %8099
      %v8102 = vsel %vm401, %v7950, %v8048
      %v8103 = vsel %vm403, %v8102, %v8052
      %v8104 = vsel %vm405, %v8103, %v8056
      %v8105 = vsel %vm407, %v8104, %v8060
      %v8106 = vsel %vm409, %v8105, %v8064
      %v8107 = vsel %vm411, %v8106, %v8068
      %v8108 = vsel %vm413, %v8107, %v8072
      %v8109 = vsel %vm401, %v8018, %v8076
      %v8110 = vsel %vm403, %v8109, %v8080
      %v8111 = vsel %vm405, %v8110, %v8084
      %v8112 = vsel %vm407, %v8111, %v8088
      %v8113 = vsel %vm409, %v8112, %v8092
      %v8114 = vsel %vm411, %v8113, %v8096
      %v8115 = vsel %vm413, %v8114, %v8100
      %8116 = vst [vmem:[#allocation2 + $0x110] sm:$0xf] %v8108
      %8117 = vst [vmem:[#allocation2 + $0x118] sm:$0xf] %v8115
      %v8118 = vld [vmem:[%s164 + $0x12] sm:$0xff]
      %v8119 = vld [vmem:[%s164 + $0x1a] sm:$0xff]
      %v8120 = vld [vmem:[%s164 + $0x3a] sm:$0xff]
      %v8121 = vld [vmem:[%s164 + $0x42] sm:$0xff]
      %v8122 = vld [vmem:[%s164 + $0x62] sm:$0xff]
      %v8123 = vld [vmem:[%s164 + $0x6a] sm:$0xff]
      %v8124 = vld [vmem:[%s164 + $0x8a] sm:$0xff]
      %v8125 = vld [vmem:[%s164 + $0x92] sm:$0xff]
      %8134 = vrot.lane.b32.xlu0 %v8118, 110
      %v8135 = vpop.permute.xlu0 %8134
      %8136 = vrot.lane.b32.xlu0 %v8119, 110
      %v8137 = vpop.permute.xlu0 %8136
      %8138 = vrot.lane.b32.xlu0 %v8120, 110
      %v8139 = vpop.permute.xlu0 %8138
      %8140 = vrot.lane.b32.xlu0 %v8121, 110
      %v8141 = vpop.permute.xlu0 %8140
      %8142 = vrot.lane.b32.xlu0 %v8122, 110
      %v8143 = vpop.permute.xlu0 %8142
      %8144 = vrot.lane.b32.xlu0 %v8123, 110
      %v8145 = vpop.permute.xlu0 %8144
      %8146 = vrot.lane.b32.xlu0 %v8124, 110
      %v8147 = vpop.permute.xlu0 %8146
      %8148 = vrot.lane.b32.xlu0 %v8125, 110
      %v8149 = vpop.permute.xlu0 %8148
      %v8158 = vcombine.low %v8135, %v8143
      %v8159 = vcombine.high %v8135, %v8143
      %v8161 = vunpack.c.l.s4 1983009808
      %v8162 = vunpack.c.0.s8 %v8161
      %v8163 = vlaneseq
      %v8164 = vshrl.u32 %v8163, 7
      %v8165 = vsub.s32 %v8162, %v8164
      %v8166 = vrot.slane %v8158, %v8165
      %v8168 = vunpack.c.l.s4 1983009808
      %v8169 = vunpack.c.0.s8 %v8168
      %v8170 = vlaneseq
      %v8171 = vshrl.u32 %v8170, 7
      %v8172 = vsub.s32 %v8169, %v8171
      %v8173 = vrot.slane %v8159, %v8172
      %v8174 = vcombine.low %v8139, %v8147
      %v8175 = vcombine.high %v8139, %v8147
      %v8177 = vunpack.c.l.s4 1983009808
      %v8178 = vunpack.c.0.s8 %v8177
      %v8179 = vlaneseq
      %v8180 = vshrl.u32 %v8179, 7
      %v8181 = vsub.s32 %v8178, %v8180
      %v8182 = vrot.slane %v8174, %v8181
      %v8184 = vunpack.c.l.s4 1983009808
      %v8185 = vunpack.c.0.s8 %v8184
      %v8186 = vlaneseq
      %v8187 = vshrl.u32 %v8186, 7
      %v8188 = vsub.s32 %v8185, %v8187
      %v8189 = vrot.slane %v8175, %v8188
      %v8190 = vcombine.low %v8166, %v8182
      %v8191 = vcombine.high %v8166, %v8182
      %v8193 = vunpack.c.l.s4 1934713408
      %v8194 = vunpack.c.0.s8 %v8193
      %v8195 = vlaneseq
      %v8196 = vshrl.u32 %v8195, 7
      %v8197 = vsub.s32 %v8194, %v8196
      %v8198 = vrot.slane %v8190, %v8197
      %v8200 = vunpack.c.l.s4 1934713408
      %v8201 = vunpack.c.0.s8 %v8200
      %v8202 = vlaneseq
      %v8203 = vshrl.u32 %v8202, 7
      %v8204 = vsub.s32 %v8201, %v8203
      %v8205 = vrot.slane %v8191, %v8204
      %v8206 = vcombine.low %v8173, %v8189
      %v8207 = vcombine.high %v8173, %v8189
      %v8209 = vunpack.c.l.s4 1934713408
      %v8210 = vunpack.c.0.s8 %v8209
      %v8211 = vlaneseq
      %v8212 = vshrl.u32 %v8211, 7
      %v8213 = vsub.s32 %v8210, %v8212
      %v8214 = vrot.slane %v8206, %v8213
      %v8216 = vunpack.c.l.s4 1934713408
      %v8217 = vunpack.c.0.s8 %v8216
      %v8218 = vlaneseq
      %v8219 = vshrl.u32 %v8218, 7
      %v8220 = vsub.s32 %v8217, %v8219
      %v8221 = vrot.slane %v8207, %v8220
      %v8222 = vcombine.high %v8198, 0.0
      %v8223 = vcombine.high %v8205, 0.0
      %v8224 = vcombine.high %v8214, 0.0
      %v8225 = vcombine.high %v8221, 0.0
      %v8226 = vcombine.low %v8137, %v8145
      %v8227 = vcombine.high %v8137, %v8145
      %v8229 = vunpack.c.l.s4 1983009808
      %v8230 = vunpack.c.0.s8 %v8229
      %v8231 = vlaneseq
      %v8232 = vshrl.u32 %v8231, 7
      %v8233 = vsub.s32 %v8230, %v8232
      %v8234 = vrot.slane %v8226, %v8233
      %v8236 = vunpack.c.l.s4 1983009808
      %v8237 = vunpack.c.0.s8 %v8236
      %v8238 = vlaneseq
      %v8239 = vshrl.u32 %v8238, 7
      %v8240 = vsub.s32 %v8237, %v8239
      %v8241 = vrot.slane %v8227, %v8240
      %v8242 = vcombine.low %v8141, %v8149
      %v8243 = vcombine.high %v8141, %v8149
      %v8245 = vunpack.c.l.s4 1983009808
      %v8246 = vunpack.c.0.s8 %v8245
      %v8247 = vlaneseq
      %v8248 = vshrl.u32 %v8247, 7
      %v8249 = vsub.s32 %v8246, %v8248
      %v8250 = vrot.slane %v8242, %v8249
      %v8252 = vunpack.c.l.s4 1983009808
      %v8253 = vunpack.c.0.s8 %v8252
      %v8254 = vlaneseq
      %v8255 = vshrl.u32 %v8254, 7
      %v8256 = vsub.s32 %v8253, %v8255
      %v8257 = vrot.slane %v8243, %v8256
      %v8258 = vcombine.low %v8234, %v8250
      %v8259 = vcombine.high %v8234, %v8250
      %v8261 = vunpack.c.l.s4 1934713408
      %v8262 = vunpack.c.0.s8 %v8261
      %v8263 = vlaneseq
      %v8264 = vshrl.u32 %v8263, 7
      %v8265 = vsub.s32 %v8262, %v8264
      %v8266 = vrot.slane %v8258, %v8265
      %v8268 = vunpack.c.l.s4 1934713408
      %v8269 = vunpack.c.0.s8 %v8268
      %v8270 = vlaneseq
      %v8271 = vshrl.u32 %v8270, 7
      %v8272 = vsub.s32 %v8269, %v8271
      %v8273 = vrot.slane %v8259, %v8272
      %v8274 = vcombine.low %v8241, %v8257
      %v8275 = vcombine.high %v8241, %v8257
      %v8277 = vunpack.c.l.s4 1934713408
      %v8278 = vunpack.c.0.s8 %v8277
      %v8279 = vlaneseq
      %v8280 = vshrl.u32 %v8279, 7
      %v8281 = vsub.s32 %v8278, %v8280
      %v8282 = vrot.slane %v8274, %v8281
      %v8284 = vunpack.c.l.s4 1934713408
      %v8285 = vunpack.c.0.s8 %v8284
      %v8286 = vlaneseq
      %v8287 = vshrl.u32 %v8286, 7
      %v8288 = vsub.s32 %v8285, %v8287
      %v8289 = vrot.slane %v8275, %v8288
      %v8290 = vcombine.high %v8266, 0.0
      %v8291 = vcombine.high %v8273, 0.0
      %v8292 = vcombine.high %v8282, 0.0
      %v8293 = vcombine.high %v8289, 0.0
      %8295 = vrot.lane.b32.xlu0 %v8222, 16
      %v8296 = vpop.permute.xlu0 %8295
      %8299 = vrot.lane.b32.xlu0 %v8205, 32
      %v8300 = vpop.permute.xlu0 %8299
      %8303 = vrot.lane.b32.xlu0 %v8223, 48
      %v8304 = vpop.permute.xlu0 %8303
      %8307 = vrot.lane.b32.xlu0 %v8214, 64
      %v8308 = vpop.permute.xlu0 %8307
      %8311 = vrot.lane.b32.xlu0 %v8224, 80
      %v8312 = vpop.permute.xlu0 %8311
      %8315 = vrot.lane.b32.xlu0 %v8221, 96
      %v8316 = vpop.permute.xlu0 %8315
      %8319 = vrot.lane.b32.xlu0 %v8225, 112
      %v8320 = vpop.permute.xlu0 %8319
      %8323 = vrot.lane.b32.xlu0 %v8290, 16
      %v8324 = vpop.permute.xlu0 %8323
      %8327 = vrot.lane.b32.xlu0 %v8273, 32
      %v8328 = vpop.permute.xlu0 %8327
      %8331 = vrot.lane.b32.xlu0 %v8291, 48
      %v8332 = vpop.permute.xlu0 %8331
      %8335 = vrot.lane.b32.xlu0 %v8282, 64
      %v8336 = vpop.permute.xlu0 %8335
      %8339 = vrot.lane.b32.xlu0 %v8292, 80
      %v8340 = vpop.permute.xlu0 %8339
      %8343 = vrot.lane.b32.xlu0 %v8289, 96
      %v8344 = vpop.permute.xlu0 %8343
      %8347 = vrot.lane.b32.xlu0 %v8293, 112
      %v8348 = vpop.permute.xlu0 %8347
      %v8350 = vsel %vm401, %v8198, %v8296
      %v8351 = vsel %vm403, %v8350, %v8300
      %v8352 = vsel %vm405, %v8351, %v8304
      %v8353 = vsel %vm407, %v8352, %v8308
      %v8354 = vsel %vm409, %v8353, %v8312
      %v8355 = vsel %vm411, %v8354, %v8316
      %v8356 = vsel %vm413, %v8355, %v8320
      %v8357 = vsel %vm401, %v8266, %v8324
      %v8358 = vsel %vm403, %v8357, %v8328
      %v8359 = vsel %vm405, %v8358, %v8332
      %v8360 = vsel %vm407, %v8359, %v8336
      %v8361 = vsel %vm409, %v8360, %v8340
      %v8362 = vsel %vm411, %v8361, %v8344
      %v8363 = vsel %vm413, %v8362, %v8348
      %v8366 = vrot.slane %v8356, 4
      %v8367 = vrot.slane %v8363, 4
      %8370 = vst [vmem:[#allocation2 + $0x110] sm:$0xf0] %v8366
      %8371 = vst [vmem:[#allocation2 + $0x118] sm:$0xf0] %v8367
      %v8372 = vld [vmem:[%s1] sm:$0xff]
      %v8373 = vld [vmem:[%s1 + $0x8] sm:$0xff]
      %v8374 = vld [vmem:[#allocation2] sm:$0xff]
      %v8375 = vld [vmem:[#allocation2 + $0x8] sm:$0xff]
      %v8376 = vld [vmem:[#allocation2 + $0x10] sm:$0xff]
      %v8377 = vld [vmem:[#allocation2 + $0x18] sm:$0xff]
      %v8378 = vld [vmem:[#allocation2 + $0x20] sm:$0xff]
      %v8379 = vld [vmem:[#allocation2 + $0x28] sm:$0xff]
      %v8380 = vld [vmem:[#allocation2 + $0x30] sm:$0xff]
      %v8381 = vld [vmem:[#allocation2 + $0x38] sm:$0xff]
      %v8382 = vld [vmem:[#allocation2 + $0x40] sm:$0xff]
      %v8383 = vld [vmem:[#allocation2 + $0x48] sm:$0xff]
      %v8384 = vld [vmem:[#allocation2 + $0x50] sm:$0xff]
      %v8385 = vld [vmem:[#allocation2 + $0x58] sm:$0xff]
      %v8386 = vld [vmem:[#allocation2 + $0x60] sm:$0xff]
      %v8387 = vld [vmem:[#allocation2 + $0x68] sm:$0xff]
      %v8388 = vld [vmem:[#allocation2 + $0x70] sm:$0xff]
      %v8389 = vld [vmem:[#allocation2 + $0x78] sm:$0xff]
      %v8390 = vld [vmem:[#allocation2 + $0x80] sm:$0xff]
      %v8391 = vld [vmem:[#allocation2 + $0x88] sm:$0xff]
      %v8392 = vld [vmem:[#allocation2 + $0x90] sm:$0xff]
      %v8393 = vld [vmem:[#allocation2 + $0x98] sm:$0xff]
      %v8394 = vld [vmem:[#allocation2 + $0xa0] sm:$0xff]
      %v8395 = vld [vmem:[#allocation2 + $0xa8] sm:$0xff]
      %v8396 = vld [vmem:[#allocation2 + $0xb0] sm:$0xff]
      %v8397 = vld [vmem:[#allocation2 + $0xb8] sm:$0xff]
      %v8398 = vld [vmem:[#allocation2 + $0xc0] sm:$0xff]
      %v8399 = vld [vmem:[#allocation2 + $0xc8] sm:$0xff]
      %v8400 = vld [vmem:[#allocation2 + $0xd0] sm:$0xff]
      %v8401 = vld [vmem:[#allocation2 + $0xd8] sm:$0xff]
      %v8402 = vld [vmem:[#allocation2 + $0xe0] sm:$0xff]
      %v8403 = vld [vmem:[#allocation2 + $0xe8] sm:$0xff]
      %v8404 = vld [vmem:[#allocation2 + $0xf0] sm:$0xff]
      %v8405 = vld [vmem:[#allocation2 + $0xf8] sm:$0xff]
      %v8406 = vld [vmem:[#allocation2 + $0x100] sm:$0xff]
      %v8407 = vld [vmem:[#allocation2 + $0x108] sm:$0xff]
      %v8408 = vld [vmem:[#allocation2 + $0x110] sm:$0xff]
      %v8409 = vld [vmem:[#allocation2 + $0x118] sm:$0xff]
      %v8411 = vsel %vm401, %v8373, 0
      %8413 = vmatprep.subr.mxu0 %v8405
      %8414 = vmatpush1.msra.mxu0 %v8404
      %8415 = vmatprep.subr.mxu0 %v8403
      %8416 = vmatpush1.msra.mxu0 %v8402
      %8417 = vmatprep.subr.mxu0 %v8401
      %8418 = vmatpush1.msra.mxu0 %v8400
      %8419 = vmatprep.subr.mxu0 %v8399
      %8420 = vmatpush1.msra.mxu0 %v8398
      %8421 = vmatprep.subr.mxu0 %v8397
      %8422 = vmatpush1.msra.mxu0 %v8396
      %8423 = vmatprep.subr.mxu0 %v8395
      %8424 = vmatpush1.msra.mxu0 %v8394
      %8425 = vmatprep.subr.mxu0 %v8393
      %8426 = vmatpush1.msra.mxu0 %v8392
      %8427 = vmatprep.subr.mxu0 %v8391
      %8428 = vmatpush1.msra.mxu0 %v8390
      %8429 = vmatprep.subr.mxu0 %v8389
      %8430 = vmatpush1.msra.mxu0 %v8388
      %8431 = vmatprep.subr.mxu0 %v8387
      %8432 = vmatpush1.msra.mxu0 %v8386
      %8433 = vmatprep.subr.mxu0 %v8385
      %8434 = vmatpush1.msra.mxu0 %v8384
      %8435 = vmatprep.subr.mxu0 %v8383
      %8436 = vmatpush1.msra.mxu0 %v8382
      %8437 = vmatprep.subr.mxu0 %v8381
      %8438 = vmatpush1.msra.mxu0 %v8380
      %8439 = vmatprep.subr.mxu0 %v8379
      %8440 = vmatpush1.msra.mxu0 %v8378
      %8441 = vmatprep.subr.mxu0 %v8377
      %8442 = vmatpush1.msra.mxu0 %v8376
      %8443 = vmatprep.subr.mxu0 %v8375
      %8444 = vmatpush1.msra.mxu0 %v8374
      %8445 = vmatprep.subr.mxu0 0.0
      %8446 = vmatpush2.msra.mxu0 0.0
      %8447 = vmatprep.subr.mxu0 0.0
      %8448 = vmatpush2.msra.mxu0 0.0
      %8449 = vmatprep.subr.mxu0 0.0
      %8450 = vmatpush2.msra.mxu0 0.0
      %8451 = vmatprep.subr.mxu0 0.0
      %8452 = vmatpush2.msra.mxu0 0.0
      %8453 = vmatprep.subr.mxu0 0.0
      %8454 = vmatpush2.msra.mxu0 0.0
      %8455 = vmatprep.subr.mxu0 0.0
      %8456 = vmatpush2.msra.mxu0 0.0
      %8457 = vmatprep.subr.mxu0 0.0
      %8458 = vmatpush2.msra.mxu0 0.0
      %8459 = vmatprep.subr.mxu0 0.0
      %8460 = vmatpush2.msra.mxu0 0.0
      %8461 = vmatprep.subr.mxu0 0.0
      %8462 = vmatpush2.msra.mxu0 0.0
      %8463 = vmatprep.subr.mxu0 0.0
      %8464 = vmatpush2.msra.mxu0 0.0
      %8465 = vmatprep.subr.mxu0 0.0
      %8466 = vmatpush2.msra.mxu0 0.0
      %8467 = vmatprep.subr.mxu0 0.0
      %8468 = vmatpush2.msra.mxu0 0.0
      %8469 = vmatprep.subr.mxu0 0.0
      %8470 = vmatpush2.msra.mxu0 0.0
      %8471 = vmatprep.subr.mxu0 0.0
      %8472 = vmatpush2.msra.mxu0 0.0
      %8473 = vmatprep.subr.mxu0 %v8409
      %8474 = vmatpush2.msra.mxu0 %v8408
      %8475 = vmatprep.subr.mxu0 %v8407
      %8476 = vmatpush2.msra.mxu0 %v8406
      %8477 = vmatprep.mubr.f32.mxu0 %v8411
      %8478 = vmatmul.mubr.f32.gmra.mxu0 %v8372
      %v8479 = vpop.f32.mrf.mxu0
      %v8480 = vadd.f32 0.0, %v8479
      %v8481 = vpop.f32.mrf.mxu0
      %v8482 = vadd.f32 0.0, %v8481
      %8483 = vdwg.mxu0
      %8485 = vrot.lane.b32.xlu0 %v8480, 126
      %v8486 = vpop.permute.xlu0 %8485
      %8488 = vrot.lane.b32.xlu0 %v8480, 124
      %v8489 = vpop.permute.xlu0 %8488
      %8491 = vrot.lane.b32.xlu0 %v8480, 122
      %v8492 = vpop.permute.xlu0 %8491
      %8494 = vrot.lane.b32.xlu0 %v8480, 120
      %v8495 = vpop.permute.xlu0 %8494
      %8497 = vrot.lane.b32.xlu0 %v8480, 118
      %v8498 = vpop.permute.xlu0 %8497
      %8500 = vrot.lane.b32.xlu0 %v8480, 116
      %v8501 = vpop.permute.xlu0 %8500
      %8503 = vrot.lane.b32.xlu0 %v8480, 114
      %v8504 = vpop.permute.xlu0 %8503
      %8506 = vrot.lane.b32.xlu0 %v8480, 112
      %v8507 = vpop.permute.xlu0 %8506
      %8509 = vrot.lane.b32.xlu0 %v8480, 110
      %v8510 = vpop.permute.xlu0 %8509
      %8512 = vrot.lane.b32.xlu0 %v8480, 108
      %v8513 = vpop.permute.xlu0 %8512
      %8515 = vrot.lane.b32.xlu0 %v8480, 106
      %v8516 = vpop.permute.xlu0 %8515
      %8518 = vrot.lane.b32.xlu0 %v8480, 104
      %v8519 = vpop.permute.xlu0 %8518
      %8521 = vrot.lane.b32.xlu0 %v8480, 102
      %v8522 = vpop.permute.xlu0 %8521
      %8524 = vrot.lane.b32.xlu0 %v8480, 100
      %v8525 = vpop.permute.xlu0 %8524
      %8527 = vrot.lane.b32.xlu0 %v8480, 98
      %v8528 = vpop.permute.xlu0 %8527
      %8530 = vrot.lane.b32.xlu0 %v8480, 96
      %v8531 = vpop.permute.xlu0 %8530
      %8533 = vrot.lane.b32.xlu0 %v8480, 94
      %v8534 = vpop.permute.xlu0 %8533
      %8536 = vrot.lane.b32.xlu0 %v8480, 92
      %v8537 = vpop.permute.xlu0 %8536
      %8539 = vrot.lane.b32.xlu0 %v8480, 90
      %v8540 = vpop.permute.xlu0 %8539
      %8542 = vrot.lane.b32.xlu0 %v8480, 88
      %v8543 = vpop.permute.xlu0 %8542
      %8545 = vrot.lane.b32.xlu0 %v8480, 86
      %v8546 = vpop.permute.xlu0 %8545
      %8548 = vrot.lane.b32.xlu0 %v8480, 84
      %v8549 = vpop.permute.xlu0 %8548
      %8551 = vrot.lane.b32.xlu0 %v8480, 82
      %v8552 = vpop.permute.xlu0 %8551
      %8554 = vrot.lane.b32.xlu0 %v8480, 80
      %v8555 = vpop.permute.xlu0 %8554
      %8557 = vrot.lane.b32.xlu0 %v8480, 78
      %v8558 = vpop.permute.xlu0 %8557
      %8560 = vrot.lane.b32.xlu0 %v8480, 76
      %v8561 = vpop.permute.xlu0 %8560
      %8563 = vrot.lane.b32.xlu0 %v8480, 74
      %v8564 = vpop.permute.xlu0 %8563
      %8566 = vrot.lane.b32.xlu0 %v8480, 72
      %v8567 = vpop.permute.xlu0 %8566
      %8569 = vrot.lane.b32.xlu0 %v8480, 70
      %v8570 = vpop.permute.xlu0 %8569
      %8572 = vrot.lane.b32.xlu0 %v8480, 68
      %v8573 = vpop.permute.xlu0 %8572
      %8575 = vrot.lane.b32.xlu0 %v8480, 66
      %v8576 = vpop.permute.xlu0 %8575
      %8578 = vrot.lane.b32.xlu0 %v8480, 64
      %v8579 = vpop.permute.xlu0 %8578
      %8581 = vrot.lane.b32.xlu0 %v8480, 62
      %v8582 = vpop.permute.xlu0 %8581
      %8584 = vrot.lane.b32.xlu0 %v8480, 60
      %v8585 = vpop.permute.xlu0 %8584
      %8587 = vrot.lane.b32.xlu0 %v8480, 58
      %v8588 = vpop.permute.xlu0 %8587
      %8590 = vrot.lane.b32.xlu0 %v8480, 56
      %v8591 = vpop.permute.xlu0 %8590
      %8593 = vrot.lane.b32.xlu0 %v8480, 54
      %v8594 = vpop.permute.xlu0 %8593
      %8596 = vrot.lane.b32.xlu0 %v8480, 52
      %v8597 = vpop.permute.xlu0 %8596
      %8599 = vrot.lane.b32.xlu0 %v8480, 50
      %v8600 = vpop.permute.xlu0 %8599
      %8602 = vrot.lane.b32.xlu0 %v8480, 48
      %v8603 = vpop.permute.xlu0 %8602
      %8605 = vrot.lane.b32.xlu0 %v8480, 46
      %v8606 = vpop.permute.xlu0 %8605
      %8608 = vrot.lane.b32.xlu0 %v8480, 44
      %v8609 = vpop.permute.xlu0 %8608
      %8611 = vrot.lane.b32.xlu0 %v8480, 42
      %v8612 = vpop.permute.xlu0 %8611
      %8614 = vrot.lane.b32.xlu0 %v8480, 40
      %v8615 = vpop.permute.xlu0 %8614
      %8617 = vrot.lane.b32.xlu0 %v8480, 38
      %v8618 = vpop.permute.xlu0 %8617
      %8620 = vrot.lane.b32.xlu0 %v8480, 36
      %v8621 = vpop.permute.xlu0 %8620
      %8623 = vrot.lane.b32.xlu0 %v8480, 34
      %v8624 = vpop.permute.xlu0 %8623
      %8626 = vrot.lane.b32.xlu0 %v8480, 32
      %v8627 = vpop.permute.xlu0 %8626
      %8629 = vrot.lane.b32.xlu0 %v8480, 30
      %v8630 = vpop.permute.xlu0 %8629
      %8632 = vrot.lane.b32.xlu0 %v8480, 28
      %v8633 = vpop.permute.xlu0 %8632
      %8635 = vrot.lane.b32.xlu0 %v8480, 26
      %v8636 = vpop.permute.xlu0 %8635
      %8638 = vrot.lane.b32.xlu0 %v8480, 24
      %v8639 = vpop.permute.xlu0 %8638
      %8641 = vrot.lane.b32.xlu0 %v8480, 22
      %v8642 = vpop.permute.xlu0 %8641
      %8644 = vrot.lane.b32.xlu0 %v8480, 20
      %v8645 = vpop.permute.xlu0 %8644
      %8647 = vrot.lane.b32.xlu0 %v8480, 18
      %v8648 = vpop.permute.xlu0 %8647
      %8650 = vrot.lane.b32.xlu0 %v8480, 16
      %v8651 = vpop.permute.xlu0 %8650
      %8653 = vrot.lane.b32.xlu0 %v8480, 14
      %v8654 = vpop.permute.xlu0 %8653
      %8656 = vrot.lane.b32.xlu0 %v8480, 12
      %v8657 = vpop.permute.xlu0 %8656
      %8659 = vrot.lane.b32.xlu0 %v8480, 10
      %v8660 = vpop.permute.xlu0 %8659
      %8662 = vrot.lane.b32.xlu0 %v8480, 8
      %v8663 = vpop.permute.xlu0 %8662
      %8665 = vrot.lane.b32.xlu0 %v8480, 6
      %v8666 = vpop.permute.xlu0 %8665
      %8668 = vrot.lane.b32.xlu0 %v8480, 4
      %v8669 = vpop.permute.xlu0 %8668
      %8671 = vrot.lane.b32.xlu0 %v8480, 2
      %v8672 = vpop.permute.xlu0 %8671
      %8675 = vrot.lane.b32.xlu0 %v8482, 126
      %v8676 = vpop.permute.xlu0 %8675
      %8678 = vrot.lane.b32.xlu0 %v8482, 124
      %v8679 = vpop.permute.xlu0 %8678
      %8681 = vrot.lane.b32.xlu0 %v8482, 122
      %v8682 = vpop.permute.xlu0 %8681
      %8684 = vrot.lane.b32.xlu0 %v8482, 120
      %v8685 = vpop.permute.xlu0 %8684
      %8687 = vrot.lane.b32.xlu0 %v8482, 118
      %v8688 = vpop.permute.xlu0 %8687
      %8690 = vrot.lane.b32.xlu0 %v8482, 116
      %v8691 = vpop.permute.xlu0 %8690
      %8693 = vrot.lane.b32.xlu0 %v8482, 114
      %v8694 = vpop.permute.xlu0 %8693
      %8696 = vrot.lane.b32.xlu0 %v8482, 112
      %v8697 = vpop.permute.xlu0 %8696
      %8699 = vrot.lane.b32.xlu0 %v8482, 110
      %v8700 = vpop.permute.xlu0 %8699
      %8702 = vrot.lane.b32.xlu0 %v8482, 108
      %v8703 = vpop.permute.xlu0 %8702
      %8705 = vrot.lane.b32.xlu0 %v8482, 106
      %v8706 = vpop.permute.xlu0 %8705
      %8708 = vrot.lane.b32.xlu0 %v8482, 104
      %v8709 = vpop.permute.xlu0 %8708
      %8711 = vrot.lane.b32.xlu0 %v8482, 102
      %v8712 = vpop.permute.xlu0 %8711
      %8714 = vrot.lane.b32.xlu0 %v8482, 100
      %v8715 = vpop.permute.xlu0 %8714
      %8717 = vrot.lane.b32.xlu0 %v8482, 98
      %v8718 = vpop.permute.xlu0 %8717
      %8720 = vrot.lane.b32.xlu0 %v8482, 96
      %v8721 = vpop.permute.xlu0 %8720
      %8723 = vrot.lane.b32.xlu0 %v8482, 94
      %v8724 = vpop.permute.xlu0 %8723
      %8726 = vrot.lane.b32.xlu0 %v8482, 92
      %v8727 = vpop.permute.xlu0 %8726
      %8729 = vrot.lane.b32.xlu0 %v8482, 90
      %v8730 = vpop.permute.xlu0 %8729
      %8732 = vrot.lane.b32.xlu0 %v8482, 88
      %v8733 = vpop.permute.xlu0 %8732
      %8735 = vrot.lane.b32.xlu0 %v8482, 86
      %v8736 = vpop.permute.xlu0 %8735
      %8738 = vrot.lane.b32.xlu0 %v8482, 84
      %v8739 = vpop.permute.xlu0 %8738
      %8741 = vrot.lane.b32.xlu0 %v8482, 82
      %v8742 = vpop.permute.xlu0 %8741
      %8744 = vrot.lane.b32.xlu0 %v8482, 80
      %v8745 = vpop.permute.xlu0 %8744
      %8747 = vrot.lane.b32.xlu0 %v8482, 78
      %v8748 = vpop.permute.xlu0 %8747
      %8750 = vrot.lane.b32.xlu0 %v8482, 76
      %v8751 = vpop.permute.xlu0 %8750
      %8753 = vrot.lane.b32.xlu0 %v8482, 74
      %v8754 = vpop.permute.xlu0 %8753
      %8756 = vrot.lane.b32.xlu0 %v8482, 72
      %v8757 = vpop.permute.xlu0 %8756
      %8759 = vrot.lane.b32.xlu0 %v8482, 70
      %v8760 = vpop.permute.xlu0 %8759
      %8762 = vrot.lane.b32.xlu0 %v8482, 68
      %v8763 = vpop.permute.xlu0 %8762
      %8765 = vrot.lane.b32.xlu0 %v8482, 66
      %v8766 = vpop.permute.xlu0 %8765
      %8768 = vrot.lane.b32.xlu0 %v8482, 64
      %v8769 = vpop.permute.xlu0 %8768
      %8771 = vrot.lane.b32.xlu0 %v8482, 62
      %v8772 = vpop.permute.xlu0 %8771
      %8774 = vrot.lane.b32.xlu0 %v8482, 60
      %v8775 = vpop.permute.xlu0 %8774
      %8777 = vrot.lane.b32.xlu0 %v8482, 58
      %v8778 = vpop.permute.xlu0 %8777
      %8780 = vrot.lane.b32.xlu0 %v8482, 56
      %v8781 = vpop.permute.xlu0 %8780
      %8783 = vrot.lane.b32.xlu0 %v8482, 54
      %v8784 = vpop.permute.xlu0 %8783
      %8786 = vrot.lane.b32.xlu0 %v8482, 52
      %v8787 = vpop.permute.xlu0 %8786
      %8789 = vrot.lane.b32.xlu0 %v8482, 50
      %v8790 = vpop.permute.xlu0 %8789
      %8792 = vrot.lane.b32.xlu0 %v8482, 48
      %v8793 = vpop.permute.xlu0 %8792
      %8795 = vrot.lane.b32.xlu0 %v8482, 46
      %v8796 = vpop.permute.xlu0 %8795
      %8798 = vrot.lane.b32.xlu0 %v8482, 44
      %v8799 = vpop.permute.xlu0 %8798
      %8801 = vrot.lane.b32.xlu0 %v8482, 42
      %v8802 = vpop.permute.xlu0 %8801
      %8804 = vrot.lane.b32.xlu0 %v8482, 40
      %v8805 = vpop.permute.xlu0 %8804
      %8807 = vrot.lane.b32.xlu0 %v8482, 38
      %v8808 = vpop.permute.xlu0 %8807
      %8810 = vrot.lane.b32.xlu0 %v8482, 36
      %v8811 = vpop.permute.xlu0 %8810
      %8813 = vrot.lane.b32.xlu0 %v8482, 34
      %v8814 = vpop.permute.xlu0 %8813
      %8816 = vrot.lane.b32.xlu0 %v8482, 32
      %v8817 = vpop.permute.xlu0 %8816
      %8819 = vrot.lane.b32.xlu0 %v8482, 30
      %v8820 = vpop.permute.xlu0 %8819
      %8822 = vrot.lane.b32.xlu0 %v8482, 28
      %v8823 = vpop.permute.xlu0 %8822
      %8825 = vrot.lane.b32.xlu0 %v8482, 26
      %v8826 = vpop.permute.xlu0 %8825
      %8828 = vrot.lane.b32.xlu0 %v8482, 24
      %v8829 = vpop.permute.xlu0 %8828
      %8831 = vrot.lane.b32.xlu0 %v8482, 22
      %v8832 = vpop.permute.xlu0 %8831
      %8834 = vrot.lane.b32.xlu0 %v8482, 20
      %v8835 = vpop.permute.xlu0 %8834
      %8837 = vrot.lane.b32.xlu0 %v8482, 18
      %v8838 = vpop.permute.xlu0 %8837
      %8840 = vrot.lane.b32.xlu0 %v8482, 16
      %v8841 = vpop.permute.xlu0 %8840
      %8843 = vrot.lane.b32.xlu0 %v8482, 14
      %v8844 = vpop.permute.xlu0 %8843
      %8846 = vrot.lane.b32.xlu0 %v8482, 12
      %v8847 = vpop.permute.xlu0 %8846
      %8849 = vrot.lane.b32.xlu0 %v8482, 10
      %v8850 = vpop.permute.xlu0 %8849
      %8852 = vrot.lane.b32.xlu0 %v8482, 8
      %v8853 = vpop.permute.xlu0 %8852
      %8855 = vrot.lane.b32.xlu0 %v8482, 6
      %v8856 = vpop.permute.xlu0 %8855
      %8858 = vrot.lane.b32.xlu0 %v8482, 4
      %v8859 = vpop.permute.xlu0 %8858
      %8861 = vrot.lane.b32.xlu0 %v8482, 2
      %v8862 = vpop.permute.xlu0 %8861
      %v8864 = vcombine.low %v8480, %v8489
      %v8865 = vcombine.high %v8480, %v8489
      %v8867 = vunpack.c.l.s4 1983009808
      %v8868 = vunpack.c.0.s8 %v8867
      %v8869 = vlaneseq
      %v8870 = vshrl.u32 %v8869, 7
      %v8871 = vsub.s32 %v8868, %v8870
      %v8872 = vrot.slane %v8864, %v8871
      %v8874 = vunpack.c.l.s4 1983009808
      %v8875 = vunpack.c.0.s8 %v8874
      %v8876 = vlaneseq
      %v8877 = vshrl.u32 %v8876, 7
      %v8878 = vsub.s32 %v8875, %v8877
      %v8879 = vrot.slane %v8865, %v8878
      %v8880 = vcombine.low %v8486, %v8492
      %v8881 = vcombine.high %v8486, %v8492
      %v8883 = vunpack.c.l.s4 1983009808
      %v8884 = vunpack.c.0.s8 %v8883
      %v8885 = vlaneseq
      %v8886 = vshrl.u32 %v8885, 7
      %v8887 = vsub.s32 %v8884, %v8886
      %v8888 = vrot.slane %v8880, %v8887
      %v8890 = vunpack.c.l.s4 1983009808
      %v8891 = vunpack.c.0.s8 %v8890
      %v8892 = vlaneseq
      %v8893 = vshrl.u32 %v8892, 7
      %v8894 = vsub.s32 %v8891, %v8893
      %v8895 = vrot.slane %v8881, %v8894
      %v8896 = vcombine.low %v8495, %v8501
      %v8897 = vcombine.high %v8495, %v8501
      %v8899 = vunpack.c.l.s4 1983009808
      %v8900 = vunpack.c.0.s8 %v8899
      %v8901 = vlaneseq
      %v8902 = vshrl.u32 %v8901, 7
      %v8903 = vsub.s32 %v8900, %v8902
      %v8904 = vrot.slane %v8896, %v8903
      %v8906 = vunpack.c.l.s4 1983009808
      %v8907 = vunpack.c.0.s8 %v8906
      %v8908 = vlaneseq
      %v8909 = vshrl.u32 %v8908, 7
      %v8910 = vsub.s32 %v8907, %v8909
      %v8911 = vrot.slane %v8897, %v8910
      %v8912 = vcombine.low %v8498, %v8504
      %v8913 = vcombine.high %v8498, %v8504
      %v8915 = vunpack.c.l.s4 1983009808
      %v8916 = vunpack.c.0.s8 %v8915
      %v8917 = vlaneseq
      %v8918 = vshrl.u32 %v8917, 7
      %v8919 = vsub.s32 %v8916, %v8918
      %v8920 = vrot.slane %v8912, %v8919
      %v8922 = vunpack.c.l.s4 1983009808
      %v8923 = vunpack.c.0.s8 %v8922
      %v8924 = vlaneseq
      %v8925 = vshrl.u32 %v8924, 7
      %v8926 = vsub.s32 %v8923, %v8925
      %v8927 = vrot.slane %v8913, %v8926
      %v8928 = vcombine.low %v8872, %v8888
      %v8929 = vcombine.high %v8872, %v8888
      %v8931 = vunpack.c.l.s4 1934713408
      %v8932 = vunpack.c.0.s8 %v8931
      %v8933 = vlaneseq
      %v8934 = vshrl.u32 %v8933, 7
      %v8935 = vsub.s32 %v8932, %v8934
      %v8936 = vrot.slane %v8928, %v8935
      %v8938 = vunpack.c.l.s4 1934713408
      %v8939 = vunpack.c.0.s8 %v8938
      %v8940 = vlaneseq
      %v8941 = vshrl.u32 %v8940, 7
      %v8942 = vsub.s32 %v8939, %v8941
      %v8943 = vrot.slane %v8929, %v8942
      %v8944 = vcombine.low %v8879, %v8895
      %v8945 = vcombine.high %v8879, %v8895
      %v8947 = vunpack.c.l.s4 1934713408
      %v8948 = vunpack.c.0.s8 %v8947
      %v8949 = vlaneseq
      %v8950 = vshrl.u32 %v8949, 7
      %v8951 = vsub.s32 %v8948, %v8950
      %v8952 = vrot.slane %v8944, %v8951
      %v8954 = vunpack.c.l.s4 1934713408
      %v8955 = vunpack.c.0.s8 %v8954
      %v8956 = vlaneseq
      %v8957 = vshrl.u32 %v8956, 7
      %v8958 = vsub.s32 %v8955, %v8957
      %v8959 = vrot.slane %v8945, %v8958
      %v8960 = vcombine.low %v8904, %v8920
      %v8961 = vcombine.high %v8904, %v8920
      %v8963 = vunpack.c.l.s4 1934713408
      %v8964 = vunpack.c.0.s8 %v8963
      %v8965 = vlaneseq
      %v8966 = vshrl.u32 %v8965, 7
      %v8967 = vsub.s32 %v8964, %v8966
      %v8968 = vrot.slane %v8960, %v8967
      %v8970 = vunpack.c.l.s4 1934713408
      %v8971 = vunpack.c.0.s8 %v8970
      %v8972 = vlaneseq
      %v8973 = vshrl.u32 %v8972, 7
      %v8974 = vsub.s32 %v8971, %v8973
      %v8975 = vrot.slane %v8961, %v8974
      %v8976 = vcombine.low %v8911, %v8927
      %v8977 = vcombine.high %v8911, %v8927
      %v8979 = vunpack.c.l.s4 1934713408
      %v8980 = vunpack.c.0.s8 %v8979
      %v8981 = vlaneseq
      %v8982 = vshrl.u32 %v8981, 7
      %v8983 = vsub.s32 %v8980, %v8982
      %v8984 = vrot.slane %v8976, %v8983
      %v8986 = vunpack.c.l.s4 1934713408
      %v8987 = vunpack.c.0.s8 %v8986
      %v8988 = vlaneseq
      %v8989 = vshrl.u32 %v8988, 7
      %v8990 = vsub.s32 %v8987, %v8989
      %v8991 = vrot.slane %v8977, %v8990
      %v8992 = vcombine.low %v8936, %v8968
      %v8993 = vcombine.high %v8936, %v8968
      %v8994 = vcombine.low %v8943, %v8975
      %v8995 = vcombine.high %v8943, %v8975
      %v8996 = vcombine.low %v8952, %v8984
      %v8997 = vcombine.high %v8952, %v8984
      %v8998 = vcombine.low %v8959, %v8991
      %v8999 = vcombine.high %v8959, %v8991
      %v9000 = vcombine.low %v8507, %v8513
      %v9001 = vcombine.high %v8507, %v8513
      %v9003 = vunpack.c.l.s4 1983009808
      %v9004 = vunpack.c.0.s8 %v9003
      %v9005 = vlaneseq
      %v9006 = vshrl.u32 %v9005, 7
      %v9007 = vsub.s32 %v9004, %v9006
      %v9008 = vrot.slane %v9000, %v9007
      %v9010 = vunpack.c.l.s4 1983009808
      %v9011 = vunpack.c.0.s8 %v9010
      %v9012 = vlaneseq
      %v9013 = vshrl.u32 %v9012, 7
      %v9014 = vsub.s32 %v9011, %v9013
      %v9015 = vrot.slane %v9001, %v9014
      %v9016 = vcombine.low %v8510, %v8516
      %v9017 = vcombine.high %v8510, %v8516
      %v9019 = vunpack.c.l.s4 1983009808
      %v9020 = vunpack.c.0.s8 %v9019
      %v9021 = vlaneseq
      %v9022 = vshrl.u32 %v9021, 7
      %v9023 = vsub.s32 %v9020, %v9022
      %v9024 = vrot.slane %v9016, %v9023
      %v9026 = vunpack.c.l.s4 1983009808
      %v9027 = vunpack.c.0.s8 %v9026
      %v9028 = vlaneseq
      %v9029 = vshrl.u32 %v9028, 7
      %v9030 = vsub.s32 %v9027, %v9029
      %v9031 = vrot.slane %v9017, %v9030
      %v9032 = vcombine.low %v8519, %v8525
      %v9033 = vcombine.high %v8519, %v8525
      %v9035 = vunpack.c.l.s4 1983009808
      %v9036 = vunpack.c.0.s8 %v9035
      %v9037 = vlaneseq
      %v9038 = vshrl.u32 %v9037, 7
      %v9039 = vsub.s32 %v9036, %v9038
      %v9040 = vrot.slane %v9032, %v9039
      %v9042 = vunpack.c.l.s4 1983009808
      %v9043 = vunpack.c.0.s8 %v9042
      %v9044 = vlaneseq
      %v9045 = vshrl.u32 %v9044, 7
      %v9046 = vsub.s32 %v9043, %v9045
      %v9047 = vrot.slane %v9033, %v9046
      %v9048 = vcombine.low %v8522, %v8528
      %v9049 = vcombine.high %v8522, %v8528
      %v9051 = vunpack.c.l.s4 1983009808
      %v9052 = vunpack.c.0.s8 %v9051
      %v9053 = vlaneseq
      %v9054 = vshrl.u32 %v9053, 7
      %v9055 = vsub.s32 %v9052, %v9054
      %v9056 = vrot.slane %v9048, %v9055
      %v9058 = vunpack.c.l.s4 1983009808
      %v9059 = vunpack.c.0.s8 %v9058
      %v9060 = vlaneseq
      %v9061 = vshrl.u32 %v9060, 7
      %v9062 = vsub.s32 %v9059, %v9061
      %v9063 = vrot.slane %v9049, %v9062
      %v9064 = vcombine.low %v9008, %v9024
      %v9065 = vcombine.high %v9008, %v9024
      %v9067 = vunpack.c.l.s4 1934713408
      %v9068 = vunpack.c.0.s8 %v9067
      %v9069 = vlaneseq
      %v9070 = vshrl.u32 %v9069, 7
      %v9071 = vsub.s32 %v9068, %v9070
      %v9072 = vrot.slane %v9064, %v9071
      %v9074 = vunpack.c.l.s4 1934713408
      %v9075 = vunpack.c.0.s8 %v9074
      %v9076 = vlaneseq
      %v9077 = vshrl.u32 %v9076, 7
      %v9078 = vsub.s32 %v9075, %v9077
      %v9079 = vrot.slane %v9065, %v9078
      %v9080 = vcombine.low %v9015, %v9031
      %v9081 = vcombine.high %v9015, %v9031
      %v9083 = vunpack.c.l.s4 1934713408
      %v9084 = vunpack.c.0.s8 %v9083
      %v9085 = vlaneseq
      %v9086 = vshrl.u32 %v9085, 7
      %v9087 = vsub.s32 %v9084, %v9086
      %v9088 = vrot.slane %v9080, %v9087
      %v9090 = vunpack.c.l.s4 1934713408
      %v9091 = vunpack.c.0.s8 %v9090
      %v9092 = vlaneseq
      %v9093 = vshrl.u32 %v9092, 7
      %v9094 = vsub.s32 %v9091, %v9093
      %v9095 = vrot.slane %v9081, %v9094
      %v9096 = vcombine.low %v9040, %v9056
      %v9097 = vcombine.high %v9040, %v9056
      %v9099 = vunpack.c.l.s4 1934713408
      %v9100 = vunpack.c.0.s8 %v9099
      %v9101 = vlaneseq
      %v9102 = vshrl.u32 %v9101, 7
      %v9103 = vsub.s32 %v9100, %v9102
      %v9104 = vrot.slane %v9096, %v9103
      %v9106 = vunpack.c.l.s4 1934713408
      %v9107 = vunpack.c.0.s8 %v9106
      %v9108 = vlaneseq
      %v9109 = vshrl.u32 %v9108, 7
      %v9110 = vsub.s32 %v9107, %v9109
      %v9111 = vrot.slane %v9097, %v9110
      %v9112 = vcombine.low %v9047, %v9063
      %v9113 = vcombine.high %v9047, %v9063
      %v9115 = vunpack.c.l.s4 1934713408
      %v9116 = vunpack.c.0.s8 %v9115
      %v9117 = vlaneseq
      %v9118 = vshrl.u32 %v9117, 7
      %v9119 = vsub.s32 %v9116, %v9118
      %v9120 = vrot.slane %v9112, %v9119
      %v9122 = vunpack.c.l.s4 1934713408
      %v9123 = vunpack.c.0.s8 %v9122
      %v9124 = vlaneseq
      %v9125 = vshrl.u32 %v9124, 7
      %v9126 = vsub.s32 %v9123, %v9125
      %v9127 = vrot.slane %v9113, %v9126
      %v9128 = vcombine.low %v9072, %v9104
      %v9129 = vcombine.high %v9072, %v9104
      %v9130 = vcombine.low %v9079, %v9111
      %v9131 = vcombine.high %v9079, %v9111
      %v9132 = vcombine.low %v9088, %v9120
      %v9133 = vcombine.high %v9088, %v9120
      %v9134 = vcombine.low %v9095, %v9127
      %v9135 = vcombine.high %v9095, %v9127
      %v9136 = vcombine.low %v8531, %v8537
      %v9137 = vcombine.high %v8531, %v8537
      %v9139 = vunpack.c.l.s4 1983009808
      %v9140 = vunpack.c.0.s8 %v9139
      %v9141 = vlaneseq
      %v9142 = vshrl.u32 %v9141, 7
      %v9143 = vsub.s32 %v9140, %v9142
      %v9144 = vrot.slane %v9136, %v9143
      %v9146 = vunpack.c.l.s4 1983009808
      %v9147 = vunpack.c.0.s8 %v9146
      %v9148 = vlaneseq
      %v9149 = vshrl.u32 %v9148, 7
      %v9150 = vsub.s32 %v9147, %v9149
      %v9151 = vrot.slane %v9137, %v9150
      %v9152 = vcombine.low %v8534, %v8540
      %v9153 = vcombine.high %v8534, %v8540
      %v9155 = vunpack.c.l.s4 1983009808
      %v9156 = vunpack.c.0.s8 %v9155
      %v9157 = vlaneseq
      %v9158 = vshrl.u32 %v9157, 7
      %v9159 = vsub.s32 %v9156, %v9158
      %v9160 = vrot.slane %v9152, %v9159
      %v9162 = vunpack.c.l.s4 1983009808
      %v9163 = vunpack.c.0.s8 %v9162
      %v9164 = vlaneseq
      %v9165 = vshrl.u32 %v9164, 7
      %v9166 = vsub.s32 %v9163, %v9165
      %v9167 = vrot.slane %v9153, %v9166
      %v9168 = vcombine.low %v8543, %v8549
      %v9169 = vcombine.high %v8543, %v8549
      %v9171 = vunpack.c.l.s4 1983009808
      %v9172 = vunpack.c.0.s8 %v9171
      %v9173 = vlaneseq
      %v9174 = vshrl.u32 %v9173, 7
      %v9175 = vsub.s32 %v9172, %v9174
      %v9176 = vrot.slane %v9168, %v9175
      %v9178 = vunpack.c.l.s4 1983009808
      %v9179 = vunpack.c.0.s8 %v9178
      %v9180 = vlaneseq
      %v9181 = vshrl.u32 %v9180, 7
      %v9182 = vsub.s32 %v9179, %v9181
      %v9183 = vrot.slane %v9169, %v9182
      %v9184 = vcombine.low %v8546, %v8552
      %v9185 = vcombine.high %v8546, %v8552
      %v9187 = vunpack.c.l.s4 1983009808
      %v9188 = vunpack.c.0.s8 %v9187
      %v9189 = vlaneseq
      %v9190 = vshrl.u32 %v9189, 7
      %v9191 = vsub.s32 %v9188, %v9190
      %v9192 = vrot.slane %v9184, %v9191
      %v9194 = vunpack.c.l.s4 1983009808
      %v9195 = vunpack.c.0.s8 %v9194
      %v9196 = vlaneseq
      %v9197 = vshrl.u32 %v9196, 7
      %v9198 = vsub.s32 %v9195, %v9197
      %v9199 = vrot.slane %v9185, %v9198
      %v9200 = vcombine.low %v9144, %v9160
      %v9201 = vcombine.high %v9144, %v9160
      %v9203 = vunpack.c.l.s4 1934713408
      %v9204 = vunpack.c.0.s8 %v9203
      %v9205 = vlaneseq
      %v9206 = vshrl.u32 %v9205, 7
      %v9207 = vsub.s32 %v9204, %v9206
      %v9208 = vrot.slane %v9200, %v9207
      %v9210 = vunpack.c.l.s4 1934713408
      %v9211 = vunpack.c.0.s8 %v9210
      %v9212 = vlaneseq
      %v9213 = vshrl.u32 %v9212, 7
      %v9214 = vsub.s32 %v9211, %v9213
      %v9215 = vrot.slane %v9201, %v9214
      %v9216 = vcombine.low %v9151, %v9167
      %v9217 = vcombine.high %v9151, %v9167
      %v9219 = vunpack.c.l.s4 1934713408
      %v9220 = vunpack.c.0.s8 %v9219
      %v9221 = vlaneseq
      %v9222 = vshrl.u32 %v9221, 7
      %v9223 = vsub.s32 %v9220, %v9222
      %v9224 = vrot.slane %v9216, %v9223
      %v9226 = vunpack.c.l.s4 1934713408
      %v9227 = vunpack.c.0.s8 %v9226
      %v9228 = vlaneseq
      %v9229 = vshrl.u32 %v9228, 7
      %v9230 = vsub.s32 %v9227, %v9229
      %v9231 = vrot.slane %v9217, %v9230
      %v9232 = vcombine.low %v9176, %v9192
      %v9233 = vcombine.high %v9176, %v9192
      %v9235 = vunpack.c.l.s4 1934713408
      %v9236 = vunpack.c.0.s8 %v9235
      %v9237 = vlaneseq
      %v9238 = vshrl.u32 %v9237, 7
      %v9239 = vsub.s32 %v9236, %v9238
      %v9240 = vrot.slane %v9232, %v9239
      %v9242 = vunpack.c.l.s4 1934713408
      %v9243 = vunpack.c.0.s8 %v9242
      %v9244 = vlaneseq
      %v9245 = vshrl.u32 %v9244, 7
      %v9246 = vsub.s32 %v9243, %v9245
      %v9247 = vrot.slane %v9233, %v9246
      %v9248 = vcombine.low %v9183, %v9199
      %v9249 = vcombine.high %v9183, %v9199
      %v9251 = vunpack.c.l.s4 1934713408
      %v9252 = vunpack.c.0.s8 %v9251
      %v9253 = vlaneseq
      %v9254 = vshrl.u32 %v9253, 7
      %v9255 = vsub.s32 %v9252, %v9254
      %v9256 = vrot.slane %v9248, %v9255
      %v9258 = vunpack.c.l.s4 1934713408
      %v9259 = vunpack.c.0.s8 %v9258
      %v9260 = vlaneseq
      %v9261 = vshrl.u32 %v9260, 7
      %v9262 = vsub.s32 %v9259, %v9261
      %v9263 = vrot.slane %v9249, %v9262
      %v9264 = vcombine.low %v9208, %v9240
      %v9265 = vcombine.high %v9208, %v9240
      %v9266 = vcombine.low %v9215, %v9247
      %v9267 = vcombine.high %v9215, %v9247
      %v9268 = vcombine.low %v9224, %v9256
      %v9269 = vcombine.high %v9224, %v9256
      %v9270 = vcombine.low %v9231, %v9263
      %v9271 = vcombine.high %v9231, %v9263
      %v9272 = vcombine.low %v8555, %v8561
      %v9273 = vcombine.high %v8555, %v8561
      %v9275 = vunpack.c.l.s4 1983009808
      %v9276 = vunpack.c.0.s8 %v9275
      %v9277 = vlaneseq
      %v9278 = vshrl.u32 %v9277, 7
      %v9279 = vsub.s32 %v9276, %v9278
      %v9280 = vrot.slane %v9272, %v9279
      %v9282 = vunpack.c.l.s4 1983009808
      %v9283 = vunpack.c.0.s8 %v9282
      %v9284 = vlaneseq
      %v9285 = vshrl.u32 %v9284, 7
      %v9286 = vsub.s32 %v9283, %v9285
      %v9287 = vrot.slane %v9273, %v9286
      %v9288 = vcombine.low %v8558, %v8564
      %v9289 = vcombine.high %v8558, %v8564
      %v9291 = vunpack.c.l.s4 1983009808
      %v9292 = vunpack.c.0.s8 %v9291
      %v9293 = vlaneseq
      %v9294 = vshrl.u32 %v9293, 7
      %v9295 = vsub.s32 %v9292, %v9294
      %v9296 = vrot.slane %v9288, %v9295
      %v9298 = vunpack.c.l.s4 1983009808
      %v9299 = vunpack.c.0.s8 %v9298
      %v9300 = vlaneseq
      %v9301 = vshrl.u32 %v9300, 7
      %v9302 = vsub.s32 %v9299, %v9301
      %v9303 = vrot.slane %v9289, %v9302
      %v9304 = vcombine.low %v8567, %v8573
      %v9305 = vcombine.high %v8567, %v8573
      %v9307 = vunpack.c.l.s4 1983009808
      %v9308 = vunpack.c.0.s8 %v9307
      %v9309 = vlaneseq
      %v9310 = vshrl.u32 %v9309, 7
      %v9311 = vsub.s32 %v9308, %v9310
      %v9312 = vrot.slane %v9304, %v9311
      %v9314 = vunpack.c.l.s4 1983009808
      %v9315 = vunpack.c.0.s8 %v9314
      %v9316 = vlaneseq
      %v9317 = vshrl.u32 %v9316, 7
      %v9318 = vsub.s32 %v9315, %v9317
      %v9319 = vrot.slane %v9305, %v9318
      %v9320 = vcombine.low %v8570, %v8576
      %v9321 = vcombine.high %v8570, %v8576
      %v9323 = vunpack.c.l.s4 1983009808
      %v9324 = vunpack.c.0.s8 %v9323
      %v9325 = vlaneseq
      %v9326 = vshrl.u32 %v9325, 7
      %v9327 = vsub.s32 %v9324, %v9326
      %v9328 = vrot.slane %v9320, %v9327
      %v9330 = vunpack.c.l.s4 1983009808
      %v9331 = vunpack.c.0.s8 %v9330
      %v9332 = vlaneseq
      %v9333 = vshrl.u32 %v9332, 7
      %v9334 = vsub.s32 %v9331, %v9333
      %v9335 = vrot.slane %v9321, %v9334
      %v9336 = vcombine.low %v9280, %v9296
      %v9337 = vcombine.high %v9280, %v9296
      %v9339 = vunpack.c.l.s4 1934713408
      %v9340 = vunpack.c.0.s8 %v9339
      %v9341 = vlaneseq
      %v9342 = vshrl.u32 %v9341, 7
      %v9343 = vsub.s32 %v9340, %v9342
      %v9344 = vrot.slane %v9336, %v9343
      %v9346 = vunpack.c.l.s4 1934713408
      %v9347 = vunpack.c.0.s8 %v9346
      %v9348 = vlaneseq
      %v9349 = vshrl.u32 %v9348, 7
      %v9350 = vsub.s32 %v9347, %v9349
      %v9351 = vrot.slane %v9337, %v9350
      %v9352 = vcombine.low %v9287, %v9303
      %v9353 = vcombine.high %v9287, %v9303
      %v9355 = vunpack.c.l.s4 1934713408
      %v9356 = vunpack.c.0.s8 %v9355
      %v9357 = vlaneseq
      %v9358 = vshrl.u32 %v9357, 7
      %v9359 = vsub.s32 %v9356, %v9358
      %v9360 = vrot.slane %v9352, %v9359
      %v9362 = vunpack.c.l.s4 1934713408
      %v9363 = vunpack.c.0.s8 %v9362
      %v9364 = vlaneseq
      %v9365 = vshrl.u32 %v9364, 7
      %v9366 = vsub.s32 %v9363, %v9365
      %v9367 = vrot.slane %v9353, %v9366
      %v9368 = vcombine.low %v9312, %v9328
      %v9369 = vcombine.high %v9312, %v9328
      %v9371 = vunpack.c.l.s4 1934713408
      %v9372 = vunpack.c.0.s8 %v9371
      %v9373 = vlaneseq
      %v9374 = vshrl.u32 %v9373, 7
      %v9375 = vsub.s32 %v9372, %v9374
      %v9376 = vrot.slane %v9368, %v9375
      %v9378 = vunpack.c.l.s4 1934713408
      %v9379 = vunpack.c.0.s8 %v9378
      %v9380 = vlaneseq
      %v9381 = vshrl.u32 %v9380, 7
      %v9382 = vsub.s32 %v9379, %v9381
      %v9383 = vrot.slane %v9369, %v9382
      %v9384 = vcombine.low %v9319, %v9335
      %v9385 = vcombine.high %v9319, %v9335
      %v9387 = vunpack.c.l.s4 1934713408
      %v9388 = vunpack.c.0.s8 %v9387
      %v9389 = vlaneseq
      %v9390 = vshrl.u32 %v9389, 7
      %v9391 = vsub.s32 %v9388, %v9390
      %v9392 = vrot.slane %v9384, %v9391
      %v9394 = vunpack.c.l.s4 1934713408
      %v9395 = vunpack.c.0.s8 %v9394
      %v9396 = vlaneseq
      %v9397 = vshrl.u32 %v9396, 7
      %v9398 = vsub.s32 %v9395, %v9397
      %v9399 = vrot.slane %v9385, %v9398
      %v9400 = vcombine.low %v9344, %v9376
      %v9401 = vcombine.high %v9344, %v9376
      %v9402 = vcombine.low %v9351, %v9383
      %v9403 = vcombine.high %v9351, %v9383
      %v9404 = vcombine.low %v9360, %v9392
      %v9405 = vcombine.high %v9360, %v9392
      %v9406 = vcombine.low %v9367, %v9399
      %v9407 = vcombine.high %v9367, %v9399
      %v9408 = vcombine.low %v8579, %v8585
      %v9409 = vcombine.high %v8579, %v8585
      %v9411 = vunpack.c.l.s4 1983009808
      %v9412 = vunpack.c.0.s8 %v9411
      %v9413 = vlaneseq
      %v9414 = vshrl.u32 %v9413, 7
      %v9415 = vsub.s32 %v9412, %v9414
      %v9416 = vrot.slane %v9408, %v9415
      %v9418 = vunpack.c.l.s4 1983009808
      %v9419 = vunpack.c.0.s8 %v9418
      %v9420 = vlaneseq
      %v9421 = vshrl.u32 %v9420, 7
      %v9422 = vsub.s32 %v9419, %v9421
      %v9423 = vrot.slane %v9409, %v9422
      %v9424 = vcombine.low %v8582, %v8588
      %v9425 = vcombine.high %v8582, %v8588
      %v9427 = vunpack.c.l.s4 1983009808
      %v9428 = vunpack.c.0.s8 %v9427
      %v9429 = vlaneseq
      %v9430 = vshrl.u32 %v9429, 7
      %v9431 = vsub.s32 %v9428, %v9430
      %v9432 = vrot.slane %v9424, %v9431
      %v9434 = vunpack.c.l.s4 1983009808
      %v9435 = vunpack.c.0.s8 %v9434
      %v9436 = vlaneseq
      %v9437 = vshrl.u32 %v9436, 7
      %v9438 = vsub.s32 %v9435, %v9437
      %v9439 = vrot.slane %v9425, %v9438
      %v9440 = vcombine.low %v8591, %v8597
      %v9441 = vcombine.high %v8591, %v8597
      %v9443 = vunpack.c.l.s4 1983009808
      %v9444 = vunpack.c.0.s8 %v9443
      %v9445 = vlaneseq
      %v9446 = vshrl.u32 %v9445, 7
      %v9447 = vsub.s32 %v9444, %v9446
      %v9448 = vrot.slane %v9440, %v9447
      %v9450 = vunpack.c.l.s4 1983009808
      %v9451 = vunpack.c.0.s8 %v9450
      %v9452 = vlaneseq
      %v9453 = vshrl.u32 %v9452, 7
      %v9454 = vsub.s32 %v9451, %v9453
      %v9455 = vrot.slane %v9441, %v9454
      %v9456 = vcombine.low %v8594, %v8600
      %v9457 = vcombine.high %v8594, %v8600
      %v9459 = vunpack.c.l.s4 1983009808
      %v9460 = vunpack.c.0.s8 %v9459
      %v9461 = vlaneseq
      %v9462 = vshrl.u32 %v9461, 7
      %v9463 = vsub.s32 %v9460, %v9462
      %v9464 = vrot.slane %v9456, %v9463
      %v9466 = vunpack.c.l.s4 1983009808
      %v9467 = vunpack.c.0.s8 %v9466
      %v9468 = vlaneseq
      %v9469 = vshrl.u32 %v9468, 7
      %v9470 = vsub.s32 %v9467, %v9469
      %v9471 = vrot.slane %v9457, %v9470
      %v9472 = vcombine.low %v9416, %v9432
      %v9473 = vcombine.high %v9416, %v9432
      %v9475 = vunpack.c.l.s4 1934713408
      %v9476 = vunpack.c.0.s8 %v9475
      %v9477 = vlaneseq
      %v9478 = vshrl.u32 %v9477, 7
      %v9479 = vsub.s32 %v9476, %v9478
      %v9480 = vrot.slane %v9472, %v9479
      %v9482 = vunpack.c.l.s4 1934713408
      %v9483 = vunpack.c.0.s8 %v9482
      %v9484 = vlaneseq
      %v9485 = vshrl.u32 %v9484, 7
      %v9486 = vsub.s32 %v9483, %v9485
      %v9487 = vrot.slane %v9473, %v9486
      %v9488 = vcombine.low %v9423, %v9439
      %v9489 = vcombine.high %v9423, %v9439
      %v9491 = vunpack.c.l.s4 1934713408
      %v9492 = vunpack.c.0.s8 %v9491
      %v9493 = vlaneseq
      %v9494 = vshrl.u32 %v9493, 7
      %v9495 = vsub.s32 %v9492, %v9494
      %v9496 = vrot.slane %v9488, %v9495
      %v9498 = vunpack.c.l.s4 1934713408
      %v9499 = vunpack.c.0.s8 %v9498
      %v9500 = vlaneseq
      %v9501 = vshrl.u32 %v9500, 7
      %v9502 = vsub.s32 %v9499, %v9501
      %v9503 = vrot.slane %v9489, %v9502
      %v9504 = vcombine.low %v9448, %v9464
      %v9505 = vcombine.high %v9448, %v9464
      %v9507 = vunpack.c.l.s4 1934713408
      %v9508 = vunpack.c.0.s8 %v9507
      %v9509 = vlaneseq
      %v9510 = vshrl.u32 %v9509, 7
      %v9511 = vsub.s32 %v9508, %v9510
      %v9512 = vrot.slane %v9504, %v9511
      %v9514 = vunpack.c.l.s4 1934713408
      %v9515 = vunpack.c.0.s8 %v9514
      %v9516 = vlaneseq
      %v9517 = vshrl.u32 %v9516, 7
      %v9518 = vsub.s32 %v9515, %v9517
      %v9519 = vrot.slane %v9505, %v9518
      %v9520 = vcombine.low %v9455, %v9471
      %v9521 = vcombine.high %v9455, %v9471
      %v9523 = vunpack.c.l.s4 1934713408
      %v9524 = vunpack.c.0.s8 %v9523
      %v9525 = vlaneseq
      %v9526 = vshrl.u32 %v9525, 7
      %v9527 = vsub.s32 %v9524, %v9526
      %v9528 = vrot.slane %v9520, %v9527
      %v9530 = vunpack.c.l.s4 1934713408
      %v9531 = vunpack.c.0.s8 %v9530
      %v9532 = vlaneseq
      %v9533 = vshrl.u32 %v9532, 7
      %v9534 = vsub.s32 %v9531, %v9533
      %v9535 = vrot.slane %v9521, %v9534
      %v9536 = vcombine.low %v9480, %v9512
      %v9537 = vcombine.high %v9480, %v9512
      %v9538 = vcombine.low %v9487, %v9519
      %v9539 = vcombine.high %v9487, %v9519
      %v9540 = vcombine.low %v9496, %v9528
      %v9541 = vcombine.high %v9496, %v9528
      %v9542 = vcombine.low %v9503, %v9535
      %v9543 = vcombine.high %v9503, %v9535
      %v9544 = vcombine.low %v8603, %v8609
      %v9545 = vcombine.high %v8603, %v8609
      %v9547 = vunpack.c.l.s4 1983009808
      %v9548 = vunpack.c.0.s8 %v9547
      %v9549 = vlaneseq
      %v9550 = vshrl.u32 %v9549, 7
      %v9551 = vsub.s32 %v9548, %v9550
      %v9552 = vrot.slane %v9544, %v9551
      %v9554 = vunpack.c.l.s4 1983009808
      %v9555 = vunpack.c.0.s8 %v9554
      %v9556 = vlaneseq
      %v9557 = vshrl.u32 %v9556, 7
      %v9558 = vsub.s32 %v9555, %v9557
      %v9559 = vrot.slane %v9545, %v9558
      %v9560 = vcombine.low %v8606, %v8612
      %v9561 = vcombine.high %v8606, %v8612
      %v9563 = vunpack.c.l.s4 1983009808
      %v9564 = vunpack.c.0.s8 %v9563
      %v9565 = vlaneseq
      %v9566 = vshrl.u32 %v9565, 7
      %v9567 = vsub.s32 %v9564, %v9566
      %v9568 = vrot.slane %v9560, %v9567
      %v9570 = vunpack.c.l.s4 1983009808
      %v9571 = vunpack.c.0.s8 %v9570
      %v9572 = vlaneseq
      %v9573 = vshrl.u32 %v9572, 7
      %v9574 = vsub.s32 %v9571, %v9573
      %v9575 = vrot.slane %v9561, %v9574
      %v9576 = vcombine.low %v8615, %v8621
      %v9577 = vcombine.high %v8615, %v8621
      %v9579 = vunpack.c.l.s4 1983009808
      %v9580 = vunpack.c.0.s8 %v9579
      %v9581 = vlaneseq
      %v9582 = vshrl.u32 %v9581, 7
      %v9583 = vsub.s32 %v9580, %v9582
      %v9584 = vrot.slane %v9576, %v9583
      %v9586 = vunpack.c.l.s4 1983009808
      %v9587 = vunpack.c.0.s8 %v9586
      %v9588 = vlaneseq
      %v9589 = vshrl.u32 %v9588, 7
      %v9590 = vsub.s32 %v9587, %v9589
      %v9591 = vrot.slane %v9577, %v9590
      %v9592 = vcombine.low %v8618, %v8624
      %v9593 = vcombine.high %v8618, %v8624
      %v9595 = vunpack.c.l.s4 1983009808
      %v9596 = vunpack.c.0.s8 %v9595
      %v9597 = vlaneseq
      %v9598 = vshrl.u32 %v9597, 7
      %v9599 = vsub.s32 %v9596, %v9598
      %v9600 = vrot.slane %v9592, %v9599
      %v9602 = vunpack.c.l.s4 1983009808
      %v9603 = vunpack.c.0.s8 %v9602
      %v9604 = vlaneseq
      %v9605 = vshrl.u32 %v9604, 7
      %v9606 = vsub.s32 %v9603, %v9605
      %v9607 = vrot.slane %v9593, %v9606
      %v9608 = vcombine.low %v9552, %v9568
      %v9609 = vcombine.high %v9552, %v9568
      %v9611 = vunpack.c.l.s4 1934713408
      %v9612 = vunpack.c.0.s8 %v9611
      %v9613 = vlaneseq
      %v9614 = vshrl.u32 %v9613, 7
      %v9615 = vsub.s32 %v9612, %v9614
      %v9616 = vrot.slane %v9608, %v9615
      %v9618 = vunpack.c.l.s4 1934713408
      %v9619 = vunpack.c.0.s8 %v9618
      %v9620 = vlaneseq
      %v9621 = vshrl.u32 %v9620, 7
      %v9622 = vsub.s32 %v9619, %v9621
      %v9623 = vrot.slane %v9609, %v9622
      %v9624 = vcombine.low %v9559, %v9575
      %v9625 = vcombine.high %v9559, %v9575
      %v9627 = vunpack.c.l.s4 1934713408
      %v9628 = vunpack.c.0.s8 %v9627
      %v9629 = vlaneseq
      %v9630 = vshrl.u32 %v9629, 7
      %v9631 = vsub.s32 %v9628, %v9630
      %v9632 = vrot.slane %v9624, %v9631
      %v9634 = vunpack.c.l.s4 1934713408
      %v9635 = vunpack.c.0.s8 %v9634
      %v9636 = vlaneseq
      %v9637 = vshrl.u32 %v9636, 7
      %v9638 = vsub.s32 %v9635, %v9637
      %v9639 = vrot.slane %v9625, %v9638
      %v9640 = vcombine.low %v9584, %v9600
      %v9641 = vcombine.high %v9584, %v9600
      %v9643 = vunpack.c.l.s4 1934713408
      %v9644 = vunpack.c.0.s8 %v9643
      %v9645 = vlaneseq
      %v9646 = vshrl.u32 %v9645, 7
      %v9647 = vsub.s32 %v9644, %v9646
      %v9648 = vrot.slane %v9640, %v9647
      %v9650 = vunpack.c.l.s4 1934713408
      %v9651 = vunpack.c.0.s8 %v9650
      %v9652 = vlaneseq
      %v9653 = vshrl.u32 %v9652, 7
      %v9654 = vsub.s32 %v9651, %v9653
      %v9655 = vrot.slane %v9641, %v9654
      %v9656 = vcombine.low %v9591, %v9607
      %v9657 = vcombine.high %v9591, %v9607
      %v9659 = vunpack.c.l.s4 1934713408
      %v9660 = vunpack.c.0.s8 %v9659
      %v9661 = vlaneseq
      %v9662 = vshrl.u32 %v9661, 7
      %v9663 = vsub.s32 %v9660, %v9662
      %v9664 = vrot.slane %v9656, %v9663
      %v9666 = vunpack.c.l.s4 1934713408
      %v9667 = vunpack.c.0.s8 %v9666
      %v9668 = vlaneseq
      %v9669 = vshrl.u32 %v9668, 7
      %v9670 = vsub.s32 %v9667, %v9669
      %v9671 = vrot.slane %v9657, %v9670
      %v9672 = vcombine.low %v9616, %v9648
      %v9673 = vcombine.high %v9616, %v9648
      %v9674 = vcombine.low %v9623, %v9655
      %v9675 = vcombine.high %v9623, %v9655
      %v9676 = vcombine.low %v9632, %v9664
      %v9677 = vcombine.high %v9632, %v9664
      %v9678 = vcombine.low %v9639, %v9671
      %v9679 = vcombine.high %v9639, %v9671
      %v9680 = vcombine.low %v8627, %v8633
      %v9681 = vcombine.high %v8627, %v8633
      %v9683 = vunpack.c.l.s4 1983009808
      %v9684 = vunpack.c.0.s8 %v9683
      %v9685 = vlaneseq
      %v9686 = vshrl.u32 %v9685, 7
      %v9687 = vsub.s32 %v9684, %v9686
      %v9688 = vrot.slane %v9680, %v9687
      %v9690 = vunpack.c.l.s4 1983009808
      %v9691 = vunpack.c.0.s8 %v9690
      %v9692 = vlaneseq
      %v9693 = vshrl.u32 %v9692, 7
      %v9694 = vsub.s32 %v9691, %v9693
      %v9695 = vrot.slane %v9681, %v9694
      %v9696 = vcombine.low %v8630, %v8636
      %v9697 = vcombine.high %v8630, %v8636
      %v9699 = vunpack.c.l.s4 1983009808
      %v9700 = vunpack.c.0.s8 %v9699
      %v9701 = vlaneseq
      %v9702 = vshrl.u32 %v9701, 7
      %v9703 = vsub.s32 %v9700, %v9702
      %v9704 = vrot.slane %v9696, %v9703
      %v9706 = vunpack.c.l.s4 1983009808
      %v9707 = vunpack.c.0.s8 %v9706
      %v9708 = vlaneseq
      %v9709 = vshrl.u32 %v9708, 7
      %v9710 = vsub.s32 %v9707, %v9709
      %v9711 = vrot.slane %v9697, %v9710
      %v9712 = vcombine.low %v8639, %v8645
      %v9713 = vcombine.high %v8639, %v8645
      %v9715 = vunpack.c.l.s4 1983009808
      %v9716 = vunpack.c.0.s8 %v9715
      %v9717 = vlaneseq
      %v9718 = vshrl.u32 %v9717, 7
      %v9719 = vsub.s32 %v9716, %v9718
      %v9720 = vrot.slane %v9712, %v9719
      %v9722 = vunpack.c.l.s4 1983009808
      %v9723 = vunpack.c.0.s8 %v9722
      %v9724 = vlaneseq
      %v9725 = vshrl.u32 %v9724, 7
      %v9726 = vsub.s32 %v9723, %v9725
      %v9727 = vrot.slane %v9713, %v9726
      %v9728 = vcombine.low %v8642, %v8648
      %v9729 = vcombine.high %v8642, %v8648
      %v9731 = vunpack.c.l.s4 1983009808
      %v9732 = vunpack.c.0.s8 %v9731
      %v9733 = vlaneseq
      %v9734 = vshrl.u32 %v9733, 7
      %v9735 = vsub.s32 %v9732, %v9734
      %v9736 = vrot.slane %v9728, %v9735
      %v9738 = vunpack.c.l.s4 1983009808
      %v9739 = vunpack.c.0.s8 %v9738
      %v9740 = vlaneseq
      %v9741 = vshrl.u32 %v9740, 7
      %v9742 = vsub.s32 %v9739, %v9741
      %v9743 = vrot.slane %v9729, %v9742
      %v9744 = vcombine.low %v9688, %v9704
      %v9745 = vcombine.high %v9688, %v9704
      %v9747 = vunpack.c.l.s4 1934713408
      %v9748 = vunpack.c.0.s8 %v9747
      %v9749 = vlaneseq
      %v9750 = vshrl.u32 %v9749, 7
      %v9751 = vsub.s32 %v9748, %v9750
      %v9752 = vrot.slane %v9744, %v9751
      %v9754 = vunpack.c.l.s4 1934713408
      %v9755 = vunpack.c.0.s8 %v9754
      %v9756 = vlaneseq
      %v9757 = vshrl.u32 %v9756, 7
      %v9758 = vsub.s32 %v9755, %v9757
      %v9759 = vrot.slane %v9745, %v9758
      %v9760 = vcombine.low %v9695, %v9711
      %v9761 = vcombine.high %v9695, %v9711
      %v9763 = vunpack.c.l.s4 1934713408
      %v9764 = vunpack.c.0.s8 %v9763
      %v9765 = vlaneseq
      %v9766 = vshrl.u32 %v9765, 7
      %v9767 = vsub.s32 %v9764, %v9766
      %v9768 = vrot.slane %v9760, %v9767
      %v9770 = vunpack.c.l.s4 1934713408
      %v9771 = vunpack.c.0.s8 %v9770
      %v9772 = vlaneseq
      %v9773 = vshrl.u32 %v9772, 7
      %v9774 = vsub.s32 %v9771, %v9773
      %v9775 = vrot.slane %v9761, %v9774
      %v9776 = vcombine.low %v9720, %v9736
      %v9777 = vcombine.high %v9720, %v9736
      %v9779 = vunpack.c.l.s4 1934713408
      %v9780 = vunpack.c.0.s8 %v9779
      %v9781 = vlaneseq
      %v9782 = vshrl.u32 %v9781, 7
      %v9783 = vsub.s32 %v9780, %v9782
      %v9784 = vrot.slane %v9776, %v9783
      %v9786 = vunpack.c.l.s4 1934713408
      %v9787 = vunpack.c.0.s8 %v9786
      %v9788 = vlaneseq
      %v9789 = vshrl.u32 %v9788, 7
      %v9790 = vsub.s32 %v9787, %v9789
      %v9791 = vrot.slane %v9777, %v9790
      %v9792 = vcombine.low %v9727, %v9743
      %v9793 = vcombine.high %v9727, %v9743
      %v9795 = vunpack.c.l.s4 1934713408
      %v9796 = vunpack.c.0.s8 %v9795
      %v9797 = vlaneseq
      %v9798 = vshrl.u32 %v9797, 7
      %v9799 = vsub.s32 %v9796, %v9798
      %v9800 = vrot.slane %v9792, %v9799
      %v9802 = vunpack.c.l.s4 1934713408
      %v9803 = vunpack.c.0.s8 %v9802
      %v9804 = vlaneseq
      %v9805 = vshrl.u32 %v9804, 7
      %v9806 = vsub.s32 %v9803, %v9805
      %v9807 = vrot.slane %v9793, %v9806
      %v9808 = vcombine.low %v9752, %v9784
      %v9809 = vcombine.high %v9752, %v9784
      %v9810 = vcombine.low %v9759, %v9791
      %v9811 = vcombine.high %v9759, %v9791
      %v9812 = vcombine.low %v9768, %v9800
      %v9813 = vcombine.high %v9768, %v9800
      %v9814 = vcombine.low %v9775, %v9807
      %v9815 = vcombine.high %v9775, %v9807
      %v9816 = vcombine.low %v8651, %v8657
      %v9817 = vcombine.high %v8651, %v8657
      %v9819 = vunpack.c.l.s4 1983009808
      %v9820 = vunpack.c.0.s8 %v9819
      %v9821 = vlaneseq
      %v9822 = vshrl.u32 %v9821, 7
      %v9823 = vsub.s32 %v9820, %v9822
      %v9824 = vrot.slane %v9816, %v9823
      %v9826 = vunpack.c.l.s4 1983009808
      %v9827 = vunpack.c.0.s8 %v9826
      %v9828 = vlaneseq
      %v9829 = vshrl.u32 %v9828, 7
      %v9830 = vsub.s32 %v9827, %v9829
      %v9831 = vrot.slane %v9817, %v9830
      %v9832 = vcombine.low %v8654, %v8660
      %v9833 = vcombine.high %v8654, %v8660
      %v9835 = vunpack.c.l.s4 1983009808
      %v9836 = vunpack.c.0.s8 %v9835
      %v9837 = vlaneseq
      %v9838 = vshrl.u32 %v9837, 7
      %v9839 = vsub.s32 %v9836, %v9838
      %v9840 = vrot.slane %v9832, %v9839
      %v9842 = vunpack.c.l.s4 1983009808
      %v9843 = vunpack.c.0.s8 %v9842
      %v9844 = vlaneseq
      %v9845 = vshrl.u32 %v9844, 7
      %v9846 = vsub.s32 %v9843, %v9845
      %v9847 = vrot.slane %v9833, %v9846
      %v9848 = vcombine.low %v8663, %v8669
      %v9849 = vcombine.high %v8663, %v8669
      %v9851 = vunpack.c.l.s4 1983009808
      %v9852 = vunpack.c.0.s8 %v9851
      %v9853 = vlaneseq
      %v9854 = vshrl.u32 %v9853, 7
      %v9855 = vsub.s32 %v9852, %v9854
      %v9856 = vrot.slane %v9848, %v9855
      %v9858 = vunpack.c.l.s4 1983009808
      %v9859 = vunpack.c.0.s8 %v9858
      %v9860 = vlaneseq
      %v9861 = vshrl.u32 %v9860, 7
      %v9862 = vsub.s32 %v9859, %v9861
      %v9863 = vrot.slane %v9849, %v9862
      %v9864 = vcombine.low %v8666, %v8672
      %v9865 = vcombine.high %v8666, %v8672
      %v9867 = vunpack.c.l.s4 1983009808
      %v9868 = vunpack.c.0.s8 %v9867
      %v9869 = vlaneseq
      %v9870 = vshrl.u32 %v9869, 7
      %v9871 = vsub.s32 %v9868, %v9870
      %v9872 = vrot.slane %v9864, %v9871
      %v9874 = vunpack.c.l.s4 1983009808
      %v9875 = vunpack.c.0.s8 %v9874
      %v9876 = vlaneseq
      %v9877 = vshrl.u32 %v9876, 7
      %v9878 = vsub.s32 %v9875, %v9877
      %v9879 = vrot.slane %v9865, %v9878
      %v9880 = vcombine.low %v9824, %v9840
      %v9881 = vcombine.high %v9824, %v9840
      %v9883 = vunpack.c.l.s4 1934713408
      %v9884 = vunpack.c.0.s8 %v9883
      %v9885 = vlaneseq
      %v9886 = vshrl.u32 %v9885, 7
      %v9887 = vsub.s32 %v9884, %v9886
      %v9888 = vrot.slane %v9880, %v9887
      %v9890 = vunpack.c.l.s4 1934713408
      %v9891 = vunpack.c.0.s8 %v9890
      %v9892 = vlaneseq
      %v9893 = vshrl.u32 %v9892, 7
      %v9894 = vsub.s32 %v9891, %v9893
      %v9895 = vrot.slane %v9881, %v9894
      %v9896 = vcombine.low %v9831, %v9847
      %v9897 = vcombine.high %v9831, %v9847
      %v9899 = vunpack.c.l.s4 1934713408
      %v9900 = vunpack.c.0.s8 %v9899
      %v9901 = vlaneseq
      %v9902 = vshrl.u32 %v9901, 7
      %v9903 = vsub.s32 %v9900, %v9902
      %v9904 = vrot.slane %v9896, %v9903
      %v9906 = vunpack.c.l.s4 1934713408
      %v9907 = vunpack.c.0.s8 %v9906
      %v9908 = vlaneseq
      %v9909 = vshrl.u32 %v9908, 7
      %v9910 = vsub.s32 %v9907, %v9909
      %v9911 = vrot.slane %v9897, %v9910
      %v9912 = vcombine.low %v9856, %v9872
      %v9913 = vcombine.high %v9856, %v9872
      %v9915 = vunpack.c.l.s4 1934713408
      %v9916 = vunpack.c.0.s8 %v9915
      %v9917 = vlaneseq
      %v9918 = vshrl.u32 %v9917, 7
      %v9919 = vsub.s32 %v9916, %v9918
      %v9920 = vrot.slane %v9912, %v9919
      %v9922 = vunpack.c.l.s4 1934713408
      %v9923 = vunpack.c.0.s8 %v9922
      %v9924 = vlaneseq
      %v9925 = vshrl.u32 %v9924, 7
      %v9926 = vsub.s32 %v9923, %v9925
      %v9927 = vrot.slane %v9913, %v9926
      %v9928 = vcombine.low %v9863, %v9879
      %v9929 = vcombine.high %v9863, %v9879
      %v9931 = vunpack.c.l.s4 1934713408
      %v9932 = vunpack.c.0.s8 %v9931
      %v9933 = vlaneseq
      %v9934 = vshrl.u32 %v9933, 7
      %v9935 = vsub.s32 %v9932, %v9934
      %v9936 = vrot.slane %v9928, %v9935
      %v9938 = vunpack.c.l.s4 1934713408
      %v9939 = vunpack.c.0.s8 %v9938
      %v9940 = vlaneseq
      %v9941 = vshrl.u32 %v9940, 7
      %v9942 = vsub.s32 %v9939, %v9941
      %v9943 = vrot.slane %v9929, %v9942
      %v9944 = vcombine.low %v9888, %v9920
      %v9945 = vcombine.high %v9888, %v9920
      %v9946 = vcombine.low %v9895, %v9927
      %v9947 = vcombine.high %v9895, %v9927
      %v9948 = vcombine.low %v9904, %v9936
      %v9949 = vcombine.high %v9904, %v9936
      %v9950 = vcombine.low %v9911, %v9943
      %v9951 = vcombine.high %v9911, %v9943
      %v9952 = vcombine.low %v8482, %v8679
      %v9953 = vcombine.high %v8482, %v8679
      %v9955 = vunpack.c.l.s4 1983009808
      %v9956 = vunpack.c.0.s8 %v9955
      %v9957 = vlaneseq
      %v9958 = vshrl.u32 %v9957, 7
      %v9959 = vsub.s32 %v9956, %v9958
      %v9960 = vrot.slane %v9952, %v9959
      %v9962 = vunpack.c.l.s4 1983009808
      %v9963 = vunpack.c.0.s8 %v9962
      %v9964 = vlaneseq
      %v9965 = vshrl.u32 %v9964, 7
      %v9966 = vsub.s32 %v9963, %v9965
      %v9967 = vrot.slane %v9953, %v9966
      %v9968 = vcombine.low %v8676, %v8682
      %v9969 = vcombine.high %v8676, %v8682
      %v9971 = vunpack.c.l.s4 1983009808
      %v9972 = vunpack.c.0.s8 %v9971
      %v9973 = vlaneseq
      %v9974 = vshrl.u32 %v9973, 7
      %v9975 = vsub.s32 %v9972, %v9974
      %v9976 = vrot.slane %v9968, %v9975
      %v9978 = vunpack.c.l.s4 1983009808
      %v9979 = vunpack.c.0.s8 %v9978
      %v9980 = vlaneseq
      %v9981 = vshrl.u32 %v9980, 7
      %v9982 = vsub.s32 %v9979, %v9981
      %v9983 = vrot.slane %v9969, %v9982
      %v9984 = vcombine.low %v8685, %v8691
      %v9985 = vcombine.high %v8685, %v8691
      %v9987 = vunpack.c.l.s4 1983009808
      %v9988 = vunpack.c.0.s8 %v9987
      %v9989 = vlaneseq
      %v9990 = vshrl.u32 %v9989, 7
      %v9991 = vsub.s32 %v9988, %v9990
      %v9992 = vrot.slane %v9984, %v9991
      %v9994 = vunpack.c.l.s4 1983009808
      %v9995 = vunpack.c.0.s8 %v9994
      %v9996 = vlaneseq
      %v9997 = vshrl.u32 %v9996, 7
      %v9998 = vsub.s32 %v9995, %v9997
      %v9999 = vrot.slane %v9985, %v9998
      %v10000 = vcombine.low %v8688, %v8694
      %v10001 = vcombine.high %v8688, %v8694
      %v10003 = vunpack.c.l.s4 1983009808
      %v10004 = vunpack.c.0.s8 %v10003
      %v10005 = vlaneseq
      %v10006 = vshrl.u32 %v10005, 7
      %v10007 = vsub.s32 %v10004, %v10006
      %v10008 = vrot.slane %v10000, %v10007
      %v10010 = vunpack.c.l.s4 1983009808
      %v10011 = vunpack.c.0.s8 %v10010
      %v10012 = vlaneseq
      %v10013 = vshrl.u32 %v10012, 7
      %v10014 = vsub.s32 %v10011, %v10013
      %v10015 = vrot.slane %v10001, %v10014
      %v10016 = vcombine.low %v9960, %v9976
      %v10017 = vcombine.high %v9960, %v9976
      %v10019 = vunpack.c.l.s4 1934713408
      %v10020 = vunpack.c.0.s8 %v10019
      %v10021 = vlaneseq
      %v10022 = vshrl.u32 %v10021, 7
      %v10023 = vsub.s32 %v10020, %v10022
      %v10024 = vrot.slane %v10016, %v10023
      %v10026 = vunpack.c.l.s4 1934713408
      %v10027 = vunpack.c.0.s8 %v10026
      %v10028 = vlaneseq
      %v10029 = vshrl.u32 %v10028, 7
      %v10030 = vsub.s32 %v10027, %v10029
      %v10031 = vrot.slane %v10017, %v10030
      %v10032 = vcombine.low %v9967, %v9983
      %v10033 = vcombine.high %v9967, %v9983
      %v10035 = vunpack.c.l.s4 1934713408
      %v10036 = vunpack.c.0.s8 %v10035
      %v10037 = vlaneseq
      %v10038 = vshrl.u32 %v10037, 7
      %v10039 = vsub.s32 %v10036, %v10038
      %v10040 = vrot.slane %v10032, %v10039
      %v10042 = vunpack.c.l.s4 1934713408
      %v10043 = vunpack.c.0.s8 %v10042
      %v10044 = vlaneseq
      %v10045 = vshrl.u32 %v10044, 7
      %v10046 = vsub.s32 %v10043, %v10045
      %v10047 = vrot.slane %v10033, %v10046
      %v10048 = vcombine.low %v9992, %v10008
      %v10049 = vcombine.high %v9992, %v10008
      %v10051 = vunpack.c.l.s4 1934713408
      %v10052 = vunpack.c.0.s8 %v10051
      %v10053 = vlaneseq
      %v10054 = vshrl.u32 %v10053, 7
      %v10055 = vsub.s32 %v10052, %v10054
      %v10056 = vrot.slane %v10048, %v10055
      %v10058 = vunpack.c.l.s4 1934713408
      %v10059 = vunpack.c.0.s8 %v10058
      %v10060 = vlaneseq
      %v10061 = vshrl.u32 %v10060, 7
      %v10062 = vsub.s32 %v10059, %v10061
      %v10063 = vrot.slane %v10049, %v10062
      %v10064 = vcombine.low %v9999, %v10015
      %v10065 = vcombine.high %v9999, %v10015
      %v10067 = vunpack.c.l.s4 1934713408
      %v10068 = vunpack.c.0.s8 %v10067
      %v10069 = vlaneseq
      %v10070 = vshrl.u32 %v10069, 7
      %v10071 = vsub.s32 %v10068, %v10070
      %v10072 = vrot.slane %v10064, %v10071
      %v10074 = vunpack.c.l.s4 1934713408
      %v10075 = vunpack.c.0.s8 %v10074
      %v10076 = vlaneseq
      %v10077 = vshrl.u32 %v10076, 7
      %v10078 = vsub.s32 %v10075, %v10077
      %v10079 = vrot.slane %v10065, %v10078
      %v10080 = vcombine.low %v10024, %v10056
      %v10081 = vcombine.high %v10024, %v10056
      %v10082 = vcombine.low %v10031, %v10063
      %v10083 = vcombine.high %v10031, %v10063
      %v10084 = vcombine.low %v10040, %v10072
      %v10085 = vcombine.high %v10040, %v10072
      %v10086 = vcombine.low %v10047, %v10079
      %v10087 = vcombine.high %v10047, %v10079
      %v10088 = vcombine.low %v8697, %v8703
      %v10089 = vcombine.high %v8697, %v8703
      %v10091 = vunpack.c.l.s4 1983009808
      %v10092 = vunpack.c.0.s8 %v10091
      %v10093 = vlaneseq
      %v10094 = vshrl.u32 %v10093, 7
      %v10095 = vsub.s32 %v10092, %v10094
      %v10096 = vrot.slane %v10088, %v10095
      %v10098 = vunpack.c.l.s4 1983009808
      %v10099 = vunpack.c.0.s8 %v10098
      %v10100 = vlaneseq
      %v10101 = vshrl.u32 %v10100, 7
      %v10102 = vsub.s32 %v10099, %v10101
      %v10103 = vrot.slane %v10089, %v10102
      %v10104 = vcombine.low %v8700, %v8706
      %v10105 = vcombine.high %v8700, %v8706
      %v10107 = vunpack.c.l.s4 1983009808
      %v10108 = vunpack.c.0.s8 %v10107
      %v10109 = vlaneseq
      %v10110 = vshrl.u32 %v10109, 7
      %v10111 = vsub.s32 %v10108, %v10110
      %v10112 = vrot.slane %v10104, %v10111
      %v10114 = vunpack.c.l.s4 1983009808
      %v10115 = vunpack.c.0.s8 %v10114
      %v10116 = vlaneseq
      %v10117 = vshrl.u32 %v10116, 7
      %v10118 = vsub.s32 %v10115, %v10117
      %v10119 = vrot.slane %v10105, %v10118
      %v10120 = vcombine.low %v8709, %v8715
      %v10121 = vcombine.high %v8709, %v8715
      %v10123 = vunpack.c.l.s4 1983009808
      %v10124 = vunpack.c.0.s8 %v10123
      %v10125 = vlaneseq
      %v10126 = vshrl.u32 %v10125, 7
      %v10127 = vsub.s32 %v10124, %v10126
      %v10128 = vrot.slane %v10120, %v10127
      %v10130 = vunpack.c.l.s4 1983009808
      %v10131 = vunpack.c.0.s8 %v10130
      %v10132 = vlaneseq
      %v10133 = vshrl.u32 %v10132, 7
      %v10134 = vsub.s32 %v10131, %v10133
      %v10135 = vrot.slane %v10121, %v10134
      %v10136 = vcombine.low %v8712, %v8718
      %v10137 = vcombine.high %v8712, %v8718
      %v10139 = vunpack.c.l.s4 1983009808
      %v10140 = vunpack.c.0.s8 %v10139
      %v10141 = vlaneseq
      %v10142 = vshrl.u32 %v10141, 7
      %v10143 = vsub.s32 %v10140, %v10142
      %v10144 = vrot.slane %v10136, %v10143
      %v10146 = vunpack.c.l.s4 1983009808
      %v10147 = vunpack.c.0.s8 %v10146
      %v10148 = vlaneseq
      %v10149 = vshrl.u32 %v10148, 7
      %v10150 = vsub.s32 %v10147, %v10149
      %v10151 = vrot.slane %v10137, %v10150
      %v10152 = vcombine.low %v10096, %v10112
      %v10153 = vcombine.high %v10096, %v10112
      %v10155 = vunpack.c.l.s4 1934713408
      %v10156 = vunpack.c.0.s8 %v10155
      %v10157 = vlaneseq
      %v10158 = vshrl.u32 %v10157, 7
      %v10159 = vsub.s32 %v10156, %v10158
      %v10160 = vrot.slane %v10152, %v10159
      %v10162 = vunpack.c.l.s4 1934713408
      %v10163 = vunpack.c.0.s8 %v10162
      %v10164 = vlaneseq
      %v10165 = vshrl.u32 %v10164, 7
      %v10166 = vsub.s32 %v10163, %v10165
      %v10167 = vrot.slane %v10153, %v10166
      %v10168 = vcombine.low %v10103, %v10119
      %v10169 = vcombine.high %v10103, %v10119
      %v10171 = vunpack.c.l.s4 1934713408
      %v10172 = vunpack.c.0.s8 %v10171
      %v10173 = vlaneseq
      %v10174 = vshrl.u32 %v10173, 7
      %v10175 = vsub.s32 %v10172, %v10174
      %v10176 = vrot.slane %v10168, %v10175
      %v10178 = vunpack.c.l.s4 1934713408
      %v10179 = vunpack.c.0.s8 %v10178
      %v10180 = vlaneseq
      %v10181 = vshrl.u32 %v10180, 7
      %v10182 = vsub.s32 %v10179, %v10181
      %v10183 = vrot.slane %v10169, %v10182
      %v10184 = vcombine.low %v10128, %v10144
      %v10185 = vcombine.high %v10128, %v10144
      %v10187 = vunpack.c.l.s4 1934713408
      %v10188 = vunpack.c.0.s8 %v10187
      %v10189 = vlaneseq
      %v10190 = vshrl.u32 %v10189, 7
      %v10191 = vsub.s32 %v10188, %v10190
      %v10192 = vrot.slane %v10184, %v10191
      %v10194 = vunpack.c.l.s4 1934713408
      %v10195 = vunpack.c.0.s8 %v10194
      %v10196 = vlaneseq
      %v10197 = vshrl.u32 %v10196, 7
      %v10198 = vsub.s32 %v10195, %v10197
      %v10199 = vrot.slane %v10185, %v10198
      %v10200 = vcombine.low %v10135, %v10151
      %v10201 = vcombine.high %v10135, %v10151
      %v10203 = vunpack.c.l.s4 1934713408
      %v10204 = vunpack.c.0.s8 %v10203
      %v10205 = vlaneseq
      %v10206 = vshrl.u32 %v10205, 7
      %v10207 = vsub.s32 %v10204, %v10206
      %v10208 = vrot.slane %v10200, %v10207
      %v10210 = vunpack.c.l.s4 1934713408
      %v10211 = vunpack.c.0.s8 %v10210
      %v10212 = vlaneseq
      %v10213 = vshrl.u32 %v10212, 7
      %v10214 = vsub.s32 %v10211, %v10213
      %v10215 = vrot.slane %v10201, %v10214
      %v10216 = vcombine.low %v10160, %v10192
      %v10217 = vcombine.high %v10160, %v10192
      %v10218 = vcombine.low %v10167, %v10199
      %v10219 = vcombine.high %v10167, %v10199
      %v10220 = vcombine.low %v10176, %v10208
      %v10221 = vcombine.high %v10176, %v10208
      %v10222 = vcombine.low %v10183, %v10215
      %v10223 = vcombine.high %v10183, %v10215
      %v10224 = vcombine.low %v8721, %v8727
      %v10225 = vcombine.high %v8721, %v8727
      %v10227 = vunpack.c.l.s4 1983009808
      %v10228 = vunpack.c.0.s8 %v10227
      %v10229 = vlaneseq
      %v10230 = vshrl.u32 %v10229, 7
      %v10231 = vsub.s32 %v10228, %v10230
      %v10232 = vrot.slane %v10224, %v10231
      %v10234 = vunpack.c.l.s4 1983009808
      %v10235 = vunpack.c.0.s8 %v10234
      %v10236 = vlaneseq
      %v10237 = vshrl.u32 %v10236, 7
      %v10238 = vsub.s32 %v10235, %v10237
      %v10239 = vrot.slane %v10225, %v10238
      %v10240 = vcombine.low %v8724, %v8730
      %v10241 = vcombine.high %v8724, %v8730
      %v10243 = vunpack.c.l.s4 1983009808
      %v10244 = vunpack.c.0.s8 %v10243
      %v10245 = vlaneseq
      %v10246 = vshrl.u32 %v10245, 7
      %v10247 = vsub.s32 %v10244, %v10246
      %v10248 = vrot.slane %v10240, %v10247
      %v10250 = vunpack.c.l.s4 1983009808
      %v10251 = vunpack.c.0.s8 %v10250
      %v10252 = vlaneseq
      %v10253 = vshrl.u32 %v10252, 7
      %v10254 = vsub.s32 %v10251, %v10253
      %v10255 = vrot.slane %v10241, %v10254
      %v10256 = vcombine.low %v8733, %v8739
      %v10257 = vcombine.high %v8733, %v8739
      %v10259 = vunpack.c.l.s4 1983009808
      %v10260 = vunpack.c.0.s8 %v10259
      %v10261 = vlaneseq
      %v10262 = vshrl.u32 %v10261, 7
      %v10263 = vsub.s32 %v10260, %v10262
      %v10264 = vrot.slane %v10256, %v10263
      %v10266 = vunpack.c.l.s4 1983009808
      %v10267 = vunpack.c.0.s8 %v10266
      %v10268 = vlaneseq
      %v10269 = vshrl.u32 %v10268, 7
      %v10270 = vsub.s32 %v10267, %v10269
      %v10271 = vrot.slane %v10257, %v10270
      %v10272 = vcombine.low %v8736, %v8742
      %v10273 = vcombine.high %v8736, %v8742
      %v10275 = vunpack.c.l.s4 1983009808
      %v10276 = vunpack.c.0.s8 %v10275
      %v10277 = vlaneseq
      %v10278 = vshrl.u32 %v10277, 7
      %v10279 = vsub.s32 %v10276, %v10278
      %v10280 = vrot.slane %v10272, %v10279
      %v10282 = vunpack.c.l.s4 1983009808
      %v10283 = vunpack.c.0.s8 %v10282
      %v10284 = vlaneseq
      %v10285 = vshrl.u32 %v10284, 7
      %v10286 = vsub.s32 %v10283, %v10285
      %v10287 = vrot.slane %v10273, %v10286
      %v10288 = vcombine.low %v10232, %v10248
      %v10289 = vcombine.high %v10232, %v10248
      %v10291 = vunpack.c.l.s4 1934713408
      %v10292 = vunpack.c.0.s8 %v10291
      %v10293 = vlaneseq
      %v10294 = vshrl.u32 %v10293, 7
      %v10295 = vsub.s32 %v10292, %v10294
      %v10296 = vrot.slane %v10288, %v10295
      %v10298 = vunpack.c.l.s4 1934713408
      %v10299 = vunpack.c.0.s8 %v10298
      %v10300 = vlaneseq
      %v10301 = vshrl.u32 %v10300, 7
      %v10302 = vsub.s32 %v10299, %v10301
      %v10303 = vrot.slane %v10289, %v10302
      %v10304 = vcombine.low %v10239, %v10255
      %v10305 = vcombine.high %v10239, %v10255
      %v10307 = vunpack.c.l.s4 1934713408
      %v10308 = vunpack.c.0.s8 %v10307
      %v10309 = vlaneseq
      %v10310 = vshrl.u32 %v10309, 7
      %v10311 = vsub.s32 %v10308, %v10310
      %v10312 = vrot.slane %v10304, %v10311
      %v10314 = vunpack.c.l.s4 1934713408
      %v10315 = vunpack.c.0.s8 %v10314
      %v10316 = vlaneseq
      %v10317 = vshrl.u32 %v10316, 7
      %v10318 = vsub.s32 %v10315, %v10317
      %v10319 = vrot.slane %v10305, %v10318
      %v10320 = vcombine.low %v10264, %v10280
      %v10321 = vcombine.high %v10264, %v10280
      %v10323 = vunpack.c.l.s4 1934713408
      %v10324 = vunpack.c.0.s8 %v10323
      %v10325 = vlaneseq
      %v10326 = vshrl.u32 %v10325, 7
      %v10327 = vsub.s32 %v10324, %v10326
      %v10328 = vrot.slane %v10320, %v10327
      %v10330 = vunpack.c.l.s4 1934713408
      %v10331 = vunpack.c.0.s8 %v10330
      %v10332 = vlaneseq
      %v10333 = vshrl.u32 %v10332, 7
      %v10334 = vsub.s32 %v10331, %v10333
      %v10335 = vrot.slane %v10321, %v10334
      %v10336 = vcombine.low %v10271, %v10287
      %v10337 = vcombine.high %v10271, %v10287
      %v10339 = vunpack.c.l.s4 1934713408
      %v10340 = vunpack.c.0.s8 %v10339
      %v10341 = vlaneseq
      %v10342 = vshrl.u32 %v10341, 7
      %v10343 = vsub.s32 %v10340, %v10342
      %v10344 = vrot.slane %v10336, %v10343
      %v10346 = vunpack.c.l.s4 1934713408
      %v10347 = vunpack.c.0.s8 %v10346
      %v10348 = vlaneseq
      %v10349 = vshrl.u32 %v10348, 7
      %v10350 = vsub.s32 %v10347, %v10349
      %v10351 = vrot.slane %v10337, %v10350
      %v10352 = vcombine.low %v10296, %v10328
      %v10353 = vcombine.high %v10296, %v10328
      %v10354 = vcombine.low %v10303, %v10335
      %v10355 = vcombine.high %v10303, %v10335
      %v10356 = vcombine.low %v10312, %v10344
      %v10357 = vcombine.high %v10312, %v10344
      %v10358 = vcombine.low %v10319, %v10351
      %v10359 = vcombine.high %v10319, %v10351
      %v10360 = vcombine.low %v8745, %v8751
      %v10361 = vcombine.high %v8745, %v8751
      %v10363 = vunpack.c.l.s4 1983009808
      %v10364 = vunpack.c.0.s8 %v10363
      %v10365 = vlaneseq
      %v10366 = vshrl.u32 %v10365, 7
      %v10367 = vsub.s32 %v10364, %v10366
      %v10368 = vrot.slane %v10360, %v10367
      %v10370 = vunpack.c.l.s4 1983009808
      %v10371 = vunpack.c.0.s8 %v10370
      %v10372 = vlaneseq
      %v10373 = vshrl.u32 %v10372, 7
      %v10374 = vsub.s32 %v10371, %v10373
      %v10375 = vrot.slane %v10361, %v10374
      %v10376 = vcombine.low %v8748, %v8754
      %v10377 = vcombine.high %v8748, %v8754
      %v10379 = vunpack.c.l.s4 1983009808
      %v10380 = vunpack.c.0.s8 %v10379
      %v10381 = vlaneseq
      %v10382 = vshrl.u32 %v10381, 7
      %v10383 = vsub.s32 %v10380, %v10382
      %v10384 = vrot.slane %v10376, %v10383
      %v10386 = vunpack.c.l.s4 1983009808
      %v10387 = vunpack.c.0.s8 %v10386
      %v10388 = vlaneseq
      %v10389 = vshrl.u32 %v10388, 7
      %v10390 = vsub.s32 %v10387, %v10389
      %v10391 = vrot.slane %v10377, %v10390
      %v10392 = vcombine.low %v8757, %v8763
      %v10393 = vcombine.high %v8757, %v8763
      %v10395 = vunpack.c.l.s4 1983009808
      %v10396 = vunpack.c.0.s8 %v10395
      %v10397 = vlaneseq
      %v10398 = vshrl.u32 %v10397, 7
      %v10399 = vsub.s32 %v10396, %v10398
      %v10400 = vrot.slane %v10392, %v10399
      %v10402 = vunpack.c.l.s4 1983009808
      %v10403 = vunpack.c.0.s8 %v10402
      %v10404 = vlaneseq
      %v10405 = vshrl.u32 %v10404, 7
      %v10406 = vsub.s32 %v10403, %v10405
      %v10407 = vrot.slane %v10393, %v10406
      %v10408 = vcombine.low %v8760, %v8766
      %v10409 = vcombine.high %v8760, %v8766
      %v10411 = vunpack.c.l.s4 1983009808
      %v10412 = vunpack.c.0.s8 %v10411
      %v10413 = vlaneseq
      %v10414 = vshrl.u32 %v10413, 7
      %v10415 = vsub.s32 %v10412, %v10414
      %v10416 = vrot.slane %v10408, %v10415
      %v10418 = vunpack.c.l.s4 1983009808
      %v10419 = vunpack.c.0.s8 %v10418
      %v10420 = vlaneseq
      %v10421 = vshrl.u32 %v10420, 7
      %v10422 = vsub.s32 %v10419, %v10421
      %v10423 = vrot.slane %v10409, %v10422
      %v10424 = vcombine.low %v10368, %v10384
      %v10425 = vcombine.high %v10368, %v10384
      %v10427 = vunpack.c.l.s4 1934713408
      %v10428 = vunpack.c.0.s8 %v10427
      %v10429 = vlaneseq
      %v10430 = vshrl.u32 %v10429, 7
      %v10431 = vsub.s32 %v10428, %v10430
      %v10432 = vrot.slane %v10424, %v10431
      %v10434 = vunpack.c.l.s4 1934713408
      %v10435 = vunpack.c.0.s8 %v10434
      %v10436 = vlaneseq
      %v10437 = vshrl.u32 %v10436, 7
      %v10438 = vsub.s32 %v10435, %v10437
      %v10439 = vrot.slane %v10425, %v10438
      %v10440 = vcombine.low %v10375, %v10391
      %v10441 = vcombine.high %v10375, %v10391
      %v10443 = vunpack.c.l.s4 1934713408
      %v10444 = vunpack.c.0.s8 %v10443
      %v10445 = vlaneseq
      %v10446 = vshrl.u32 %v10445, 7
      %v10447 = vsub.s32 %v10444, %v10446
      %v10448 = vrot.slane %v10440, %v10447
      %v10450 = vunpack.c.l.s4 1934713408
      %v10451 = vunpack.c.0.s8 %v10450
      %v10452 = vlaneseq
      %v10453 = vshrl.u32 %v10452, 7
      %v10454 = vsub.s32 %v10451, %v10453
      %v10455 = vrot.slane %v10441, %v10454
      %v10456 = vcombine.low %v10400, %v10416
      %v10457 = vcombine.high %v10400, %v10416
      %v10459 = vunpack.c.l.s4 1934713408
      %v10460 = vunpack.c.0.s8 %v10459
      %v10461 = vlaneseq
      %v10462 = vshrl.u32 %v10461, 7
      %v10463 = vsub.s32 %v10460, %v10462
      %v10464 = vrot.slane %v10456, %v10463
      %v10466 = vunpack.c.l.s4 1934713408
      %v10467 = vunpack.c.0.s8 %v10466
      %v10468 = vlaneseq
      %v10469 = vshrl.u32 %v10468, 7
      %v10470 = vsub.s32 %v10467, %v10469
      %v10471 = vrot.slane %v10457, %v10470
      %v10472 = vcombine.low %v10407, %v10423
      %v10473 = vcombine.high %v10407, %v10423
      %v10475 = vunpack.c.l.s4 1934713408
      %v10476 = vunpack.c.0.s8 %v10475
      %v10477 = vlaneseq
      %v10478 = vshrl.u32 %v10477, 7
      %v10479 = vsub.s32 %v10476, %v10478
      %v10480 = vrot.slane %v10472, %v10479
      %v10482 = vunpack.c.l.s4 1934713408
      %v10483 = vunpack.c.0.s8 %v10482
      %v10484 = vlaneseq
      %v10485 = vshrl.u32 %v10484, 7
      %v10486 = vsub.s32 %v10483, %v10485
      %v10487 = vrot.slane %v10473, %v10486
      %v10488 = vcombine.low %v10432, %v10464
      %v10489 = vcombine.high %v10432, %v10464
      %v10490 = vcombine.low %v10439, %v10471
      %v10491 = vcombine.high %v10439, %v10471
      %v10492 = vcombine.low %v10448, %v10480
      %v10493 = vcombine.high %v10448, %v10480
      %v10494 = vcombine.low %v10455, %v10487
      %v10495 = vcombine.high %v10455, %v10487
      %v10496 = vcombine.low %v8769, %v8775
      %v10497 = vcombine.high %v8769, %v8775
      %v10499 = vunpack.c.l.s4 1983009808
      %v10500 = vunpack.c.0.s8 %v10499
      %v10501 = vlaneseq
      %v10502 = vshrl.u32 %v10501, 7
      %v10503 = vsub.s32 %v10500, %v10502
      %v10504 = vrot.slane %v10496, %v10503
      %v10506 = vunpack.c.l.s4 1983009808
      %v10507 = vunpack.c.0.s8 %v10506
      %v10508 = vlaneseq
      %v10509 = vshrl.u32 %v10508, 7
      %v10510 = vsub.s32 %v10507, %v10509
      %v10511 = vrot.slane %v10497, %v10510
      %v10512 = vcombine.low %v8772, %v8778
      %v10513 = vcombine.high %v8772, %v8778
      %v10515 = vunpack.c.l.s4 1983009808
      %v10516 = vunpack.c.0.s8 %v10515
      %v10517 = vlaneseq
      %v10518 = vshrl.u32 %v10517, 7
      %v10519 = vsub.s32 %v10516, %v10518
      %v10520 = vrot.slane %v10512, %v10519
      %v10522 = vunpack.c.l.s4 1983009808
      %v10523 = vunpack.c.0.s8 %v10522
      %v10524 = vlaneseq
      %v10525 = vshrl.u32 %v10524, 7
      %v10526 = vsub.s32 %v10523, %v10525
      %v10527 = vrot.slane %v10513, %v10526
      %v10528 = vcombine.low %v8781, %v8787
      %v10529 = vcombine.high %v8781, %v8787
      %v10531 = vunpack.c.l.s4 1983009808
      %v10532 = vunpack.c.0.s8 %v10531
      %v10533 = vlaneseq
      %v10534 = vshrl.u32 %v10533, 7
      %v10535 = vsub.s32 %v10532, %v10534
      %v10536 = vrot.slane %v10528, %v10535
      %v10538 = vunpack.c.l.s4 1983009808
      %v10539 = vunpack.c.0.s8 %v10538
      %v10540 = vlaneseq
      %v10541 = vshrl.u32 %v10540, 7
      %v10542 = vsub.s32 %v10539, %v10541
      %v10543 = vrot.slane %v10529, %v10542
      %v10544 = vcombine.low %v8784, %v8790
      %v10545 = vcombine.high %v8784, %v8790
      %v10547 = vunpack.c.l.s4 1983009808
      %v10548 = vunpack.c.0.s8 %v10547
      %v10549 = vlaneseq
      %v10550 = vshrl.u32 %v10549, 7
      %v10551 = vsub.s32 %v10548, %v10550
      %v10552 = vrot.slane %v10544, %v10551
      %v10554 = vunpack.c.l.s4 1983009808
      %v10555 = vunpack.c.0.s8 %v10554
      %v10556 = vlaneseq
      %v10557 = vshrl.u32 %v10556, 7
      %v10558 = vsub.s32 %v10555, %v10557
      %v10559 = vrot.slane %v10545, %v10558
      %v10560 = vcombine.low %v10504, %v10520
      %v10561 = vcombine.high %v10504, %v10520
      %v10563 = vunpack.c.l.s4 1934713408
      %v10564 = vunpack.c.0.s8 %v10563
      %v10565 = vlaneseq
      %v10566 = vshrl.u32 %v10565, 7
      %v10567 = vsub.s32 %v10564, %v10566
      %v10568 = vrot.slane %v10560, %v10567
      %v10570 = vunpack.c.l.s4 1934713408
      %v10571 = vunpack.c.0.s8 %v10570
      %v10572 = vlaneseq
      %v10573 = vshrl.u32 %v10572, 7
      %v10574 = vsub.s32 %v10571, %v10573
      %v10575 = vrot.slane %v10561, %v10574
      %v10576 = vcombine.low %v10511, %v10527
      %v10577 = vcombine.high %v10511, %v10527
      %v10579 = vunpack.c.l.s4 1934713408
      %v10580 = vunpack.c.0.s8 %v10579
      %v10581 = vlaneseq
      %v10582 = vshrl.u32 %v10581, 7
      %v10583 = vsub.s32 %v10580, %v10582
      %v10584 = vrot.slane %v10576, %v10583
      %v10586 = vunpack.c.l.s4 1934713408
      %v10587 = vunpack.c.0.s8 %v10586
      %v10588 = vlaneseq
      %v10589 = vshrl.u32 %v10588, 7
      %v10590 = vsub.s32 %v10587, %v10589
      %v10591 = vrot.slane %v10577, %v10590
      %v10592 = vcombine.low %v10536, %v10552
      %v10593 = vcombine.high %v10536, %v10552
      %v10595 = vunpack.c.l.s4 1934713408
      %v10596 = vunpack.c.0.s8 %v10595
      %v10597 = vlaneseq
      %v10598 = vshrl.u32 %v10597, 7
      %v10599 = vsub.s32 %v10596, %v10598
      %v10600 = vrot.slane %v10592, %v10599
      %v10602 = vunpack.c.l.s4 1934713408
      %v10603 = vunpack.c.0.s8 %v10602
      %v10604 = vlaneseq
      %v10605 = vshrl.u32 %v10604, 7
      %v10606 = vsub.s32 %v10603, %v10605
      %v10607 = vrot.slane %v10593, %v10606
      %v10608 = vcombine.low %v10543, %v10559
      %v10609 = vcombine.high %v10543, %v10559
      %v10611 = vunpack.c.l.s4 1934713408
      %v10612 = vunpack.c.0.s8 %v10611
      %v10613 = vlaneseq
      %v10614 = vshrl.u32 %v10613, 7
      %v10615 = vsub.s32 %v10612, %v10614
      %v10616 = vrot.slane %v10608, %v10615
      %v10618 = vunpack.c.l.s4 1934713408
      %v10619 = vunpack.c.0.s8 %v10618
      %v10620 = vlaneseq
      %v10621 = vshrl.u32 %v10620, 7
      %v10622 = vsub.s32 %v10619, %v10621
      %v10623 = vrot.slane %v10609, %v10622
      %v10624 = vcombine.low %v10568, %v10600
      %v10625 = vcombine.high %v10568, %v10600
      %v10626 = vcombine.low %v10575, %v10607
      %v10627 = vcombine.high %v10575, %v10607
      %v10628 = vcombine.low %v10584, %v10616
      %v10629 = vcombine.high %v10584, %v10616
      %v10630 = vcombine.low %v10591, %v10623
      %v10631 = vcombine.high %v10591, %v10623
      %v10632 = vcombine.low %v8793, %v8799
      %v10633 = vcombine.high %v8793, %v8799
      %v10635 = vunpack.c.l.s4 1983009808
      %v10636 = vunpack.c.0.s8 %v10635
      %v10637 = vlaneseq
      %v10638 = vshrl.u32 %v10637, 7
      %v10639 = vsub.s32 %v10636, %v10638
      %v10640 = vrot.slane %v10632, %v10639
      %v10642 = vunpack.c.l.s4 1983009808
      %v10643 = vunpack.c.0.s8 %v10642
      %v10644 = vlaneseq
      %v10645 = vshrl.u32 %v10644, 7
      %v10646 = vsub.s32 %v10643, %v10645
      %v10647 = vrot.slane %v10633, %v10646
      %v10648 = vcombine.low %v8796, %v8802
      %v10649 = vcombine.high %v8796, %v8802
      %v10651 = vunpack.c.l.s4 1983009808
      %v10652 = vunpack.c.0.s8 %v10651
      %v10653 = vlaneseq
      %v10654 = vshrl.u32 %v10653, 7
      %v10655 = vsub.s32 %v10652, %v10654
      %v10656 = vrot.slane %v10648, %v10655
      %v10658 = vunpack.c.l.s4 1983009808
      %v10659 = vunpack.c.0.s8 %v10658
      %v10660 = vlaneseq
      %v10661 = vshrl.u32 %v10660, 7
      %v10662 = vsub.s32 %v10659, %v10661
      %v10663 = vrot.slane %v10649, %v10662
      %v10664 = vcombine.low %v8805, %v8811
      %v10665 = vcombine.high %v8805, %v8811
      %v10667 = vunpack.c.l.s4 1983009808
      %v10668 = vunpack.c.0.s8 %v10667
      %v10669 = vlaneseq
      %v10670 = vshrl.u32 %v10669, 7
      %v10671 = vsub.s32 %v10668, %v10670
      %v10672 = vrot.slane %v10664, %v10671
      %v10674 = vunpack.c.l.s4 1983009808
      %v10675 = vunpack.c.0.s8 %v10674
      %v10676 = vlaneseq
      %v10677 = vshrl.u32 %v10676, 7
      %v10678 = vsub.s32 %v10675, %v10677
      %v10679 = vrot.slane %v10665, %v10678
      %v10680 = vcombine.low %v8808, %v8814
      %v10681 = vcombine.high %v8808, %v8814
      %v10683 = vunpack.c.l.s4 1983009808
      %v10684 = vunpack.c.0.s8 %v10683
      %v10685 = vlaneseq
      %v10686 = vshrl.u32 %v10685, 7
      %v10687 = vsub.s32 %v10684, %v10686
      %v10688 = vrot.slane %v10680, %v10687
      %v10690 = vunpack.c.l.s4 1983009808
      %v10691 = vunpack.c.0.s8 %v10690
      %v10692 = vlaneseq
      %v10693 = vshrl.u32 %v10692, 7
      %v10694 = vsub.s32 %v10691, %v10693
      %v10695 = vrot.slane %v10681, %v10694
      %v10696 = vcombine.low %v10640, %v10656
      %v10697 = vcombine.high %v10640, %v10656
      %v10699 = vunpack.c.l.s4 1934713408
      %v10700 = vunpack.c.0.s8 %v10699
      %v10701 = vlaneseq
      %v10702 = vshrl.u32 %v10701, 7
      %v10703 = vsub.s32 %v10700, %v10702
      %v10704 = vrot.slane %v10696, %v10703
      %v10706 = vunpack.c.l.s4 1934713408
      %v10707 = vunpack.c.0.s8 %v10706
      %v10708 = vlaneseq
      %v10709 = vshrl.u32 %v10708, 7
      %v10710 = vsub.s32 %v10707, %v10709
      %v10711 = vrot.slane %v10697, %v10710
      %v10712 = vcombine.low %v10647, %v10663
      %v10713 = vcombine.high %v10647, %v10663
      %v10715 = vunpack.c.l.s4 1934713408
      %v10716 = vunpack.c.0.s8 %v10715
      %v10717 = vlaneseq
      %v10718 = vshrl.u32 %v10717, 7
      %v10719 = vsub.s32 %v10716, %v10718
      %v10720 = vrot.slane %v10712, %v10719
      %v10722 = vunpack.c.l.s4 1934713408
      %v10723 = vunpack.c.0.s8 %v10722
      %v10724 = vlaneseq
      %v10725 = vshrl.u32 %v10724, 7
      %v10726 = vsub.s32 %v10723, %v10725
      %v10727 = vrot.slane %v10713, %v10726
      %v10728 = vcombine.low %v10672, %v10688
      %v10729 = vcombine.high %v10672, %v10688
      %v10731 = vunpack.c.l.s4 1934713408
      %v10732 = vunpack.c.0.s8 %v10731
      %v10733 = vlaneseq
      %v10734 = vshrl.u32 %v10733, 7
      %v10735 = vsub.s32 %v10732, %v10734
      %v10736 = vrot.slane %v10728, %v10735
      %v10738 = vunpack.c.l.s4 1934713408
      %v10739 = vunpack.c.0.s8 %v10738
      %v10740 = vlaneseq
      %v10741 = vshrl.u32 %v10740, 7
      %v10742 = vsub.s32 %v10739, %v10741
      %v10743 = vrot.slane %v10729, %v10742
      %v10744 = vcombine.low %v10679, %v10695
      %v10745 = vcombine.high %v10679, %v10695
      %v10747 = vunpack.c.l.s4 1934713408
      %v10748 = vunpack.c.0.s8 %v10747
      %v10749 = vlaneseq
      %v10750 = vshrl.u32 %v10749, 7
      %v10751 = vsub.s32 %v10748, %v10750
      %v10752 = vrot.slane %v10744, %v10751
      %v10754 = vunpack.c.l.s4 1934713408
      %v10755 = vunpack.c.0.s8 %v10754
      %v10756 = vlaneseq
      %v10757 = vshrl.u32 %v10756, 7
      %v10758 = vsub.s32 %v10755, %v10757
      %v10759 = vrot.slane %v10745, %v10758
      %v10760 = vcombine.low %v10704, %v10736
      %v10761 = vcombine.high %v10704, %v10736
      %v10762 = vcombine.low %v10711, %v10743
      %v10763 = vcombine.high %v10711, %v10743
      %v10764 = vcombine.low %v10720, %v10752
      %v10765 = vcombine.high %v10720, %v10752
      %v10766 = vcombine.low %v10727, %v10759
      %v10767 = vcombine.high %v10727, %v10759
      %v10768 = vcombine.low %v8817, %v8823
      %v10769 = vcombine.high %v8817, %v8823
      %v10771 = vunpack.c.l.s4 1983009808
      %v10772 = vunpack.c.0.s8 %v10771
      %v10773 = vlaneseq
      %v10774 = vshrl.u32 %v10773, 7
      %v10775 = vsub.s32 %v10772, %v10774
      %v10776 = vrot.slane %v10768, %v10775
      %v10778 = vunpack.c.l.s4 1983009808
      %v10779 = vunpack.c.0.s8 %v10778
      %v10780 = vlaneseq
      %v10781 = vshrl.u32 %v10780, 7
      %v10782 = vsub.s32 %v10779, %v10781
      %v10783 = vrot.slane %v10769, %v10782
      %v10784 = vcombine.low %v8820, %v8826
      %v10785 = vcombine.high %v8820, %v8826
      %v10787 = vunpack.c.l.s4 1983009808
      %v10788 = vunpack.c.0.s8 %v10787
      %v10789 = vlaneseq
      %v10790 = vshrl.u32 %v10789, 7
      %v10791 = vsub.s32 %v10788, %v10790
      %v10792 = vrot.slane %v10784, %v10791
      %v10794 = vunpack.c.l.s4 1983009808
      %v10795 = vunpack.c.0.s8 %v10794
      %v10796 = vlaneseq
      %v10797 = vshrl.u32 %v10796, 7
      %v10798 = vsub.s32 %v10795, %v10797
      %v10799 = vrot.slane %v10785, %v10798
      %v10800 = vcombine.low %v8829, %v8835
      %v10801 = vcombine.high %v8829, %v8835
      %v10803 = vunpack.c.l.s4 1983009808
      %v10804 = vunpack.c.0.s8 %v10803
      %v10805 = vlaneseq
      %v10806 = vshrl.u32 %v10805, 7
      %v10807 = vsub.s32 %v10804, %v10806
      %v10808 = vrot.slane %v10800, %v10807
      %v10810 = vunpack.c.l.s4 1983009808
      %v10811 = vunpack.c.0.s8 %v10810
      %v10812 = vlaneseq
      %v10813 = vshrl.u32 %v10812, 7
      %v10814 = vsub.s32 %v10811, %v10813
      %v10815 = vrot.slane %v10801, %v10814
      %v10816 = vcombine.low %v8832, %v8838
      %v10817 = vcombine.high %v8832, %v8838
      %v10819 = vunpack.c.l.s4 1983009808
      %v10820 = vunpack.c.0.s8 %v10819
      %v10821 = vlaneseq
      %v10822 = vshrl.u32 %v10821, 7
      %v10823 = vsub.s32 %v10820, %v10822
      %v10824 = vrot.slane %v10816, %v10823
      %v10826 = vunpack.c.l.s4 1983009808
      %v10827 = vunpack.c.0.s8 %v10826
      %v10828 = vlaneseq
      %v10829 = vshrl.u32 %v10828, 7
      %v10830 = vsub.s32 %v10827, %v10829
      %v10831 = vrot.slane %v10817, %v10830
      %v10832 = vcombine.low %v10776, %v10792
      %v10833 = vcombine.high %v10776, %v10792
      %v10835 = vunpack.c.l.s4 1934713408
      %v10836 = vunpack.c.0.s8 %v10835
      %v10837 = vlaneseq
      %v10838 = vshrl.u32 %v10837, 7
      %v10839 = vsub.s32 %v10836, %v10838
      %v10840 = vrot.slane %v10832, %v10839
      %v10842 = vunpack.c.l.s4 1934713408
      %v10843 = vunpack.c.0.s8 %v10842
      %v10844 = vlaneseq
      %v10845 = vshrl.u32 %v10844, 7
      %v10846 = vsub.s32 %v10843, %v10845
      %v10847 = vrot.slane %v10833, %v10846
      %v10848 = vcombine.low %v10783, %v10799
      %v10849 = vcombine.high %v10783, %v10799
      %v10851 = vunpack.c.l.s4 1934713408
      %v10852 = vunpack.c.0.s8 %v10851
      %v10853 = vlaneseq
      %v10854 = vshrl.u32 %v10853, 7
      %v10855 = vsub.s32 %v10852, %v10854
      %v10856 = vrot.slane %v10848, %v10855
      %v10858 = vunpack.c.l.s4 1934713408
      %v10859 = vunpack.c.0.s8 %v10858
      %v10860 = vlaneseq
      %v10861 = vshrl.u32 %v10860, 7
      %v10862 = vsub.s32 %v10859, %v10861
      %v10863 = vrot.slane %v10849, %v10862
      %v10864 = vcombine.low %v10808, %v10824
      %v10865 = vcombine.high %v10808, %v10824
      %v10867 = vunpack.c.l.s4 1934713408
      %v10868 = vunpack.c.0.s8 %v10867
      %v10869 = vlaneseq
      %v10870 = vshrl.u32 %v10869, 7
      %v10871 = vsub.s32 %v10868, %v10870
      %v10872 = vrot.slane %v10864, %v10871
      %v10874 = vunpack.c.l.s4 1934713408
      %v10875 = vunpack.c.0.s8 %v10874
      %v10876 = vlaneseq
      %v10877 = vshrl.u32 %v10876, 7
      %v10878 = vsub.s32 %v10875, %v10877
      %v10879 = vrot.slane %v10865, %v10878
      %v10880 = vcombine.low %v10815, %v10831
      %v10881 = vcombine.high %v10815, %v10831
      %v10883 = vunpack.c.l.s4 1934713408
      %v10884 = vunpack.c.0.s8 %v10883
      %v10885 = vlaneseq
      %v10886 = vshrl.u32 %v10885, 7
      %v10887 = vsub.s32 %v10884, %v10886
      %v10888 = vrot.slane %v10880, %v10887
      %v10890 = vunpack.c.l.s4 1934713408
      %v10891 = vunpack.c.0.s8 %v10890
      %v10892 = vlaneseq
      %v10893 = vshrl.u32 %v10892, 7
      %v10894 = vsub.s32 %v10891, %v10893
      %v10895 = vrot.slane %v10881, %v10894
      %v10896 = vcombine.low %v10840, %v10872
      %v10897 = vcombine.high %v10840, %v10872
      %v10898 = vcombine.low %v10847, %v10879
      %v10899 = vcombine.high %v10847, %v10879
      %v10900 = vcombine.low %v10856, %v10888
      %v10901 = vcombine.high %v10856, %v10888
      %v10902 = vcombine.low %v10863, %v10895
      %v10903 = vcombine.high %v10863, %v10895
      %v10904 = vcombine.low %v8841, %v8847
      %v10905 = vcombine.high %v8841, %v8847
      %v10907 = vunpack.c.l.s4 1983009808
      %v10908 = vunpack.c.0.s8 %v10907
      %v10909 = vlaneseq
      %v10910 = vshrl.u32 %v10909, 7
      %v10911 = vsub.s32 %v10908, %v10910
      %v10912 = vrot.slane %v10904, %v10911
      %v10914 = vunpack.c.l.s4 1983009808
      %v10915 = vunpack.c.0.s8 %v10914
      %v10916 = vlaneseq
      %v10917 = vshrl.u32 %v10916, 7
      %v10918 = vsub.s32 %v10915, %v10917
      %v10919 = vrot.slane %v10905, %v10918
      %v10920 = vcombine.low %v8844, %v8850
      %v10921 = vcombine.high %v8844, %v8850
      %v10923 = vunpack.c.l.s4 1983009808
      %v10924 = vunpack.c.0.s8 %v10923
      %v10925 = vlaneseq
      %v10926 = vshrl.u32 %v10925, 7
      %v10927 = vsub.s32 %v10924, %v10926
      %v10928 = vrot.slane %v10920, %v10927
      %v10930 = vunpack.c.l.s4 1983009808
      %v10931 = vunpack.c.0.s8 %v10930
      %v10932 = vlaneseq
      %v10933 = vshrl.u32 %v10932, 7
      %v10934 = vsub.s32 %v10931, %v10933
      %v10935 = vrot.slane %v10921, %v10934
      %v10936 = vcombine.low %v8853, %v8859
      %v10937 = vcombine.high %v8853, %v8859
      %v10939 = vunpack.c.l.s4 1983009808
      %v10940 = vunpack.c.0.s8 %v10939
      %v10941 = vlaneseq
      %v10942 = vshrl.u32 %v10941, 7
      %v10943 = vsub.s32 %v10940, %v10942
      %v10944 = vrot.slane %v10936, %v10943
      %v10946 = vunpack.c.l.s4 1983009808
      %v10947 = vunpack.c.0.s8 %v10946
      %v10948 = vlaneseq
      %v10949 = vshrl.u32 %v10948, 7
      %v10950 = vsub.s32 %v10947, %v10949
      %v10951 = vrot.slane %v10937, %v10950
      %v10952 = vcombine.low %v8856, %v8862
      %v10953 = vcombine.high %v8856, %v8862
      %v10955 = vunpack.c.l.s4 1983009808
      %v10956 = vunpack.c.0.s8 %v10955
      %v10957 = vlaneseq
      %v10958 = vshrl.u32 %v10957, 7
      %v10959 = vsub.s32 %v10956, %v10958
      %v10960 = vrot.slane %v10952, %v10959
      %v10962 = vunpack.c.l.s4 1983009808
      %v10963 = vunpack.c.0.s8 %v10962
      %v10964 = vlaneseq
      %v10965 = vshrl.u32 %v10964, 7
      %v10966 = vsub.s32 %v10963, %v10965
      %v10967 = vrot.slane %v10953, %v10966
      %v10968 = vcombine.low %v10912, %v10928
      %v10969 = vcombine.high %v10912, %v10928
      %v10971 = vunpack.c.l.s4 1934713408
      %v10972 = vunpack.c.0.s8 %v10971
      %v10973 = vlaneseq
      %v10974 = vshrl.u32 %v10973, 7
      %v10975 = vsub.s32 %v10972, %v10974
      %v10976 = vrot.slane %v10968, %v10975
      %v10978 = vunpack.c.l.s4 1934713408
      %v10979 = vunpack.c.0.s8 %v10978
      %v10980 = vlaneseq
      %v10981 = vshrl.u32 %v10980, 7
      %v10982 = vsub.s32 %v10979, %v10981
      %v10983 = vrot.slane %v10969, %v10982
      %v10984 = vcombine.low %v10919, %v10935
      %v10985 = vcombine.high %v10919, %v10935
      %v10987 = vunpack.c.l.s4 1934713408
      %v10988 = vunpack.c.0.s8 %v10987
      %v10989 = vlaneseq
      %v10990 = vshrl.u32 %v10989, 7
      %v10991 = vsub.s32 %v10988, %v10990
      %v10992 = vrot.slane %v10984, %v10991
      %v10994 = vunpack.c.l.s4 1934713408
      %v10995 = vunpack.c.0.s8 %v10994
      %v10996 = vlaneseq
      %v10997 = vshrl.u32 %v10996, 7
      %v10998 = vsub.s32 %v10995, %v10997
      %v10999 = vrot.slane %v10985, %v10998
      %v11000 = vcombine.low %v10944, %v10960
      %v11001 = vcombine.high %v10944, %v10960
      %v11003 = vunpack.c.l.s4 1934713408
      %v11004 = vunpack.c.0.s8 %v11003
      %v11005 = vlaneseq
      %v11006 = vshrl.u32 %v11005, 7
      %v11007 = vsub.s32 %v11004, %v11006
      %v11008 = vrot.slane %v11000, %v11007
      %v11010 = vunpack.c.l.s4 1934713408
      %v11011 = vunpack.c.0.s8 %v11010
      %v11012 = vlaneseq
      %v11013 = vshrl.u32 %v11012, 7
      %v11014 = vsub.s32 %v11011, %v11013
      %v11015 = vrot.slane %v11001, %v11014
      %v11016 = vcombine.low %v10951, %v10967
      %v11017 = vcombine.high %v10951, %v10967
      %v11019 = vunpack.c.l.s4 1934713408
      %v11020 = vunpack.c.0.s8 %v11019
      %v11021 = vlaneseq
      %v11022 = vshrl.u32 %v11021, 7
      %v11023 = vsub.s32 %v11020, %v11022
      %v11024 = vrot.slane %v11016, %v11023
      %v11026 = vunpack.c.l.s4 1934713408
      %v11027 = vunpack.c.0.s8 %v11026
      %v11028 = vlaneseq
      %v11029 = vshrl.u32 %v11028, 7
      %v11030 = vsub.s32 %v11027, %v11029
      %v11031 = vrot.slane %v11017, %v11030
      %v11032 = vcombine.low %v10976, %v11008
      %v11033 = vcombine.high %v10976, %v11008
      %v11034 = vcombine.low %v10983, %v11015
      %v11035 = vcombine.high %v10983, %v11015
      %v11036 = vcombine.low %v10992, %v11024
      %v11037 = vcombine.high %v10992, %v11024
      %v11038 = vcombine.low %v10999, %v11031
      %v11039 = vcombine.high %v10999, %v11031
      %11168 = vrot.lane.b32.xlu0 %v8992, 127
      %v11169 = vpop.permute.xlu0 %11168
      %11170 = vrot.lane.b32.xlu0 %v9128, 127
      %v11171 = vpop.permute.xlu0 %11170
      %11172 = vrot.lane.b32.xlu0 %v9264, 127
      %v11173 = vpop.permute.xlu0 %11172
      %11174 = vrot.lane.b32.xlu0 %v9400, 127
      %v11175 = vpop.permute.xlu0 %11174
      %11176 = vrot.lane.b32.xlu0 %v9536, 127
      %v11177 = vpop.permute.xlu0 %11176
      %11178 = vrot.lane.b32.xlu0 %v9672, 127
      %v11179 = vpop.permute.xlu0 %11178
      %11180 = vrot.lane.b32.xlu0 %v9808, 127
      %v11181 = vpop.permute.xlu0 %11180
      %11182 = vrot.lane.b32.xlu0 %v9944, 127
      %v11183 = vpop.permute.xlu0 %11182
      %11184 = vrot.lane.b32.xlu0 %v10080, 127
      %v11185 = vpop.permute.xlu0 %11184
      %11186 = vrot.lane.b32.xlu0 %v10216, 127
      %v11187 = vpop.permute.xlu0 %11186
      %11188 = vrot.lane.b32.xlu0 %v10352, 127
      %v11189 = vpop.permute.xlu0 %11188
      %11190 = vrot.lane.b32.xlu0 %v10488, 127
      %v11191 = vpop.permute.xlu0 %11190
      %11192 = vrot.lane.b32.xlu0 %v10624, 127
      %v11193 = vpop.permute.xlu0 %11192
      %11194 = vrot.lane.b32.xlu0 %v10760, 127
      %v11195 = vpop.permute.xlu0 %11194
      %11196 = vrot.lane.b32.xlu0 %v10896, 127
      %v11197 = vpop.permute.xlu0 %11196
      %11198 = vrot.lane.b32.xlu0 %v11032, 127
      %v11199 = vpop.permute.xlu0 %11198
      %11200 = vrot.lane.b32.xlu0 %v8993, 127
      %v11201 = vpop.permute.xlu0 %11200
      %11202 = vrot.lane.b32.xlu0 %v9129, 127
      %v11203 = vpop.permute.xlu0 %11202
      %11204 = vrot.lane.b32.xlu0 %v9265, 127
      %v11205 = vpop.permute.xlu0 %11204
      %11206 = vrot.lane.b32.xlu0 %v9401, 127
      %v11207 = vpop.permute.xlu0 %11206
      %11208 = vrot.lane.b32.xlu0 %v9537, 127
      %v11209 = vpop.permute.xlu0 %11208
      %11210 = vrot.lane.b32.xlu0 %v9673, 127
      %v11211 = vpop.permute.xlu0 %11210
      %11212 = vrot.lane.b32.xlu0 %v9809, 127
      %v11213 = vpop.permute.xlu0 %11212
      %11214 = vrot.lane.b32.xlu0 %v9945, 127
      %v11215 = vpop.permute.xlu0 %11214
      %11216 = vrot.lane.b32.xlu0 %v10081, 127
      %v11217 = vpop.permute.xlu0 %11216
      %11218 = vrot.lane.b32.xlu0 %v10217, 127
      %v11219 = vpop.permute.xlu0 %11218
      %11220 = vrot.lane.b32.xlu0 %v10353, 127
      %v11221 = vpop.permute.xlu0 %11220
      %11222 = vrot.lane.b32.xlu0 %v10489, 127
      %v11223 = vpop.permute.xlu0 %11222
      %11224 = vrot.lane.b32.xlu0 %v10625, 127
      %v11225 = vpop.permute.xlu0 %11224
      %11226 = vrot.lane.b32.xlu0 %v10761, 127
      %v11227 = vpop.permute.xlu0 %11226
      %11228 = vrot.lane.b32.xlu0 %v10897, 127
      %v11229 = vpop.permute.xlu0 %11228
      %11230 = vrot.lane.b32.xlu0 %v11033, 127
      %v11231 = vpop.permute.xlu0 %11230
      %11232 = vrot.lane.b32.xlu0 %v8994, 127
      %v11233 = vpop.permute.xlu0 %11232
      %11234 = vrot.lane.b32.xlu0 %v9130, 127
      %v11235 = vpop.permute.xlu0 %11234
      %11236 = vrot.lane.b32.xlu0 %v9266, 127
      %v11237 = vpop.permute.xlu0 %11236
      %11238 = vrot.lane.b32.xlu0 %v9402, 127
      %v11239 = vpop.permute.xlu0 %11238
      %11240 = vrot.lane.b32.xlu0 %v9538, 127
      %v11241 = vpop.permute.xlu0 %11240
      %11242 = vrot.lane.b32.xlu0 %v9674, 127
      %v11243 = vpop.permute.xlu0 %11242
      %11244 = vrot.lane.b32.xlu0 %v9810, 127
      %v11245 = vpop.permute.xlu0 %11244
      %11246 = vrot.lane.b32.xlu0 %v9946, 127
      %v11247 = vpop.permute.xlu0 %11246
      %11248 = vrot.lane.b32.xlu0 %v10082, 127
      %v11249 = vpop.permute.xlu0 %11248
      %11250 = vrot.lane.b32.xlu0 %v10218, 127
      %v11251 = vpop.permute.xlu0 %11250
      %11252 = vrot.lane.b32.xlu0 %v10354, 127
      %v11253 = vpop.permute.xlu0 %11252
      %11254 = vrot.lane.b32.xlu0 %v10490, 127
      %v11255 = vpop.permute.xlu0 %11254
      %11256 = vrot.lane.b32.xlu0 %v10626, 127
      %v11257 = vpop.permute.xlu0 %11256
      %11258 = vrot.lane.b32.xlu0 %v10762, 127
      %v11259 = vpop.permute.xlu0 %11258
      %11260 = vrot.lane.b32.xlu0 %v10898, 127
      %v11261 = vpop.permute.xlu0 %11260
      %11262 = vrot.lane.b32.xlu0 %v11034, 127
      %v11263 = vpop.permute.xlu0 %11262
      %11264 = vrot.lane.b32.xlu0 %v8995, 127
      %v11265 = vpop.permute.xlu0 %11264
      %11266 = vrot.lane.b32.xlu0 %v9131, 127
      %v11267 = vpop.permute.xlu0 %11266
      %11268 = vrot.lane.b32.xlu0 %v9267, 127
      %v11269 = vpop.permute.xlu0 %11268
      %11270 = vrot.lane.b32.xlu0 %v9403, 127
      %v11271 = vpop.permute.xlu0 %11270
      %11272 = vrot.lane.b32.xlu0 %v9539, 127
      %v11273 = vpop.permute.xlu0 %11272
      %11274 = vrot.lane.b32.xlu0 %v9675, 127
      %v11275 = vpop.permute.xlu0 %11274
      %11276 = vrot.lane.b32.xlu0 %v9811, 127
      %v11277 = vpop.permute.xlu0 %11276
      %11278 = vrot.lane.b32.xlu0 %v9947, 127
      %v11279 = vpop.permute.xlu0 %11278
      %11280 = vrot.lane.b32.xlu0 %v10083, 127
      %v11281 = vpop.permute.xlu0 %11280
      %11282 = vrot.lane.b32.xlu0 %v10219, 127
      %v11283 = vpop.permute.xlu0 %11282
      %11284 = vrot.lane.b32.xlu0 %v10355, 127
      %v11285 = vpop.permute.xlu0 %11284
      %11286 = vrot.lane.b32.xlu0 %v10491, 127
      %v11287 = vpop.permute.xlu0 %11286
      %11288 = vrot.lane.b32.xlu0 %v10627, 127
      %v11289 = vpop.permute.xlu0 %11288
      %11290 = vrot.lane.b32.xlu0 %v10763, 127
      %v11291 = vpop.permute.xlu0 %11290
      %11292 = vrot.lane.b32.xlu0 %v10899, 127
      %v11293 = vpop.permute.xlu0 %11292
      %11294 = vrot.lane.b32.xlu0 %v11035, 127
      %v11295 = vpop.permute.xlu0 %11294
      %11296 = vrot.lane.b32.xlu0 %v8996, 127
      %v11297 = vpop.permute.xlu0 %11296
      %11298 = vrot.lane.b32.xlu0 %v9132, 127
      %v11299 = vpop.permute.xlu0 %11298
      %11300 = vrot.lane.b32.xlu0 %v9268, 127
      %v11301 = vpop.permute.xlu0 %11300
      %11302 = vrot.lane.b32.xlu0 %v9404, 127
      %v11303 = vpop.permute.xlu0 %11302
      %11304 = vrot.lane.b32.xlu0 %v9540, 127
      %v11305 = vpop.permute.xlu0 %11304
      %11306 = vrot.lane.b32.xlu0 %v9676, 127
      %v11307 = vpop.permute.xlu0 %11306
      %11308 = vrot.lane.b32.xlu0 %v9812, 127
      %v11309 = vpop.permute.xlu0 %11308
      %11310 = vrot.lane.b32.xlu0 %v9948, 127
      %v11311 = vpop.permute.xlu0 %11310
      %11312 = vrot.lane.b32.xlu0 %v10084, 127
      %v11313 = vpop.permute.xlu0 %11312
      %11314 = vrot.lane.b32.xlu0 %v10220, 127
      %v11315 = vpop.permute.xlu0 %11314
      %11316 = vrot.lane.b32.xlu0 %v10356, 127
      %v11317 = vpop.permute.xlu0 %11316
      %11318 = vrot.lane.b32.xlu0 %v10492, 127
      %v11319 = vpop.permute.xlu0 %11318
      %11320 = vrot.lane.b32.xlu0 %v10628, 127
      %v11321 = vpop.permute.xlu0 %11320
      %11322 = vrot.lane.b32.xlu0 %v10764, 127
      %v11323 = vpop.permute.xlu0 %11322
      %11324 = vrot.lane.b32.xlu0 %v10900, 127
      %v11325 = vpop.permute.xlu0 %11324
      %11326 = vrot.lane.b32.xlu0 %v11036, 127
      %v11327 = vpop.permute.xlu0 %11326
      %11328 = vrot.lane.b32.xlu0 %v8997, 127
      %v11329 = vpop.permute.xlu0 %11328
      %11330 = vrot.lane.b32.xlu0 %v9133, 127
      %v11331 = vpop.permute.xlu0 %11330
      %11332 = vrot.lane.b32.xlu0 %v9269, 127
      %v11333 = vpop.permute.xlu0 %11332
      %11334 = vrot.lane.b32.xlu0 %v9405, 127
      %v11335 = vpop.permute.xlu0 %11334
      %11336 = vrot.lane.b32.xlu0 %v9541, 127
      %v11337 = vpop.permute.xlu0 %11336
      %11338 = vrot.lane.b32.xlu0 %v9677, 127
      %v11339 = vpop.permute.xlu0 %11338
      %11340 = vrot.lane.b32.xlu0 %v9813, 127
      %v11341 = vpop.permute.xlu0 %11340
      %11342 = vrot.lane.b32.xlu0 %v9949, 127
      %v11343 = vpop.permute.xlu0 %11342
      %11344 = vrot.lane.b32.xlu0 %v10085, 127
      %v11345 = vpop.permute.xlu0 %11344
      %11346 = vrot.lane.b32.xlu0 %v10221, 127
      %v11347 = vpop.permute.xlu0 %11346
      %11348 = vrot.lane.b32.xlu0 %v10357, 127
      %v11349 = vpop.permute.xlu0 %11348
      %11350 = vrot.lane.b32.xlu0 %v10493, 127
      %v11351 = vpop.permute.xlu0 %11350
      %11352 = vrot.lane.b32.xlu0 %v10629, 127
      %v11353 = vpop.permute.xlu0 %11352
      %11354 = vrot.lane.b32.xlu0 %v10765, 127
      %v11355 = vpop.permute.xlu0 %11354
      %11356 = vrot.lane.b32.xlu0 %v10901, 127
      %v11357 = vpop.permute.xlu0 %11356
      %11358 = vrot.lane.b32.xlu0 %v11037, 127
      %v11359 = vpop.permute.xlu0 %11358
      %11360 = vrot.lane.b32.xlu0 %v8998, 127
      %v11361 = vpop.permute.xlu0 %11360
      %11362 = vrot.lane.b32.xlu0 %v9134, 127
      %v11363 = vpop.permute.xlu0 %11362
      %11364 = vrot.lane.b32.xlu0 %v9270, 127
      %v11365 = vpop.permute.xlu0 %11364
      %11366 = vrot.lane.b32.xlu0 %v9406, 127
      %v11367 = vpop.permute.xlu0 %11366
      %11368 = vrot.lane.b32.xlu0 %v9542, 127
      %v11369 = vpop.permute.xlu0 %11368
      %11370 = vrot.lane.b32.xlu0 %v9678, 127
      %v11371 = vpop.permute.xlu0 %11370
      %11372 = vrot.lane.b32.xlu0 %v9814, 127
      %v11373 = vpop.permute.xlu0 %11372
      %11374 = vrot.lane.b32.xlu0 %v9950, 127
      %v11375 = vpop.permute.xlu0 %11374
      %11376 = vrot.lane.b32.xlu0 %v10086, 127
      %v11377 = vpop.permute.xlu0 %11376
      %11378 = vrot.lane.b32.xlu0 %v10222, 127
      %v11379 = vpop.permute.xlu0 %11378
      %11380 = vrot.lane.b32.xlu0 %v10358, 127
      %v11381 = vpop.permute.xlu0 %11380
      %11382 = vrot.lane.b32.xlu0 %v10494, 127
      %v11383 = vpop.permute.xlu0 %11382
      %11384 = vrot.lane.b32.xlu0 %v10630, 127
      %v11385 = vpop.permute.xlu0 %11384
      %11386 = vrot.lane.b32.xlu0 %v10766, 127
      %v11387 = vpop.permute.xlu0 %11386
      %11388 = vrot.lane.b32.xlu0 %v10902, 127
      %v11389 = vpop.permute.xlu0 %11388
      %11390 = vrot.lane.b32.xlu0 %v11038, 127
      %v11391 = vpop.permute.xlu0 %11390
      %11392 = vrot.lane.b32.xlu0 %v8999, 127
      %v11393 = vpop.permute.xlu0 %11392
      %11394 = vrot.lane.b32.xlu0 %v9135, 127
      %v11395 = vpop.permute.xlu0 %11394
      %11396 = vrot.lane.b32.xlu0 %v9271, 127
      %v11397 = vpop.permute.xlu0 %11396
      %11398 = vrot.lane.b32.xlu0 %v9407, 127
      %v11399 = vpop.permute.xlu0 %11398
      %11400 = vrot.lane.b32.xlu0 %v9543, 127
      %v11401 = vpop.permute.xlu0 %11400
      %11402 = vrot.lane.b32.xlu0 %v9679, 127
      %v11403 = vpop.permute.xlu0 %11402
      %11404 = vrot.lane.b32.xlu0 %v9815, 127
      %v11405 = vpop.permute.xlu0 %11404
      %11406 = vrot.lane.b32.xlu0 %v9951, 127
      %v11407 = vpop.permute.xlu0 %11406
      %11408 = vrot.lane.b32.xlu0 %v10087, 127
      %v11409 = vpop.permute.xlu0 %11408
      %11410 = vrot.lane.b32.xlu0 %v10223, 127
      %v11411 = vpop.permute.xlu0 %11410
      %11412 = vrot.lane.b32.xlu0 %v10359, 127
      %v11413 = vpop.permute.xlu0 %11412
      %11414 = vrot.lane.b32.xlu0 %v10495, 127
      %v11415 = vpop.permute.xlu0 %11414
      %11416 = vrot.lane.b32.xlu0 %v10631, 127
      %v11417 = vpop.permute.xlu0 %11416
      %11418 = vrot.lane.b32.xlu0 %v10767, 127
      %v11419 = vpop.permute.xlu0 %11418
      %11420 = vrot.lane.b32.xlu0 %v10903, 127
      %v11421 = vpop.permute.xlu0 %11420
      %11422 = vrot.lane.b32.xlu0 %v11039, 127
      %v11423 = vpop.permute.xlu0 %11422
      %v11552 = vadd.f32 %v8992, %v11169
      %v11553 = vadd.f32 %v9128, %v11171
      %v11554 = vadd.f32 %v9264, %v11173
      %v11555 = vadd.f32 %v9400, %v11175
      %v11556 = vadd.f32 %v9536, %v11177
      %v11557 = vadd.f32 %v9672, %v11179
      %v11558 = vadd.f32 %v9808, %v11181
      %v11559 = vadd.f32 %v9944, %v11183
      %v11560 = vadd.f32 %v10080, %v11185
      %v11561 = vadd.f32 %v10216, %v11187
      %v11562 = vadd.f32 %v10352, %v11189
      %v11563 = vadd.f32 %v10488, %v11191
      %v11564 = vadd.f32 %v10624, %v11193
      %v11565 = vadd.f32 %v10760, %v11195
      %v11566 = vadd.f32 %v10896, %v11197
      %v11567 = vadd.f32 %v11032, %v11199
      %v11568 = vadd.f32 %v8993, %v11201
      %v11569 = vadd.f32 %v9129, %v11203
      %v11570 = vadd.f32 %v9265, %v11205
      %v11571 = vadd.f32 %v9401, %v11207
      %v11572 = vadd.f32 %v9537, %v11209
      %v11573 = vadd.f32 %v9673, %v11211
      %v11574 = vadd.f32 %v9809, %v11213
      %v11575 = vadd.f32 %v9945, %v11215
      %v11576 = vadd.f32 %v10081, %v11217
      %v11577 = vadd.f32 %v10217, %v11219
      %v11578 = vadd.f32 %v10353, %v11221
      %v11579 = vadd.f32 %v10489, %v11223
      %v11580 = vadd.f32 %v10625, %v11225
      %v11581 = vadd.f32 %v10761, %v11227
      %v11582 = vadd.f32 %v10897, %v11229
      %v11583 = vadd.f32 %v11033, %v11231
      %v11584 = vadd.f32 %v8994, %v11233
      %v11585 = vadd.f32 %v9130, %v11235
      %v11586 = vadd.f32 %v9266, %v11237
      %v11587 = vadd.f32 %v9402, %v11239
      %v11588 = vadd.f32 %v9538, %v11241
      %v11589 = vadd.f32 %v9674, %v11243
      %v11590 = vadd.f32 %v9810, %v11245
      %v11591 = vadd.f32 %v9946, %v11247
      %v11592 = vadd.f32 %v10082, %v11249
      %v11593 = vadd.f32 %v10218, %v11251
      %v11594 = vadd.f32 %v10354, %v11253
      %v11595 = vadd.f32 %v10490, %v11255
      %v11596 = vadd.f32 %v10626, %v11257
      %v11597 = vadd.f32 %v10762, %v11259
      %v11598 = vadd.f32 %v10898, %v11261
      %v11599 = vadd.f32 %v11034, %v11263
      %v11600 = vadd.f32 %v8995, %v11265
      %v11601 = vadd.f32 %v9131, %v11267
      %v11602 = vadd.f32 %v9267, %v11269
      %v11603 = vadd.f32 %v9403, %v11271
      %v11604 = vadd.f32 %v9539, %v11273
      %v11605 = vadd.f32 %v9675, %v11275
      %v11606 = vadd.f32 %v9811, %v11277
      %v11607 = vadd.f32 %v9947, %v11279
      %v11608 = vadd.f32 %v10083, %v11281
      %v11609 = vadd.f32 %v10219, %v11283
      %v11610 = vadd.f32 %v10355, %v11285
      %v11611 = vadd.f32 %v10491, %v11287
      %v11612 = vadd.f32 %v10627, %v11289
      %v11613 = vadd.f32 %v10763, %v11291
      %v11614 = vadd.f32 %v10899, %v11293
      %v11615 = vadd.f32 %v11035, %v11295
      %v11616 = vadd.f32 %v8996, %v11297
      %v11617 = vadd.f32 %v9132, %v11299
      %v11618 = vadd.f32 %v9268, %v11301
      %v11619 = vadd.f32 %v9404, %v11303
      %v11620 = vadd.f32 %v9540, %v11305
      %v11621 = vadd.f32 %v9676, %v11307
      %v11622 = vadd.f32 %v9812, %v11309
      %v11623 = vadd.f32 %v9948, %v11311
      %v11624 = vadd.f32 %v10084, %v11313
      %v11625 = vadd.f32 %v10220, %v11315
      %v11626 = vadd.f32 %v10356, %v11317
      %v11627 = vadd.f32 %v10492, %v11319
      %v11628 = vadd.f32 %v10628, %v11321
      %v11629 = vadd.f32 %v10764, %v11323
      %v11630 = vadd.f32 %v10900, %v11325
      %v11631 = vadd.f32 %v11036, %v11327
      %v11632 = vadd.f32 %v8997, %v11329
      %v11633 = vadd.f32 %v9133, %v11331
      %v11634 = vadd.f32 %v9269, %v11333
      %v11635 = vadd.f32 %v9405, %v11335
      %v11636 = vadd.f32 %v9541, %v11337
      %v11637 = vadd.f32 %v9677, %v11339
      %v11638 = vadd.f32 %v9813, %v11341
      %v11639 = vadd.f32 %v9949, %v11343
      %v11640 = vadd.f32 %v10085, %v11345
      %v11641 = vadd.f32 %v10221, %v11347
      %v11642 = vadd.f32 %v10357, %v11349
      %v11643 = vadd.f32 %v10493, %v11351
      %v11644 = vadd.f32 %v10629, %v11353
      %v11645 = vadd.f32 %v10765, %v11355
      %v11646 = vadd.f32 %v10901, %v11357
      %v11647 = vadd.f32 %v11037, %v11359
      %v11648 = vadd.f32 %v8998, %v11361
      %v11649 = vadd.f32 %v9134, %v11363
      %v11650 = vadd.f32 %v9270, %v11365
      %v11651 = vadd.f32 %v9406, %v11367
      %v11652 = vadd.f32 %v9542, %v11369
      %v11653 = vadd.f32 %v9678, %v11371
      %v11654 = vadd.f32 %v9814, %v11373
      %v11655 = vadd.f32 %v9950, %v11375
      %v11656 = vadd.f32 %v10086, %v11377
      %v11657 = vadd.f32 %v10222, %v11379
      %v11658 = vadd.f32 %v10358, %v11381
      %v11659 = vadd.f32 %v10494, %v11383
      %v11660 = vadd.f32 %v10630, %v11385
      %v11661 = vadd.f32 %v10766, %v11387
      %v11662 = vadd.f32 %v10902, %v11389
      %v11663 = vadd.f32 %v11038, %v11391
      %v11664 = vadd.f32 %v8999, %v11393
      %v11665 = vadd.f32 %v9135, %v11395
      %v11666 = vadd.f32 %v9271, %v11397
      %v11667 = vadd.f32 %v9407, %v11399
      %v11668 = vadd.f32 %v9543, %v11401
      %v11669 = vadd.f32 %v9679, %v11403
      %v11670 = vadd.f32 %v9815, %v11405
      %v11671 = vadd.f32 %v9951, %v11407
      %v11672 = vadd.f32 %v10087, %v11409
      %v11673 = vadd.f32 %v10223, %v11411
      %v11674 = vadd.f32 %v10359, %v11413
      %v11675 = vadd.f32 %v10495, %v11415
      %v11676 = vadd.f32 %v10631, %v11417
      %v11677 = vadd.f32 %v10767, %v11419
      %v11678 = vadd.f32 %v10903, %v11421
      %v11679 = vadd.f32 %v11039, %v11423
      %v11680 = vadd.f32 %v11552, %v11553
      %v11681 = vadd.f32 %v11554, %v11555
      %v11682 = vadd.f32 %v11556, %v11557
      %v11683 = vadd.f32 %v11558, %v11559
      %v11684 = vadd.f32 %v11560, %v11561
      %v11685 = vadd.f32 %v11562, %v11563
      %v11686 = vadd.f32 %v11564, %v11565
      %v11687 = vadd.f32 %v11566, %v11567
      %v11688 = vadd.f32 %v11568, %v11569
      %v11689 = vadd.f32 %v11570, %v11571
      %v11690 = vadd.f32 %v11572, %v11573
      %v11691 = vadd.f32 %v11574, %v11575
      %v11692 = vadd.f32 %v11576, %v11577
      %v11693 = vadd.f32 %v11578, %v11579
      %v11694 = vadd.f32 %v11580, %v11581
      %v11695 = vadd.f32 %v11582, %v11583
      %v11696 = vadd.f32 %v11584, %v11585
      %v11697 = vadd.f32 %v11586, %v11587
      %v11698 = vadd.f32 %v11588, %v11589
      %v11699 = vadd.f32 %v11590, %v11591
      %v11700 = vadd.f32 %v11592, %v11593
      %v11701 = vadd.f32 %v11594, %v11595
      %v11702 = vadd.f32 %v11596, %v11597
      %v11703 = vadd.f32 %v11598, %v11599
      %v11704 = vadd.f32 %v11600, %v11601
      %v11705 = vadd.f32 %v11602, %v11603
      %v11706 = vadd.f32 %v11604, %v11605
      %v11707 = vadd.f32 %v11606, %v11607
      %v11708 = vadd.f32 %v11608, %v11609
      %v11709 = vadd.f32 %v11610, %v11611
      %v11710 = vadd.f32 %v11612, %v11613
      %v11711 = vadd.f32 %v11614, %v11615
      %v11712 = vadd.f32 %v11616, %v11617
      %v11713 = vadd.f32 %v11618, %v11619
      %v11714 = vadd.f32 %v11620, %v11621
      %v11715 = vadd.f32 %v11622, %v11623
      %v11716 = vadd.f32 %v11624, %v11625
      %v11717 = vadd.f32 %v11626, %v11627
      %v11718 = vadd.f32 %v11628, %v11629
      %v11719 = vadd.f32 %v11630, %v11631
      %v11720 = vadd.f32 %v11632, %v11633
      %v11721 = vadd.f32 %v11634, %v11635
      %v11722 = vadd.f32 %v11636, %v11637
      %v11723 = vadd.f32 %v11638, %v11639
      %v11724 = vadd.f32 %v11640, %v11641
      %v11725 = vadd.f32 %v11642, %v11643
      %v11726 = vadd.f32 %v11644, %v11645
      %v11727 = vadd.f32 %v11646, %v11647
      %v11728 = vadd.f32 %v11648, %v11649
      %v11729 = vadd.f32 %v11650, %v11651
      %v11730 = vadd.f32 %v11652, %v11653
      %v11731 = vadd.f32 %v11654, %v11655
      %v11732 = vadd.f32 %v11656, %v11657
      %v11733 = vadd.f32 %v11658, %v11659
      %v11734 = vadd.f32 %v11660, %v11661
      %v11735 = vadd.f32 %v11662, %v11663
      %v11736 = vadd.f32 %v11664, %v11665
      %v11737 = vadd.f32 %v11666, %v11667
      %v11738 = vadd.f32 %v11668, %v11669
      %v11739 = vadd.f32 %v11670, %v11671
      %v11740 = vadd.f32 %v11672, %v11673
      %v11741 = vadd.f32 %v11674, %v11675
      %v11742 = vadd.f32 %v11676, %v11677
      %v11743 = vadd.f32 %v11678, %v11679
      %v11744 = vmul.f32 %v11680, 0.25
      %v11745 = vmul.f32 %v11681, 0.25
      %v11746 = vmul.f32 %v11682, 0.25
      %v11747 = vmul.f32 %v11683, 0.25
      %v11748 = vmul.f32 %v11684, 0.25
      %v11749 = vmul.f32 %v11685, 0.25
      %v11750 = vmul.f32 %v11686, 0.25
      %v11751 = vmul.f32 %v11687, 0.25
      %v11752 = vmul.f32 %v11688, 0.25
      %v11753 = vmul.f32 %v11689, 0.25
      %v11754 = vmul.f32 %v11690, 0.25
      %v11755 = vmul.f32 %v11691, 0.25
      %v11756 = vmul.f32 %v11692, 0.25
      %v11757 = vmul.f32 %v11693, 0.25
      %v11758 = vmul.f32 %v11694, 0.25
      %v11759 = vmul.f32 %v11695, 0.25
      %v11760 = vmul.f32 %v11696, 0.25
      %v11761 = vmul.f32 %v11697, 0.25
      %v11762 = vmul.f32 %v11698, 0.25
      %v11763 = vmul.f32 %v11699, 0.25
      %v11764 = vmul.f32 %v11700, 0.25
      %v11765 = vmul.f32 %v11701, 0.25
      %v11766 = vmul.f32 %v11702, 0.25
      %v11767 = vmul.f32 %v11703, 0.25
      %v11768 = vmul.f32 %v11704, 0.25
      %v11769 = vmul.f32 %v11705, 0.25
      %v11770 = vmul.f32 %v11706, 0.25
      %v11771 = vmul.f32 %v11707, 0.25
      %v11772 = vmul.f32 %v11708, 0.25
      %v11773 = vmul.f32 %v11709, 0.25
      %v11774 = vmul.f32 %v11710, 0.25
      %v11775 = vmul.f32 %v11711, 0.25
      %v11776 = vmul.f32 %v11712, 0.25
      %v11777 = vmul.f32 %v11713, 0.25
      %v11778 = vmul.f32 %v11714, 0.25
      %v11779 = vmul.f32 %v11715, 0.25
      %v11780 = vmul.f32 %v11716, 0.25
      %v11781 = vmul.f32 %v11717, 0.25
      %v11782 = vmul.f32 %v11718, 0.25
      %v11783 = vmul.f32 %v11719, 0.25
      %v11784 = vmul.f32 %v11720, 0.25
      %v11785 = vmul.f32 %v11721, 0.25
      %v11786 = vmul.f32 %v11722, 0.25
      %v11787 = vmul.f32 %v11723, 0.25
      %v11788 = vmul.f32 %v11724, 0.25
      %v11789 = vmul.f32 %v11725, 0.25
      %v11790 = vmul.f32 %v11726, 0.25
      %v11791 = vmul.f32 %v11727, 0.25
      %v11792 = vmul.f32 %v11728, 0.25
      %v11793 = vmul.f32 %v11729, 0.25
      %v11794 = vmul.f32 %v11730, 0.25
      %v11795 = vmul.f32 %v11731, 0.25
      %v11796 = vmul.f32 %v11732, 0.25
      %v11797 = vmul.f32 %v11733, 0.25
      %v11798 = vmul.f32 %v11734, 0.25
      %v11799 = vmul.f32 %v11735, 0.25
      %v11800 = vmul.f32 %v11736, 0.25
      %v11801 = vmul.f32 %v11737, 0.25
      %v11802 = vmul.f32 %v11738, 0.25
      %v11803 = vmul.f32 %v11739, 0.25
      %v11804 = vmul.f32 %v11740, 0.25
      %v11805 = vmul.f32 %v11741, 0.25
      %v11806 = vmul.f32 %v11742, 0.25
      %v11807 = vmul.f32 %v11743, 0.25
      %11872 = vset.pattern.permute.xlu0 0
      %11873 = vperm.xlu0 %11872, %v11744
      %v11874 = vpop.permute.xlu0 %11873
      %11875 = vset.pattern.permute.xlu0 0
      %11876 = vperm.xlu0 %11875, %v11745
      %v11877 = vpop.permute.xlu0 %11876
      %11878 = vset.pattern.permute.xlu0 0
      %11879 = vperm.xlu0 %11878, %v11746
      %v11880 = vpop.permute.xlu0 %11879
      %11881 = vset.pattern.permute.xlu0 0
      %11882 = vperm.xlu0 %11881, %v11747
      %v11883 = vpop.permute.xlu0 %11882
      %11884 = vset.pattern.permute.xlu0 0
      %11885 = vperm.xlu0 %11884, %v11748
      %v11886 = vpop.permute.xlu0 %11885
      %11887 = vset.pattern.permute.xlu0 0
      %11888 = vperm.xlu0 %11887, %v11749
      %v11889 = vpop.permute.xlu0 %11888
      %11890 = vset.pattern.permute.xlu0 0
      %11891 = vperm.xlu0 %11890, %v11750
      %v11892 = vpop.permute.xlu0 %11891
      %11893 = vset.pattern.permute.xlu0 0
      %11894 = vperm.xlu0 %11893, %v11751
      %v11895 = vpop.permute.xlu0 %11894
      %11896 = vset.pattern.permute.xlu0 0
      %11897 = vperm.xlu0 %11896, %v11752
      %v11898 = vpop.permute.xlu0 %11897
      %11899 = vset.pattern.permute.xlu0 0
      %11900 = vperm.xlu0 %11899, %v11753
      %v11901 = vpop.permute.xlu0 %11900
      %11902 = vset.pattern.permute.xlu0 0
      %11903 = vperm.xlu0 %11902, %v11754
      %v11904 = vpop.permute.xlu0 %11903
      %11905 = vset.pattern.permute.xlu0 0
      %11906 = vperm.xlu0 %11905, %v11755
      %v11907 = vpop.permute.xlu0 %11906
      %11908 = vset.pattern.permute.xlu0 0
      %11909 = vperm.xlu0 %11908, %v11756
      %v11910 = vpop.permute.xlu0 %11909
      %11911 = vset.pattern.permute.xlu0 0
      %11912 = vperm.xlu0 %11911, %v11757
      %v11913 = vpop.permute.xlu0 %11912
      %11914 = vset.pattern.permute.xlu0 0
      %11915 = vperm.xlu0 %11914, %v11758
      %v11916 = vpop.permute.xlu0 %11915
      %11917 = vset.pattern.permute.xlu0 0
      %11918 = vperm.xlu0 %11917, %v11759
      %v11919 = vpop.permute.xlu0 %11918
      %11920 = vset.pattern.permute.xlu0 0
      %11921 = vperm.xlu0 %11920, %v11760
      %v11922 = vpop.permute.xlu0 %11921
      %11923 = vset.pattern.permute.xlu0 0
      %11924 = vperm.xlu0 %11923, %v11761
      %v11925 = vpop.permute.xlu0 %11924
      %11926 = vset.pattern.permute.xlu0 0
      %11927 = vperm.xlu0 %11926, %v11762
      %v11928 = vpop.permute.xlu0 %11927
      %11929 = vset.pattern.permute.xlu0 0
      %11930 = vperm.xlu0 %11929, %v11763
      %v11931 = vpop.permute.xlu0 %11930
      %11932 = vset.pattern.permute.xlu0 0
      %11933 = vperm.xlu0 %11932, %v11764
      %v11934 = vpop.permute.xlu0 %11933
      %11935 = vset.pattern.permute.xlu0 0
      %11936 = vperm.xlu0 %11935, %v11765
      %v11937 = vpop.permute.xlu0 %11936
      %11938 = vset.pattern.permute.xlu0 0
      %11939 = vperm.xlu0 %11938, %v11766
      %v11940 = vpop.permute.xlu0 %11939
      %11941 = vset.pattern.permute.xlu0 0
      %11942 = vperm.xlu0 %11941, %v11767
      %v11943 = vpop.permute.xlu0 %11942
      %11944 = vset.pattern.permute.xlu0 0
      %11945 = vperm.xlu0 %11944, %v11768
      %v11946 = vpop.permute.xlu0 %11945
      %11947 = vset.pattern.permute.xlu0 0
      %11948 = vperm.xlu0 %11947, %v11769
      %v11949 = vpop.permute.xlu0 %11948
      %11950 = vset.pattern.permute.xlu0 0
      %11951 = vperm.xlu0 %11950, %v11770
      %v11952 = vpop.permute.xlu0 %11951
      %11953 = vset.pattern.permute.xlu0 0
      %11954 = vperm.xlu0 %11953, %v11771
      %v11955 = vpop.permute.xlu0 %11954
      %11956 = vset.pattern.permute.xlu0 0
      %11957 = vperm.xlu0 %11956, %v11772
      %v11958 = vpop.permute.xlu0 %11957
      %11959 = vset.pattern.permute.xlu0 0
      %11960 = vperm.xlu0 %11959, %v11773
      %v11961 = vpop.permute.xlu0 %11960
      %11962 = vset.pattern.permute.xlu0 0
      %11963 = vperm.xlu0 %11962, %v11774
      %v11964 = vpop.permute.xlu0 %11963
      %11965 = vset.pattern.permute.xlu0 0
      %11966 = vperm.xlu0 %11965, %v11775
      %v11967 = vpop.permute.xlu0 %11966
      %11968 = vset.pattern.permute.xlu0 0
      %11969 = vperm.xlu0 %11968, %v11776
      %v11970 = vpop.permute.xlu0 %11969
      %11971 = vset.pattern.permute.xlu0 0
      %11972 = vperm.xlu0 %11971, %v11777
      %v11973 = vpop.permute.xlu0 %11972
      %11974 = vset.pattern.permute.xlu0 0
      %11975 = vperm.xlu0 %11974, %v11778
      %v11976 = vpop.permute.xlu0 %11975
      %11977 = vset.pattern.permute.xlu0 0
      %11978 = vperm.xlu0 %11977, %v11779
      %v11979 = vpop.permute.xlu0 %11978
      %11980 = vset.pattern.permute.xlu0 0
      %11981 = vperm.xlu0 %11980, %v11780
      %v11982 = vpop.permute.xlu0 %11981
      %11983 = vset.pattern.permute.xlu0 0
      %11984 = vperm.xlu0 %11983, %v11781
      %v11985 = vpop.permute.xlu0 %11984
      %11986 = vset.pattern.permute.xlu0 0
      %11987 = vperm.xlu0 %11986, %v11782
      %v11988 = vpop.permute.xlu0 %11987
      %11989 = vset.pattern.permute.xlu0 0
      %11990 = vperm.xlu0 %11989, %v11783
      %v11991 = vpop.permute.xlu0 %11990
      %11992 = vset.pattern.permute.xlu0 0
      %11993 = vperm.xlu0 %11992, %v11784
      %v11994 = vpop.permute.xlu0 %11993
      %11995 = vset.pattern.permute.xlu0 0
      %11996 = vperm.xlu0 %11995, %v11785
      %v11997 = vpop.permute.xlu0 %11996
      %11998 = vset.pattern.permute.xlu0 0
      %11999 = vperm.xlu0 %11998, %v11786
      %v12000 = vpop.permute.xlu0 %11999
      %12001 = vset.pattern.permute.xlu0 0
      %12002 = vperm.xlu0 %12001, %v11787
      %v12003 = vpop.permute.xlu0 %12002
      %12004 = vset.pattern.permute.xlu0 0
      %12005 = vperm.xlu0 %12004, %v11788
      %v12006 = vpop.permute.xlu0 %12005
      %12007 = vset.pattern.permute.xlu0 0
      %12008 = vperm.xlu0 %12007, %v11789
      %v12009 = vpop.permute.xlu0 %12008
      %12010 = vset.pattern.permute.xlu0 0
      %12011 = vperm.xlu0 %12010, %v11790
      %v12012 = vpop.permute.xlu0 %12011
      %12013 = vset.pattern.permute.xlu0 0
      %12014 = vperm.xlu0 %12013, %v11791
      %v12015 = vpop.permute.xlu0 %12014
      %12016 = vset.pattern.permute.xlu0 0
      %12017 = vperm.xlu0 %12016, %v11792
      %v12018 = vpop.permute.xlu0 %12017
      %12019 = vset.pattern.permute.xlu0 0
      %12020 = vperm.xlu0 %12019, %v11793
      %v12021 = vpop.permute.xlu0 %12020
      %12022 = vset.pattern.permute.xlu0 0
      %12023 = vperm.xlu0 %12022, %v11794
      %v12024 = vpop.permute.xlu0 %12023
      %12025 = vset.pattern.permute.xlu0 0
      %12026 = vperm.xlu0 %12025, %v11795
      %v12027 = vpop.permute.xlu0 %12026
      %12028 = vset.pattern.permute.xlu0 0
      %12029 = vperm.xlu0 %12028, %v11796
      %v12030 = vpop.permute.xlu0 %12029
      %12031 = vset.pattern.permute.xlu0 0
      %12032 = vperm.xlu0 %12031, %v11797
      %v12033 = vpop.permute.xlu0 %12032
      %12034 = vset.pattern.permute.xlu0 0
      %12035 = vperm.xlu0 %12034, %v11798
      %v12036 = vpop.permute.xlu0 %12035
      %12037 = vset.pattern.permute.xlu0 0
      %12038 = vperm.xlu0 %12037, %v11799
      %v12039 = vpop.permute.xlu0 %12038
      %12040 = vset.pattern.permute.xlu0 0
      %12041 = vperm.xlu0 %12040, %v11800
      %v12042 = vpop.permute.xlu0 %12041
      %12043 = vset.pattern.permute.xlu0 0
      %12044 = vperm.xlu0 %12043, %v11801
      %v12045 = vpop.permute.xlu0 %12044
      %12046 = vset.pattern.permute.xlu0 0
      %12047 = vperm.xlu0 %12046, %v11802
      %v12048 = vpop.permute.xlu0 %12047
      %12049 = vset.pattern.permute.xlu0 0
      %12050 = vperm.xlu0 %12049, %v11803
      %v12051 = vpop.permute.xlu0 %12050
      %12052 = vset.pattern.permute.xlu0 0
      %12053 = vperm.xlu0 %12052, %v11804
      %v12054 = vpop.permute.xlu0 %12053
      %12055 = vset.pattern.permute.xlu0 0
      %12056 = vperm.xlu0 %12055, %v11805
      %v12057 = vpop.permute.xlu0 %12056
      %12058 = vset.pattern.permute.xlu0 0
      %12059 = vperm.xlu0 %12058, %v11806
      %v12060 = vpop.permute.xlu0 %12059
      %12061 = vset.pattern.permute.xlu0 0
      %12062 = vperm.xlu0 %12061, %v11807
      %v12063 = vpop.permute.xlu0 %12062
      %v12064 = vlaneseq
      %v12065 = vand.u32 %v12064, 127
      %v12066 = vlaneseq
      %v12067 = vshrl.u32 %v12066, 7
      %v12068 = vsub.s32 %v12065, %v12067
      %v12069 = vrot.slane %v11874, %v12068
      %v12070 = vlaneseq
      %v12071 = vshrl.u32 %v12070, 7
      %v12072 = vsub.s32 %v12065, %v12071
      %v12073 = vrot.slane %v11877, %v12072
      %v12074 = vlaneseq
      %v12075 = vshrl.u32 %v12074, 7
      %v12076 = vsub.s32 %v12065, %v12075
      %v12077 = vrot.slane %v11880, %v12076
      %v12078 = vlaneseq
      %v12079 = vshrl.u32 %v12078, 7
      %v12080 = vsub.s32 %v12065, %v12079
      %v12081 = vrot.slane %v11883, %v12080
      %v12082 = vlaneseq
      %v12083 = vshrl.u32 %v12082, 7
      %v12084 = vsub.s32 %v12065, %v12083
      %v12085 = vrot.slane %v11886, %v12084
      %v12086 = vlaneseq
      %v12087 = vshrl.u32 %v12086, 7
      %v12088 = vsub.s32 %v12065, %v12087
      %v12089 = vrot.slane %v11889, %v12088
      %v12090 = vlaneseq
      %v12091 = vshrl.u32 %v12090, 7
      %v12092 = vsub.s32 %v12065, %v12091
      %v12093 = vrot.slane %v11892, %v12092
      %v12094 = vlaneseq
      %v12095 = vshrl.u32 %v12094, 7
      %v12096 = vsub.s32 %v12065, %v12095
      %v12097 = vrot.slane %v11895, %v12096
      %v12098 = vlaneseq
      %v12099 = vshrl.u32 %v12098, 7
      %v12100 = vsub.s32 %v12065, %v12099
      %v12101 = vrot.slane %v11898, %v12100
      %v12102 = vlaneseq
      %v12103 = vshrl.u32 %v12102, 7
      %v12104 = vsub.s32 %v12065, %v12103
      %v12105 = vrot.slane %v11901, %v12104
      %v12106 = vlaneseq
      %v12107 = vshrl.u32 %v12106, 7
      %v12108 = vsub.s32 %v12065, %v12107
      %v12109 = vrot.slane %v11904, %v12108
      %v12110 = vlaneseq
      %v12111 = vshrl.u32 %v12110, 7
      %v12112 = vsub.s32 %v12065, %v12111
      %v12113 = vrot.slane %v11907, %v12112
      %v12114 = vlaneseq
      %v12115 = vshrl.u32 %v12114, 7
      %v12116 = vsub.s32 %v12065, %v12115
      %v12117 = vrot.slane %v11910, %v12116
      %v12118 = vlaneseq
      %v12119 = vshrl.u32 %v12118, 7
      %v12120 = vsub.s32 %v12065, %v12119
      %v12121 = vrot.slane %v11913, %v12120
      %v12122 = vlaneseq
      %v12123 = vshrl.u32 %v12122, 7
      %v12124 = vsub.s32 %v12065, %v12123
      %v12125 = vrot.slane %v11916, %v12124
      %v12126 = vlaneseq
      %v12127 = vshrl.u32 %v12126, 7
      %v12128 = vsub.s32 %v12065, %v12127
      %v12129 = vrot.slane %v11919, %v12128
      %v12130 = vlaneseq
      %v12131 = vshrl.u32 %v12130, 7
      %v12132 = vsub.s32 %v12065, %v12131
      %v12133 = vrot.slane %v11922, %v12132
      %v12134 = vlaneseq
      %v12135 = vshrl.u32 %v12134, 7
      %v12136 = vsub.s32 %v12065, %v12135
      %v12137 = vrot.slane %v11925, %v12136
      %v12138 = vlaneseq
      %v12139 = vshrl.u32 %v12138, 7
      %v12140 = vsub.s32 %v12065, %v12139
      %v12141 = vrot.slane %v11928, %v12140
      %v12142 = vlaneseq
      %v12143 = vshrl.u32 %v12142, 7
      %v12144 = vsub.s32 %v12065, %v12143
      %v12145 = vrot.slane %v11931, %v12144
      %v12146 = vlaneseq
      %v12147 = vshrl.u32 %v12146, 7
      %v12148 = vsub.s32 %v12065, %v12147
      %v12149 = vrot.slane %v11934, %v12148
      %v12150 = vlaneseq
      %v12151 = vshrl.u32 %v12150, 7
      %v12152 = vsub.s32 %v12065, %v12151
      %v12153 = vrot.slane %v11937, %v12152
      %v12154 = vlaneseq
      %v12155 = vshrl.u32 %v12154, 7
      %v12156 = vsub.s32 %v12065, %v12155
      %v12157 = vrot.slane %v11940, %v12156
      %v12158 = vlaneseq
      %v12159 = vshrl.u32 %v12158, 7
      %v12160 = vsub.s32 %v12065, %v12159
      %v12161 = vrot.slane %v11943, %v12160
      %v12162 = vlaneseq
      %v12163 = vshrl.u32 %v12162, 7
      %v12164 = vsub.s32 %v12065, %v12163
      %v12165 = vrot.slane %v11946, %v12164
      %v12166 = vlaneseq
      %v12167 = vshrl.u32 %v12166, 7
      %v12168 = vsub.s32 %v12065, %v12167
      %v12169 = vrot.slane %v11949, %v12168
      %v12170 = vlaneseq
      %v12171 = vshrl.u32 %v12170, 7
      %v12172 = vsub.s32 %v12065, %v12171
      %v12173 = vrot.slane %v11952, %v12172
      %v12174 = vlaneseq
      %v12175 = vshrl.u32 %v12174, 7
      %v12176 = vsub.s32 %v12065, %v12175
      %v12177 = vrot.slane %v11955, %v12176
      %v12178 = vlaneseq
      %v12179 = vshrl.u32 %v12178, 7
      %v12180 = vsub.s32 %v12065, %v12179
      %v12181 = vrot.slane %v11958, %v12180
      %v12182 = vlaneseq
      %v12183 = vshrl.u32 %v12182, 7
      %v12184 = vsub.s32 %v12065, %v12183
      %v12185 = vrot.slane %v11961, %v12184
      %v12186 = vlaneseq
      %v12187 = vshrl.u32 %v12186, 7
      %v12188 = vsub.s32 %v12065, %v12187
      %v12189 = vrot.slane %v11964, %v12188
      %v12190 = vlaneseq
      %v12191 = vshrl.u32 %v12190, 7
      %v12192 = vsub.s32 %v12065, %v12191
      %v12193 = vrot.slane %v11967, %v12192
      %v12194 = vlaneseq
      %v12195 = vshrl.u32 %v12194, 7
      %v12196 = vsub.s32 %v12065, %v12195
      %v12197 = vrot.slane %v11970, %v12196
      %v12198 = vlaneseq
      %v12199 = vshrl.u32 %v12198, 7
      %v12200 = vsub.s32 %v12065, %v12199
      %v12201 = vrot.slane %v11973, %v12200
      %v12202 = vlaneseq
      %v12203 = vshrl.u32 %v12202, 7
      %v12204 = vsub.s32 %v12065, %v12203
      %v12205 = vrot.slane %v11976, %v12204
      %v12206 = vlaneseq
      %v12207 = vshrl.u32 %v12206, 7
      %v12208 = vsub.s32 %v12065, %v12207
      %v12209 = vrot.slane %v11979, %v12208
      %v12210 = vlaneseq
      %v12211 = vshrl.u32 %v12210, 7
      %v12212 = vsub.s32 %v12065, %v12211
      %v12213 = vrot.slane %v11982, %v12212
      %v12214 = vlaneseq
      %v12215 = vshrl.u32 %v12214, 7
      %v12216 = vsub.s32 %v12065, %v12215
      %v12217 = vrot.slane %v11985, %v12216
      %v12218 = vlaneseq
      %v12219 = vshrl.u32 %v12218, 7
      %v12220 = vsub.s32 %v12065, %v12219
      %v12221 = vrot.slane %v11988, %v12220
      %v12222 = vlaneseq
      %v12223 = vshrl.u32 %v12222, 7
      %v12224 = vsub.s32 %v12065, %v12223
      %v12225 = vrot.slane %v11991, %v12224
      %v12226 = vlaneseq
      %v12227 = vshrl.u32 %v12226, 7
      %v12228 = vsub.s32 %v12065, %v12227
      %v12229 = vrot.slane %v11994, %v12228
      %v12230 = vlaneseq
      %v12231 = vshrl.u32 %v12230, 7
      %v12232 = vsub.s32 %v12065, %v12231
      %v12233 = vrot.slane %v11997, %v12232
      %v12234 = vlaneseq
      %v12235 = vshrl.u32 %v12234, 7
      %v12236 = vsub.s32 %v12065, %v12235
      %v12237 = vrot.slane %v12000, %v12236
      %v12238 = vlaneseq
      %v12239 = vshrl.u32 %v12238, 7
      %v12240 = vsub.s32 %v12065, %v12239
      %v12241 = vrot.slane %v12003, %v12240
      %v12242 = vlaneseq
      %v12243 = vshrl.u32 %v12242, 7
      %v12244 = vsub.s32 %v12065, %v12243
      %v12245 = vrot.slane %v12006, %v12244
      %v12246 = vlaneseq
      %v12247 = vshrl.u32 %v12246, 7
      %v12248 = vsub.s32 %v12065, %v12247
      %v12249 = vrot.slane %v12009, %v12248
      %v12250 = vlaneseq
      %v12251 = vshrl.u32 %v12250, 7
      %v12252 = vsub.s32 %v12065, %v12251
      %v12253 = vrot.slane %v12012, %v12252
      %v12254 = vlaneseq
      %v12255 = vshrl.u32 %v12254, 7
      %v12256 = vsub.s32 %v12065, %v12255
      %v12257 = vrot.slane %v12015, %v12256
      %v12258 = vlaneseq
      %v12259 = vshrl.u32 %v12258, 7
      %v12260 = vsub.s32 %v12065, %v12259
      %v12261 = vrot.slane %v12018, %v12260
      %v12262 = vlaneseq
      %v12263 = vshrl.u32 %v12262, 7
      %v12264 = vsub.s32 %v12065, %v12263
      %v12265 = vrot.slane %v12021, %v12264
      %v12266 = vlaneseq
      %v12267 = vshrl.u32 %v12266, 7
      %v12268 = vsub.s32 %v12065, %v12267
      %v12269 = vrot.slane %v12024, %v12268
      %v12270 = vlaneseq
      %v12271 = vshrl.u32 %v12270, 7
      %v12272 = vsub.s32 %v12065, %v12271
      %v12273 = vrot.slane %v12027, %v12272
      %v12274 = vlaneseq
      %v12275 = vshrl.u32 %v12274, 7
      %v12276 = vsub.s32 %v12065, %v12275
      %v12277 = vrot.slane %v12030, %v12276
      %v12278 = vlaneseq
      %v12279 = vshrl.u32 %v12278, 7
      %v12280 = vsub.s32 %v12065, %v12279
      %v12281 = vrot.slane %v12033, %v12280
      %v12282 = vlaneseq
      %v12283 = vshrl.u32 %v12282, 7
      %v12284 = vsub.s32 %v12065, %v12283
      %v12285 = vrot.slane %v12036, %v12284
      %v12286 = vlaneseq
      %v12287 = vshrl.u32 %v12286, 7
      %v12288 = vsub.s32 %v12065, %v12287
      %v12289 = vrot.slane %v12039, %v12288
      %v12290 = vlaneseq
      %v12291 = vshrl.u32 %v12290, 7
      %v12292 = vsub.s32 %v12065, %v12291
      %v12293 = vrot.slane %v12042, %v12292
      %v12294 = vlaneseq
      %v12295 = vshrl.u32 %v12294, 7
      %v12296 = vsub.s32 %v12065, %v12295
      %v12297 = vrot.slane %v12045, %v12296
      %v12298 = vlaneseq
      %v12299 = vshrl.u32 %v12298, 7
      %v12300 = vsub.s32 %v12065, %v12299
      %v12301 = vrot.slane %v12048, %v12300
      %v12302 = vlaneseq
      %v12303 = vshrl.u32 %v12302, 7
      %v12304 = vsub.s32 %v12065, %v12303
      %v12305 = vrot.slane %v12051, %v12304
      %v12306 = vlaneseq
      %v12307 = vshrl.u32 %v12306, 7
      %v12308 = vsub.s32 %v12065, %v12307
      %v12309 = vrot.slane %v12054, %v12308
      %v12310 = vlaneseq
      %v12311 = vshrl.u32 %v12310, 7
      %v12312 = vsub.s32 %v12065, %v12311
      %v12313 = vrot.slane %v12057, %v12312
      %v12314 = vlaneseq
      %v12315 = vshrl.u32 %v12314, 7
      %v12316 = vsub.s32 %v12065, %v12315
      %v12317 = vrot.slane %v12060, %v12316
      %v12318 = vlaneseq
      %v12319 = vshrl.u32 %v12318, 7
      %v12320 = vsub.s32 %v12065, %v12319
      %v12321 = vrot.slane %v12063, %v12320
      %vm12322 = vcmask 1041409
      %v12323 = vsel %vm12322, %v12073, %v12069
      %vm12324 = vcmask 1042434
      %v12325 = vsel %vm12324, %v12077, %v12323
      %vm12326 = vcmask 1043459
      %v12327 = vsel %vm12326, %v12081, %v12325
      %vm12328 = vcmask 1044484
      %v12329 = vsel %vm12328, %v12085, %v12327
      %vm12330 = vcmask 1045509
      %v12331 = vsel %vm12330, %v12089, %v12329
      %vm12332 = vcmask 1046534
      %v12333 = vsel %vm12332, %v12093, %v12331
      %vm12334 = vcmask 1047559
      %v12335 = vsel %vm12334, %v12097, %v12333
      %v12336 = vsel %vm12322, %v12105, %v12101
      %v12337 = vsel %vm12324, %v12109, %v12336
      %v12338 = vsel %vm12326, %v12113, %v12337
      %v12339 = vsel %vm12328, %v12117, %v12338
      %v12340 = vsel %vm12330, %v12121, %v12339
      %v12341 = vsel %vm12332, %v12125, %v12340
      %v12342 = vsel %vm12334, %v12129, %v12341
      %v12343 = vsel %vm12322, %v12137, %v12133
      %v12344 = vsel %vm12324, %v12141, %v12343
      %v12345 = vsel %vm12326, %v12145, %v12344
      %v12346 = vsel %vm12328, %v12149, %v12345
      %v12347 = vsel %vm12330, %v12153, %v12346
      %v12348 = vsel %vm12332, %v12157, %v12347
      %v12349 = vsel %vm12334, %v12161, %v12348
      %v12350 = vsel %vm12322, %v12169, %v12165
      %v12351 = vsel %vm12324, %v12173, %v12350
      %v12352 = vsel %vm12326, %v12177, %v12351
      %v12353 = vsel %vm12328, %v12181, %v12352
      %v12354 = vsel %vm12330, %v12185, %v12353
      %v12355 = vsel %vm12332, %v12189, %v12354
      %v12356 = vsel %vm12334, %v12193, %v12355
      %v12357 = vsel %vm12322, %v12201, %v12197
      %v12358 = vsel %vm12324, %v12205, %v12357
      %v12359 = vsel %vm12326, %v12209, %v12358
      %v12360 = vsel %vm12328, %v12213, %v12359
      %v12361 = vsel %vm12330, %v12217, %v12360
      %v12362 = vsel %vm12332, %v12221, %v12361
      %v12363 = vsel %vm12334, %v12225, %v12362
      %v12364 = vsel %vm12322, %v12233, %v12229
      %v12365 = vsel %vm12324, %v12237, %v12364
      %v12366 = vsel %vm12326, %v12241, %v12365
      %v12367 = vsel %vm12328, %v12245, %v12366
      %v12368 = vsel %vm12330, %v12249, %v12367
      %v12369 = vsel %vm12332, %v12253, %v12368
      %v12370 = vsel %vm12334, %v12257, %v12369
      %v12371 = vsel %vm12322, %v12265, %v12261
      %v12372 = vsel %vm12324, %v12269, %v12371
      %v12373 = vsel %vm12326, %v12273, %v12372
      %v12374 = vsel %vm12328, %v12277, %v12373
      %v12375 = vsel %vm12330, %v12281, %v12374
      %v12376 = vsel %vm12332, %v12285, %v12375
      %v12377 = vsel %vm12334, %v12289, %v12376
      %v12378 = vsel %vm12322, %v12297, %v12293
      %v12379 = vsel %vm12324, %v12301, %v12378
      %v12380 = vsel %vm12326, %v12305, %v12379
      %v12381 = vsel %vm12328, %v12309, %v12380
      %v12382 = vsel %vm12330, %v12313, %v12381
      %v12383 = vsel %vm12332, %v12317, %v12382
      %v12384 = vsel %vm12334, %v12321, %v12383
      %v12393 = vcombine.low %v12335, %v12349
      %v12394 = vcombine.high %v12335, %v12349
      %v12396 = vunpack.c.l.s4 1983009808
      %v12397 = vunpack.c.0.s8 %v12396
      %v12398 = vlaneseq
      %v12399 = vshrl.u32 %v12398, 7
      %v12400 = vsub.s32 %v12397, %v12399
      %v12401 = vrot.slane %v12393, %v12400
      %v12403 = vunpack.c.l.s4 1983009808
      %v12404 = vunpack.c.0.s8 %v12403
      %v12405 = vlaneseq
      %v12406 = vshrl.u32 %v12405, 7
      %v12407 = vsub.s32 %v12404, %v12406
      %v12408 = vrot.slane %v12394, %v12407
      %v12409 = vcombine.low %v12342, %v12356
      %v12410 = vcombine.high %v12342, %v12356
      %v12412 = vunpack.c.l.s4 1983009808
      %v12413 = vunpack.c.0.s8 %v12412
      %v12414 = vlaneseq
      %v12415 = vshrl.u32 %v12414, 7
      %v12416 = vsub.s32 %v12413, %v12415
      %v12417 = vrot.slane %v12409, %v12416
      %v12419 = vunpack.c.l.s4 1983009808
      %v12420 = vunpack.c.0.s8 %v12419
      %v12421 = vlaneseq
      %v12422 = vshrl.u32 %v12421, 7
      %v12423 = vsub.s32 %v12420, %v12422
      %v12424 = vrot.slane %v12410, %v12423
      %v12425 = vcombine.low %v12363, %v12377
      %v12426 = vcombine.high %v12363, %v12377
      %v12428 = vunpack.c.l.s4 1983009808
      %v12429 = vunpack.c.0.s8 %v12428
      %v12430 = vlaneseq
      %v12431 = vshrl.u32 %v12430, 7
      %v12432 = vsub.s32 %v12429, %v12431
      %v12433 = vrot.slane %v12425, %v12432
      %v12435 = vunpack.c.l.s4 1983009808
      %v12436 = vunpack.c.0.s8 %v12435
      %v12437 = vlaneseq
      %v12438 = vshrl.u32 %v12437, 7
      %v12439 = vsub.s32 %v12436, %v12438
      %v12440 = vrot.slane %v12426, %v12439
      %v12441 = vcombine.low %v12370, %v12384
      %v12442 = vcombine.high %v12370, %v12384
      %v12444 = vunpack.c.l.s4 1983009808
      %v12445 = vunpack.c.0.s8 %v12444
      %v12446 = vlaneseq
      %v12447 = vshrl.u32 %v12446, 7
      %v12448 = vsub.s32 %v12445, %v12447
      %v12449 = vrot.slane %v12441, %v12448
      %v12451 = vunpack.c.l.s4 1983009808
      %v12452 = vunpack.c.0.s8 %v12451
      %v12453 = vlaneseq
      %v12454 = vshrl.u32 %v12453, 7
      %v12455 = vsub.s32 %v12452, %v12454
      %v12456 = vrot.slane %v12442, %v12455
      %v12457 = vcombine.low %v12401, %v12417
      %v12458 = vcombine.high %v12401, %v12417
      %v12460 = vunpack.c.l.s4 1934713408
      %v12461 = vunpack.c.0.s8 %v12460
      %v12462 = vlaneseq
      %v12463 = vshrl.u32 %v12462, 7
      %v12464 = vsub.s32 %v12461, %v12463
      %v12465 = vrot.slane %v12457, %v12464
      %v12467 = vunpack.c.l.s4 1934713408
      %v12468 = vunpack.c.0.s8 %v12467
      %v12469 = vlaneseq
      %v12470 = vshrl.u32 %v12469, 7
      %v12471 = vsub.s32 %v12468, %v12470
      %v12472 = vrot.slane %v12458, %v12471
      %v12473 = vcombine.low %v12408, %v12424
      %v12474 = vcombine.high %v12408, %v12424
      %v12476 = vunpack.c.l.s4 1934713408
      %v12477 = vunpack.c.0.s8 %v12476
      %v12478 = vlaneseq
      %v12479 = vshrl.u32 %v12478, 7
      %v12480 = vsub.s32 %v12477, %v12479
      %v12481 = vrot.slane %v12473, %v12480
      %v12483 = vunpack.c.l.s4 1934713408
      %v12484 = vunpack.c.0.s8 %v12483
      %v12485 = vlaneseq
      %v12486 = vshrl.u32 %v12485, 7
      %v12487 = vsub.s32 %v12484, %v12486
      %v12488 = vrot.slane %v12474, %v12487
      %v12489 = vcombine.low %v12433, %v12449
      %v12490 = vcombine.high %v12433, %v12449
      %v12492 = vunpack.c.l.s4 1934713408
      %v12493 = vunpack.c.0.s8 %v12492
      %v12494 = vlaneseq
      %v12495 = vshrl.u32 %v12494, 7
      %v12496 = vsub.s32 %v12493, %v12495
      %v12497 = vrot.slane %v12489, %v12496
      %v12499 = vunpack.c.l.s4 1934713408
      %v12500 = vunpack.c.0.s8 %v12499
      %v12501 = vlaneseq
      %v12502 = vshrl.u32 %v12501, 7
      %v12503 = vsub.s32 %v12500, %v12502
      %v12504 = vrot.slane %v12490, %v12503
      %v12505 = vcombine.low %v12440, %v12456
      %v12506 = vcombine.high %v12440, %v12456
      %v12508 = vunpack.c.l.s4 1934713408
      %v12509 = vunpack.c.0.s8 %v12508
      %v12510 = vlaneseq
      %v12511 = vshrl.u32 %v12510, 7
      %v12512 = vsub.s32 %v12509, %v12511
      %v12513 = vrot.slane %v12505, %v12512
      %v12515 = vunpack.c.l.s4 1934713408
      %v12516 = vunpack.c.0.s8 %v12515
      %v12517 = vlaneseq
      %v12518 = vshrl.u32 %v12517, 7
      %v12519 = vsub.s32 %v12516, %v12518
      %v12520 = vrot.slane %v12506, %v12519
      %v12521 = vcombine.low %v12465, %v12497
      %v12522 = vcombine.high %v12465, %v12497
      %v12523 = vcombine.low %v12472, %v12504
      %v12524 = vcombine.high %v12472, %v12504
      %v12525 = vcombine.low %v12481, %v12513
      %v12526 = vcombine.high %v12481, %v12513
      %v12527 = vcombine.low %v12488, %v12520
      %v12528 = vcombine.high %v12488, %v12520
      %12530 = vrot.lane.b32.xlu0 %v12522, 8
      %v12531 = vpop.permute.xlu0 %12530
      %12534 = vrot.lane.b32.xlu0 %v12523, 16
      %v12535 = vpop.permute.xlu0 %12534
      %12538 = vrot.lane.b32.xlu0 %v12524, 24
      %v12539 = vpop.permute.xlu0 %12538
      %12542 = vrot.lane.b32.xlu0 %v12525, 32
      %v12543 = vpop.permute.xlu0 %12542
      %12546 = vrot.lane.b32.xlu0 %v12526, 40
      %v12547 = vpop.permute.xlu0 %12546
      %12550 = vrot.lane.b32.xlu0 %v12527, 48
      %v12551 = vpop.permute.xlu0 %12550
      %12554 = vrot.lane.b32.xlu0 %v12528, 56
      %v12555 = vpop.permute.xlu0 %12554
      %vm12557 = vcmask 64512
      %v12558 = vsel %vm12557, %v12521, %v12531
      %v12559 = vsel %vm401, %v12558, %v12535
      %vm12560 = vcmask 195584
      %v12561 = vsel %vm12560, %v12559, %v12539
      %v12562 = vsel %vm403, %v12561, %v12543
      %vm12563 = vcmask 326656
      %v12564 = vsel %vm12563, %v12562, %v12547
      %v12565 = vsel %vm405, %v12564, %v12551
      %vm12566 = vcmask 457728
      %v12567 = vsel %vm12566, %v12565, %v12555
      %v12568 = vld [vmem:[%s2] sm:$0xff]
      %12570 = vset.pattern.permute.xlu0 0
      %12571 = vperm.xlu0 %12570, %v12568
      %v12572 = vpop.permute.xlu0 %12571
      %v12574 = vadd.f32 %v12567, %v12572
      %12575 = vst.msk [vmem:[%s168] sm:$0xff] %vm407, %v12574
      %p12576 = scmp.lt.s32.totalorder %s14, 1
      %s12577 = scalar_select %p12576, %s14, 1
      %s12578 = smul.addr %s12577, 8
      %s12579 = scalar_lea.vmem %s3, %s12578
      // Predicated region
      $region33: #{multiscale.1} parent=31 // pred_check
        %p12580 = pneg %p100
      $region34: #{multiscale.1} parent=31 // pred_check_branch
        %12582 = sbr.rel (%p12580) target = $region36
      $region35: #{multiscale.1} parent=31 // pred_region
        _
      $region36: #{multiscale.1} parent=31 // pred_fallthru
        _
    $region32: #{multiscale.1} parent=5 // pred_fallthru
      _
    %p12583 = scmp.le.s32.totalorder 2, %s9
    // Predicated region
    $region37: #{multiscale.1} parent=5 // pred_check
      %p12584 = pneg %p12583
    $region38: #{multiscale.1} parent=5 // pred_check_branch
      %12586 = sbr.rel (%p12584) target = $region40
    $region39: #{multiscale.1} parent=5 // pred_region
      %s12587 = ssub.s32 %s9, 2
      // Predicated region
      $region41: #{multiscale.1} parent=39 // pred_check
        %p12588 = pneg %p106
      $region42: #{multiscale.1} parent=39 // pred_check_branch
        %12590 = sbr.rel (%p12588) target = $region44
      $region43: #{multiscale.1} parent=39 // pred_region
        %p12591 = scmp.lt.s32.totalorder %s15, 1
        %s12592 = scalar_select %p12591, %s15, 1
        %s12593 = smul.addr %s12592, 8
        %s12594 = scalar_lea.vmem %s3, %s12593
      $region44: #{multiscale.1} parent=39 // pred_fallthru
        _
    $region40: #{multiscale.1} parent=5 // pred_fallthru
      _
  $region6: #{multiscale.1} parent=0 // loop_footer
    %s13 = sadd.s32 1, %s9
  $region7: #{multiscale.1} parent=0 // loop_footer_branch
    %8 = sbr.rel target = $region3
  $region8: #{multiscale.1} parent=0 // loop_exit
    _

</llo_original>
